<compile_context>
chip_gen: v7x
topology: tpu7x:2x2x1
jax: 0.10.0
libtpu: 0.0.40
codegen_flags: <defaults>
</compile_context>

<pallas_src>
import functools
import math

import jax
import jax.numpy as jnp
from jax.experimental import pallas as pl
from jax.experimental.pallas import tpu as pltpu

BN_EPS = 1e-5
ACT_DTYPE = jnp.bfloat16

COMPILER_PARAMS = pltpu.CompilerParams(
    dimension_semantics=("parallel",),
    vmem_limit_bytes=64 * 1024 * 1024,   # explicit: v5e/v6e default scoped VMEM is tiny
)


def _round8(x):
    return ((x + 7) // 8) * 8


# ------------------------------------------------------------------ in-kernel helpers
def _zero_border(pad_ref, halo, lw, H, W):
    """Zero only the halo strips of a padded VMEM buffer; the interior is written later."""
    Hp, Wp, C = pad_ref.shape
    dt = pad_ref.dtype
    pad_ref[0:halo, :, :] = jnp.zeros((halo, Wp, C), dt)                       # top rows
    pad_ref[halo + H:Hp, :, :] = jnp.zeros((Hp - halo - H, Wp, C), dt)         # bottom rows
    pad_ref[halo:halo + H, lw - halo:lw, :] = jnp.zeros((H, halo, C), dt)      # left strip
    pad_ref[halo:halo + H, lw + W:lw + W + halo, :] = jnp.zeros((H, halo, C), dt)  # right strip


def _conv3x3_acc(pad_ref, H, W, dilation, r0, c0, wget, acc=None):
    """One dilated 3x3 conv as 9 accumulated per-tap matmuls (no im2col buffer).

    pad_ref : bf16 VMEM halo buffer; image interior at offset (r0, c0), zero halo.
    wget(t) : returns the (Cin, Cout) bf16 weight slice for tap t (ki-major, kj-minor).
    acc     : optional existing (H*W, Cout) f32 accumulator to add into.
    """
    t = 0
    for ki in range(3):
        for kj in range(3):
            oi = r0 + (ki - 1) * dilation
            oj = c0 + (kj - 1) * dilation
            tap = pad_ref[oi:oi + H, oj:oj + W, :].reshape(H * W, -1)   # bf16 (H*W, Cin)
            p = jnp.dot(tap, wget(t), preferred_element_type=jnp.float32)
            acc = p if acc is None else acc + p
            t += 1
    return acc


# ------------------------------------------------------------------ fused stage kernels
def _down_block_kernel(x_ref, w1_ref, s1_ref, w2_ref, s2_ref, *refs,
                       dilations, maxd, lw1, lw2, pool):
    """Fused DownConv: conv1+BN+ReLU -> [conv2(dil)+BN +res +ReLU]*blocks (-> 2x2 maxpool)."""
    if pool:
        o_ref, p_ref, pad1_ref, pad2_ref, stage_ref = refs
    else:
        o_ref, pad1_ref, pad2_ref = refs
    _, H, W, _ = x_ref.shape
    Cout = o_ref.shape[3]

    # conv1 (3x3, pad=1): bf16 halo buffer, border-only zeroing, 9 per-tap matmuls, ReLU.
    _zero_border(pad1_ref, 1, lw1, H, W)
    pad1_ref[1:1 + H, lw1:lw1 + W, :] = x_ref[0]
    acc = _conv3x3_acc(pad1_ref, H, W, 1, 1, lw1, lambda t: w1_ref[t])
    cur = jnp.maximum(acc + s1_ref[...], 0.0)                      # (H*W, Cout) f32

    # conv2 blocks: dilated conv + folded BN + residual + ReLU, all resident in VMEM.
    _zero_border(pad2_ref, maxd, lw2, H, W)
    for bi, d in enumerate(dilations):
        pad2_ref[maxd:maxd + H, lw2:lw2 + W, :] = (
            cur.reshape(H, W, Cout).astype(pad2_ref.dtype))
        z = _conv3x3_acc(pad2_ref, H, W, d, maxd, lw2,
                         lambda t: w2_ref[bi, t]) + s2_ref[bi]
        cur = jnp.maximum(z + cur, 0.0)

    o_ref[0] = cur.reshape(H, W, Cout).astype(o_ref.dtype)

    if pool:
        # Fused 2x2 max-pool: row-pair max on the resident f32 activation, then
        # column-pair max via stride-2 sublane loads from a small f32 staging scratch.
        half = cur.reshape(H // 2, 2 * W, Cout)
        rmax = jnp.maximum(half[:, :W, :], half[:, W:, :])          # (H//2, W, Cout) f32
        stage_ref[...] = rmax
        p_ref[0] = jnp.maximum(
            stage_ref[:, pl.ds(0, W // 2, 2), :],
            stage_ref[:, pl.ds(1, W // 2, 2), :]).astype(p_ref.dtype)


def _up_block_kernel(yup_ref, skip_ref, w1a_ref, w1b_ref, s1_ref, w2_ref, s2_ref,
                     eca_ref, o_ref, padu_ref, pads_ref, pad2_ref,
                     *, dilations, maxd, lw1, lw2):
    """Fused UpConv: concat(from_up, skip) -> conv1+BN+ReLU -> [conv2+BN (+ECA) +res +ReLU].

    The channel concat is never materialized: conv1 over cat(up, skip) == conv(up, w1a)
    + conv(skip, w1b), each from its own bf16 halo buffer.
    """
    _, H, W, Cout = o_ref.shape

    _zero_border(padu_ref, 1, lw1, H, W)
    _zero_border(pads_ref, 1, lw1, H, W)
    padu_ref[1:1 + H, lw1:lw1 + W, :] = yup_ref[0]
    pads_ref[1:1 + H, lw1:lw1 + W, :] = skip_ref[0]
    acc = _conv3x3_acc(padu_ref, H, W, 1, 1, lw1, lambda t: w1a_ref[t])
    acc = _conv3x3_acc(pads_ref, H, W, 1, 1, lw1, lambda t: w1b_ref[t], acc)
    cur = jnp.maximum(acc + s1_ref[...], 0.0)                      # (H*W, Cout) f32

    _zero_border(pad2_ref, maxd, lw2, H, W)
    nblocks = len(dilations)
    for bi, d in enumerate(dilations):
        pad2_ref[maxd:maxd + H, lw2:lw2 + W, :] = (
            cur.reshape(H, W, Cout).astype(pad2_ref.dtype))
        z = _conv3x3_acc(pad2_ref, H, W, d, maxd, lw2,
                         lambda t: w2_ref[bi, t]) + s2_ref[bi]
        if bi == nblocks - 1:
            # ECA gate: conv1d(k=3, zero-padded) over channels of GAP(z), expressed as two
            # lane shifts + 3 FMAs on the (1, Cout) GAP vector (no (C,C) matmul / weight DMA).
            m = jnp.mean(z, axis=0, keepdims=True)                       # (1, Cout)
            zero = jnp.zeros((1, 1), jnp.float32)
            m_l = jnp.concatenate([zero, m[:, :Cout - 1]], axis=1)       # m[c-1]
            m_r = jnp.concatenate([m[:, 1:], zero], axis=1)              # m[c+1]
            gate = jax.nn.sigmoid(eca_ref[0:1, :] * m_l
                                  + eca_ref[1:2, :] * m
                                  + eca_ref[2:3, :] * m_r)
            cur = jnp.maximum(z * gate + cur, 0.0)                       # gate + res + ReLU
        else:
            cur = jnp.maximum(z + cur, 0.0)

    o_ref[0] = cur.reshape(H, W, Cout).astype(o_ref.dtype)


def _deconv_kernel(x_ref, w_ref, b_ref, o_ref):
    """ConvTranspose2d(k=2, s=2) as one per-pixel matmul producing the 4 output slots."""
    _, H, W, Cin = x_ref.shape
    K = o_ref.shape[3]
    x = x_ref[0].reshape(H * W, Cin)
    out = jnp.dot(x, w_ref[...], preferred_element_type=jnp.float32) + b_ref[...]
    o_ref[0] = out.reshape(H, W, K).astype(o_ref.dtype)


# ------------------------------------------------------------------ pallas_call wrappers
def _wspec(shape):
    """BlockSpec for a grid-constant weight/shift input: fetched once, single-buffered."""
    nd = len(shape)
    return pl.BlockSpec(shape, lambda n, _nd=nd: (0,) * _nd,
                        pipeline_mode=pl.Buffered(1))


def down_block(x, d, dilations):
    N, H, W, Cin = x.shape
    Cout = d["w1"].shape[2]
    blocks = d["w2"].shape[0]
    dils = tuple(dilations[:blocks])
    maxd = max(dils)
    lw1 = 8                      # sublane-aligned left halo for the pad=1 conv
    lw2 = _round8(maxd)          # sublane-aligned left halo for the dilated convs
    pool = bool(d["pooling"])
    kern = functools.partial(_down_block_kernel, dilations=dils, maxd=maxd,
                             lw1=lw1, lw2=lw2, pool=pool)

    out_before = jax.ShapeDtypeStruct((N, H, W, Cout), ACT_DTYPE)
    spec_before = pl.BlockSpec((1, H, W, Cout), lambda n: (n, 0, 0, 0))
    if pool:
        out_shape = (out_before,
                     jax.ShapeDtypeStruct((N, H // 2, W // 2, Cout), ACT_DTYPE))
        out_specs = (spec_before,
                     pl.BlockSpec((1, H // 2, W // 2, Cout), lambda n: (n, 0, 0, 0)))
    else:
        out_shape = out_before
        out_specs = spec_before

    scratch = [
        pltpu.VMEM((H + 2, lw1 + W + 1, Cin), ACT_DTYPE),
        pltpu.VMEM((H + 2 * maxd, lw2 + W + maxd, Cout), ACT_DTYPE),
    ]
    if pool:
        scratch.append(pltpu.VMEM((H // 2, W, Cout), jnp.float32))

    return pl.pallas_call(
        kern,
        out_shape=out_shape,
        grid=(N,),
        in_specs=[
            pl.BlockSpec((1, H, W, Cin), lambda n: (n, 0, 0, 0)),
            _wspec((9, Cin, Cout)),
            _wspec((1, Cout)),
            _wspec((blocks, 9, Cout, Cout)),
            _wspec((blocks, 1, Cout)),
        ],
        out_specs=out_specs,
        scratch_shapes=scratch,
        compiler_params=COMPILER_PARAMS,
    )(x, d["w1"], d["shift1"], d["w2"], d["shift2"])


def up_block(y_up, skip, u, dilations):
    N, H, W, Cout = y_up.shape
    blocks = u["w2"].shape[0]
    dils = tuple(dilations[:blocks])
    maxd = max(dils)
    lw1 = 8
    lw2 = _round8(maxd)
    kern = functools.partial(_up_block_kernel, dilations=dils, maxd=maxd,
                             lw1=lw1, lw2=lw2)
    return pl.pallas_call(
        kern,
        out_shape=jax.ShapeDtypeStruct((N, H, W, Cout), ACT_DTYPE),
        grid=(N,),
        in_specs=[
            pl.BlockSpec((1, H, W, Cout), lambda n: (n, 0, 0, 0)),   # from_up
            pl.BlockSpec((1, H, W, Cout), lambda n: (n, 0, 0, 0)),   # skip (from_down)
            _wspec((9, Cout, Cout)),                                 # conv1 weights, up half
            _wspec((9, Cout, Cout)),                                 # conv1 weights, skip half
            _wspec((1, Cout)),
            _wspec((blocks, 9, Cout, Cout)),
            _wspec((blocks, 1, Cout)),
            _wspec((3, Cout)),                                       # ECA k=3 weights
        ],
        out_specs=pl.BlockSpec((1, H, W, Cout), lambda n: (n, 0, 0, 0)),
        scratch_shapes=[
            pltpu.VMEM((H + 2, lw1 + W + 1, Cout), ACT_DTYPE),
            pltpu.VMEM((H + 2, lw1 + W + 1, Cout), ACT_DTYPE),
            pltpu.VMEM((H + 2 * maxd, lw2 + W + maxd, Cout), ACT_DTYPE),
        ],
        compiler_params=COMPILER_PARAMS,
    )(y_up, skip, u["w1a"], u["w1b"], u["shift1"], u["w2"], u["shift2"], u["w_eca"])


def deconv2x2(x, wt_cat, bt_cat):
    N, H, W, Cin = x.shape
    K = wt_cat.shape[1]
    return pl.pallas_call(
        _deconv_kernel,
        out_shape=jax.ShapeDtypeStruct((N, H, W, K), ACT_DTYPE),
        grid=(N,),
        in_specs=[
            pl.BlockSpec((1, H, W, Cin), lambda n: (n, 0, 0, 0)),
            _wspec((Cin, K)),
            _wspec((1, K)),
        ],
        out_specs=pl.BlockSpec((1, H, W, K), lambda n: (n, 0, 0, 0)),
        compiler_params=COMPILER_PARAMS,
    )(x, wt_cat, bt_cat)


# ------------------------------------------------------------------ parameters
def _xavier(key, shape):
    # shape = (kh, kw, cin, cout); matches nn.init.xavier_normal_ fan computation.
    fan_in = shape[0] * shape[1] * shape[2]
    fan_out = shape[0] * shape[1] * shape[3]
    std = math.sqrt(2.0 / (fan_in + fan_out))
    return std * jax.random.normal(key, shape, jnp.float32)


def make_params(key, in_channels, depth=5, shared_depth=2, blocks=1, max_filters=512):
    dilations = [1, 2, 5]
    start_depth = depth - shared_depth
    keys = iter(jax.random.split(key, 256))
    bn_scale = 1.0 / math.sqrt(1.0 + BN_EPS)   # eval-mode BN with fresh stats, folded into w
    down, up = [], []
    outs = in_channels
    for i in range(start_depth, depth):
        ins = in_channels if i == start_depth else outs
        outs = min(ins * 2, max_filters)
        pooling = i < depth - 1

        w1 = _xavier(next(keys), (3, 3, ins, outs)) * bn_scale
        b1 = jnp.zeros((outs,), jnp.float32)
        w2_l, s2_l = [], []
        for _ in range(blocks):
            w2 = _xavier(next(keys), (3, 3, outs, outs)) * bn_scale
            b2 = jnp.zeros((outs,), jnp.float32)
            w2_l.append(w2.reshape(9, outs, outs))
            s2_l.append((b2 * bn_scale).reshape(1, outs))
        down.append({
            "w1": w1.reshape(9, ins, outs).astype(ACT_DTYPE),
            "shift1": (b1 * bn_scale).reshape(1, outs),
            "w2": jnp.stack(w2_l).astype(ACT_DTYPE),
            "shift2": jnp.stack(s2_l),
            "pooling": pooling,
        })

        if i < depth - 1:
            assert outs >= 2, "ECA channel conv assumes at least 2 channels"
            up_in = min(outs * 2, max_filters)
            # ConvTranspose2d(up_in, outs, k=2, s=2): weight stored as (2,2,cin,cout);
            # fold the 4 (a,b) slots into the output channels: col = (a*2+b)*cout + co.
            wt = _xavier(next(keys), (2, 2, up_in, outs))
            bt = jnp.zeros((outs,), jnp.float32)
            wt_cat = jnp.transpose(wt, (2, 0, 1, 3)).reshape(up_in, 4 * outs)
            bt_cat = jnp.tile(bt, 4).reshape(1, 4 * outs)

            # conv1 over cat(from_up, from_down): split into the two cin halves
            # (conv over concat == sum of convs over the halves).
            w1u = _xavier(next(keys), (3, 3, 2 * outs, outs)) * bn_scale
            b1u = jnp.zeros((outs,), jnp.float32)
            w2u_l, s2u_l = [], []
            for _ in range(blocks):
                w2u = _xavier(next(keys), (3, 3, outs, outs)) * bn_scale
                b2u = jnp.zeros((outs,), jnp.float32)
                w2u_l.append(w2u.reshape(9, outs, outs))
                s2u_l.append((b2u * bn_scale).reshape(1, outs))

            # ECA: conv1d(1,1,k=3, no bias) over channels; 3 taps broadcast per channel.
            w_eca = 0.1 * jax.random.normal(next(keys), (3,), jnp.float32)
            eca_b = jnp.tile(w_eca.reshape(3, 1), (1, outs)).astype(jnp.float32)

            up.append({
                "wt_cat": wt_cat.astype(ACT_DTYPE), "bt_cat": bt_cat, "out": outs,
                "w1a": w1u[:, :, :outs, :].reshape(9, outs, outs).astype(ACT_DTYPE),
                "w1b": w1u[:, :, outs:, :].reshape(9, outs, outs).astype(ACT_DTYPE),
                "shift1": (b1u * bn_scale).reshape(1, outs),
                "w2": jnp.stack(w2u_l).astype(ACT_DTYPE),
                "shift2": jnp.stack(s2u_l),
                "w_eca": eca_b,
            })
    return {"down": down, "up": up, "dilations": dilations}


# ------------------------------------------------------------------ forward
def shared_bottleneck(params, x_nchw):
    dil = params["dilations"]
    x = jnp.transpose(x_nchw, (0, 2, 3, 1)).astype(ACT_DTYPE)   # NCHW -> NHWC, bf16

    # ---- encoder (DownConv x2); each stage is one fused pallas_call (pool included) ----
    enc = []
    for d in params["down"]:
        if d["pooling"]:
            before, x = down_block(x, d, dil)    # (before_pool, pooled) from one kernel
            enc.append(before)
        else:
            before = down_block(x, d, dil)
            enc.append(before)
            x = before

    # ---- decoder (UpConv + ECA), fused per stage ----
    for i, u in enumerate(params["up"]):
        skip = enc[-(i + 2)]
        cout = u["out"]
        y4 = deconv2x2(x, u["wt_cat"], u["bt_cat"])             # (N, h, w, 4*cout)
        N, h, w, _ = y4.shape
        # TODO(synk): fuse the deconv matmul + 2x2 spatial interleave into the up kernel
        # (needs a stride-2 VMEM scatter); kept as one fused XLA reshape/transpose pass.
        y_up = (y4.reshape(N, h, w, 2, 2, cout)
                  .transpose(0, 1, 3, 2, 4, 5)
                  .reshape(N, 2 * h, 2 * w, cout))
        x = up_block(y_up, skip, u, dil)     # concat + conv1 + conv2 + ECA + res + ReLU

    return jnp.transpose(x, (0, 3, 1, 2)).astype(jnp.float32)   # NHWC -> NCHW


# ------------------------------------------------------------------ main
if __name__ == "__main__":
    key = jax.random.PRNGKey(0)
    k_param, k_x = jax.random.split(key)

    # Small config mirroring the default structure (channels saturate at max_filters,
    # as they do at 512 in the original): in_channels == max_filters.
    N, C, H, W = 2, 8, 16, 16
    params = make_params(k_param, in_channels=C, depth=5, shared_depth=2,
                         blocks=1, max_filters=C)

    x = jax.random.normal(k_x, (N, C, H, W), jnp.float32)  # NCHW, like PyTorch
    out = shared_bottleneck(params, x)
    jax.block_until_ready(out)

    assert out.shape == (N, C, H, W), out.shape
    assert bool(jnp.isfinite(out).all())
    print("KERNEL_OK")
</pallas_src>

<mosaic_0001>
module attributes {stable_mosaic.version = 11 : i64} {
  func.func @_down_block_kernel(%arg0: i32, %arg1: memref<1x16x16x8xbf16, #tpu.memory_space<vmem>>, %arg2: memref<9x8x8xbf16, #tpu.memory_space<vmem>>, %arg3: memref<1x8xf32, #tpu.memory_space<vmem>>, %arg4: memref<1x9x8x8xbf16, #tpu.memory_space<vmem>>, %arg5: memref<1x1x8xf32, #tpu.memory_space<vmem>>, %arg6: memref<1x16x16x8xbf16, #tpu.memory_space<vmem>>, %arg7: memref<1x8x8x8xbf16, #tpu.memory_space<vmem>>, %arg8: memref<18x25x8xbf16, #tpu.memory_space<vmem>>, %arg9: memref<18x25x8xbf16, #tpu.memory_space<vmem>>, %arg10: memref<8x16x8xf32, #tpu.memory_space<vmem>>) attributes {dimension_semantics = [#tpu.dimension_semantics<parallel>], iteration_bounds = array<i64: 2>, scalar_prefetch = 0 : i64, scratch_operands = 3 : i64, tpu.core_type = #tpu.core_type<tc>, window_params = [{transform_indices = @transform_0, window_bounds = array<i64: 1, 16, 16, 8>}, {pipeline_mode = #tpu.pipeline_mode<synchronous>, transform_indices = @transform_1, window_bounds = array<i64: 9, 8, 8>}, {pipeline_mode = #tpu.pipeline_mode<synchronous>, transform_indices = @transform_2, window_bounds = array<i64: 1, 8>}, {pipeline_mode = #tpu.pipeline_mode<synchronous>, transform_indices = @transform_3, window_bounds = array<i64: 1, 9, 8, 8>}, {pipeline_mode = #tpu.pipeline_mode<synchronous>, transform_indices = @transform_4, window_bounds = array<i64: 1, 1, 8>}, {transform_indices = @transform_5, window_bounds = array<i64: 1, 16, 16, 8>}, {transform_indices = @transform_6, window_bounds = array<i64: 1, 8, 8, 8>}]} {
    %cst = arith.constant 0.000000e+00 : bf16
    %0 = vector.broadcast %cst : bf16 to vector<1x25x8xbf16>
    %c0 = arith.constant 0 : index
    %c0_0 = arith.constant 0 : index
    %c0_1 = arith.constant 0 : index
    %1 = vector.load %arg8[%c0, %c0_0, %c0_1] : memref<18x25x8xbf16, #tpu.memory_space<vmem>>, vector<1x25x8xbf16>
    tpu.vector_store %arg8[%c0, %c0_0, %c0_1], %0 {strides = array<i32>} : memref<18x25x8xbf16, #tpu.memory_space<vmem>>, vector<1x25x8xbf16>,
    %cst_2 = arith.constant 0.000000e+00 : bf16
    %2 = vector.broadcast %cst_2 : bf16 to vector<1x25x8xbf16>
    %c17 = arith.constant 17 : index
    %c0_3 = arith.constant 0 : index
    %c0_4 = arith.constant 0 : index
    %3 = vector.load %arg8[%c17, %c0_3, %c0_4] : memref<18x25x8xbf16, #tpu.memory_space<vmem>>, vector<1x25x8xbf16>
    tpu.vector_store %arg8[%c17, %c0_3, %c0_4], %2 {strides = array<i32>} : memref<18x25x8xbf16, #tpu.memory_space<vmem>>, vector<1x25x8xbf16>,
    %cst_5 = arith.constant 0.000000e+00 : bf16
    %4 = vector.broadcast %cst_5 : bf16 to vector<16x1x8xbf16>
    %c1 = arith.constant 1 : index
    %c7 = arith.constant 7 : index
    %c0_6 = arith.constant 0 : index
    %5 = vector.load %arg8[%c1, %c7, %c0_6] : memref<18x25x8xbf16, #tpu.memory_space<vmem>>, vector<16x1x8xbf16>
    tpu.vector_store %arg8[%c1, %c7, %c0_6], %4 {strides = array<i32>} : memref<18x25x8xbf16, #tpu.memory_space<vmem>>, vector<16x1x8xbf16>,
    %cst_7 = arith.constant 0.000000e+00 : bf16
    %6 = vector.broadcast %cst_7 : bf16 to vector<16x1x8xbf16>
    %c1_8 = arith.constant 1 : index
    %c24 = arith.constant 24 : index
    %c0_9 = arith.constant 0 : index
    %7 = vector.load %arg8[%c1_8, %c24, %c0_9] : memref<18x25x8xbf16, #tpu.memory_space<vmem>>, vector<16x1x8xbf16>
    tpu.vector_store %arg8[%c1_8, %c24, %c0_9], %6 {strides = array<i32>} : memref<18x25x8xbf16, #tpu.memory_space<vmem>>, vector<16x1x8xbf16>,
    %c0_10 = arith.constant 0 : index
    %c0_11 = arith.constant 0 : index
    %c0_12 = arith.constant 0 : index
    %c0_13 = arith.constant 0 : index
    %8 = vector.load %arg1[%c0_10, %c0_11, %c0_12, %c0_13] : memref<1x16x16x8xbf16, #tpu.memory_space<vmem>>, vector<1x16x16x8xbf16>
    %9 = vector.shape_cast %8 : vector<1x16x16x8xbf16> to vector<16x16x8xbf16>
    %c1_14 = arith.constant 1 : index
    %c8 = arith.constant 8 : index
    %c0_15 = arith.constant 0 : index
    %10 = vector.load %arg8[%c1_14, %c8, %c0_15] : memref<18x25x8xbf16, #tpu.memory_space<vmem>>, vector<16x16x8xbf16>
    tpu.vector_store %arg8[%c1_14, %c8, %c0_15], %9 {strides = array<i32>} : memref<18x25x8xbf16, #tpu.memory_space<vmem>>, vector<16x16x8xbf16>,
    %c0_16 = arith.constant 0 : index
    %c7_17 = arith.constant 7 : index
    %c0_18 = arith.constant 0 : index
    %11 = vector.load %arg8[%c0_16, %c7_17, %c0_18] : memref<18x25x8xbf16, #tpu.memory_space<vmem>>, vector<16x16x8xbf16>
    %12 = vector.shape_cast %11 : vector<16x16x8xbf16> to vector<256x8xbf16>
    %c0_19 = arith.constant 0 : index
    %c0_20 = arith.constant 0 : index
    %c0_21 = arith.constant 0 : index
    %13 = vector.load %arg2[%c0_19, %c0_20, %c0_21] : memref<9x8x8xbf16, #tpu.memory_space<vmem>>, vector<1x8x8xbf16>
    %14 = vector.shape_cast %13 : vector<1x8x8xbf16> to vector<8x8xbf16>
    %cst_22 = arith.constant dense<0.000000e+00> : vector<256x8xf32>
    %15 = tpu.matmul %12, %14, %cst_22 {dimension_numbers = #tpu.dot_dimension_numbers<[1], [0], [0], [1], [0, 0, 1, 1], [], []>} : vector<256x8xbf16>, vector<8x8xbf16>, vector<256x8xf32> -> vector<256x8xf32>
    %c0_23 = arith.constant 0 : index
    %c8_24 = arith.constant 8 : index
    %c0_25 = arith.constant 0 : index
    %16 = vector.load %arg8[%c0_23, %c8_24, %c0_25] : memref<18x25x8xbf16, #tpu.memory_space<vmem>>, vector<16x16x8xbf16>
    %17 = vector.shape_cast %16 : vector<16x16x8xbf16> to vector<256x8xbf16>
    %c1_26 = arith.constant 1 : index
    %c0_27 = arith.constant 0 : index
    %c0_28 = arith.constant 0 : index
    %18 = vector.load %arg2[%c1_26, %c0_27, %c0_28] : memref<9x8x8xbf16, #tpu.memory_space<vmem>>, vector<1x8x8xbf16>
    %19 = vector.shape_cast %18 : vector<1x8x8xbf16> to vector<8x8xbf16>
    %cst_29 = arith.constant dense<0.000000e+00> : vector<256x8xf32>
    %20 = tpu.matmul %17, %19, %cst_29 {dimension_numbers = #tpu.dot_dimension_numbers<[1], [0], [0], [1], [0, 0, 1, 1], [], []>} : vector<256x8xbf16>, vector<8x8xbf16>, vector<256x8xf32> -> vector<256x8xf32>
    %21 = arith.addf %15, %20 : vector<256x8xf32>
    %c0_30 = arith.constant 0 : index
    %c9 = arith.constant 9 : index
    %c0_31 = arith.constant 0 : index
    %22 = vector.load %arg8[%c0_30, %c9, %c0_31] : memref<18x25x8xbf16, #tpu.memory_space<vmem>>, vector<16x16x8xbf16>
    %23 = vector.shape_cast %22 : vector<16x16x8xbf16> to vector<256x8xbf16>
    %c2 = arith.constant 2 : index
    %c0_32 = arith.constant 0 : index
    %c0_33 = arith.constant 0 : index
    %24 = vector.load %arg2[%c2, %c0_32, %c0_33] : memref<9x8x8xbf16, #tpu.memory_space<vmem>>, vector<1x8x8xbf16>
    %25 = vector.shape_cast %24 : vector<1x8x8xbf16> to vector<8x8xbf16>
    %cst_34 = arith.constant dense<0.000000e+00> : vector<256x8xf32>
    %26 = tpu.matmul %23, %25, %cst_34 {dimension_numbers = #tpu.dot_dimension_numbers<[1], [0], [0], [1], [0, 0, 1, 1], [], []>} : vector<256x8xbf16>, vector<8x8xbf16>, vector<256x8xf32> -> vector<256x8xf32>
    %27 = arith.addf %21, %26 : vector<256x8xf32>
    %c1_35 = arith.constant 1 : index
    %c7_36 = arith.constant 7 : index
    %c0_37 = arith.constant 0 : index
    %28 = vector.load %arg8[%c1_35, %c7_36, %c0_37] : memref<18x25x8xbf16, #tpu.memory_space<vmem>>, vector<16x16x8xbf16>
    %29 = vector.shape_cast %28 : vector<16x16x8xbf16> to vector<256x8xbf16>
    %c3 = arith.constant 3 : index
    %c0_38 = arith.constant 0 : index
    %c0_39 = arith.constant 0 : index
    %30 = vector.load %arg2[%c3, %c0_38, %c0_39] : memref<9x8x8xbf16, #tpu.memory_space<vmem>>, vector<1x8x8xbf16>
    %31 = vector.shape_cast %30 : vector<1x8x8xbf16> to vector<8x8xbf16>
    %cst_40 = arith.constant dense<0.000000e+00> : vector<256x8xf32>
    %32 = tpu.matmul %29, %31, %cst_40 {dimension_numbers = #tpu.dot_dimension_numbers<[1], [0], [0], [1], [0, 0, 1, 1], [], []>} : vector<256x8xbf16>, vector<8x8xbf16>, vector<256x8xf32> -> vector<256x8xf32>
    %33 = arith.addf %27, %32 : vector<256x8xf32>
    %c1_41 = arith.constant 1 : index
    %c8_42 = arith.constant 8 : index
    %c0_43 = arith.constant 0 : index
    %34 = vector.load %arg8[%c1_41, %c8_42, %c0_43] : memref<18x25x8xbf16, #tpu.memory_space<vmem>>, vector<16x16x8xbf16>
    %35 = vector.shape_cast %34 : vector<16x16x8xbf16> to vector<256x8xbf16>
    %c4 = arith.constant 4 : index
    %c0_44 = arith.constant 0 : index
    %c0_45 = arith.constant 0 : index
    %36 = vector.load %arg2[%c4, %c0_44, %c0_45] : memref<9x8x8xbf16, #tpu.memory_space<vmem>>, vector<1x8x8xbf16>
    %37 = vector.shape_cast %36 : vector<1x8x8xbf16> to vector<8x8xbf16>
    %cst_46 = arith.constant dense<0.000000e+00> : vector<256x8xf32>
    %38 = tpu.matmul %35, %37, %cst_46 {dimension_numbers = #tpu.dot_dimension_numbers<[1], [0], [0], [1], [0, 0, 1, 1], [], []>} : vector<256x8xbf16>, vector<8x8xbf16>, vector<256x8xf32> -> vector<256x8xf32>
    %39 = arith.addf %33, %38 : vector<256x8xf32>
    %c1_47 = arith.constant 1 : index
    %c9_48 = arith.constant 9 : index
    %c0_49 = arith.constant 0 : index
    %40 = vector.load %arg8[%c1_47, %c9_48, %c0_49] : memref<18x25x8xbf16, #tpu.memory_space<vmem>>, vector<16x16x8xbf16>
    %41 = vector.shape_cast %40 : vector<16x16x8xbf16> to vector<256x8xbf16>
    %c5 = arith.constant 5 : index
    %c0_50 = arith.constant 0 : index
    %c0_51 = arith.constant 0 : index
    %42 = vector.load %arg2[%c5, %c0_50, %c0_51] : memref<9x8x8xbf16, #tpu.memory_space<vmem>>, vector<1x8x8xbf16>
    %43 = vector.shape_cast %42 : vector<1x8x8xbf16> to vector<8x8xbf16>
    %cst_52 = arith.constant dense<0.000000e+00> : vector<256x8xf32>
    %44 = tpu.matmul %41, %43, %cst_52 {dimension_numbers = #tpu.dot_dimension_numbers<[1], [0], [0], [1], [0, 0, 1, 1], [], []>} : vector<256x8xbf16>, vector<8x8xbf16>, vector<256x8xf32> -> vector<256x8xf32>
    %45 = arith.addf %39, %44 : vector<256x8xf32>
    %c2_53 = arith.constant 2 : index
    %c7_54 = arith.constant 7 : index
    %c0_55 = arith.constant 0 : index
    %46 = vector.load %arg8[%c2_53, %c7_54, %c0_55] : memref<18x25x8xbf16, #tpu.memory_space<vmem>>, vector<16x16x8xbf16>
    %47 = vector.shape_cast %46 : vector<16x16x8xbf16> to vector<256x8xbf16>
    %c6 = arith.constant 6 : index
    %c0_56 = arith.constant 0 : index
    %c0_57 = arith.constant 0 : index
    %48 = vector.load %arg2[%c6, %c0_56, %c0_57] : memref<9x8x8xbf16, #tpu.memory_space<vmem>>, vector<1x8x8xbf16>
    %49 = vector.shape_cast %48 : vector<1x8x8xbf16> to vector<8x8xbf16>
    %cst_58 = arith.constant dense<0.000000e+00> : vector<256x8xf32>
    %50 = tpu.matmul %47, %49, %cst_58 {dimension_numbers = #tpu.dot_dimension_numbers<[1], [0], [0], [1], [0, 0, 1, 1], [], []>} : vector<256x8xbf16>, vector<8x8xbf16>, vector<256x8xf32> -> vector<256x8xf32>
    %51 = arith.addf %45, %50 : vector<256x8xf32>
    %c2_59 = arith.constant 2 : index
    %c8_60 = arith.constant 8 : index
    %c0_61 = arith.constant 0 : index
    %52 = vector.load %arg8[%c2_59, %c8_60, %c0_61] : memref<18x25x8xbf16, #tpu.memory_space<vmem>>, vector<16x16x8xbf16>
    %53 = vector.shape_cast %52 : vector<16x16x8xbf16> to vector<256x8xbf16>
    %c7_62 = arith.constant 7 : index
    %c0_63 = arith.constant 0 : index
    %c0_64 = arith.constant 0 : index
    %54 = vector.load %arg2[%c7_62, %c0_63, %c0_64] : memref<9x8x8xbf16, #tpu.memory_space<vmem>>, vector<1x8x8xbf16>
    %55 = vector.shape_cast %54 : vector<1x8x8xbf16> to vector<8x8xbf16>
    %cst_65 = arith.constant dense<0.000000e+00> : vector<256x8xf32>
    %56 = tpu.matmul %53, %55, %cst_65 {dimension_numbers = #tpu.dot_dimension_numbers<[1], [0], [0], [1], [0, 0, 1, 1], [], []>} : vector<256x8xbf16>, vector<8x8xbf16>, vector<256x8xf32> -> vector<256x8xf32>
    %57 = arith.addf %51, %56 : vector<256x8xf32>
    %c2_66 = arith.constant 2 : index
    %c9_67 = arith.constant 9 : index
    %c0_68 = arith.constant 0 : index
    %58 = vector.load %arg8[%c2_66, %c9_67, %c0_68] : memref<18x25x8xbf16, #tpu.memory_space<vmem>>, vector<16x16x8xbf16>
    %59 = vector.shape_cast %58 : vector<16x16x8xbf16> to vector<256x8xbf16>
    %c8_69 = arith.constant 8 : index
    %c0_70 = arith.constant 0 : index
    %c0_71 = arith.constant 0 : index
    %60 = vector.load %arg2[%c8_69, %c0_70, %c0_71] : memref<9x8x8xbf16, #tpu.memory_space<vmem>>, vector<1x8x8xbf16>
    %61 = vector.shape_cast %60 : vector<1x8x8xbf16> to vector<8x8xbf16>
    %cst_72 = arith.constant dense<0.000000e+00> : vector<256x8xf32>
    %62 = tpu.matmul %59, %61, %cst_72 {dimension_numbers = #tpu.dot_dimension_numbers<[1], [0], [0], [1], [0, 0, 1, 1], [], []>} : vector<256x8xbf16>, vector<8x8xbf16>, vector<256x8xf32> -> vector<256x8xf32>
    %63 = arith.addf %57, %62 : vector<256x8xf32>
    %c0_73 = arith.constant 0 : index
    %c0_74 = arith.constant 0 : index
    %64 = vector.load %arg3[%c0_73, %c0_74] : memref<1x8xf32, #tpu.memory_space<vmem>>, vector<1x8xf32>
    %65 = vector.broadcast %64 : vector<1x8xf32> to vector<256x8xf32>
    %66 = arith.addf %63, %65 : vector<256x8xf32>
    %cst_75 = arith.constant 0.000000e+00 : f32
    %67 = vector.broadcast %cst_75 : f32 to vector<256x8xf32>
    %68 = arith.maximumf %66, %67 : vector<256x8xf32>
    %cst_76 = arith.constant 0.000000e+00 : bf16
    %69 = vector.broadcast %cst_76 : bf16 to vector<1x25x8xbf16>
    %c0_77 = arith.constant 0 : index
    %c0_78 = arith.constant 0 : index
    %c0_79 = arith.constant 0 : index
    %70 = vector.load %arg9[%c0_77, %c0_78, %c0_79] : memref<18x25x8xbf16, #tpu.memory_space<vmem>>, vector<1x25x8xbf16>
    tpu.vector_store %arg9[%c0_77, %c0_78, %c0_79], %69 {strides = array<i32>} : memref<18x25x8xbf16, #tpu.memory_space<vmem>>, vector<1x25x8xbf16>,
    %cst_80 = arith.constant 0.000000e+00 : bf16
    %71 = vector.broadcast %cst_80 : bf16 to vector<1x25x8xbf16>
    %c17_81 = arith.constant 17 : index
    %c0_82 = arith.constant 0 : index
    %c0_83 = arith.constant 0 : index
    %72 = vector.load %arg9[%c17_81, %c0_82, %c0_83] : memref<18x25x8xbf16, #tpu.memory_space<vmem>>, vector<1x25x8xbf16>
    tpu.vector_store %arg9[%c17_81, %c0_82, %c0_83], %71 {strides = array<i32>} : memref<18x25x8xbf16, #tpu.memory_space<vmem>>, vector<1x25x8xbf16>,
    %cst_84 = arith.constant 0.000000e+00 : bf16
    %73 = vector.broadcast %cst_84 : bf16 to vector<16x1x8xbf16>
    %c1_85 = arith.constant 1 : index
    %c7_86 = arith.constant 7 : index
    %c0_87 = arith.constant 0 : index
    %74 = vector.load %arg9[%c1_85, %c7_86, %c0_87] : memref<18x25x8xbf16, #tpu.memory_space<vmem>>, vector<16x1x8xbf16>
    tpu.vector_store %arg9[%c1_85, %c7_86, %c0_87], %73 {strides = array<i32>} : memref<18x25x8xbf16, #tpu.memory_space<vmem>>, vector<16x1x8xbf16>,
    %cst_88 = arith.constant 0.000000e+00 : bf16
    %75 = vector.broadcast %cst_88 : bf16 to vector<16x1x8xbf16>
    %c1_89 = arith.constant 1 : index
    %c24_90 = arith.constant 24 : index
    %c0_91 = arith.constant 0 : index
    %76 = vector.load %arg9[%c1_89, %c24_90, %c0_91] : memref<18x25x8xbf16, #tpu.memory_space<vmem>>, vector<16x1x8xbf16>
    tpu.vector_store %arg9[%c1_89, %c24_90, %c0_91], %75 {strides = array<i32>} : memref<18x25x8xbf16, #tpu.memory_space<vmem>>, vector<16x1x8xbf16>,
    %77 = vector.shape_cast %68 : vector<256x8xf32> to vector<16x16x8xf32>
    %78 = arith.truncf %77 : vector<16x16x8xf32> to vector<16x16x8xbf16>
    %c1_92 = arith.constant 1 : index
    %c8_93 = arith.constant 8 : index
    %c0_94 = arith.constant 0 : index
    %79 = vector.load %arg9[%c1_92, %c8_93, %c0_94] : memref<18x25x8xbf16, #tpu.memory_space<vmem>>, vector<16x16x8xbf16>
    tpu.vector_store %arg9[%c1_92, %c8_93, %c0_94], %78 {strides = array<i32>} : memref<18x25x8xbf16, #tpu.memory_space<vmem>>, vector<16x16x8xbf16>,
    %c0_95 = arith.constant 0 : index
    %c7_96 = arith.constant 7 : index
    %c0_97 = arith.constant 0 : index
    %80 = vector.load %arg9[%c0_95, %c7_96, %c0_97] : memref<18x25x8xbf16, #tpu.memory_space<vmem>>, vector<16x16x8xbf16>
    %81 = vector.shape_cast %80 : vector<16x16x8xbf16> to vector<256x8xbf16>
    %c0_98 = arith.constant 0 : index
    %c0_99 = arith.constant 0 : index
    %c0_100 = arith.constant 0 : index
    %c0_101 = arith.constant 0 : index
    %82 = vector.load %arg4[%c0_98, %c0_99, %c0_100, %c0_101] : memref<1x9x8x8xbf16, #tpu.memory_space<vmem>>, vector<1x1x8x8xbf16>
    %83 = vector.shape_cast %82 : vector<1x1x8x8xbf16> to vector<8x8xbf16>
    %cst_102 = arith.constant dense<0.000000e+00> : vector<256x8xf32>
    %84 = tpu.matmul %81, %83, %cst_102 {dimension_numbers = #tpu.dot_dimension_numbers<[1], [0], [0], [1], [0, 0, 1, 1], [], []>} : vector<256x8xbf16>, vector<8x8xbf16>, vector<256x8xf32> -> vector<256x8xf32>
    %c0_103 = arith.constant 0 : index
    %c8_104 = arith.constant 8 : index
    %c0_105 = arith.constant 0 : index
    %85 = vector.load %arg9[%c0_103, %c8_104, %c0_105] : memref<18x25x8xbf16, #tpu.memory_space<vmem>>, vector<16x16x8xbf16>
    %86 = vector.shape_cast %85 : vector<16x16x8xbf16> to vector<256x8xbf16>
    %c0_106 = arith.constant 0 : index
    %c1_107 = arith.constant 1 : index
    %c0_108 = arith.constant 0 : index
    %c0_109 = arith.constant 0 : index
    %87 = vector.load %arg4[%c0_106, %c1_107, %c0_108, %c0_109] : memref<1x9x8x8xbf16, #tpu.memory_space<vmem>>, vector<1x1x8x8xbf16>
    %88 = vector.shape_cast %87 : vector<1x1x8x8xbf16> to vector<8x8xbf16>
    %cst_110 = arith.constant dense<0.000000e+00> : vector<256x8xf32>
    %89 = tpu.matmul %86, %88, %cst_110 {dimension_numbers = #tpu.dot_dimension_numbers<[1], [0], [0], [1], [0, 0, 1, 1], [], []>} : vector<256x8xbf16>, vector<8x8xbf16>, vector<256x8xf32> -> vector<256x8xf32>
    %90 = arith.addf %84, %89 : vector<256x8xf32>
    %c0_111 = arith.constant 0 : index
    %c9_112 = arith.constant 9 : index
    %c0_113 = arith.constant 0 : index
    %91 = vector.load %arg9[%c0_111, %c9_112, %c0_113] : memref<18x25x8xbf16, #tpu.memory_space<vmem>>, vector<16x16x8xbf16>
    %92 = vector.shape_cast %91 : vector<16x16x8xbf16> to vector<256x8xbf16>
    %c0_114 = arith.constant 0 : index
    %c2_115 = arith.constant 2 : index
    %c0_116 = arith.constant 0 : index
    %c0_117 = arith.constant 0 : index
    %93 = vector.load %arg4[%c0_114, %c2_115, %c0_116, %c0_117] : memref<1x9x8x8xbf16, #tpu.memory_space<vmem>>, vector<1x1x8x8xbf16>
    %94 = vector.shape_cast %93 : vector<1x1x8x8xbf16> to vector<8x8xbf16>
    %cst_118 = arith.constant dense<0.000000e+00> : vector<256x8xf32>
    %95 = tpu.matmul %92, %94, %cst_118 {dimension_numbers = #tpu.dot_dimension_numbers<[1], [0], [0], [1], [0, 0, 1, 1], [], []>} : vector<256x8xbf16>, vector<8x8xbf16>, vector<256x8xf32> -> vector<256x8xf32>
    %96 = arith.addf %90, %95 : vector<256x8xf32>
    %c1_119 = arith.constant 1 : index
    %c7_120 = arith.constant 7 : index
    %c0_121 = arith.constant 0 : index
    %97 = vector.load %arg9[%c1_119, %c7_120, %c0_121] : memref<18x25x8xbf16, #tpu.memory_space<vmem>>, vector<16x16x8xbf16>
    %98 = vector.shape_cast %97 : vector<16x16x8xbf16> to vector<256x8xbf16>
    %c0_122 = arith.constant 0 : index
    %c3_123 = arith.constant 3 : index
    %c0_124 = arith.constant 0 : index
    %c0_125 = arith.constant 0 : index
    %99 = vector.load %arg4[%c0_122, %c3_123, %c0_124, %c0_125] : memref<1x9x8x8xbf16, #tpu.memory_space<vmem>>, vector<1x1x8x8xbf16>
    %100 = vector.shape_cast %99 : vector<1x1x8x8xbf16> to vector<8x8xbf16>
    %cst_126 = arith.constant dense<0.000000e+00> : vector<256x8xf32>
    %101 = tpu.matmul %98, %100, %cst_126 {dimension_numbers = #tpu.dot_dimension_numbers<[1], [0], [0], [1], [0, 0, 1, 1], [], []>} : vector<256x8xbf16>, vector<8x8xbf16>, vector<256x8xf32> -> vector<256x8xf32>
    %102 = arith.addf %96, %101 : vector<256x8xf32>
    %c1_127 = arith.constant 1 : index
    %c8_128 = arith.constant 8 : index
    %c0_129 = arith.constant 0 : index
    %103 = vector.load %arg9[%c1_127, %c8_128, %c0_129] : memref<18x25x8xbf16, #tpu.memory_space<vmem>>, vector<16x16x8xbf16>
    %104 = vector.shape_cast %103 : vector<16x16x8xbf16> to vector<256x8xbf16>
    %c0_130 = arith.constant 0 : index
    %c4_131 = arith.constant 4 : index
    %c0_132 = arith.constant 0 : index
    %c0_133 = arith.constant 0 : index
    %105 = vector.load %arg4[%c0_130, %c4_131, %c0_132, %c0_133] : memref<1x9x8x8xbf16, #tpu.memory_space<vmem>>, vector<1x1x8x8xbf16>
    %106 = vector.shape_cast %105 : vector<1x1x8x8xbf16> to vector<8x8xbf16>
    %cst_134 = arith.constant dense<0.000000e+00> : vector<256x8xf32>
    %107 = tpu.matmul %104, %106, %cst_134 {dimension_numbers = #tpu.dot_dimension_numbers<[1], [0], [0], [1], [0, 0, 1, 1], [], []>} : vector<256x8xbf16>, vector<8x8xbf16>, vector<256x8xf32> -> vector<256x8xf32>
    %108 = arith.addf %102, %107 : vector<256x8xf32>
    %c1_135 = arith.constant 1 : index
    %c9_136 = arith.constant 9 : index
    %c0_137 = arith.constant 0 : index
    %109 = vector.load %arg9[%c1_135, %c9_136, %c0_137] : memref<18x25x8xbf16, #tpu.memory_space<vmem>>, vector<16x16x8xbf16>
    %110 = vector.shape_cast %109 : vector<16x16x8xbf16> to vector<256x8xbf16>
    %c0_138 = arith.constant 0 : index
    %c5_139 = arith.constant 5 : index
    %c0_140 = arith.constant 0 : index
    %c0_141 = arith.constant 0 : index
    %111 = vector.load %arg4[%c0_138, %c5_139, %c0_140, %c0_141] : memref<1x9x8x8xbf16, #tpu.memory_space<vmem>>, vector<1x1x8x8xbf16>
    %112 = vector.shape_cast %111 : vector<1x1x8x8xbf16> to vector<8x8xbf16>
    %cst_142 = arith.constant dense<0.000000e+00> : vector<256x8xf32>
    %113 = tpu.matmul %110, %112, %cst_142 {dimension_numbers = #tpu.dot_dimension_numbers<[1], [0], [0], [1], [0, 0, 1, 1], [], []>} : vector<256x8xbf16>, vector<8x8xbf16>, vector<256x8xf32> -> vector<256x8xf32>
    %114 = arith.addf %108, %113 : vector<256x8xf32>
    %c2_143 = arith.constant 2 : index
    %c7_144 = arith.constant 7 : index
    %c0_145 = arith.constant 0 : index
    %115 = vector.load %arg9[%c2_143, %c7_144, %c0_145] : memref<18x25x8xbf16, #tpu.memory_space<vmem>>, vector<16x16x8xbf16>
    %116 = vector.shape_cast %115 : vector<16x16x8xbf16> to vector<256x8xbf16>
    %c0_146 = arith.constant 0 : index
    %c6_147 = arith.constant 6 : index
    %c0_148 = arith.constant 0 : index
    %c0_149 = arith.constant 0 : index
    %117 = vector.load %arg4[%c0_146, %c6_147, %c0_148, %c0_149] : memref<1x9x8x8xbf16, #tpu.memory_space<vmem>>, vector<1x1x8x8xbf16>
    %118 = vector.shape_cast %117 : vector<1x1x8x8xbf16> to vector<8x8xbf16>
    %cst_150 = arith.constant dense<0.000000e+00> : vector<256x8xf32>
    %119 = tpu.matmul %116, %118, %cst_150 {dimension_numbers = #tpu.dot_dimension_numbers<[1], [0], [0], [1], [0, 0, 1, 1], [], []>} : vector<256x8xbf16>, vector<8x8xbf16>, vector<256x8xf32> -> vector<256x8xf32>
    %120 = arith.addf %114, %119 : vector<256x8xf32>
    %c2_151 = arith.constant 2 : index
    %c8_152 = arith.constant 8 : index
    %c0_153 = arith.constant 0 : index
    %121 = vector.load %arg9[%c2_151, %c8_152, %c0_153] : memref<18x25x8xbf16, #tpu.memory_space<vmem>>, vector<16x16x8xbf16>
    %122 = vector.shape_cast %121 : vector<16x16x8xbf16> to vector<256x8xbf16>
    %c0_154 = arith.constant 0 : index
    %c7_155 = arith.constant 7 : index
    %c0_156 = arith.constant 0 : index
    %c0_157 = arith.constant 0 : index
    %123 = vector.load %arg4[%c0_154, %c7_155, %c0_156, %c0_157] : memref<1x9x8x8xbf16, #tpu.memory_space<vmem>>, vector<1x1x8x8xbf16>
    %124 = vector.shape_cast %123 : vector<1x1x8x8xbf16> to vector<8x8xbf16>
    %cst_158 = arith.constant dense<0.000000e+00> : vector<256x8xf32>
    %125 = tpu.matmul %122, %124, %cst_158 {dimension_numbers = #tpu.dot_dimension_numbers<[1], [0], [0], [1], [0, 0, 1, 1], [], []>} : vector<256x8xbf16>, vector<8x8xbf16>, vector<256x8xf32> -> vector<256x8xf32>
    %126 = arith.addf %120, %125 : vector<256x8xf32>
    %c2_159 = arith.constant 2 : index
    %c9_160 = arith.constant 9 : index
    %c0_161 = arith.constant 0 : index
    %127 = vector.load %arg9[%c2_159, %c9_160, %c0_161] : memref<18x25x8xbf16, #tpu.memory_space<vmem>>, vector<16x16x8xbf16>
    %128 = vector.shape_cast %127 : vector<16x16x8xbf16> to vector<256x8xbf16>
    %c0_162 = arith.constant 0 : index
    %c8_163 = arith.constant 8 : index
    %c0_164 = arith.constant 0 : index
    %c0_165 = arith.constant 0 : index
    %129 = vector.load %arg4[%c0_162, %c8_163, %c0_164, %c0_165] : memref<1x9x8x8xbf16, #tpu.memory_space<vmem>>, vector<1x1x8x8xbf16>
    %130 = vector.shape_cast %129 : vector<1x1x8x8xbf16> to vector<8x8xbf16>
    %cst_166 = arith.constant dense<0.000000e+00> : vector<256x8xf32>
    %131 = tpu.matmul %128, %130, %cst_166 {dimension_numbers = #tpu.dot_dimension_numbers<[1], [0], [0], [1], [0, 0, 1, 1], [], []>} : vector<256x8xbf16>, vector<8x8xbf16>, vector<256x8xf32> -> vector<256x8xf32>
    %132 = arith.addf %126, %131 : vector<256x8xf32>
    %c0_167 = arith.constant 0 : index
    %c0_168 = arith.constant 0 : index
    %c0_169 = arith.constant 0 : index
    %133 = vector.load %arg5[%c0_167, %c0_168, %c0_169] : memref<1x1x8xf32, #tpu.memory_space<vmem>>, vector<1x1x8xf32>
    %134 = vector.shape_cast %133 : vector<1x1x8xf32> to vector<1x8xf32>
    %135 = vector.broadcast %134 : vector<1x8xf32> to vector<256x8xf32>
    %136 = arith.addf %132, %135 : vector<256x8xf32>
    %137 = arith.addf %136, %68 : vector<256x8xf32>
    %cst_170 = arith.constant 0.000000e+00 : f32
    %138 = vector.broadcast %cst_170 : f32 to vector<256x8xf32>
    %139 = arith.maximumf %137, %138 : vector<256x8xf32>
    %140 = vector.shape_cast %139 : vector<256x8xf32> to vector<16x16x8xf32>
    %141 = arith.truncf %140 : vector<16x16x8xf32> to vector<16x16x8xbf16>
    %c0_171 = arith.constant 0 : index
    %c0_172 = arith.constant 0 : index
    %c0_173 = arith.constant 0 : index
    %c0_174 = arith.constant 0 : index
    %142 = vector.load %arg6[%c0_171, %c0_172, %c0_173, %c0_174] : memref<1x16x16x8xbf16, #tpu.memory_space<vmem>>, vector<1x16x16x8xbf16>
    %143 = vector.shape_cast %142 : vector<1x16x16x8xbf16> to vector<16x16x8xbf16>
    %144 = vector.shape_cast %141 : vector<16x16x8xbf16> to vector<1x16x16x8xbf16>
    tpu.vector_store %arg6[%c0_171, %c0_172, %c0_173, %c0_174], %144 {strides = array<i32>} : memref<1x16x16x8xbf16, #tpu.memory_space<vmem>>, vector<1x16x16x8xbf16>,
    %145 = vector.shape_cast %139 : vector<256x8xf32> to vector<8x32x8xf32>
    %146 = vector.extract_strided_slice %145 {offsets = [0, 0, 0], sizes = [8, 16, 8], strides = [1, 1, 1]} : vector<8x32x8xf32> to vector<8x16x8xf32>
    %147 = vector.extract_strided_slice %145 {offsets = [0, 16, 0], sizes = [8, 16, 8], strides = [1, 1, 1]} : vector<8x32x8xf32> to vector<8x16x8xf32>
    %148 = arith.maximumf %146, %147 : vector<8x16x8xf32>
    %c0_175 = arith.constant 0 : index
    %c0_176 = arith.constant 0 : index
    %c0_177 = arith.constant 0 : index
    %149 = vector.load %arg10[%c0_175, %c0_176, %c0_177] : memref<8x16x8xf32, #tpu.memory_space<vmem>>, vector<8x16x8xf32>
    tpu.vector_store %arg10[%c0_175, %c0_176, %c0_177], %148 {strides = array<i32>} : memref<8x16x8xf32, #tpu.memory_space<vmem>>, vector<8x16x8xf32>,
    %c0_178 = arith.constant 0 : index
    %c0_179 = arith.constant 0 : index
    %c0_180 = arith.constant 0 : index
    %150 = tpu.strided_load %arg10[%c0_178, %c0_179, %c0_180] {strides = array<i32: 1, 2, 1>} : memref<8x16x8xf32, #tpu.memory_space<vmem>>, vector<8x8x8xf32>
    %c0_181 = arith.constant 0 : index
    %c1_182 = arith.constant 1 : index
    %c0_183 = arith.constant 0 : index
    %151 = tpu.strided_load %arg10[%c0_181, %c1_182, %c0_183] {strides = array<i32: 1, 2, 1>} : memref<8x16x8xf32, #tpu.memory_space<vmem>>, vector<8x8x8xf32>
    %152 = arith.maximumf %150, %151 : vector<8x8x8xf32>
    %153 = arith.truncf %152 : vector<8x8x8xf32> to vector<8x8x8xbf16>
    %c0_184 = arith.constant 0 : index
    %c0_185 = arith.constant 0 : index
    %c0_186 = arith.constant 0 : index
    %c0_187 = arith.constant 0 : index
    %154 = vector.load %arg7[%c0_184, %c0_185, %c0_186, %c0_187] : memref<1x8x8x8xbf16, #tpu.memory_space<vmem>>, vector<1x8x8x8xbf16>
    %155 = vector.shape_cast %154 : vector<1x8x8x8xbf16> to vector<8x8x8xbf16>
    %156 = vector.shape_cast %153 : vector<8x8x8xbf16> to vector<1x8x8x8xbf16>
    tpu.vector_store %arg7[%c0_184, %c0_185, %c0_186, %c0_187], %156 {strides = array<i32>} : memref<1x8x8x8xbf16, #tpu.memory_space<vmem>>, vector<1x8x8x8xbf16>,
    return
  }
  func.func @transform_0(%arg0: i32) -> (i32, i32, i32, i32) {
    %c0_i32 = arith.constant 0 : i32
    %c0_i32_0 = arith.constant 0 : i32
    %c0_i32_1 = arith.constant 0 : i32
    %c0_i32_2 = arith.constant 0 : i32
    return %arg0, %c0_i32, %c0_i32_0, %c0_i32_1 : i32, i32, i32, i32
  }
  func.func @transform_1(%arg0: i32) -> (i32, i32, i32) {
    %c0_i32 = arith.constant 0 : i32
    %c0_i32_0 = arith.constant 0 : i32
    %c0_i32_1 = arith.constant 0 : i32
    %c0_i32_2 = arith.constant 0 : i32
    return %c0_i32, %c0_i32_0, %c0_i32_1 : i32, i32, i32
  }
  func.func @transform_2(%arg0: i32) -> (i32, i32) {
    %c0_i32 = arith.constant 0 : i32
    %c0_i32_0 = arith.constant 0 : i32
    %c0_i32_1 = arith.constant 0 : i32
    return %c0_i32, %c0_i32_0 : i32, i32
  }
  func.func @transform_3(%arg0: i32) -> (i32, i32, i32, i32) {
    %c0_i32 = arith.constant 0 : i32
    %c0_i32_0 = arith.constant 0 : i32
    %c0_i32_1 = arith.constant 0 : i32
    %c0_i32_2 = arith.constant 0 : i32
    %c0_i32_3 = arith.constant 0 : i32
    return %c0_i32, %c0_i32_0, %c0_i32_1, %c0_i32_2 : i32, i32, i32, i32
  }
  func.func @transform_4(%arg0: i32) -> (i32, i32, i32) {
    %c0_i32 = arith.constant 0 : i32
    %c0_i32_0 = arith.constant 0 : i32
    %c0_i32_1 = arith.constant 0 : i32
    %c0_i32_2 = arith.constant 0 : i32
    return %c0_i32, %c0_i32_0, %c0_i32_1 : i32, i32, i32
  }
  func.func @transform_5(%arg0: i32) -> (i32, i32, i32, i32) {
    %c0_i32 = arith.constant 0 : i32
    %c0_i32_0 = arith.constant 0 : i32
    %c0_i32_1 = arith.constant 0 : i32
    %c0_i32_2 = arith.constant 0 : i32
    return %arg0, %c0_i32, %c0_i32_0, %c0_i32_1 : i32, i32, i32, i32
  }
  func.func @transform_6(%arg0: i32) -> (i32, i32, i32, i32) {
    %c0_i32 = arith.constant 0 : i32
    %c0_i32_0 = arith.constant 0 : i32
    %c0_i32_1 = arith.constant 0 : i32
    %c0_i32_2 = arith.constant 0 : i32
    return %arg0, %c0_i32, %c0_i32_0, %c0_i32_1 : i32, i32, i32, i32
  }
}

</mosaic_0001>

<llo_original>
// kernel: tpu_custom_call.1
$region0: #{tpu_custom_call.1}
  #allocation0 [shape = 'u32[]', space=smem, size = 0x4, offset = 0x4, fixed_abs, tag = 'smem constant byte address 0x4 - core index']
  #allocation1 [shape = 'u32[144,128]{1,0:T(1,128)}', space=vmem, size = 0x12000, scoped, tag = 'internal scratch']
  #allocation2 [shape = 'bf16[18,25,8]{2,1,0:T(8,128)(2,1)}', space=vmem, size = 0x24000, scoped, tag = 'scratch operand']
  #allocation3 [shape = 'bf16[18,25,8]{2,1,0:T(8,128)(2,1)}', space=vmem, size = 0x24000, scoped, tag = 'scratch operand']
  #allocation4 [shape = 'f32[8,16,8]{2,1,0:T(8,128)}', space=vmem, size = 0x10000, scoped, tag = 'scratch operand']
  %s0 = inlined_call_operand.hbm [shape: bf16[2,16,16,8], index: 0, kind: input, shape index: {}]
  %s1 = inlined_call_operand.hbm [shape: bf16[9,8,8], index: 1, kind: input, shape index: {}]
  %s2 = inlined_call_operand.hbm [shape: f32[1,8], index: 2, kind: input, shape index: {}]
  %s3 = inlined_call_operand.hbm [shape: bf16[1,9,8,8], index: 3, kind: input, shape index: {}]
  %s4 = inlined_call_operand.hbm [shape: f32[1,1,8], index: 4, kind: input, shape index: {}]
  %s5 = inlined_call_operand.hbm [shape: bf16[2,16,16,8], index: 5, kind: output, shape index: {0}]
  %s6 = inlined_call_operand.hbm [shape: bf16[2,8,8,8], index: 6, kind: output, shape index: {1}]
  %7 = xla_tuple %s5, %s6
  %s8 = sld [smem:[#allocation0]]
  $region81: #{tpu_custom_call.1} parent=0
    _
  %s10 = ssub.s32 1, %s8
  %s11 = scalar_select 0, %s10, %s8
  $region1: #{tpu_custom_call.1} parent=0
    #allocation5 [shape = 'u8[131072]{0}', space=vmem, size = 0x20000, scoped, tag = 'input window, operand 0']
    #allocation6 [shape = 's32[2]{0}', space=sflag, size = 0x8, scoped, tag = 'scoped memory for tpu_custom_call.1']
    #allocation7 [shape = 's32[2]{0}', space=sflag, size = 0x8, scoped, tag = 'scoped memory for tpu_custom_call.1']
    #allocation8 [shape = 'u8[18432]{0}', space=vmem, size = 0x4800, scoped, tag = 'input window, operand 1, single buffered']
    #allocation9 [shape = 's32[1]{0}', space=sflag, size = 0x4, scoped, tag = 'scoped memory for tpu_custom_call.1']
    #allocation10 [shape = 'u8[512]{0}', space=vmem, size = 0x400, scoped, tag = 'input window, operand 2, single buffered']
    #allocation11 [shape = 'u8[18432]{0}', space=vmem, size = 0x4800, scoped, tag = 'input window, operand 3, single buffered']
    #allocation12 [shape = 's32[1]{0}', space=sflag, size = 0x4, scoped, tag = 'scoped memory for tpu_custom_call.1']
    #allocation13 [shape = 'u8[512]{0}', space=vmem, size = 0x400, scoped, tag = 'input window, operand 4, single buffered']
    #allocation14 [shape = 'u8[131072]{0}', space=vmem, size = 0x20000, scoped, tag = 'output window, operand 0']
    #allocation15 [shape = 'u8[32768]{0}', space=vmem, size = 0x8000, scoped, tag = 'output window, operand 1']
    #allocation16 [shape = 's32[2]{0}', space=sflag, size = 0x8, scoped, tag = 'scoped memory for tpu_custom_call.1']
    %12 = vsyncpa [#allocation6], 0
    %s13 = scalar_lea.sflag [#allocation6], 1
    %14 = vsyncpa %s13, 0
    %15 = vsyncpa [#allocation9], 0
    %16 = vsyncpa [#allocation12], 0
    %17 = vsyncpa [#allocation7], 0
    %s18 = scalar_lea.sflag [#allocation7], 1
    %19 = vsyncpa %s18, 0
    %20 = vsyncpa [#allocation16], 0
    %s21 = scalar_lea.sflag [#allocation16], 1
    %22 = vsyncpa %s21, 0
    loop: start=0, step=1, limit=4
    $region2: #{tpu_custom_call.1} parent=1 // loop_pre_header
      _
    $region3: #{tpu_custom_call.1} parent=1 // loop_header
      %s24 = sphi 0, %s28
      %p25 = scmp.ge.s32.totalorder %s24, 4
      %s34 = sphi 0, %s36
      %s37 = sphi 0, %s34
      %s38 = sphi 0, %s37
      %s54 = sphi 0, %s38
      %s58 = sphi 0, %s58
      %s60 = sphi 0, %s58
      %s61 = sphi 0, %s60
      %s75 = sphi 0, %s61
      %s79 = sphi 0, %s79
      %s81 = sphi 0, %s79
      %s82 = sphi 0, %s81
      %s96 = sphi 0, %s82
      %s100 = sphi 0, %s100
      %s102 = sphi 0, %s100
      %s103 = sphi 0, %s102
      %s117 = sphi 0, %s103
      %s121 = sphi 0, %s121
      %s123 = sphi 0, %s121
      %s124 = sphi 0, %s123
      %s138 = sphi 0, %s124
      %s144 = sphi 0, %s146
      %s147 = sphi 0, %s144
      %s148 = sphi 0, %s147
      %s164 = sphi 0, %s148
      %s170 = sphi 0, %s172
      %s173 = sphi 0, %s170
      %s174 = sphi 0, %s173
      %s190 = sphi 0, %s174
    $region4: #{tpu_custom_call.1} parent=1 // loop_header_branch
      %27 = sbr.rel (%p25) target = $region8
    $region5: #{tpu_custom_call.1} parent=1 // loop_body
      %s29 = ssub.s32 %s24, 1
      %s30 = ssub.s32 %s24, 2
      %s31 = sadd.s32 %s24, 1
      %s32 = ssub.s32 %s24, %s31
      %p33 = scmp.eq.s32.totalorder %s32, 0
      %s35 = sadd.s32 %s34, 1
      %s36 = scalar_select %p33, %s34, %s35
      %p39 = pneg %p33
      %p40 = scmp.eq.s32.totalorder %s24, 1
      %p41 = por %p39, %p40
      %p42 = scmp.ne.s32.totalorder %s34, %s37
      %p43 = scmp.eq.s32.totalorder %s24, 0
      %p44 = por %p42, %p43
      %p45 = scmp.ne.s32.totalorder %s34, %s37
      %p46 = scmp.eq.s32.totalorder %s29, 1
      %p47 = por %p45, %p46
      %p48 = scmp.ne.s32.totalorder %s37, %s38
      %p49 = scmp.eq.s32.totalorder %s29, 0
      %p50 = por %p48, %p49
      %p51 = scmp.ne.s32.totalorder %s37, %s38
      %p52 = scmp.eq.s32.totalorder %s30, 1
      %p53 = por %p51, %p52
      %p55 = scmp.ne.s32.totalorder %s38, %s54
      %p56 = scmp.eq.s32.totalorder %s30, 0
      %p57 = por %p55, %p56
      %s59 = sadd.s32 %s58, 1
      %p62 = scmp.eq.s32.totalorder %s24, 1
      %p63 = scmp.ne.s32.totalorder %s58, %s60
      %p64 = scmp.eq.s32.totalorder %s24, 0
      %p65 = por %p63, %p64
      %p66 = scmp.ne.s32.totalorder %s58, %s60
      %p67 = scmp.eq.s32.totalorder %s29, 1
      %p68 = por %p66, %p67
      %p69 = scmp.ne.s32.totalorder %s60, %s61
      %p70 = scmp.eq.s32.totalorder %s29, 0
      %p71 = por %p69, %p70
      %p72 = scmp.ne.s32.totalorder %s60, %s61
      %p73 = scmp.eq.s32.totalorder %s30, 1
      %p74 = por %p72, %p73
      %p76 = scmp.ne.s32.totalorder %s61, %s75
      %p77 = scmp.eq.s32.totalorder %s30, 0
      %p78 = por %p76, %p77
      %s80 = sadd.s32 %s79, 1
      %p83 = scmp.eq.s32.totalorder %s24, 1
      %p84 = scmp.ne.s32.totalorder %s79, %s81
      %p85 = scmp.eq.s32.totalorder %s24, 0
      %p86 = por %p84, %p85
      %p87 = scmp.ne.s32.totalorder %s79, %s81
      %p88 = scmp.eq.s32.totalorder %s29, 1
      %p89 = por %p87, %p88
      %p90 = scmp.ne.s32.totalorder %s81, %s82
      %p91 = scmp.eq.s32.totalorder %s29, 0
      %p92 = por %p90, %p91
      %p93 = scmp.ne.s32.totalorder %s81, %s82
      %p94 = scmp.eq.s32.totalorder %s30, 1
      %p95 = por %p93, %p94
      %p97 = scmp.ne.s32.totalorder %s82, %s96
      %p98 = scmp.eq.s32.totalorder %s30, 0
      %p99 = por %p97, %p98
      %s101 = sadd.s32 %s100, 1
      %p104 = scmp.eq.s32.totalorder %s24, 1
      %p105 = scmp.ne.s32.totalorder %s100, %s102
      %p106 = scmp.eq.s32.totalorder %s24, 0
      %p107 = por %p105, %p106
      %p108 = scmp.ne.s32.totalorder %s100, %s102
      %p109 = scmp.eq.s32.totalorder %s29, 1
      %p110 = por %p108, %p109
      %p111 = scmp.ne.s32.totalorder %s102, %s103
      %p112 = scmp.eq.s32.totalorder %s29, 0
      %p113 = por %p111, %p112
      %p114 = scmp.ne.s32.totalorder %s102, %s103
      %p115 = scmp.eq.s32.totalorder %s30, 1
      %p116 = por %p114, %p115
      %p118 = scmp.ne.s32.totalorder %s103, %s117
      %p119 = scmp.eq.s32.totalorder %s30, 0
      %p120 = por %p118, %p119
      %s122 = sadd.s32 %s121, 1
      %p125 = scmp.eq.s32.totalorder %s24, 1
      %p126 = scmp.ne.s32.totalorder %s121, %s123
      %p127 = scmp.eq.s32.totalorder %s24, 0
      %p128 = por %p126, %p127
      %p129 = scmp.ne.s32.totalorder %s121, %s123
      %p130 = scmp.eq.s32.totalorder %s29, 1
      %p131 = por %p129, %p130
      %p132 = scmp.ne.s32.totalorder %s123, %s124
      %p133 = scmp.eq.s32.totalorder %s29, 0
      %p134 = por %p132, %p133
      %p135 = scmp.ne.s32.totalorder %s123, %s124
      %p136 = scmp.eq.s32.totalorder %s30, 1
      %p137 = por %p135, %p136
      %p139 = scmp.ne.s32.totalorder %s124, %s138
      %p140 = scmp.eq.s32.totalorder %s30, 0
      %p141 = por %p139, %p140
      %s142 = ssub.s32 %s24, %s31
      %p143 = scmp.eq.s32.totalorder %s142, 0
      %s145 = sadd.s32 %s144, 1
      %s146 = scalar_select %p143, %s144, %s145
      %p149 = pneg %p143
      %p150 = scmp.eq.s32.totalorder %s24, 1
      %p151 = por %p149, %p150
      %p152 = scmp.ne.s32.totalorder %s144, %s147
      %p153 = scmp.eq.s32.totalorder %s24, 0
      %p154 = por %p152, %p153
      %p155 = scmp.ne.s32.totalorder %s144, %s147
      %p156 = scmp.eq.s32.totalorder %s29, 1
      %p157 = por %p155, %p156
      %p158 = scmp.ne.s32.totalorder %s147, %s148
      %p159 = scmp.eq.s32.totalorder %s29, 0
      %p160 = por %p158, %p159
      %p161 = scmp.ne.s32.totalorder %s147, %s148
      %p162 = scmp.eq.s32.totalorder %s30, 1
      %p163 = por %p161, %p162
      %p165 = scmp.ne.s32.totalorder %s148, %s164
      %p166 = scmp.eq.s32.totalorder %s30, 0
      %p167 = por %p165, %p166
      %s168 = ssub.s32 %s24, %s31
      %p169 = scmp.eq.s32.totalorder %s168, 0
      %s171 = sadd.s32 %s170, 1
      %s172 = scalar_select %p169, %s170, %s171
      %p175 = pneg %p169
      %p176 = scmp.eq.s32.totalorder %s24, 1
      %p177 = por %p175, %p176
      %p178 = scmp.ne.s32.totalorder %s170, %s173
      %p179 = scmp.eq.s32.totalorder %s24, 0
      %p180 = por %p178, %p179
      %p181 = scmp.ne.s32.totalorder %s170, %s173
      %p182 = scmp.eq.s32.totalorder %s29, 1
      %p183 = por %p181, %p182
      %p184 = scmp.ne.s32.totalorder %s173, %s174
      %p185 = scmp.eq.s32.totalorder %s29, 0
      %p186 = por %p184, %p185
      %p187 = scmp.ne.s32.totalorder %s173, %s174
      %p188 = scmp.eq.s32.totalorder %s30, 1
      %p189 = por %p187, %p188
      %p191 = scmp.ne.s32.totalorder %s174, %s190
      %p192 = scmp.eq.s32.totalorder %s30, 0
      %p193 = por %p191, %p192
      %p194 = scmp.le.s32.totalorder 1, %s24
      %p195 = scmp.lt.s32.totalorder %s24, 3
      %p196 = pnand %p194, %p195
      %p197 = pneg %p196
      // Predicated region
      $region9: #{tpu_custom_call.1} parent=5 // pred_check
        _
      $region10: #{tpu_custom_call.1} parent=5 // pred_check_branch
        %199 = sbr.rel (%p196) target = $region12
      $region11: #{tpu_custom_call.1} parent=5 // pred_region
        %s200 = ssub.s32 %s24, 1
        // Predicated region
        $region13: #{tpu_custom_call.1} parent=11 // pred_check
          %p201 = pneg %p71
        $region14: #{tpu_custom_call.1} parent=11 // pred_check_branch
          %203 = sbr.rel (%p201) target = $region16
        $region15: #{tpu_custom_call.1} parent=11 // pred_region
          %s205 = ssub.s32 576, 576
          %206 = vsyncadd [#allocation9], %s205
          %s207 = sshll.u32 [#allocation8], 4
          %s208 = int_to_ptr.vmem [resolvable:$true] %s207
          %213 = dma.hbm_to_vmem [thread:$0]  %s1, 576, %s208, [#allocation9], 64, 64, 4
        $region16: #{tpu_custom_call.1} parent=11 // pred_fallthru
          _
        // Predicated region
        $region17: #{tpu_custom_call.1} parent=11 // pred_check
          %p214 = pneg %p92
        $region18: #{tpu_custom_call.1} parent=11 // pred_check_branch
          %216 = sbr.rel (%p214) target = $region20
        $region19: #{tpu_custom_call.1} parent=11 // pred_region
          %s218 = ssub.s32 16, 16
          %219 = vsyncadd [#allocation9], %s218
          %s221 = sshll.u32 [#allocation10], 4
          %s222 = int_to_ptr.vmem [resolvable:$true] %s221
          %224 = dma.hbm_to_vmem [thread:$0]  %s2, 16, %s222, [#allocation9]
        $region20: #{tpu_custom_call.1} parent=11 // pred_fallthru
          _
        // Predicated region
        $region21: #{tpu_custom_call.1} parent=11 // pred_check
          %p225 = pneg %p113
        $region22: #{tpu_custom_call.1} parent=11 // pred_check_branch
          %227 = sbr.rel (%p225) target = $region24
        $region23: #{tpu_custom_call.1} parent=11 // pred_region
          %s229 = ssub.s32 576, 576
          %230 = vsyncadd [#allocation12], %s229
          %s231 = sshll.u32 [#allocation11], 4
          %s232 = int_to_ptr.vmem [resolvable:$true] %s231
          %237 = dma.hbm_to_vmem [thread:$0]  %s3, 576, %s232, [#allocation12], 64, 64, 4
        $region24: #{tpu_custom_call.1} parent=11 // pred_fallthru
          _
        // Predicated region
        $region25: #{tpu_custom_call.1} parent=11 // pred_check
          %p238 = pneg %p134
        $region26: #{tpu_custom_call.1} parent=11 // pred_check_branch
          %240 = sbr.rel (%p238) target = $region28
        $region27: #{tpu_custom_call.1} parent=11 // pred_region
          %s242 = ssub.s32 16, 16
          %243 = vsyncadd [#allocation12], %s242
          %s245 = sshll.u32 [#allocation13], 4
          %s246 = int_to_ptr.vmem [resolvable:$true] %s245
          %248 = dma.hbm_to_vmem [thread:$0]  %s4, 16, %s246, [#allocation12]
        $region28: #{tpu_custom_call.1} parent=11 // pred_fallthru
          _
      $region12: #{tpu_custom_call.1} parent=5 // pred_fallthru
        _
      %p249 = scmp.lt.s32.totalorder %s24, 2
      // Predicated region
      $region29: #{tpu_custom_call.1} parent=5 // pred_check
        %p250 = pneg %p249
      $region30: #{tpu_custom_call.1} parent=5 // pred_check_branch
        %252 = sbr.rel (%p250) target = $region32
      $region31: #{tpu_custom_call.1} parent=5 // pred_region
        // Predicated region
        $region33: #{tpu_custom_call.1} parent=31 // pred_check
          %p253 = pneg %p44
        $region34: #{tpu_custom_call.1} parent=31 // pred_check_branch
          %255 = sbr.rel (%p253) target = $region36
        $region35: #{tpu_custom_call.1} parent=31 // pred_region
          %s256 = sand.u32 %s34, 1
          %s257 = scalar_lea.sflag [#allocation6], %s256
          %s258 = sand.u32 %s34, 1
          %s259 = smul.addr %s258, 128
          %s260 = scalar_lea.vmem [#allocation5], %s259
          %s262 = ssub.s32 2048, 2048
          %263 = vsyncadd %s257, %s262
          %s264 = smul.addr %s24, 32
          %s265 = smul.addr %s264, 64
          %s266 = scalar_lea.hbm %s0, %s265
          %s267 = sshll.u32 %s260, 4
          %s268 = int_to_ptr.vmem [resolvable:$true] %s267
          %273 = dma.hbm_to_vmem [thread:$0]  %s266, 2048, %s268, %s257, 64, 64, 4
        $region36: #{tpu_custom_call.1} parent=31 // pred_fallthru
          _
      $region32: #{tpu_custom_call.1} parent=5 // pred_fallthru
        _
      %p274 = scmp.le.s32.totalorder 1, %s24
      %p275 = scmp.lt.s32.totalorder %s24, 3
      %p276 = pnand %p274, %p275
      %p277 = pneg %p276
      // Predicated region
      $region37: #{tpu_custom_call.1} parent=5 // pred_check
        _
      $region38: #{tpu_custom_call.1} parent=5 // pred_check_branch
        %279 = sbr.rel (%p276) target = $region40
      $region39: #{tpu_custom_call.1} parent=5 // pred_region
        %s280 = ssub.s32 %s24, 1
        %s281 = sand.u32 %s37, 1
        %s282 = scalar_lea.sflag [#allocation6], %s281
        %s283 = sand.u32 %s37, 1
        %s284 = smul.addr %s283, 128
        %s285 = scalar_lea.vmem [#allocation5], %s284
        // Predicated region
        $region41: #{tpu_custom_call.1} parent=39 // pred_check
          %p286 = pneg %p50
        $region42: #{tpu_custom_call.1} parent=39 // pred_check_branch
          %288 = sbr.rel (%p286) target = $region44
        $region43: #{tpu_custom_call.1} parent=39 // pred_region
          %289 = dma.done %s282, 2048
        $region44: #{tpu_custom_call.1} parent=39 // pred_fallthru
          _
        // Predicated region
        $region45: #{tpu_custom_call.1} parent=39 // pred_check
          %p290 = pneg %p71
        $region46: #{tpu_custom_call.1} parent=39 // pred_check_branch
          %292 = sbr.rel (%p290) target = $region48
        $region47: #{tpu_custom_call.1} parent=39 // pred_region
          %293 = dma.done [#allocation9], 576
        $region48: #{tpu_custom_call.1} parent=39 // pred_fallthru
          _
        // Predicated region
        $region49: #{tpu_custom_call.1} parent=39 // pred_check
          %p294 = pneg %p92
        $region50: #{tpu_custom_call.1} parent=39 // pred_check_branch
          %296 = sbr.rel (%p294) target = $region52
        $region51: #{tpu_custom_call.1} parent=39 // pred_region
          %297 = dma.done [#allocation9], 16
        $region52: #{tpu_custom_call.1} parent=39 // pred_fallthru
          _
        // Predicated region
        $region53: #{tpu_custom_call.1} parent=39 // pred_check
          %p298 = pneg %p113
        $region54: #{tpu_custom_call.1} parent=39 // pred_check_branch
          %300 = sbr.rel (%p298) target = $region56
        $region55: #{tpu_custom_call.1} parent=39 // pred_region
          %301 = dma.done [#allocation12], 576
        $region56: #{tpu_custom_call.1} parent=39 // pred_fallthru
          _
        // Predicated region
        $region57: #{tpu_custom_call.1} parent=39 // pred_check
          %p302 = pneg %p134
        $region58: #{tpu_custom_call.1} parent=39 // pred_check_branch
          %304 = sbr.rel (%p302) target = $region60
        $region59: #{tpu_custom_call.1} parent=39 // pred_region
          %305 = dma.done [#allocation12], 16
        $region60: #{tpu_custom_call.1} parent=39 // pred_fallthru
          _
        %s306 = sand.u32 %s37, 1
        %s307 = scalar_lea.sflag [#allocation6], %s306
        %s308 = sand.u32 %s37, 1
        %s309 = smul.addr %s308, 128
        %s310 = scalar_lea.vmem [#allocation5], %s309
        %p311 = pneg %p50
        %p312 = pneg %p47
        %p313 = pneg %p71
        %p314 = pneg %p68
        %p315 = pneg %p92
        %p316 = pneg %p89
        %p317 = pneg %p113
        %p318 = pneg %p110
        %p319 = pneg %p134
        %p320 = pneg %p131
        %p321 = pneg %p160
        %p322 = pneg %p157
        %s323 = sand.u32 %s147, 1
        %s324 = scalar_lea.sflag [#allocation7], %s323
        %s325 = sand.u32 %s147, 1
        %s326 = smul.addr %s325, 128
        %s327 = scalar_lea.vmem [#allocation14], %s326
        %p328 = pneg %p186
        %p329 = pneg %p183
        %s330 = sand.u32 %s173, 1
        %s331 = scalar_lea.sflag [#allocation16], %s330
        %s332 = sand.u32 %s173, 1
        %s333 = smul.addr %s332, 32
        %s334 = scalar_lea.vmem [#allocation15], %s333
        %vm336 = vcmask 60416
        %337 = vst.msk [vmem:[#allocation2] sm:$0xf] %vm336, 0
        %338 = vst.msk [vmem:[#allocation2 + $0x4] sm:$0xf] %vm336, 0
        %339 = vst.msk [vmem:[#allocation2 + $0x8] sm:$0xf] %vm336, 0
        %vm340 = vcmask 57344
        %vm341 = vsmask.f32 256
        %vm342 = vmand %vm340, %vm341
        %v343 = vld [vmem:[#allocation2 + $0xc] sm:$0x1]
        %v344 = vsel %vm342, 0, %v343
        %345 = vst [vmem:[#allocation2 + $0xc] sm:$0x1] %v344
        %s346 = scalar_lea.vmem [#allocation2], 272
        %347 = vst.msk [vmem:[%s346] sm:$0xf] %vm336, 0
        %348 = vst.msk [vmem:[%s346 + $0x4] sm:$0xf] %vm336, 0
        %349 = vst.msk [vmem:[%s346 + $0x8] sm:$0xf] %vm336, 0
        %v350 = vld [vmem:[%s346 + $0xc] sm:$0x1]
        %v351 = vsel %vm342, 0, %v350
        %352 = vst [vmem:[%s346 + $0xc] sm:$0x1] %v351
        %s353 = scalar_lea.vmem [#allocation2], 16
        %vm354 = vcmask 60419
        %vm355 = vsmask.f32 7950
        %vm356 = vmand %vm354, %vm355
        %v357 = vld [vmem:[%s353] sm:$0x8]
        %v358 = vsel %vm356, 0, %v357
        %359 = vst [vmem:[%s353] sm:$0x8] %v358
        %v360 = vld [vmem:[%s353 + $0x10] sm:$0x8]
        %v361 = vsel %vm356, 0, %v360
        %362 = vst [vmem:[%s353 + $0x10] sm:$0x8] %v361
        %v363 = vld [vmem:[%s353 + $0x20] sm:$0x8]
        %v364 = vsel %vm356, 0, %v363
        %365 = vst [vmem:[%s353 + $0x20] sm:$0x8] %v364
        %v366 = vld [vmem:[%s353 + $0x30] sm:$0x8]
        %v367 = vsel %vm356, 0, %v366
        %368 = vst [vmem:[%s353 + $0x30] sm:$0x8] %v367
        %v369 = vld [vmem:[%s353 + $0x40] sm:$0x8]
        %v370 = vsel %vm356, 0, %v369
        %371 = vst [vmem:[%s353 + $0x40] sm:$0x8] %v370
        %v372 = vld [vmem:[%s353 + $0x50] sm:$0x8]
        %v373 = vsel %vm356, 0, %v372
        %374 = vst [vmem:[%s353 + $0x50] sm:$0x8] %v373
        %v375 = vld [vmem:[%s353 + $0x60] sm:$0x8]
        %v376 = vsel %vm356, 0, %v375
        %377 = vst [vmem:[%s353 + $0x60] sm:$0x8] %v376
        %v378 = vld [vmem:[%s353 + $0x70] sm:$0x8]
        %v379 = vsel %vm356, 0, %v378
        %380 = vst [vmem:[%s353 + $0x70] sm:$0x8] %v379
        %v381 = vld [vmem:[%s353 + $0x80] sm:$0x8]
        %v382 = vsel %vm356, 0, %v381
        %383 = vst [vmem:[%s353 + $0x80] sm:$0x8] %v382
        %v384 = vld [vmem:[%s353 + $0x90] sm:$0x8]
        %v385 = vsel %vm356, 0, %v384
        %386 = vst [vmem:[%s353 + $0x90] sm:$0x8] %v385
        %v387 = vld [vmem:[%s353 + $0xa0] sm:$0x8]
        %v388 = vsel %vm356, 0, %v387
        %389 = vst [vmem:[%s353 + $0xa0] sm:$0x8] %v388
        %v390 = vld [vmem:[%s353 + $0xb0] sm:$0x8]
        %v391 = vsel %vm356, 0, %v390
        %392 = vst [vmem:[%s353 + $0xb0] sm:$0x8] %v391
        %v393 = vld [vmem:[%s353 + $0xc0] sm:$0x8]
        %v394 = vsel %vm356, 0, %v393
        %395 = vst [vmem:[%s353 + $0xc0] sm:$0x8] %v394
        %v396 = vld [vmem:[%s353 + $0xd0] sm:$0x8]
        %v397 = vsel %vm356, 0, %v396
        %398 = vst [vmem:[%s353 + $0xd0] sm:$0x8] %v397
        %v399 = vld [vmem:[%s353 + $0xe0] sm:$0x8]
        %v400 = vsel %vm356, 0, %v399
        %401 = vst [vmem:[%s353 + $0xe0] sm:$0x8] %v400
        %v402 = vld [vmem:[%s353 + $0xf0] sm:$0x8]
        %v403 = vsel %vm356, 0, %v402
        %404 = vst [vmem:[%s353 + $0xf0] sm:$0x8] %v403
        %v405 = vld [vmem:[%s353 + $0xc] sm:$0x1]
        %v406 = vsel %vm342, 0, %v405
        %407 = vst [vmem:[%s353 + $0xc] sm:$0x1] %v406
        %v408 = vld [vmem:[%s353 + $0x1c] sm:$0x1]
        %v409 = vsel %vm342, 0, %v408
        %410 = vst [vmem:[%s353 + $0x1c] sm:$0x1] %v409
        %v411 = vld [vmem:[%s353 + $0x2c] sm:$0x1]
        %v412 = vsel %vm342, 0, %v411
        %413 = vst [vmem:[%s353 + $0x2c] sm:$0x1] %v412
        %v414 = vld [vmem:[%s353 + $0x3c] sm:$0x1]
        %v415 = vsel %vm342, 0, %v414
        %416 = vst [vmem:[%s353 + $0x3c] sm:$0x1] %v415
        %v417 = vld [vmem:[%s353 + $0x4c] sm:$0x1]
        %v418 = vsel %vm342, 0, %v417
        %419 = vst [vmem:[%s353 + $0x4c] sm:$0x1] %v418
        %v420 = vld [vmem:[%s353 + $0x5c] sm:$0x1]
        %v421 = vsel %vm342, 0, %v420
        %422 = vst [vmem:[%s353 + $0x5c] sm:$0x1] %v421
        %v423 = vld [vmem:[%s353 + $0x6c] sm:$0x1]
        %v424 = vsel %vm342, 0, %v423
        %425 = vst [vmem:[%s353 + $0x6c] sm:$0x1] %v424
        %v426 = vld [vmem:[%s353 + $0x7c] sm:$0x1]
        %v427 = vsel %vm342, 0, %v426
        %428 = vst [vmem:[%s353 + $0x7c] sm:$0x1] %v427
        %v429 = vld [vmem:[%s353 + $0x8c] sm:$0x1]
        %v430 = vsel %vm342, 0, %v429
        %431 = vst [vmem:[%s353 + $0x8c] sm:$0x1] %v430
        %v432 = vld [vmem:[%s353 + $0x9c] sm:$0x1]
        %v433 = vsel %vm342, 0, %v432
        %434 = vst [vmem:[%s353 + $0x9c] sm:$0x1] %v433
        %v435 = vld [vmem:[%s353 + $0xac] sm:$0x1]
        %v436 = vsel %vm342, 0, %v435
        %437 = vst [vmem:[%s353 + $0xac] sm:$0x1] %v436
        %v438 = vld [vmem:[%s353 + $0xbc] sm:$0x1]
        %v439 = vsel %vm342, 0, %v438
        %440 = vst [vmem:[%s353 + $0xbc] sm:$0x1] %v439
        %v441 = vld [vmem:[%s353 + $0xcc] sm:$0x1]
        %v442 = vsel %vm342, 0, %v441
        %443 = vst [vmem:[%s353 + $0xcc] sm:$0x1] %v442
        %v444 = vld [vmem:[%s353 + $0xdc] sm:$0x1]
        %v445 = vsel %vm342, 0, %v444
        %446 = vst [vmem:[%s353 + $0xdc] sm:$0x1] %v445
        %v447 = vld [vmem:[%s353 + $0xec] sm:$0x1]
        %v448 = vsel %vm342, 0, %v447
        %449 = vst [vmem:[%s353 + $0xec] sm:$0x1] %v448
        %v450 = vld [vmem:[%s353 + $0xfc] sm:$0x1]
        %v451 = vsel %vm342, 0, %v450
        %452 = vst [vmem:[%s353 + $0xfc] sm:$0x1] %v451
        %v453 = vld [vmem:[%s285] sm:$0xf]
        %v454 = vld [vmem:[%s285 + $0x4] sm:$0xf]
        %v455 = vld [vmem:[%s285 + $0x8] sm:$0xf]
        %v456 = vld [vmem:[%s285 + $0xc] sm:$0xf]
        %v457 = vld [vmem:[%s285 + $0x10] sm:$0xf]
        %v458 = vld [vmem:[%s285 + $0x14] sm:$0xf]
        %v459 = vld [vmem:[%s285 + $0x18] sm:$0xf]
        %v460 = vld [vmem:[%s285 + $0x1c] sm:$0xf]
        %v461 = vld [vmem:[%s285 + $0x20] sm:$0xf]
        %v462 = vld [vmem:[%s285 + $0x24] sm:$0xf]
        %v463 = vld [vmem:[%s285 + $0x28] sm:$0xf]
        %v464 = vld [vmem:[%s285 + $0x2c] sm:$0xf]
        %v465 = vld [vmem:[%s285 + $0x30] sm:$0xf]
        %v466 = vld [vmem:[%s285 + $0x34] sm:$0xf]
        %v467 = vld [vmem:[%s285 + $0x38] sm:$0xf]
        %v468 = vld [vmem:[%s285 + $0x3c] sm:$0xf]
        %v469 = vld [vmem:[%s285 + $0x40] sm:$0xf]
        %v470 = vld [vmem:[%s285 + $0x44] sm:$0xf]
        %v471 = vld [vmem:[%s285 + $0x48] sm:$0xf]
        %v472 = vld [vmem:[%s285 + $0x4c] sm:$0xf]
        %v473 = vld [vmem:[%s285 + $0x50] sm:$0xf]
        %v474 = vld [vmem:[%s285 + $0x54] sm:$0xf]
        %v475 = vld [vmem:[%s285 + $0x58] sm:$0xf]
        %v476 = vld [vmem:[%s285 + $0x5c] sm:$0xf]
        %v477 = vld [vmem:[%s285 + $0x60] sm:$0xf]
        %v478 = vld [vmem:[%s285 + $0x64] sm:$0xf]
        %v479 = vld [vmem:[%s285 + $0x68] sm:$0xf]
        %v480 = vld [vmem:[%s285 + $0x6c] sm:$0xf]
        %v481 = vld [vmem:[%s285 + $0x70] sm:$0xf]
        %v482 = vld [vmem:[%s285 + $0x74] sm:$0xf]
        %v483 = vld [vmem:[%s285 + $0x78] sm:$0xf]
        %v484 = vld [vmem:[%s285 + $0x7c] sm:$0xf]
        %485 = vst.msk [vmem:[%s353 + $0x4] sm:$0xf] %vm336, %v453
        %486 = vst.msk [vmem:[%s353 + $0x8] sm:$0xf] %vm336, %v454
        %487 = vst.msk [vmem:[%s353 + $0x14] sm:$0xf] %vm336, %v455
        %488 = vst.msk [vmem:[%s353 + $0x18] sm:$0xf] %vm336, %v456
        %489 = vst.msk [vmem:[%s353 + $0x24] sm:$0xf] %vm336, %v457
        %490 = vst.msk [vmem:[%s353 + $0x28] sm:$0xf] %vm336, %v458
        %491 = vst.msk [vmem:[%s353 + $0x34] sm:$0xf] %vm336, %v459
        %492 = vst.msk [vmem:[%s353 + $0x38] sm:$0xf] %vm336, %v460
        %493 = vst.msk [vmem:[%s353 + $0x44] sm:$0xf] %vm336, %v461
        %494 = vst.msk [vmem:[%s353 + $0x48] sm:$0xf] %vm336, %v462
        %495 = vst.msk [vmem:[%s353 + $0x54] sm:$0xf] %vm336, %v463
        %496 = vst.msk [vmem:[%s353 + $0x58] sm:$0xf] %vm336, %v464
        %497 = vst.msk [vmem:[%s353 + $0x64] sm:$0xf] %vm336, %v465
        %498 = vst.msk [vmem:[%s353 + $0x68] sm:$0xf] %vm336, %v466
        %499 = vst.msk [vmem:[%s353 + $0x74] sm:$0xf] %vm336, %v467
        %500 = vst.msk [vmem:[%s353 + $0x78] sm:$0xf] %vm336, %v468
        %501 = vst.msk [vmem:[%s353 + $0x84] sm:$0xf] %vm336, %v469
        %502 = vst.msk [vmem:[%s353 + $0x88] sm:$0xf] %vm336, %v470
        %503 = vst.msk [vmem:[%s353 + $0x94] sm:$0xf] %vm336, %v471
        %504 = vst.msk [vmem:[%s353 + $0x98] sm:$0xf] %vm336, %v472
        %505 = vst.msk [vmem:[%s353 + $0xa4] sm:$0xf] %vm336, %v473
        %506 = vst.msk [vmem:[%s353 + $0xa8] sm:$0xf] %vm336, %v474
        %507 = vst.msk [vmem:[%s353 + $0xb4] sm:$0xf] %vm336, %v475
        %508 = vst.msk [vmem:[%s353 + $0xb8] sm:$0xf] %vm336, %v476
        %509 = vst.msk [vmem:[%s353 + $0xc4] sm:$0xf] %vm336, %v477
        %510 = vst.msk [vmem:[%s353 + $0xc8] sm:$0xf] %vm336, %v478
        %511 = vst.msk [vmem:[%s353 + $0xd4] sm:$0xf] %vm336, %v479
        %512 = vst.msk [vmem:[%s353 + $0xd8] sm:$0xf] %vm336, %v480
        %513 = vst.msk [vmem:[%s353 + $0xe4] sm:$0xf] %vm336, %v481
        %514 = vst.msk [vmem:[%s353 + $0xe8] sm:$0xf] %vm336, %v482
        %515 = vst.msk [vmem:[%s353 + $0xf4] sm:$0xf] %vm336, %v483
        %516 = vst.msk [vmem:[%s353 + $0xf8] sm:$0xf] %vm336, %v484
        %v517 = vld [vmem:[#allocation2] sm:$0x8]
        %v518 = vld [vmem:[#allocation2 + $0x4] sm:$0xf]
        %v519 = vld [vmem:[#allocation2 + $0x8] sm:$0xf]
        %v520 = vld [vmem:[#allocation2 + $0x10] sm:$0x8]
        %v521 = vld [vmem:[#allocation2 + $0x14] sm:$0xf]
        %v522 = vld [vmem:[#allocation2 + $0x18] sm:$0xf]
        %v523 = vld [vmem:[#allocation2 + $0x20] sm:$0x8]
        %v524 = vld [vmem:[#allocation2 + $0x24] sm:$0xf]
        %v525 = vld [vmem:[#allocation2 + $0x28] sm:$0xf]
        %v526 = vld [vmem:[#allocation2 + $0x30] sm:$0x8]
        %v527 = vld [vmem:[#allocation2 + $0x34] sm:$0xf]
        %v528 = vld [vmem:[#allocation2 + $0x38] sm:$0xf]
        %v529 = vld [vmem:[#allocation2 + $0x40] sm:$0x8]
        %v530 = vld [vmem:[#allocation2 + $0x44] sm:$0xf]
        %v531 = vld [vmem:[#allocation2 + $0x48] sm:$0xf]
        %v532 = vld [vmem:[#allocation2 + $0x50] sm:$0x8]
        %v533 = vld [vmem:[#allocation2 + $0x54] sm:$0xf]
        %v534 = vld [vmem:[#allocation2 + $0x58] sm:$0xf]
        %v535 = vld [vmem:[#allocation2 + $0x60] sm:$0x8]
        %v536 = vld [vmem:[#allocation2 + $0x64] sm:$0xf]
        %v537 = vld [vmem:[#allocation2 + $0x68] sm:$0xf]
        %v538 = vld [vmem:[#allocation2 + $0x70] sm:$0x8]
        %v539 = vld [vmem:[#allocation2 + $0x74] sm:$0xf]
        %v540 = vld [vmem:[#allocation2 + $0x78] sm:$0xf]
        %v541 = vld [vmem:[#allocation2 + $0x80] sm:$0x8]
        %v542 = vld [vmem:[#allocation2 + $0x84] sm:$0xf]
        %v543 = vld [vmem:[#allocation2 + $0x88] sm:$0xf]
        %v544 = vld [vmem:[#allocation2 + $0x90] sm:$0x8]
        %v545 = vld [vmem:[#allocation2 + $0x94] sm:$0xf]
        %v546 = vld [vmem:[#allocation2 + $0x98] sm:$0xf]
        %v547 = vld [vmem:[#allocation2 + $0xa0] sm:$0x8]
        %v548 = vld [vmem:[#allocation2 + $0xa4] sm:$0xf]
        %v549 = vld [vmem:[#allocation2 + $0xa8] sm:$0xf]
        %v550 = vld [vmem:[#allocation2 + $0xb0] sm:$0x8]
        %v551 = vld [vmem:[#allocation2 + $0xb4] sm:$0xf]
        %v552 = vld [vmem:[#allocation2 + $0xb8] sm:$0xf]
        %v553 = vld [vmem:[#allocation2 + $0xc0] sm:$0x8]
        %v554 = vld [vmem:[#allocation2 + $0xc4] sm:$0xf]
        %v555 = vld [vmem:[#allocation2 + $0xc8] sm:$0xf]
        %v556 = vld [vmem:[#allocation2 + $0xd0] sm:$0x8]
        %v557 = vld [vmem:[#allocation2 + $0xd4] sm:$0xf]
        %v558 = vld [vmem:[#allocation2 + $0xd8] sm:$0xf]
        %v559 = vld [vmem:[#allocation2 + $0xe0] sm:$0x8]
        %v560 = vld [vmem:[#allocation2 + $0xe4] sm:$0xf]
        %v561 = vld [vmem:[#allocation2 + $0xe8] sm:$0xf]
        %v562 = vld [vmem:[#allocation2 + $0xf0] sm:$0x8]
        %v563 = vld [vmem:[#allocation2 + $0xf4] sm:$0xf]
        %v564 = vld [vmem:[#allocation2 + $0xf8] sm:$0xf]
        %vm565 = vsmask.f32 4368
        %vm566 = vmor %vm341, %vm565
        %v568 = vshrl.u32 %v517, 16
        %v570 = vrot.slane %v568, 7
        %v571 = vrot.slane %v570, 4
        %v573 = vshrl.u32 %v518, 16
        %v575 = vrot.slane %v573, 7
        %v576 = vshll.u32 %v518, 16
        %v578 = vor.u32 %v575, %v576
        %v579 = vsel %vm566, %v571, %v578
        %v580 = vrot.slane %v575, 4
        %v582 = vshrl.u32 %v519, 16
        %v584 = vrot.slane %v582, 7
        %v585 = vshll.u32 %v519, 16
        %v587 = vor.u32 %v584, %v585
        %v588 = vsel %vm566, %v580, %v587
        %v590 = vshrl.u32 %v520, 16
        %v592 = vrot.slane %v590, 7
        %v593 = vrot.slane %v592, 4
        %v595 = vshrl.u32 %v521, 16
        %v597 = vrot.slane %v595, 7
        %v598 = vshll.u32 %v521, 16
        %v600 = vor.u32 %v597, %v598
        %v601 = vsel %vm566, %v593, %v600
        %v602 = vrot.slane %v597, 4
        %v604 = vshrl.u32 %v522, 16
        %v606 = vrot.slane %v604, 7
        %v607 = vshll.u32 %v522, 16
        %v609 = vor.u32 %v606, %v607
        %v610 = vsel %vm566, %v602, %v609
        %v612 = vshrl.u32 %v523, 16
        %v614 = vrot.slane %v612, 7
        %v615 = vrot.slane %v614, 4
        %v617 = vshrl.u32 %v524, 16
        %v619 = vrot.slane %v617, 7
        %v620 = vshll.u32 %v524, 16
        %v622 = vor.u32 %v619, %v620
        %v623 = vsel %vm566, %v615, %v622
        %v624 = vrot.slane %v619, 4
        %v626 = vshrl.u32 %v525, 16
        %v628 = vrot.slane %v626, 7
        %v629 = vshll.u32 %v525, 16
        %v631 = vor.u32 %v628, %v629
        %v632 = vsel %vm566, %v624, %v631
        %v634 = vshrl.u32 %v526, 16
        %v636 = vrot.slane %v634, 7
        %v637 = vrot.slane %v636, 4
        %v639 = vshrl.u32 %v527, 16
        %v641 = vrot.slane %v639, 7
        %v642 = vshll.u32 %v527, 16
        %v644 = vor.u32 %v641, %v642
        %v645 = vsel %vm566, %v637, %v644
        %v646 = vrot.slane %v641, 4
        %v648 = vshrl.u32 %v528, 16
        %v650 = vrot.slane %v648, 7
        %v651 = vshll.u32 %v528, 16
        %v653 = vor.u32 %v650, %v651
        %v654 = vsel %vm566, %v646, %v653
        %v656 = vshrl.u32 %v529, 16
        %v658 = vrot.slane %v656, 7
        %v659 = vrot.slane %v658, 4
        %v661 = vshrl.u32 %v530, 16
        %v663 = vrot.slane %v661, 7
        %v664 = vshll.u32 %v530, 16
        %v666 = vor.u32 %v663, %v664
        %v667 = vsel %vm566, %v659, %v666
        %v668 = vrot.slane %v663, 4
        %v670 = vshrl.u32 %v531, 16
        %v672 = vrot.slane %v670, 7
        %v673 = vshll.u32 %v531, 16
        %v675 = vor.u32 %v672, %v673
        %v676 = vsel %vm566, %v668, %v675
        %v678 = vshrl.u32 %v532, 16
        %v680 = vrot.slane %v678, 7
        %v681 = vrot.slane %v680, 4
        %v683 = vshrl.u32 %v533, 16
        %v685 = vrot.slane %v683, 7
        %v686 = vshll.u32 %v533, 16
        %v688 = vor.u32 %v685, %v686
        %v689 = vsel %vm566, %v681, %v688
        %v690 = vrot.slane %v685, 4
        %v692 = vshrl.u32 %v534, 16
        %v694 = vrot.slane %v692, 7
        %v695 = vshll.u32 %v534, 16
        %v697 = vor.u32 %v694, %v695
        %v698 = vsel %vm566, %v690, %v697
        %v700 = vshrl.u32 %v535, 16
        %v702 = vrot.slane %v700, 7
        %v703 = vrot.slane %v702, 4
        %v705 = vshrl.u32 %v536, 16
        %v707 = vrot.slane %v705, 7
        %v708 = vshll.u32 %v536, 16
        %v710 = vor.u32 %v707, %v708
        %v711 = vsel %vm566, %v703, %v710
        %v712 = vrot.slane %v707, 4
        %v714 = vshrl.u32 %v537, 16
        %v716 = vrot.slane %v714, 7
        %v717 = vshll.u32 %v537, 16
        %v719 = vor.u32 %v716, %v717
        %v720 = vsel %vm566, %v712, %v719
        %v722 = vshrl.u32 %v538, 16
        %v724 = vrot.slane %v722, 7
        %v725 = vrot.slane %v724, 4
        %v727 = vshrl.u32 %v539, 16
        %v729 = vrot.slane %v727, 7
        %v730 = vshll.u32 %v539, 16
        %v732 = vor.u32 %v729, %v730
        %v733 = vsel %vm566, %v725, %v732
        %v734 = vrot.slane %v729, 4
        %v736 = vshrl.u32 %v540, 16
        %v738 = vrot.slane %v736, 7
        %v739 = vshll.u32 %v540, 16
        %v741 = vor.u32 %v738, %v739
        %v742 = vsel %vm566, %v734, %v741
        %v744 = vshrl.u32 %v541, 16
        %v746 = vrot.slane %v744, 7
        %v747 = vrot.slane %v746, 4
        %v749 = vshrl.u32 %v542, 16
        %v751 = vrot.slane %v749, 7
        %v752 = vshll.u32 %v542, 16
        %v754 = vor.u32 %v751, %v752
        %v755 = vsel %vm566, %v747, %v754
        %v756 = vrot.slane %v751, 4
        %v758 = vshrl.u32 %v543, 16
        %v760 = vrot.slane %v758, 7
        %v761 = vshll.u32 %v543, 16
        %v763 = vor.u32 %v760, %v761
        %v764 = vsel %vm566, %v756, %v763
        %v766 = vshrl.u32 %v544, 16
        %v768 = vrot.slane %v766, 7
        %v769 = vrot.slane %v768, 4
        %v771 = vshrl.u32 %v545, 16
        %v773 = vrot.slane %v771, 7
        %v774 = vshll.u32 %v545, 16
        %v776 = vor.u32 %v773, %v774
        %v777 = vsel %vm566, %v769, %v776
        %v778 = vrot.slane %v773, 4
        %v780 = vshrl.u32 %v546, 16
        %v782 = vrot.slane %v780, 7
        %v783 = vshll.u32 %v546, 16
        %v785 = vor.u32 %v782, %v783
        %v786 = vsel %vm566, %v778, %v785
        %v788 = vshrl.u32 %v547, 16
        %v790 = vrot.slane %v788, 7
        %v791 = vrot.slane %v790, 4
        %v793 = vshrl.u32 %v548, 16
        %v795 = vrot.slane %v793, 7
        %v796 = vshll.u32 %v548, 16
        %v798 = vor.u32 %v795, %v796
        %v799 = vsel %vm566, %v791, %v798
        %v800 = vrot.slane %v795, 4
        %v802 = vshrl.u32 %v549, 16
        %v804 = vrot.slane %v802, 7
        %v805 = vshll.u32 %v549, 16
        %v807 = vor.u32 %v804, %v805
        %v808 = vsel %vm566, %v800, %v807
        %v810 = vshrl.u32 %v550, 16
        %v812 = vrot.slane %v810, 7
        %v813 = vrot.slane %v812, 4
        %v815 = vshrl.u32 %v551, 16
        %v817 = vrot.slane %v815, 7
        %v818 = vshll.u32 %v551, 16
        %v820 = vor.u32 %v817, %v818
        %v821 = vsel %vm566, %v813, %v820
        %v822 = vrot.slane %v817, 4
        %v824 = vshrl.u32 %v552, 16
        %v826 = vrot.slane %v824, 7
        %v827 = vshll.u32 %v552, 16
        %v829 = vor.u32 %v826, %v827
        %v830 = vsel %vm566, %v822, %v829
        %v832 = vshrl.u32 %v553, 16
        %v834 = vrot.slane %v832, 7
        %v835 = vrot.slane %v834, 4
        %v837 = vshrl.u32 %v554, 16
        %v839 = vrot.slane %v837, 7
        %v840 = vshll.u32 %v554, 16
        %v842 = vor.u32 %v839, %v840
        %v843 = vsel %vm566, %v835, %v842
        %v844 = vrot.slane %v839, 4
        %v846 = vshrl.u32 %v555, 16
        %v848 = vrot.slane %v846, 7
        %v849 = vshll.u32 %v555, 16
        %v851 = vor.u32 %v848, %v849
        %v852 = vsel %vm566, %v844, %v851
        %v854 = vshrl.u32 %v556, 16
        %v856 = vrot.slane %v854, 7
        %v857 = vrot.slane %v856, 4
        %v859 = vshrl.u32 %v557, 16
        %v861 = vrot.slane %v859, 7
        %v862 = vshll.u32 %v557, 16
        %v864 = vor.u32 %v861, %v862
        %v865 = vsel %vm566, %v857, %v864
        %v866 = vrot.slane %v861, 4
        %v868 = vshrl.u32 %v558, 16
        %v870 = vrot.slane %v868, 7
        %v871 = vshll.u32 %v558, 16
        %v873 = vor.u32 %v870, %v871
        %v874 = vsel %vm566, %v866, %v873
        %v876 = vshrl.u32 %v559, 16
        %v878 = vrot.slane %v876, 7
        %v879 = vrot.slane %v878, 4
        %v881 = vshrl.u32 %v560, 16
        %v883 = vrot.slane %v881, 7
        %v884 = vshll.u32 %v560, 16
        %v886 = vor.u32 %v883, %v884
        %v887 = vsel %vm566, %v879, %v886
        %v888 = vrot.slane %v883, 4
        %v890 = vshrl.u32 %v561, 16
        %v892 = vrot.slane %v890, 7
        %v893 = vshll.u32 %v561, 16
        %v895 = vor.u32 %v892, %v893
        %v896 = vsel %vm566, %v888, %v895
        %v898 = vshrl.u32 %v562, 16
        %v900 = vrot.slane %v898, 7
        %v901 = vrot.slane %v900, 4
        %v903 = vshrl.u32 %v563, 16
        %v905 = vrot.slane %v903, 7
        %v906 = vshll.u32 %v563, 16
        %v908 = vor.u32 %v905, %v906
        %v909 = vsel %vm566, %v901, %v908
        %v910 = vrot.slane %v905, 4
        %v912 = vshrl.u32 %v564, 16
        %v914 = vrot.slane %v912, 7
        %v915 = vshll.u32 %v564, 16
        %v917 = vor.u32 %v914, %v915
        %v918 = vsel %vm566, %v910, %v917
        %v919 = vld [vmem:[#allocation8] sm:$0xf]
        %s920 = scalar_lea.vmem [#allocation8], 4
        %v921 = vld [vmem:[%s920] sm:$0xf]
        %v954 = vunpack.c.l.b16 %v518
        %v955 = vunpack.c.l.b16 %v519
        %v956 = vunpack.c.l.b16 %v521
        %v957 = vunpack.c.l.b16 %v522
        %v958 = vunpack.c.l.b16 %v524
        %v959 = vunpack.c.l.b16 %v525
        %v960 = vunpack.c.l.b16 %v527
        %v961 = vunpack.c.l.b16 %v528
        %v962 = vunpack.c.l.b16 %v530
        %v963 = vunpack.c.l.b16 %v531
        %v964 = vunpack.c.l.b16 %v533
        %v965 = vunpack.c.l.b16 %v534
        %v966 = vunpack.c.l.b16 %v536
        %v967 = vunpack.c.l.b16 %v537
        %v968 = vunpack.c.l.b16 %v539
        %v969 = vunpack.c.l.b16 %v540
        %v970 = vunpack.c.l.b16 %v542
        %v971 = vunpack.c.l.b16 %v543
        %v972 = vunpack.c.l.b16 %v545
        %v973 = vunpack.c.l.b16 %v546
        %v974 = vunpack.c.l.b16 %v548
        %v975 = vunpack.c.l.b16 %v549
        %v976 = vunpack.c.l.b16 %v551
        %v977 = vunpack.c.l.b16 %v552
        %v978 = vunpack.c.l.b16 %v554
        %v979 = vunpack.c.l.b16 %v555
        %v980 = vunpack.c.l.b16 %v557
        %v981 = vunpack.c.l.b16 %v558
        %v982 = vunpack.c.l.b16 %v560
        %v983 = vunpack.c.l.b16 %v561
        %v984 = vunpack.c.l.b16 %v563
        %v985 = vunpack.c.l.b16 %v564
        %v986 = vpack.c.b16 %v955, %v954
        %v987 = vpack.c.b16 %v957, %v956
        %v988 = vpack.c.b16 %v959, %v958
        %v989 = vpack.c.b16 %v961, %v960
        %v990 = vpack.c.b16 %v963, %v962
        %v991 = vpack.c.b16 %v965, %v964
        %v992 = vpack.c.b16 %v967, %v966
        %v993 = vpack.c.b16 %v969, %v968
        %v994 = vpack.c.b16 %v971, %v970
        %v995 = vpack.c.b16 %v973, %v972
        %v996 = vpack.c.b16 %v975, %v974
        %v997 = vpack.c.b16 %v977, %v976
        %v998 = vpack.c.b16 %v979, %v978
        %v999 = vpack.c.b16 %v981, %v980
        %v1000 = vpack.c.b16 %v983, %v982
        %v1001 = vpack.c.b16 %v985, %v984
        %vm1002 = vcmask 64512
        %v1004 = vsel %vm1002, %v986, 0
        %v1007 = vsel %vm1002, %v987, 0
        %v1010 = vsel %vm1002, %v988, 0
        %v1013 = vsel %vm1002, %v989, 0
        %v1016 = vsel %vm1002, %v990, 0
        %v1019 = vsel %vm1002, %v991, 0
        %v1022 = vsel %vm1002, %v992, 0
        %v1025 = vsel %vm1002, %v993, 0
        %v1028 = vsel %vm1002, %v994, 0
        %v1031 = vsel %vm1002, %v995, 0
        %v1034 = vsel %vm1002, %v996, 0
        %v1037 = vsel %vm1002, %v997, 0
        %v1040 = vsel %vm1002, %v998, 0
        %v1043 = vsel %vm1002, %v999, 0
        %v1046 = vsel %vm1002, %v1000, 0
        %v1049 = vsel %vm1002, %v1001, 0
        %vm1051 = vcmask 1043456
        %v1053 = vsel %vm1051, %v921, 0
        %1055 = vmatprep.subr.bf16.mxu0 0
        %1056 = vmatpush1.bf16.msra.mxu0 %v1053
        %1057 = vmatprep.subr.bf16.mxu0 0
        %1058 = vmatpush1.bf16.msra.mxu0 0
        %1059 = vmatprep.subr.bf16.mxu0 0
        %1060 = vmatpush1.bf16.msra.mxu0 0
        %1061 = vmatprep.subr.bf16.mxu0 0
        %1062 = vmatpush1.bf16.msra.mxu0 0
        %1063 = vmatprep.subr.bf16.mxu0 0
        %1064 = vmatpush1.bf16.msra.mxu0 0
        %1065 = vmatprep.subr.bf16.mxu0 0
        %1066 = vmatpush1.bf16.msra.mxu0 0
        %1067 = vmatprep.subr.bf16.mxu0 0
        %1068 = vmatpush1.bf16.msra.mxu0 0
        %1069 = vmatprep.subr.bf16.mxu0 0
        %1070 = vmatpush1.bf16.msra.mxu0 0
        %1071 = vmatprep.subr.bf16.mxu0 0
        %1072 = vmatpush1.bf16.msra.mxu0 0
        %1073 = vmatprep.subr.bf16.mxu0 0
        %1074 = vmatpush1.bf16.msra.mxu0 0
        %1075 = vmatprep.subr.bf16.mxu0 0
        %1076 = vmatpush1.bf16.msra.mxu0 0
        %1077 = vmatprep.subr.bf16.mxu0 0
        %1078 = vmatpush1.bf16.msra.mxu0 0
        %1079 = vmatprep.subr.bf16.mxu0 0
        %1080 = vmatpush1.bf16.msra.mxu0 0
        %1081 = vmatprep.subr.bf16.mxu0 0
        %1082 = vmatpush1.bf16.msra.mxu0 0
        %1083 = vmatprep.subr.bf16.mxu0 0
        %1084 = vmatpush1.bf16.msra.mxu0 0
        %1085 = vmatprep.subr.bf16.mxu0 0
        %1086 = vmatpush1.bf16.msra.mxu0 0
        %1087 = vmatprep.mubr.bf16.mxu0 0
        %1088 = vmatmul.mubr.bf16.gmra.mrb[0].mxu0 %v1004
        %v1089 = vpop.f32.mrb[0].mxu0
        %v1090 = vadd.f32 0.0, %v1089
        %v1091 = vpop.f32.mrb[0].mxu0
        %v1092 = vpop.f32.mrb[0].mxu0
        %v1093 = vadd.f32 0.0, %v1092
        %v1094 = vpop.f32.mrb[0].mxu0
        %1095 = vmatprep.mubr.bf16.mxu0 0
        %1096 = vmatmul.mubr.bf16.gmra.mrb[0].mxu0 %v1007
        %v1097 = vpop.f32.mrb[0].mxu0
        %v1098 = vadd.f32 0.0, %v1097
        %v1099 = vpop.f32.mrb[0].mxu0
        %v1100 = vpop.f32.mrb[0].mxu0
        %v1101 = vadd.f32 0.0, %v1100
        %v1102 = vpop.f32.mrb[0].mxu0
        %1103 = vmatprep.mubr.bf16.mxu0 0
        %1104 = vmatmul.mubr.bf16.gmra.mrb[0].mxu0 %v1010
        %v1105 = vpop.f32.mrb[0].mxu0
        %v1106 = vadd.f32 0.0, %v1105
        %v1107 = vpop.f32.mrb[0].mxu0
        %v1108 = vpop.f32.mrb[0].mxu0
        %v1109 = vadd.f32 0.0, %v1108
        %v1110 = vpop.f32.mrb[0].mxu0
        %1111 = vmatprep.mubr.bf16.mxu0 0
        %1112 = vmatmul.mubr.bf16.gmra.mrb[0].mxu0 %v1013
        %v1113 = vpop.f32.mrb[0].mxu0
        %v1114 = vadd.f32 0.0, %v1113
        %v1115 = vpop.f32.mrb[0].mxu0
        %v1116 = vpop.f32.mrb[0].mxu0
        %v1117 = vadd.f32 0.0, %v1116
        %v1118 = vpop.f32.mrb[0].mxu0
        %1119 = vmatprep.mubr.bf16.mxu0 0
        %1120 = vmatmul.mubr.bf16.gmra.mrb[0].mxu0 %v1016
        %v1121 = vpop.f32.mrb[0].mxu0
        %v1122 = vadd.f32 0.0, %v1121
        %v1123 = vpop.f32.mrb[0].mxu0
        %v1124 = vpop.f32.mrb[0].mxu0
        %v1125 = vadd.f32 0.0, %v1124
        %v1126 = vpop.f32.mrb[0].mxu0
        %1127 = vmatprep.mubr.bf16.mxu0 0
        %1128 = vmatmul.mubr.bf16.gmra.mrb[0].mxu0 %v1019
        %v1129 = vpop.f32.mrb[0].mxu0
        %v1130 = vadd.f32 0.0, %v1129
        %v1131 = vpop.f32.mrb[0].mxu0
        %v1132 = vpop.f32.mrb[0].mxu0
        %v1133 = vadd.f32 0.0, %v1132
        %v1134 = vpop.f32.mrb[0].mxu0
        %1135 = vmatprep.mubr.bf16.mxu0 0
        %1136 = vmatmul.mubr.bf16.gmra.mrb[0].mxu0 %v1022
        %v1137 = vpop.f32.mrb[0].mxu0
        %v1138 = vadd.f32 0.0, %v1137
        %v1139 = vpop.f32.mrb[0].mxu0
        %v1140 = vpop.f32.mrb[0].mxu0
        %v1141 = vadd.f32 0.0, %v1140
        %v1142 = vpop.f32.mrb[0].mxu0
        %1143 = vmatprep.mubr.bf16.mxu0 0
        %1144 = vmatmul.mubr.bf16.gmra.mrb[0].mxu0 %v1025
        %v1145 = vpop.f32.mrb[0].mxu0
        %v1146 = vadd.f32 0.0, %v1145
        %v1147 = vpop.f32.mrb[0].mxu0
        %v1148 = vpop.f32.mrb[0].mxu0
        %v1149 = vadd.f32 0.0, %v1148
        %v1150 = vpop.f32.mrb[0].mxu0
        %1151 = vmatprep.mubr.bf16.mxu0 0
        %1152 = vmatmul.mubr.bf16.gmra.mrb[0].mxu0 %v1028
        %v1153 = vpop.f32.mrb[0].mxu0
        %v1154 = vadd.f32 0.0, %v1153
        %v1155 = vpop.f32.mrb[0].mxu0
        %v1156 = vpop.f32.mrb[0].mxu0
        %v1157 = vadd.f32 0.0, %v1156
        %v1158 = vpop.f32.mrb[0].mxu0
        %1159 = vmatprep.mubr.bf16.mxu0 0
        %1160 = vmatmul.mubr.bf16.gmra.mrb[0].mxu0 %v1031
        %v1161 = vpop.f32.mrb[0].mxu0
        %v1162 = vadd.f32 0.0, %v1161
        %v1163 = vpop.f32.mrb[0].mxu0
        %v1164 = vpop.f32.mrb[0].mxu0
        %v1165 = vadd.f32 0.0, %v1164
        %v1166 = vpop.f32.mrb[0].mxu0
        %1167 = vmatprep.mubr.bf16.mxu0 0
        %1168 = vmatmul.mubr.bf16.gmra.mrb[0].mxu0 %v1034
        %v1169 = vpop.f32.mrb[0].mxu0
        %v1170 = vadd.f32 0.0, %v1169
        %v1171 = vpop.f32.mrb[0].mxu0
        %v1172 = vpop.f32.mrb[0].mxu0
        %v1173 = vadd.f32 0.0, %v1172
        %v1174 = vpop.f32.mrb[0].mxu0
        %1175 = vmatprep.mubr.bf16.mxu0 0
        %1176 = vmatmul.mubr.bf16.gmra.mrb[0].mxu0 %v1037
        %v1177 = vpop.f32.mrb[0].mxu0
        %v1178 = vadd.f32 0.0, %v1177
        %v1179 = vpop.f32.mrb[0].mxu0
        %v1180 = vpop.f32.mrb[0].mxu0
        %v1181 = vadd.f32 0.0, %v1180
        %v1182 = vpop.f32.mrb[0].mxu0
        %1183 = vmatprep.mubr.bf16.mxu0 0
        %1184 = vmatmul.mubr.bf16.gmra.mrb[0].mxu0 %v1040
        %v1185 = vpop.f32.mrb[0].mxu0
        %v1186 = vadd.f32 0.0, %v1185
        %v1187 = vpop.f32.mrb[0].mxu0
        %v1188 = vpop.f32.mrb[0].mxu0
        %v1189 = vadd.f32 0.0, %v1188
        %v1190 = vpop.f32.mrb[0].mxu0
        %1191 = vmatprep.mubr.bf16.mxu0 0
        %1192 = vmatmul.mubr.bf16.gmra.mrb[0].mxu0 %v1043
        %v1193 = vpop.f32.mrb[0].mxu0
        %v1194 = vadd.f32 0.0, %v1193
        %v1195 = vpop.f32.mrb[0].mxu0
        %v1196 = vpop.f32.mrb[0].mxu0
        %v1197 = vadd.f32 0.0, %v1196
        %v1198 = vpop.f32.mrb[0].mxu0
        %1199 = vmatprep.mubr.bf16.mxu0 0
        %1200 = vmatmul.mubr.bf16.gmra.mrb[0].mxu0 %v1046
        %v1201 = vpop.f32.mrb[0].mxu0
        %v1202 = vadd.f32 0.0, %v1201
        %v1203 = vpop.f32.mrb[0].mxu0
        %v1204 = vpop.f32.mrb[0].mxu0
        %v1205 = vadd.f32 0.0, %v1204
        %v1206 = vpop.f32.mrb[0].mxu0
        %1207 = vmatprep.mubr.bf16.mxu0 0
        %1208 = vmatmul.mubr.bf16.gmra.mrb[0].mxu0 %v1049
        %v1209 = vpop.f32.mrb[0].mxu0
        %v1210 = vadd.f32 0.0, %v1209
        %v1211 = vpop.f32.mrb[0].mxu0
        %v1212 = vpop.f32.mrb[0].mxu0
        %v1213 = vadd.f32 0.0, %v1212
        %v1214 = vpop.f32.mrb[0].mxu0
        %1215 = vdwg.mxu0
        %v1216 = vunpack.c.l.b16 %v579
        %v1217 = vunpack.c.l.b16 %v588
        %v1218 = vunpack.c.l.b16 %v601
        %v1219 = vunpack.c.l.b16 %v610
        %v1220 = vunpack.c.l.b16 %v623
        %v1221 = vunpack.c.l.b16 %v632
        %v1222 = vunpack.c.l.b16 %v645
        %v1223 = vunpack.c.l.b16 %v654
        %v1224 = vunpack.c.l.b16 %v667
        %v1225 = vunpack.c.l.b16 %v676
        %v1226 = vunpack.c.l.b16 %v689
        %v1227 = vunpack.c.l.b16 %v698
        %v1228 = vunpack.c.l.b16 %v711
        %v1229 = vunpack.c.l.b16 %v720
        %v1230 = vunpack.c.l.b16 %v733
        %v1231 = vunpack.c.l.b16 %v742
        %v1232 = vunpack.c.l.b16 %v755
        %v1233 = vunpack.c.l.b16 %v764
        %v1234 = vunpack.c.l.b16 %v777
        %v1235 = vunpack.c.l.b16 %v786
        %v1236 = vunpack.c.l.b16 %v799
        %v1237 = vunpack.c.l.b16 %v808
        %v1238 = vunpack.c.l.b16 %v821
        %v1239 = vunpack.c.l.b16 %v830
        %v1240 = vunpack.c.l.b16 %v843
        %v1241 = vunpack.c.l.b16 %v852
        %v1242 = vunpack.c.l.b16 %v865
        %v1243 = vunpack.c.l.b16 %v874
        %v1244 = vunpack.c.l.b16 %v887
        %v1245 = vunpack.c.l.b16 %v896
        %v1246 = vunpack.c.l.b16 %v909
        %v1247 = vunpack.c.l.b16 %v918
        %v1248 = vpack.c.b16 %v1217, %v1216
        %v1249 = vpack.c.b16 %v1219, %v1218
        %v1250 = vpack.c.b16 %v1221, %v1220
        %v1251 = vpack.c.b16 %v1223, %v1222
        %v1252 = vpack.c.b16 %v1225, %v1224
        %v1253 = vpack.c.b16 %v1227, %v1226
        %v1254 = vpack.c.b16 %v1229, %v1228
        %v1255 = vpack.c.b16 %v1231, %v1230
        %v1256 = vpack.c.b16 %v1233, %v1232
        %v1257 = vpack.c.b16 %v1235, %v1234
        %v1258 = vpack.c.b16 %v1237, %v1236
        %v1259 = vpack.c.b16 %v1239, %v1238
        %v1260 = vpack.c.b16 %v1241, %v1240
        %v1261 = vpack.c.b16 %v1243, %v1242
        %v1262 = vpack.c.b16 %v1245, %v1244
        %v1263 = vpack.c.b16 %v1247, %v1246
        %v1265 = vsel %vm1002, %v1248, 0
        %v1268 = vsel %vm1002, %v1249, 0
        %v1271 = vsel %vm1002, %v1250, 0
        %v1274 = vsel %vm1002, %v1251, 0
        %v1277 = vsel %vm1002, %v1252, 0
        %v1280 = vsel %vm1002, %v1253, 0
        %v1283 = vsel %vm1002, %v1254, 0
        %v1286 = vsel %vm1002, %v1255, 0
        %v1289 = vsel %vm1002, %v1256, 0
        %v1292 = vsel %vm1002, %v1257, 0
        %v1295 = vsel %vm1002, %v1258, 0
        %v1298 = vsel %vm1002, %v1259, 0
        %v1301 = vsel %vm1002, %v1260, 0
        %v1304 = vsel %vm1002, %v1261, 0
        %v1307 = vsel %vm1002, %v1262, 0
        %v1310 = vsel %vm1002, %v1263, 0
        %v1313 = vsel %vm1051, %v919, 0
        %1315 = vmatprep.subr.bf16.mxu0 0
        %1316 = vmatpush1.bf16.msra.mxu0 %v1313
        %1317 = vmatprep.subr.bf16.mxu0 0
        %1318 = vmatpush1.bf16.msra.mxu0 0
        %1319 = vmatprep.subr.bf16.mxu0 0
        %1320 = vmatpush1.bf16.msra.mxu0 0
        %1321 = vmatprep.subr.bf16.mxu0 0
        %1322 = vmatpush1.bf16.msra.mxu0 0
        %1323 = vmatprep.subr.bf16.mxu0 0
        %1324 = vmatpush1.bf16.msra.mxu0 0
        %1325 = vmatprep.subr.bf16.mxu0 0
        %1326 = vmatpush1.bf16.msra.mxu0 0
        %1327 = vmatprep.subr.bf16.mxu0 0
        %1328 = vmatpush1.bf16.msra.mxu0 0
        %1329 = vmatprep.subr.bf16.mxu0 0
        %1330 = vmatpush1.bf16.msra.mxu0 0
        %1331 = vmatprep.subr.bf16.mxu0 0
        %1332 = vmatpush1.bf16.msra.mxu0 0
        %1333 = vmatprep.subr.bf16.mxu0 0
        %1334 = vmatpush1.bf16.msra.mxu0 0
        %1335 = vmatprep.subr.bf16.mxu0 0
        %1336 = vmatpush1.bf16.msra.mxu0 0
        %1337 = vmatprep.subr.bf16.mxu0 0
        %1338 = vmatpush1.bf16.msra.mxu0 0
        %1339 = vmatprep.subr.bf16.mxu0 0
        %1340 = vmatpush1.bf16.msra.mxu0 0
        %1341 = vmatprep.subr.bf16.mxu0 0
        %1342 = vmatpush1.bf16.msra.mxu0 0
        %1343 = vmatprep.subr.bf16.mxu0 0
        %1344 = vmatpush1.bf16.msra.mxu0 0
        %1345 = vmatprep.subr.bf16.mxu0 0
        %1346 = vmatpush1.bf16.msra.mxu0 0
        %1347 = vmatprep.mubr.bf16.mxu0 0
        %1348 = vmatmul.mubr.bf16.gmra.mrb[0].mxu0 %v1265
        %v1349 = vpop.f32.mrb[0].mxu0
        %v1350 = vadd.f32 %v1090, %v1349
        %v1351 = vpop.f32.mrb[0].mxu0
        %v1352 = vpop.f32.mrb[0].mxu0
        %v1353 = vadd.f32 %v1093, %v1352
        %v1354 = vpop.f32.mrb[0].mxu0
        %1355 = vmatprep.mubr.bf16.mxu0 0
        %1356 = vmatmul.mubr.bf16.gmra.mrb[0].mxu0 %v1268
        %v1357 = vpop.f32.mrb[0].mxu0
        %v1358 = vadd.f32 %v1098, %v1357
        %v1359 = vpop.f32.mrb[0].mxu0
        %v1360 = vpop.f32.mrb[0].mxu0
        %v1361 = vadd.f32 %v1101, %v1360
        %v1362 = vpop.f32.mrb[0].mxu0
        %1363 = vmatprep.mubr.bf16.mxu0 0
        %1364 = vmatmul.mubr.bf16.gmra.mrb[0].mxu0 %v1271
        %v1365 = vpop.f32.mrb[0].mxu0
        %v1366 = vadd.f32 %v1106, %v1365
        %v1367 = vpop.f32.mrb[0].mxu0
        %v1368 = vpop.f32.mrb[0].mxu0
        %v1369 = vadd.f32 %v1109, %v1368
        %v1370 = vpop.f32.mrb[0].mxu0
        %1371 = vmatprep.mubr.bf16.mxu0 0
        %1372 = vmatmul.mubr.bf16.gmra.mrb[0].mxu0 %v1274
        %v1373 = vpop.f32.mrb[0].mxu0
        %v1374 = vadd.f32 %v1114, %v1373
        %v1375 = vpop.f32.mrb[0].mxu0
        %v1376 = vpop.f32.mrb[0].mxu0
        %v1377 = vadd.f32 %v1117, %v1376
        %v1378 = vpop.f32.mrb[0].mxu0
        %1379 = vmatprep.mubr.bf16.mxu0 0
        %1380 = vmatmul.mubr.bf16.gmra.mrb[0].mxu0 %v1277
        %v1381 = vpop.f32.mrb[0].mxu0
        %v1382 = vadd.f32 %v1122, %v1381
        %v1383 = vpop.f32.mrb[0].mxu0
        %v1384 = vpop.f32.mrb[0].mxu0
        %v1385 = vadd.f32 %v1125, %v1384
        %v1386 = vpop.f32.mrb[0].mxu0
        %1387 = vmatprep.mubr.bf16.mxu0 0
        %1388 = vmatmul.mubr.bf16.gmra.mrb[0].mxu0 %v1280
        %v1389 = vpop.f32.mrb[0].mxu0
        %v1390 = vadd.f32 %v1130, %v1389
        %v1391 = vpop.f32.mrb[0].mxu0
        %v1392 = vpop.f32.mrb[0].mxu0
        %v1393 = vadd.f32 %v1133, %v1392
        %v1394 = vpop.f32.mrb[0].mxu0
        %1395 = vmatprep.mubr.bf16.mxu0 0
        %1396 = vmatmul.mubr.bf16.gmra.mrb[0].mxu0 %v1283
        %v1397 = vpop.f32.mrb[0].mxu0
        %v1398 = vadd.f32 %v1138, %v1397
        %v1399 = vpop.f32.mrb[0].mxu0
        %v1400 = vpop.f32.mrb[0].mxu0
        %v1401 = vadd.f32 %v1141, %v1400
        %v1402 = vpop.f32.mrb[0].mxu0
        %1403 = vmatprep.mubr.bf16.mxu0 0
        %1404 = vmatmul.mubr.bf16.gmra.mrb[0].mxu0 %v1286
        %v1405 = vpop.f32.mrb[0].mxu0
        %v1406 = vadd.f32 %v1146, %v1405
        %v1407 = vpop.f32.mrb[0].mxu0
        %v1408 = vpop.f32.mrb[0].mxu0
        %v1409 = vadd.f32 %v1149, %v1408
        %v1410 = vpop.f32.mrb[0].mxu0
        %1411 = vmatprep.mubr.bf16.mxu0 0
        %1412 = vmatmul.mubr.bf16.gmra.mrb[0].mxu0 %v1289
        %v1413 = vpop.f32.mrb[0].mxu0
        %v1414 = vadd.f32 %v1154, %v1413
        %v1415 = vpop.f32.mrb[0].mxu0
        %v1416 = vpop.f32.mrb[0].mxu0
        %v1417 = vadd.f32 %v1157, %v1416
        %v1418 = vpop.f32.mrb[0].mxu0
        %1419 = vmatprep.mubr.bf16.mxu0 0
        %1420 = vmatmul.mubr.bf16.gmra.mrb[0].mxu0 %v1292
        %v1421 = vpop.f32.mrb[0].mxu0
        %v1422 = vadd.f32 %v1162, %v1421
        %v1423 = vpop.f32.mrb[0].mxu0
        %v1424 = vpop.f32.mrb[0].mxu0
        %v1425 = vadd.f32 %v1165, %v1424
        %v1426 = vpop.f32.mrb[0].mxu0
        %1427 = vmatprep.mubr.bf16.mxu0 0
        %1428 = vmatmul.mubr.bf16.gmra.mrb[0].mxu0 %v1295
        %v1429 = vpop.f32.mrb[0].mxu0
        %v1430 = vadd.f32 %v1170, %v1429
        %v1431 = vpop.f32.mrb[0].mxu0
        %v1432 = vpop.f32.mrb[0].mxu0
        %v1433 = vadd.f32 %v1173, %v1432
        %v1434 = vpop.f32.mrb[0].mxu0
        %1435 = vmatprep.mubr.bf16.mxu0 0
        %1436 = vmatmul.mubr.bf16.gmra.mrb[0].mxu0 %v1298
        %v1437 = vpop.f32.mrb[0].mxu0
        %v1438 = vadd.f32 %v1178, %v1437
        %v1439 = vpop.f32.mrb[0].mxu0
        %v1440 = vpop.f32.mrb[0].mxu0
        %v1441 = vadd.f32 %v1181, %v1440
        %v1442 = vpop.f32.mrb[0].mxu0
        %1443 = vmatprep.mubr.bf16.mxu0 0
        %1444 = vmatmul.mubr.bf16.gmra.mrb[0].mxu0 %v1301
        %v1445 = vpop.f32.mrb[0].mxu0
        %v1446 = vadd.f32 %v1186, %v1445
        %v1447 = vpop.f32.mrb[0].mxu0
        %v1448 = vpop.f32.mrb[0].mxu0
        %v1449 = vadd.f32 %v1189, %v1448
        %v1450 = vpop.f32.mrb[0].mxu0
        %1451 = vmatprep.mubr.bf16.mxu0 0
        %1452 = vmatmul.mubr.bf16.gmra.mrb[0].mxu0 %v1304
        %v1453 = vpop.f32.mrb[0].mxu0
        %v1454 = vadd.f32 %v1194, %v1453
        %v1455 = vpop.f32.mrb[0].mxu0
        %v1456 = vpop.f32.mrb[0].mxu0
        %v1457 = vadd.f32 %v1197, %v1456
        %v1458 = vpop.f32.mrb[0].mxu0
        %1459 = vmatprep.mubr.bf16.mxu0 0
        %1460 = vmatmul.mubr.bf16.gmra.mrb[0].mxu0 %v1307
        %v1461 = vpop.f32.mrb[0].mxu0
        %v1462 = vadd.f32 %v1202, %v1461
        %v1463 = vpop.f32.mrb[0].mxu0
        %v1464 = vpop.f32.mrb[0].mxu0
        %v1465 = vadd.f32 %v1205, %v1464
        %v1466 = vpop.f32.mrb[0].mxu0
        %1467 = vmatprep.mubr.bf16.mxu0 0
        %1468 = vmatmul.mubr.bf16.gmra.mrb[0].mxu0 %v1310
        %v1469 = vpop.f32.mrb[0].mxu0
        %v1470 = vadd.f32 %v1210, %v1469
        %v1471 = vpop.f32.mrb[0].mxu0
        %v1472 = vpop.f32.mrb[0].mxu0
        %v1473 = vadd.f32 %v1213, %v1472
        %v1474 = vpop.f32.mrb[0].mxu0
        %1475 = vdwg.mxu0
        %v1476 = vld [vmem:[#allocation2 + $0x4] sm:$0xf]
        %v1477 = vld [vmem:[#allocation2 + $0x8] sm:$0xf]
        %v1478 = vld [vmem:[#allocation2 + $0xc] sm:$0x1]
        %v1479 = vld [vmem:[#allocation2 + $0x14] sm:$0xf]
        %v1480 = vld [vmem:[#allocation2 + $0x18] sm:$0xf]
        %v1481 = vld [vmem:[#allocation2 + $0x1c] sm:$0x1]
        %v1482 = vld [vmem:[#allocation2 + $0x24] sm:$0xf]
        %v1483 = vld [vmem:[#allocation2 + $0x28] sm:$0xf]
        %v1484 = vld [vmem:[#allocation2 + $0x2c] sm:$0x1]
        %v1485 = vld [vmem:[#allocation2 + $0x34] sm:$0xf]
        %v1486 = vld [vmem:[#allocation2 + $0x38] sm:$0xf]
        %v1487 = vld [vmem:[#allocation2 + $0x3c] sm:$0x1]
        %v1488 = vld [vmem:[#allocation2 + $0x44] sm:$0xf]
        %v1489 = vld [vmem:[#allocation2 + $0x48] sm:$0xf]
        %v1490 = vld [vmem:[#allocation2 + $0x4c] sm:$0x1]
        %v1491 = vld [vmem:[#allocation2 + $0x54] sm:$0xf]
        %v1492 = vld [vmem:[#allocation2 + $0x58] sm:$0xf]
        %v1493 = vld [vmem:[#allocation2 + $0x5c] sm:$0x1]
        %v1494 = vld [vmem:[#allocation2 + $0x64] sm:$0xf]
        %v1495 = vld [vmem:[#allocation2 + $0x68] sm:$0xf]
        %v1496 = vld [vmem:[#allocation2 + $0x6c] sm:$0x1]
        %v1497 = vld [vmem:[#allocation2 + $0x74] sm:$0xf]
        %v1498 = vld [vmem:[#allocation2 + $0x78] sm:$0xf]
        %v1499 = vld [vmem:[#allocation2 + $0x7c] sm:$0x1]
        %v1500 = vld [vmem:[#allocation2 + $0x84] sm:$0xf]
        %v1501 = vld [vmem:[#allocation2 + $0x88] sm:$0xf]
        %v1502 = vld [vmem:[#allocation2 + $0x8c] sm:$0x1]
        %v1503 = vld [vmem:[#allocation2 + $0x94] sm:$0xf]
        %v1504 = vld [vmem:[#allocation2 + $0x98] sm:$0xf]
        %v1505 = vld [vmem:[#allocation2 + $0x9c] sm:$0x1]
        %v1506 = vld [vmem:[#allocation2 + $0xa4] sm:$0xf]
        %v1507 = vld [vmem:[#allocation2 + $0xa8] sm:$0xf]
        %v1508 = vld [vmem:[#allocation2 + $0xac] sm:$0x1]
        %v1509 = vld [vmem:[#allocation2 + $0xb4] sm:$0xf]
        %v1510 = vld [vmem:[#allocation2 + $0xb8] sm:$0xf]
        %v1511 = vld [vmem:[#allocation2 + $0xbc] sm:$0x1]
        %v1512 = vld [vmem:[#allocation2 + $0xc4] sm:$0xf]
        %v1513 = vld [vmem:[#allocation2 + $0xc8] sm:$0xf]
        %v1514 = vld [vmem:[#allocation2 + $0xcc] sm:$0x1]
        %v1515 = vld [vmem:[#allocation2 + $0xd4] sm:$0xf]
        %v1516 = vld [vmem:[#allocation2 + $0xd8] sm:$0xf]
        %v1517 = vld [vmem:[#allocation2 + $0xdc] sm:$0x1]
        %v1518 = vld [vmem:[#allocation2 + $0xe4] sm:$0xf]
        %v1519 = vld [vmem:[#allocation2 + $0xe8] sm:$0xf]
        %v1520 = vld [vmem:[#allocation2 + $0xec] sm:$0x1]
        %v1521 = vld [vmem:[#allocation2 + $0xf4] sm:$0xf]
        %v1522 = vld [vmem:[#allocation2 + $0xf8] sm:$0xf]
        %v1523 = vld [vmem:[#allocation2 + $0xfc] sm:$0x1]
        %vm1524 = vsmask.f32 3328
        %vm1525 = vsmask.f32 7440
        %vm1526 = vmor %vm1524, %vm1525
        %v1528 = vshrl.u32 %v1476, 16
        %v1530 = vrot.slane %v1528, 4
        %v1531 = vshll.u32 %v1476, 16
        %v1533 = vrot.slane %v1531, 5
        %v1534 = vor.u32 %v1530, %v1533
        %v1535 = vrot.slane %v1534, 4
        %v1537 = vshll.u32 %v1477, 16
        %v1539 = vrot.slane %v1537, 5
        %v1540 = vsel %vm1526, %v1535, %v1539
        %v1541 = vshrl.u32 %v1477, 16
        %v1543 = vrot.slane %v1541, 4
        %v1544 = vor.u32 %v1543, %v1539
        %v1545 = vrot.slane %v1544, 4
        %v1547 = vshll.u32 %v1478, 16
        %v1549 = vrot.slane %v1547, 5
        %v1550 = vsel %vm1526, %v1545, %v1549
        %v1552 = vshrl.u32 %v1479, 16
        %v1554 = vrot.slane %v1552, 4
        %v1555 = vshll.u32 %v1479, 16
        %v1557 = vrot.slane %v1555, 5
        %v1558 = vor.u32 %v1554, %v1557
        %v1559 = vrot.slane %v1558, 4
        %v1561 = vshll.u32 %v1480, 16
        %v1563 = vrot.slane %v1561, 5
        %v1564 = vsel %vm1526, %v1559, %v1563
        %v1565 = vshrl.u32 %v1480, 16
        %v1567 = vrot.slane %v1565, 4
        %v1568 = vor.u32 %v1567, %v1563
        %v1569 = vrot.slane %v1568, 4
        %v1571 = vshll.u32 %v1481, 16
        %v1573 = vrot.slane %v1571, 5
        %v1574 = vsel %vm1526, %v1569, %v1573
        %v1576 = vshrl.u32 %v1482, 16
        %v1578 = vrot.slane %v1576, 4
        %v1579 = vshll.u32 %v1482, 16
        %v1581 = vrot.slane %v1579, 5
        %v1582 = vor.u32 %v1578, %v1581
        %v1583 = vrot.slane %v1582, 4
        %v1585 = vshll.u32 %v1483, 16
        %v1587 = vrot.slane %v1585, 5
        %v1588 = vsel %vm1526, %v1583, %v1587
        %v1589 = vshrl.u32 %v1483, 16
        %v1591 = vrot.slane %v1589, 4
        %v1592 = vor.u32 %v1591, %v1587
        %v1593 = vrot.slane %v1592, 4
        %v1595 = vshll.u32 %v1484, 16
        %v1597 = vrot.slane %v1595, 5
        %v1598 = vsel %vm1526, %v1593, %v1597
        %v1600 = vshrl.u32 %v1485, 16
        %v1602 = vrot.slane %v1600, 4
        %v1603 = vshll.u32 %v1485, 16
        %v1605 = vrot.slane %v1603, 5
        %v1606 = vor.u32 %v1602, %v1605
        %v1607 = vrot.slane %v1606, 4
        %v1609 = vshll.u32 %v1486, 16
        %v1611 = vrot.slane %v1609, 5
        %v1612 = vsel %vm1526, %v1607, %v1611
        %v1613 = vshrl.u32 %v1486, 16
        %v1615 = vrot.slane %v1613, 4
        %v1616 = vor.u32 %v1615, %v1611
        %v1617 = vrot.slane %v1616, 4
        %v1619 = vshll.u32 %v1487, 16
        %v1621 = vrot.slane %v1619, 5
        %v1622 = vsel %vm1526, %v1617, %v1621
        %v1624 = vshrl.u32 %v1488, 16
        %v1626 = vrot.slane %v1624, 4
        %v1627 = vshll.u32 %v1488, 16
        %v1629 = vrot.slane %v1627, 5
        %v1630 = vor.u32 %v1626, %v1629
        %v1631 = vrot.slane %v1630, 4
        %v1633 = vshll.u32 %v1489, 16
        %v1635 = vrot.slane %v1633, 5
        %v1636 = vsel %vm1526, %v1631, %v1635
        %v1637 = vshrl.u32 %v1489, 16
        %v1639 = vrot.slane %v1637, 4
        %v1640 = vor.u32 %v1639, %v1635
        %v1641 = vrot.slane %v1640, 4
        %v1643 = vshll.u32 %v1490, 16
        %v1645 = vrot.slane %v1643, 5
        %v1646 = vsel %vm1526, %v1641, %v1645
        %v1648 = vshrl.u32 %v1491, 16
        %v1650 = vrot.slane %v1648, 4
        %v1651 = vshll.u32 %v1491, 16
        %v1653 = vrot.slane %v1651, 5
        %v1654 = vor.u32 %v1650, %v1653
        %v1655 = vrot.slane %v1654, 4
        %v1657 = vshll.u32 %v1492, 16
        %v1659 = vrot.slane %v1657, 5
        %v1660 = vsel %vm1526, %v1655, %v1659
        %v1661 = vshrl.u32 %v1492, 16
        %v1663 = vrot.slane %v1661, 4
        %v1664 = vor.u32 %v1663, %v1659
        %v1665 = vrot.slane %v1664, 4
        %v1667 = vshll.u32 %v1493, 16
        %v1669 = vrot.slane %v1667, 5
        %v1670 = vsel %vm1526, %v1665, %v1669
        %v1672 = vshrl.u32 %v1494, 16
        %v1674 = vrot.slane %v1672, 4
        %v1675 = vshll.u32 %v1494, 16
        %v1677 = vrot.slane %v1675, 5
        %v1678 = vor.u32 %v1674, %v1677
        %v1679 = vrot.slane %v1678, 4
        %v1681 = vshll.u32 %v1495, 16
        %v1683 = vrot.slane %v1681, 5
        %v1684 = vsel %vm1526, %v1679, %v1683
        %v1685 = vshrl.u32 %v1495, 16
        %v1687 = vrot.slane %v1685, 4
        %v1688 = vor.u32 %v1687, %v1683
        %v1689 = vrot.slane %v1688, 4
        %v1691 = vshll.u32 %v1496, 16
        %v1693 = vrot.slane %v1691, 5
        %v1694 = vsel %vm1526, %v1689, %v1693
        %v1696 = vshrl.u32 %v1497, 16
        %v1698 = vrot.slane %v1696, 4
        %v1699 = vshll.u32 %v1497, 16
        %v1701 = vrot.slane %v1699, 5
        %v1702 = vor.u32 %v1698, %v1701
        %v1703 = vrot.slane %v1702, 4
        %v1705 = vshll.u32 %v1498, 16
        %v1707 = vrot.slane %v1705, 5
        %v1708 = vsel %vm1526, %v1703, %v1707
        %v1709 = vshrl.u32 %v1498, 16
        %v1711 = vrot.slane %v1709, 4
        %v1712 = vor.u32 %v1711, %v1707
        %v1713 = vrot.slane %v1712, 4
        %v1715 = vshll.u32 %v1499, 16
        %v1717 = vrot.slane %v1715, 5
        %v1718 = vsel %vm1526, %v1713, %v1717
        %v1720 = vshrl.u32 %v1500, 16
        %v1722 = vrot.slane %v1720, 4
        %v1723 = vshll.u32 %v1500, 16
        %v1725 = vrot.slane %v1723, 5
        %v1726 = vor.u32 %v1722, %v1725
        %v1727 = vrot.slane %v1726, 4
        %v1729 = vshll.u32 %v1501, 16
        %v1731 = vrot.slane %v1729, 5
        %v1732 = vsel %vm1526, %v1727, %v1731
        %v1733 = vshrl.u32 %v1501, 16
        %v1735 = vrot.slane %v1733, 4
        %v1736 = vor.u32 %v1735, %v1731
        %v1737 = vrot.slane %v1736, 4
        %v1739 = vshll.u32 %v1502, 16
        %v1741 = vrot.slane %v1739, 5
        %v1742 = vsel %vm1526, %v1737, %v1741
        %v1744 = vshrl.u32 %v1503, 16
        %v1746 = vrot.slane %v1744, 4
        %v1747 = vshll.u32 %v1503, 16
        %v1749 = vrot.slane %v1747, 5
        %v1750 = vor.u32 %v1746, %v1749
        %v1751 = vrot.slane %v1750, 4
        %v1753 = vshll.u32 %v1504, 16
        %v1755 = vrot.slane %v1753, 5
        %v1756 = vsel %vm1526, %v1751, %v1755
        %v1757 = vshrl.u32 %v1504, 16
        %v1759 = vrot.slane %v1757, 4
        %v1760 = vor.u32 %v1759, %v1755
        %v1761 = vrot.slane %v1760, 4
        %v1763 = vshll.u32 %v1505, 16
        %v1765 = vrot.slane %v1763, 5
        %v1766 = vsel %vm1526, %v1761, %v1765
        %v1768 = vshrl.u32 %v1506, 16
        %v1770 = vrot.slane %v1768, 4
        %v1771 = vshll.u32 %v1506, 16
        %v1773 = vrot.slane %v1771, 5
        %v1774 = vor.u32 %v1770, %v1773
        %v1775 = vrot.slane %v1774, 4
        %v1777 = vshll.u32 %v1507, 16
        %v1779 = vrot.slane %v1777, 5
        %v1780 = vsel %vm1526, %v1775, %v1779
        %v1781 = vshrl.u32 %v1507, 16
        %v1783 = vrot.slane %v1781, 4
        %v1784 = vor.u32 %v1783, %v1779
        %v1785 = vrot.slane %v1784, 4
        %v1787 = vshll.u32 %v1508, 16
        %v1789 = vrot.slane %v1787, 5
        %v1790 = vsel %vm1526, %v1785, %v1789
        %v1792 = vshrl.u32 %v1509, 16
        %v1794 = vrot.slane %v1792, 4
        %v1795 = vshll.u32 %v1509, 16
        %v1797 = vrot.slane %v1795, 5
        %v1798 = vor.u32 %v1794, %v1797
        %v1799 = vrot.slane %v1798, 4
        %v1801 = vshll.u32 %v1510, 16
        %v1803 = vrot.slane %v1801, 5
        %v1804 = vsel %vm1526, %v1799, %v1803
        %v1805 = vshrl.u32 %v1510, 16
        %v1807 = vrot.slane %v1805, 4
        %v1808 = vor.u32 %v1807, %v1803
        %v1809 = vrot.slane %v1808, 4
        %v1811 = vshll.u32 %v1511, 16
        %v1813 = vrot.slane %v1811, 5
        %v1814 = vsel %vm1526, %v1809, %v1813
        %v1816 = vshrl.u32 %v1512, 16
        %v1818 = vrot.slane %v1816, 4
        %v1819 = vshll.u32 %v1512, 16
        %v1821 = vrot.slane %v1819, 5
        %v1822 = vor.u32 %v1818, %v1821
        %v1823 = vrot.slane %v1822, 4
        %v1825 = vshll.u32 %v1513, 16
        %v1827 = vrot.slane %v1825, 5
        %v1828 = vsel %vm1526, %v1823, %v1827
        %v1829 = vshrl.u32 %v1513, 16
        %v1831 = vrot.slane %v1829, 4
        %v1832 = vor.u32 %v1831, %v1827
        %v1833 = vrot.slane %v1832, 4
        %v1835 = vshll.u32 %v1514, 16
        %v1837 = vrot.slane %v1835, 5
        %v1838 = vsel %vm1526, %v1833, %v1837
        %v1840 = vshrl.u32 %v1515, 16
        %v1842 = vrot.slane %v1840, 4
        %v1843 = vshll.u32 %v1515, 16
        %v1845 = vrot.slane %v1843, 5
        %v1846 = vor.u32 %v1842, %v1845
        %v1847 = vrot.slane %v1846, 4
        %v1849 = vshll.u32 %v1516, 16
        %v1851 = vrot.slane %v1849, 5
        %v1852 = vsel %vm1526, %v1847, %v1851
        %v1853 = vshrl.u32 %v1516, 16
        %v1855 = vrot.slane %v1853, 4
        %v1856 = vor.u32 %v1855, %v1851
        %v1857 = vrot.slane %v1856, 4
        %v1859 = vshll.u32 %v1517, 16
        %v1861 = vrot.slane %v1859, 5
        %v1862 = vsel %vm1526, %v1857, %v1861
        %v1864 = vshrl.u32 %v1518, 16
        %v1866 = vrot.slane %v1864, 4
        %v1867 = vshll.u32 %v1518, 16
        %v1869 = vrot.slane %v1867, 5
        %v1870 = vor.u32 %v1866, %v1869
        %v1871 = vrot.slane %v1870, 4
        %v1873 = vshll.u32 %v1519, 16
        %v1875 = vrot.slane %v1873, 5
        %v1876 = vsel %vm1526, %v1871, %v1875
        %v1877 = vshrl.u32 %v1519, 16
        %v1879 = vrot.slane %v1877, 4
        %v1880 = vor.u32 %v1879, %v1875
        %v1881 = vrot.slane %v1880, 4
        %v1883 = vshll.u32 %v1520, 16
        %v1885 = vrot.slane %v1883, 5
        %v1886 = vsel %vm1526, %v1881, %v1885
        %v1888 = vshrl.u32 %v1521, 16
        %v1890 = vrot.slane %v1888, 4
        %v1891 = vshll.u32 %v1521, 16
        %v1893 = vrot.slane %v1891, 5
        %v1894 = vor.u32 %v1890, %v1893
        %v1895 = vrot.slane %v1894, 4
        %v1897 = vshll.u32 %v1522, 16
        %v1899 = vrot.slane %v1897, 5
        %v1900 = vsel %vm1526, %v1895, %v1899
        %v1901 = vshrl.u32 %v1522, 16
        %v1903 = vrot.slane %v1901, 4
        %v1904 = vor.u32 %v1903, %v1899
        %v1905 = vrot.slane %v1904, 4
        %v1907 = vshll.u32 %v1523, 16
        %v1909 = vrot.slane %v1907, 5
        %v1910 = vsel %vm1526, %v1905, %v1909
        %s1911 = scalar_lea.vmem [#allocation8], 8
        %v1912 = vld [vmem:[%s1911] sm:$0xf]
        %v1913 = vunpack.c.l.b16 %v1540
        %v1914 = vunpack.c.l.b16 %v1550
        %v1915 = vunpack.c.l.b16 %v1564
        %v1916 = vunpack.c.l.b16 %v1574
        %v1917 = vunpack.c.l.b16 %v1588
        %v1918 = vunpack.c.l.b16 %v1598
        %v1919 = vunpack.c.l.b16 %v1612
        %v1920 = vunpack.c.l.b16 %v1622
        %v1921 = vunpack.c.l.b16 %v1636
        %v1922 = vunpack.c.l.b16 %v1646
        %v1923 = vunpack.c.l.b16 %v1660
        %v1924 = vunpack.c.l.b16 %v1670
        %v1925 = vunpack.c.l.b16 %v1684
        %v1926 = vunpack.c.l.b16 %v1694
        %v1927 = vunpack.c.l.b16 %v1708
        %v1928 = vunpack.c.l.b16 %v1718
        %v1929 = vunpack.c.l.b16 %v1732
        %v1930 = vunpack.c.l.b16 %v1742
        %v1931 = vunpack.c.l.b16 %v1756
        %v1932 = vunpack.c.l.b16 %v1766
        %v1933 = vunpack.c.l.b16 %v1780
        %v1934 = vunpack.c.l.b16 %v1790
        %v1935 = vunpack.c.l.b16 %v1804
        %v1936 = vunpack.c.l.b16 %v1814
        %v1937 = vunpack.c.l.b16 %v1828
        %v1938 = vunpack.c.l.b16 %v1838
        %v1939 = vunpack.c.l.b16 %v1852
        %v1940 = vunpack.c.l.b16 %v1862
        %v1941 = vunpack.c.l.b16 %v1876
        %v1942 = vunpack.c.l.b16 %v1886
        %v1943 = vunpack.c.l.b16 %v1900
        %v1944 = vunpack.c.l.b16 %v1910
        %v1945 = vpack.c.b16 %v1914, %v1913
        %v1946 = vpack.c.b16 %v1916, %v1915
        %v1947 = vpack.c.b16 %v1918, %v1917
        %v1948 = vpack.c.b16 %v1920, %v1919
        %v1949 = vpack.c.b16 %v1922, %v1921
        %v1950 = vpack.c.b16 %v1924, %v1923
        %v1951 = vpack.c.b16 %v1926, %v1925
        %v1952 = vpack.c.b16 %v1928, %v1927
        %v1953 = vpack.c.b16 %v1930, %v1929
        %v1954 = vpack.c.b16 %v1932, %v1931
        %v1955 = vpack.c.b16 %v1934, %v1933
        %v1956 = vpack.c.b16 %v1936, %v1935
        %v1957 = vpack.c.b16 %v1938, %v1937
        %v1958 = vpack.c.b16 %v1940, %v1939
        %v1959 = vpack.c.b16 %v1942, %v1941
        %v1960 = vpack.c.b16 %v1944, %v1943
        %v1962 = vsel %vm1002, %v1945, 0
        %v1965 = vsel %vm1002, %v1946, 0
        %v1968 = vsel %vm1002, %v1947, 0
        %v1971 = vsel %vm1002, %v1948, 0
        %v1974 = vsel %vm1002, %v1949, 0
        %v1977 = vsel %vm1002, %v1950, 0
        %v1980 = vsel %vm1002, %v1951, 0
        %v1983 = vsel %vm1002, %v1952, 0
        %v1986 = vsel %vm1002, %v1953, 0
        %v1989 = vsel %vm1002, %v1954, 0
        %v1992 = vsel %vm1002, %v1955, 0
        %v1995 = vsel %vm1002, %v1956, 0
        %v1998 = vsel %vm1002, %v1957, 0
        %v2001 = vsel %vm1002, %v1958, 0
        %v2004 = vsel %vm1002, %v1959, 0
        %v2007 = vsel %vm1002, %v1960, 0
        %v2010 = vsel %vm1051, %v1912, 0
        %2012 = vmatprep.subr.bf16.mxu0 0
        %2013 = vmatpush1.bf16.msra.mxu0 %v2010
        %2014 = vmatprep.subr.bf16.mxu0 0
        %2015 = vmatpush1.bf16.msra.mxu0 0
        %2016 = vmatprep.subr.bf16.mxu0 0
        %2017 = vmatpush1.bf16.msra.mxu0 0
        %2018 = vmatprep.subr.bf16.mxu0 0
        %2019 = vmatpush1.bf16.msra.mxu0 0
        %2020 = vmatprep.subr.bf16.mxu0 0
        %2021 = vmatpush1.bf16.msra.mxu0 0
        %2022 = vmatprep.subr.bf16.mxu0 0
        %2023 = vmatpush1.bf16.msra.mxu0 0
        %2024 = vmatprep.subr.bf16.mxu0 0
        %2025 = vmatpush1.bf16.msra.mxu0 0
        %2026 = vmatprep.subr.bf16.mxu0 0
        %2027 = vmatpush1.bf16.msra.mxu0 0
        %2028 = vmatprep.subr.bf16.mxu0 0
        %2029 = vmatpush1.bf16.msra.mxu0 0
        %2030 = vmatprep.subr.bf16.mxu0 0
        %2031 = vmatpush1.bf16.msra.mxu0 0
        %2032 = vmatprep.subr.bf16.mxu0 0
        %2033 = vmatpush1.bf16.msra.mxu0 0
        %2034 = vmatprep.subr.bf16.mxu0 0
        %2035 = vmatpush1.bf16.msra.mxu0 0
        %2036 = vmatprep.subr.bf16.mxu0 0
        %2037 = vmatpush1.bf16.msra.mxu0 0
        %2038 = vmatprep.subr.bf16.mxu0 0
        %2039 = vmatpush1.bf16.msra.mxu0 0
        %2040 = vmatprep.subr.bf16.mxu0 0
        %2041 = vmatpush1.bf16.msra.mxu0 0
        %2042 = vmatprep.subr.bf16.mxu0 0
        %2043 = vmatpush1.bf16.msra.mxu0 0
        %2044 = vmatprep.mubr.bf16.mxu0 0
        %2045 = vmatmul.mubr.bf16.gmra.mrb[0].mxu0 %v1962
        %v2046 = vpop.f32.mrb[0].mxu0
        %v2047 = vadd.f32 0.0, %v2046
        %v2048 = vpop.f32.mrb[0].mxu0
        %v2049 = vpop.f32.mrb[0].mxu0
        %v2050 = vadd.f32 0.0, %v2049
        %v2051 = vpop.f32.mrb[0].mxu0
        %2052 = vmatprep.mubr.bf16.mxu0 0
        %2053 = vmatmul.mubr.bf16.gmra.mrb[0].mxu0 %v1965
        %v2054 = vpop.f32.mrb[0].mxu0
        %v2055 = vadd.f32 0.0, %v2054
        %v2056 = vpop.f32.mrb[0].mxu0
        %v2057 = vpop.f32.mrb[0].mxu0
        %v2058 = vadd.f32 0.0, %v2057
        %v2059 = vpop.f32.mrb[0].mxu0
        %2060 = vmatprep.mubr.bf16.mxu0 0
        %2061 = vmatmul.mubr.bf16.gmra.mrb[0].mxu0 %v1968
        %v2062 = vpop.f32.mrb[0].mxu0
        %v2063 = vadd.f32 0.0, %v2062
        %v2064 = vpop.f32.mrb[0].mxu0
        %v2065 = vpop.f32.mrb[0].mxu0
        %v2066 = vadd.f32 0.0, %v2065
        %v2067 = vpop.f32.mrb[0].mxu0
        %2068 = vmatprep.mubr.bf16.mxu0 0
        %2069 = vmatmul.mubr.bf16.gmra.mrb[0].mxu0 %v1971
        %v2070 = vpop.f32.mrb[0].mxu0
        %v2071 = vadd.f32 0.0, %v2070
        %v2072 = vpop.f32.mrb[0].mxu0
        %v2073 = vpop.f32.mrb[0].mxu0
        %v2074 = vadd.f32 0.0, %v2073
        %v2075 = vpop.f32.mrb[0].mxu0
        %2076 = vmatprep.mubr.bf16.mxu0 0
        %2077 = vmatmul.mubr.bf16.gmra.mrb[0].mxu0 %v1974
        %v2078 = vpop.f32.mrb[0].mxu0
        %v2079 = vadd.f32 0.0, %v2078
        %v2080 = vpop.f32.mrb[0].mxu0
        %v2081 = vpop.f32.mrb[0].mxu0
        %v2082 = vadd.f32 0.0, %v2081
        %v2083 = vpop.f32.mrb[0].mxu0
        %2084 = vmatprep.mubr.bf16.mxu0 0
        %2085 = vmatmul.mubr.bf16.gmra.mrb[0].mxu0 %v1977
        %v2086 = vpop.f32.mrb[0].mxu0
        %v2087 = vadd.f32 0.0, %v2086
        %v2088 = vpop.f32.mrb[0].mxu0
        %v2089 = vpop.f32.mrb[0].mxu0
        %v2090 = vadd.f32 0.0, %v2089
        %v2091 = vpop.f32.mrb[0].mxu0
        %2092 = vmatprep.mubr.bf16.mxu0 0
        %2093 = vmatmul.mubr.bf16.gmra.mrb[0].mxu0 %v1980
        %v2094 = vpop.f32.mrb[0].mxu0
        %v2095 = vadd.f32 0.0, %v2094
        %v2096 = vpop.f32.mrb[0].mxu0
        %v2097 = vpop.f32.mrb[0].mxu0
        %v2098 = vadd.f32 0.0, %v2097
        %v2099 = vpop.f32.mrb[0].mxu0
        %2100 = vmatprep.mubr.bf16.mxu0 0
        %2101 = vmatmul.mubr.bf16.gmra.mrb[0].mxu0 %v1983
        %v2102 = vpop.f32.mrb[0].mxu0
        %v2103 = vadd.f32 0.0, %v2102
        %v2104 = vpop.f32.mrb[0].mxu0
        %v2105 = vpop.f32.mrb[0].mxu0
        %v2106 = vadd.f32 0.0, %v2105
        %v2107 = vpop.f32.mrb[0].mxu0
        %2108 = vmatprep.mubr.bf16.mxu0 0
        %2109 = vmatmul.mubr.bf16.gmra.mrb[0].mxu0 %v1986
        %v2110 = vpop.f32.mrb[0].mxu0
        %v2111 = vadd.f32 0.0, %v2110
        %v2112 = vpop.f32.mrb[0].mxu0
        %v2113 = vpop.f32.mrb[0].mxu0
        %v2114 = vadd.f32 0.0, %v2113
        %v2115 = vpop.f32.mrb[0].mxu0
        %2116 = vmatprep.mubr.bf16.mxu0 0
        %2117 = vmatmul.mubr.bf16.gmra.mrb[0].mxu0 %v1989
        %v2118 = vpop.f32.mrb[0].mxu0
        %v2119 = vadd.f32 0.0, %v2118
        %v2120 = vpop.f32.mrb[0].mxu0
        %v2121 = vpop.f32.mrb[0].mxu0
        %v2122 = vadd.f32 0.0, %v2121
        %v2123 = vpop.f32.mrb[0].mxu0
        %2124 = vmatprep.mubr.bf16.mxu0 0
        %2125 = vmatmul.mubr.bf16.gmra.mrb[0].mxu0 %v1992
        %v2126 = vpop.f32.mrb[0].mxu0
        %v2127 = vadd.f32 0.0, %v2126
        %v2128 = vpop.f32.mrb[0].mxu0
        %v2129 = vpop.f32.mrb[0].mxu0
        %v2130 = vadd.f32 0.0, %v2129
        %v2131 = vpop.f32.mrb[0].mxu0
        %2132 = vmatprep.mubr.bf16.mxu0 0
        %2133 = vmatmul.mubr.bf16.gmra.mrb[0].mxu0 %v1995
        %v2134 = vpop.f32.mrb[0].mxu0
        %v2135 = vadd.f32 0.0, %v2134
        %v2136 = vpop.f32.mrb[0].mxu0
        %v2137 = vpop.f32.mrb[0].mxu0
        %v2138 = vadd.f32 0.0, %v2137
        %v2139 = vpop.f32.mrb[0].mxu0
        %2140 = vmatprep.mubr.bf16.mxu0 0
        %2141 = vmatmul.mubr.bf16.gmra.mrb[0].mxu0 %v1998
        %v2142 = vpop.f32.mrb[0].mxu0
        %v2143 = vadd.f32 0.0, %v2142
        %v2144 = vpop.f32.mrb[0].mxu0
        %v2145 = vpop.f32.mrb[0].mxu0
        %v2146 = vadd.f32 0.0, %v2145
        %v2147 = vpop.f32.mrb[0].mxu0
        %2148 = vmatprep.mubr.bf16.mxu0 0
        %2149 = vmatmul.mubr.bf16.gmra.mrb[0].mxu0 %v2001
        %v2150 = vpop.f32.mrb[0].mxu0
        %v2151 = vadd.f32 0.0, %v2150
        %v2152 = vpop.f32.mrb[0].mxu0
        %v2153 = vpop.f32.mrb[0].mxu0
        %v2154 = vadd.f32 0.0, %v2153
        %v2155 = vpop.f32.mrb[0].mxu0
        %2156 = vmatprep.mubr.bf16.mxu0 0
        %2157 = vmatmul.mubr.bf16.gmra.mrb[0].mxu0 %v2004
        %v2158 = vpop.f32.mrb[0].mxu0
        %v2159 = vadd.f32 0.0, %v2158
        %v2160 = vpop.f32.mrb[0].mxu0
        %v2161 = vpop.f32.mrb[0].mxu0
        %v2162 = vadd.f32 0.0, %v2161
        %v2163 = vpop.f32.mrb[0].mxu0
        %2164 = vmatprep.mubr.bf16.mxu0 0
        %2165 = vmatmul.mubr.bf16.gmra.mrb[0].mxu0 %v2007
        %v2166 = vpop.f32.mrb[0].mxu0
        %v2167 = vadd.f32 0.0, %v2166
        %v2168 = vpop.f32.mrb[0].mxu0
        %v2169 = vpop.f32.mrb[0].mxu0
        %v2170 = vadd.f32 0.0, %v2169
        %v2171 = vpop.f32.mrb[0].mxu0
        %2172 = vdwg.mxu0
        %v2173 = vadd.f32 %v1350, %v2047
        %v2174 = vadd.f32 %v1353, %v2050
        %v2175 = vadd.f32 %v1358, %v2055
        %v2176 = vadd.f32 %v1361, %v2058
        %v2177 = vadd.f32 %v1366, %v2063
        %v2178 = vadd.f32 %v1369, %v2066
        %v2179 = vadd.f32 %v1374, %v2071
        %v2180 = vadd.f32 %v1377, %v2074
        %v2181 = vadd.f32 %v1382, %v2079
        %v2182 = vadd.f32 %v1385, %v2082
        %v2183 = vadd.f32 %v1390, %v2087
        %v2184 = vadd.f32 %v1393, %v2090
        %v2185 = vadd.f32 %v1398, %v2095
        %v2186 = vadd.f32 %v1401, %v2098
        %v2187 = vadd.f32 %v1406, %v2103
        %v2188 = vadd.f32 %v1409, %v2106
        %v2189 = vadd.f32 %v1414, %v2111
        %v2190 = vadd.f32 %v1417, %v2114
        %v2191 = vadd.f32 %v1422, %v2119
        %v2192 = vadd.f32 %v1425, %v2122
        %v2193 = vadd.f32 %v1430, %v2127
        %v2194 = vadd.f32 %v1433, %v2130
        %v2195 = vadd.f32 %v1438, %v2135
        %v2196 = vadd.f32 %v1441, %v2138
        %v2197 = vadd.f32 %v1446, %v2143
        %v2198 = vadd.f32 %v1449, %v2146
        %v2199 = vadd.f32 %v1454, %v2151
        %v2200 = vadd.f32 %v1457, %v2154
        %v2201 = vadd.f32 %v1462, %v2159
        %v2202 = vadd.f32 %v1465, %v2162
        %v2203 = vadd.f32 %v1470, %v2167
        %v2204 = vadd.f32 %v1473, %v2170
        %v2205 = vld [vmem:[%s353] sm:$0x8]
        %v2206 = vld [vmem:[%s353 + $0x4] sm:$0xf]
        %v2207 = vld [vmem:[%s353 + $0x8] sm:$0xf]
        %v2208 = vld [vmem:[%s353 + $0x10] sm:$0x8]
        %v2209 = vld [vmem:[%s353 + $0x14] sm:$0xf]
        %v2210 = vld [vmem:[%s353 + $0x18] sm:$0xf]
        %v2211 = vld [vmem:[%s353 + $0x20] sm:$0x8]
        %v2212 = vld [vmem:[%s353 + $0x24] sm:$0xf]
        %v2213 = vld [vmem:[%s353 + $0x28] sm:$0xf]
        %v2214 = vld [vmem:[%s353 + $0x30] sm:$0x8]
        %v2215 = vld [vmem:[%s353 + $0x34] sm:$0xf]
        %v2216 = vld [vmem:[%s353 + $0x38] sm:$0xf]
        %v2217 = vld [vmem:[%s353 + $0x40] sm:$0x8]
        %v2218 = vld [vmem:[%s353 + $0x44] sm:$0xf]
        %v2219 = vld [vmem:[%s353 + $0x48] sm:$0xf]
        %v2220 = vld [vmem:[%s353 + $0x50] sm:$0x8]
        %v2221 = vld [vmem:[%s353 + $0x54] sm:$0xf]
        %v2222 = vld [vmem:[%s353 + $0x58] sm:$0xf]
        %v2223 = vld [vmem:[%s353 + $0x60] sm:$0x8]
        %v2224 = vld [vmem:[%s353 + $0x64] sm:$0xf]
        %v2225 = vld [vmem:[%s353 + $0x68] sm:$0xf]
        %v2226 = vld [vmem:[%s353 + $0x70] sm:$0x8]
        %v2227 = vld [vmem:[%s353 + $0x74] sm:$0xf]
        %v2228 = vld [vmem:[%s353 + $0x78] sm:$0xf]
        %v2229 = vld [vmem:[%s353 + $0x80] sm:$0x8]
        %v2230 = vld [vmem:[%s353 + $0x84] sm:$0xf]
        %v2231 = vld [vmem:[%s353 + $0x88] sm:$0xf]
        %v2232 = vld [vmem:[%s353 + $0x90] sm:$0x8]
        %v2233 = vld [vmem:[%s353 + $0x94] sm:$0xf]
        %v2234 = vld [vmem:[%s353 + $0x98] sm:$0xf]
        %v2235 = vld [vmem:[%s353 + $0xa0] sm:$0x8]
        %v2236 = vld [vmem:[%s353 + $0xa4] sm:$0xf]
        %v2237 = vld [vmem:[%s353 + $0xa8] sm:$0xf]
        %v2238 = vld [vmem:[%s353 + $0xb0] sm:$0x8]
        %v2239 = vld [vmem:[%s353 + $0xb4] sm:$0xf]
        %v2240 = vld [vmem:[%s353 + $0xb8] sm:$0xf]
        %v2241 = vld [vmem:[%s353 + $0xc0] sm:$0x8]
        %v2242 = vld [vmem:[%s353 + $0xc4] sm:$0xf]
        %v2243 = vld [vmem:[%s353 + $0xc8] sm:$0xf]
        %v2244 = vld [vmem:[%s353 + $0xd0] sm:$0x8]
        %v2245 = vld [vmem:[%s353 + $0xd4] sm:$0xf]
        %v2246 = vld [vmem:[%s353 + $0xd8] sm:$0xf]
        %v2247 = vld [vmem:[%s353 + $0xe0] sm:$0x8]
        %v2248 = vld [vmem:[%s353 + $0xe4] sm:$0xf]
        %v2249 = vld [vmem:[%s353 + $0xe8] sm:$0xf]
        %v2250 = vld [vmem:[%s353 + $0xf0] sm:$0x8]
        %v2251 = vld [vmem:[%s353 + $0xf4] sm:$0xf]
        %v2252 = vld [vmem:[%s353 + $0xf8] sm:$0xf]
        %v2254 = vshrl.u32 %v2205, 16
        %v2256 = vrot.slane %v2254, 7
        %v2257 = vrot.slane %v2256, 4
        %v2259 = vshrl.u32 %v2206, 16
        %v2261 = vrot.slane %v2259, 7
        %v2262 = vshll.u32 %v2206, 16
        %v2264 = vor.u32 %v2261, %v2262
        %v2265 = vsel %vm566, %v2257, %v2264
        %v2266 = vrot.slane %v2261, 4
        %v2268 = vshrl.u32 %v2207, 16
        %v2270 = vrot.slane %v2268, 7
        %v2271 = vshll.u32 %v2207, 16
        %v2273 = vor.u32 %v2270, %v2271
        %v2274 = vsel %vm566, %v2266, %v2273
        %v2276 = vshrl.u32 %v2208, 16
        %v2278 = vrot.slane %v2276, 7
        %v2279 = vrot.slane %v2278, 4
        %v2281 = vshrl.u32 %v2209, 16
        %v2283 = vrot.slane %v2281, 7
        %v2284 = vshll.u32 %v2209, 16
        %v2286 = vor.u32 %v2283, %v2284
        %v2287 = vsel %vm566, %v2279, %v2286
        %v2288 = vrot.slane %v2283, 4
        %v2290 = vshrl.u32 %v2210, 16
        %v2292 = vrot.slane %v2290, 7
        %v2293 = vshll.u32 %v2210, 16
        %v2295 = vor.u32 %v2292, %v2293
        %v2296 = vsel %vm566, %v2288, %v2295
        %v2298 = vshrl.u32 %v2211, 16
        %v2300 = vrot.slane %v2298, 7
        %v2301 = vrot.slane %v2300, 4
        %v2303 = vshrl.u32 %v2212, 16
        %v2305 = vrot.slane %v2303, 7
        %v2306 = vshll.u32 %v2212, 16
        %v2308 = vor.u32 %v2305, %v2306
        %v2309 = vsel %vm566, %v2301, %v2308
        %v2310 = vrot.slane %v2305, 4
        %v2312 = vshrl.u32 %v2213, 16
        %v2314 = vrot.slane %v2312, 7
        %v2315 = vshll.u32 %v2213, 16
        %v2317 = vor.u32 %v2314, %v2315
        %v2318 = vsel %vm566, %v2310, %v2317
        %v2320 = vshrl.u32 %v2214, 16
        %v2322 = vrot.slane %v2320, 7
        %v2323 = vrot.slane %v2322, 4
        %v2325 = vshrl.u32 %v2215, 16
        %v2327 = vrot.slane %v2325, 7
        %v2328 = vshll.u32 %v2215, 16
        %v2330 = vor.u32 %v2327, %v2328
        %v2331 = vsel %vm566, %v2323, %v2330
        %v2332 = vrot.slane %v2327, 4
        %v2334 = vshrl.u32 %v2216, 16
        %v2336 = vrot.slane %v2334, 7
        %v2337 = vshll.u32 %v2216, 16
        %v2339 = vor.u32 %v2336, %v2337
        %v2340 = vsel %vm566, %v2332, %v2339
        %v2342 = vshrl.u32 %v2217, 16
        %v2344 = vrot.slane %v2342, 7
        %v2345 = vrot.slane %v2344, 4
        %v2347 = vshrl.u32 %v2218, 16
        %v2349 = vrot.slane %v2347, 7
        %v2350 = vshll.u32 %v2218, 16
        %v2352 = vor.u32 %v2349, %v2350
        %v2353 = vsel %vm566, %v2345, %v2352
        %v2354 = vrot.slane %v2349, 4
        %v2356 = vshrl.u32 %v2219, 16
        %v2358 = vrot.slane %v2356, 7
        %v2359 = vshll.u32 %v2219, 16
        %v2361 = vor.u32 %v2358, %v2359
        %v2362 = vsel %vm566, %v2354, %v2361
        %v2364 = vshrl.u32 %v2220, 16
        %v2366 = vrot.slane %v2364, 7
        %v2367 = vrot.slane %v2366, 4
        %v2369 = vshrl.u32 %v2221, 16
        %v2371 = vrot.slane %v2369, 7
        %v2372 = vshll.u32 %v2221, 16
        %v2374 = vor.u32 %v2371, %v2372
        %v2375 = vsel %vm566, %v2367, %v2374
        %v2376 = vrot.slane %v2371, 4
        %v2378 = vshrl.u32 %v2222, 16
        %v2380 = vrot.slane %v2378, 7
        %v2381 = vshll.u32 %v2222, 16
        %v2383 = vor.u32 %v2380, %v2381
        %v2384 = vsel %vm566, %v2376, %v2383
        %v2386 = vshrl.u32 %v2223, 16
        %v2388 = vrot.slane %v2386, 7
        %v2389 = vrot.slane %v2388, 4
        %v2391 = vshrl.u32 %v2224, 16
        %v2393 = vrot.slane %v2391, 7
        %v2394 = vshll.u32 %v2224, 16
        %v2396 = vor.u32 %v2393, %v2394
        %v2397 = vsel %vm566, %v2389, %v2396
        %v2398 = vrot.slane %v2393, 4
        %v2400 = vshrl.u32 %v2225, 16
        %v2402 = vrot.slane %v2400, 7
        %v2403 = vshll.u32 %v2225, 16
        %v2405 = vor.u32 %v2402, %v2403
        %v2406 = vsel %vm566, %v2398, %v2405
        %v2408 = vshrl.u32 %v2226, 16
        %v2410 = vrot.slane %v2408, 7
        %v2411 = vrot.slane %v2410, 4
        %v2413 = vshrl.u32 %v2227, 16
        %v2415 = vrot.slane %v2413, 7
        %v2416 = vshll.u32 %v2227, 16
        %v2418 = vor.u32 %v2415, %v2416
        %v2419 = vsel %vm566, %v2411, %v2418
        %v2420 = vrot.slane %v2415, 4
        %v2422 = vshrl.u32 %v2228, 16
        %v2424 = vrot.slane %v2422, 7
        %v2425 = vshll.u32 %v2228, 16
        %v2427 = vor.u32 %v2424, %v2425
        %v2428 = vsel %vm566, %v2420, %v2427
        %v2430 = vshrl.u32 %v2229, 16
        %v2432 = vrot.slane %v2430, 7
        %v2433 = vrot.slane %v2432, 4
        %v2435 = vshrl.u32 %v2230, 16
        %v2437 = vrot.slane %v2435, 7
        %v2438 = vshll.u32 %v2230, 16
        %v2440 = vor.u32 %v2437, %v2438
        %v2441 = vsel %vm566, %v2433, %v2440
        %v2442 = vrot.slane %v2437, 4
        %v2444 = vshrl.u32 %v2231, 16
        %v2446 = vrot.slane %v2444, 7
        %v2447 = vshll.u32 %v2231, 16
        %v2449 = vor.u32 %v2446, %v2447
        %v2450 = vsel %vm566, %v2442, %v2449
        %v2452 = vshrl.u32 %v2232, 16
        %v2454 = vrot.slane %v2452, 7
        %v2455 = vrot.slane %v2454, 4
        %v2457 = vshrl.u32 %v2233, 16
        %v2459 = vrot.slane %v2457, 7
        %v2460 = vshll.u32 %v2233, 16
        %v2462 = vor.u32 %v2459, %v2460
        %v2463 = vsel %vm566, %v2455, %v2462
        %v2464 = vrot.slane %v2459, 4
        %v2466 = vshrl.u32 %v2234, 16
        %v2468 = vrot.slane %v2466, 7
        %v2469 = vshll.u32 %v2234, 16
        %v2471 = vor.u32 %v2468, %v2469
        %v2472 = vsel %vm566, %v2464, %v2471
        %v2474 = vshrl.u32 %v2235, 16
        %v2476 = vrot.slane %v2474, 7
        %v2477 = vrot.slane %v2476, 4
        %v2479 = vshrl.u32 %v2236, 16
        %v2481 = vrot.slane %v2479, 7
        %v2482 = vshll.u32 %v2236, 16
        %v2484 = vor.u32 %v2481, %v2482
        %v2485 = vsel %vm566, %v2477, %v2484
        %v2486 = vrot.slane %v2481, 4
        %v2488 = vshrl.u32 %v2237, 16
        %v2490 = vrot.slane %v2488, 7
        %v2491 = vshll.u32 %v2237, 16
        %v2493 = vor.u32 %v2490, %v2491
        %v2494 = vsel %vm566, %v2486, %v2493
        %v2496 = vshrl.u32 %v2238, 16
        %v2498 = vrot.slane %v2496, 7
        %v2499 = vrot.slane %v2498, 4
        %v2501 = vshrl.u32 %v2239, 16
        %v2503 = vrot.slane %v2501, 7
        %v2504 = vshll.u32 %v2239, 16
        %v2506 = vor.u32 %v2503, %v2504
        %v2507 = vsel %vm566, %v2499, %v2506
        %v2508 = vrot.slane %v2503, 4
        %v2510 = vshrl.u32 %v2240, 16
        %v2512 = vrot.slane %v2510, 7
        %v2513 = vshll.u32 %v2240, 16
        %v2515 = vor.u32 %v2512, %v2513
        %v2516 = vsel %vm566, %v2508, %v2515
        %v2518 = vshrl.u32 %v2241, 16
        %v2520 = vrot.slane %v2518, 7
        %v2521 = vrot.slane %v2520, 4
        %v2523 = vshrl.u32 %v2242, 16
        %v2525 = vrot.slane %v2523, 7
        %v2526 = vshll.u32 %v2242, 16
        %v2528 = vor.u32 %v2525, %v2526
        %v2529 = vsel %vm566, %v2521, %v2528
        %v2530 = vrot.slane %v2525, 4
        %v2532 = vshrl.u32 %v2243, 16
        %v2534 = vrot.slane %v2532, 7
        %v2535 = vshll.u32 %v2243, 16
        %v2537 = vor.u32 %v2534, %v2535
        %v2538 = vsel %vm566, %v2530, %v2537
        %v2540 = vshrl.u32 %v2244, 16
        %v2542 = vrot.slane %v2540, 7
        %v2543 = vrot.slane %v2542, 4
        %v2545 = vshrl.u32 %v2245, 16
        %v2547 = vrot.slane %v2545, 7
        %v2548 = vshll.u32 %v2245, 16
        %v2550 = vor.u32 %v2547, %v2548
        %v2551 = vsel %vm566, %v2543, %v2550
        %v2552 = vrot.slane %v2547, 4
        %v2554 = vshrl.u32 %v2246, 16
        %v2556 = vrot.slane %v2554, 7
        %v2557 = vshll.u32 %v2246, 16
        %v2559 = vor.u32 %v2556, %v2557
        %v2560 = vsel %vm566, %v2552, %v2559
        %v2562 = vshrl.u32 %v2247, 16
        %v2564 = vrot.slane %v2562, 7
        %v2565 = vrot.slane %v2564, 4
        %v2567 = vshrl.u32 %v2248, 16
        %v2569 = vrot.slane %v2567, 7
        %v2570 = vshll.u32 %v2248, 16
        %v2572 = vor.u32 %v2569, %v2570
        %v2573 = vsel %vm566, %v2565, %v2572
        %v2574 = vrot.slane %v2569, 4
        %v2576 = vshrl.u32 %v2249, 16
        %v2578 = vrot.slane %v2576, 7
        %v2579 = vshll.u32 %v2249, 16
        %v2581 = vor.u32 %v2578, %v2579
        %v2582 = vsel %vm566, %v2574, %v2581
        %v2584 = vshrl.u32 %v2250, 16
        %v2586 = vrot.slane %v2584, 7
        %v2587 = vrot.slane %v2586, 4
        %v2589 = vshrl.u32 %v2251, 16
        %v2591 = vrot.slane %v2589, 7
        %v2592 = vshll.u32 %v2251, 16
        %v2594 = vor.u32 %v2591, %v2592
        %v2595 = vsel %vm566, %v2587, %v2594
        %v2596 = vrot.slane %v2591, 4
        %v2598 = vshrl.u32 %v2252, 16
        %v2600 = vrot.slane %v2598, 7
        %v2601 = vshll.u32 %v2252, 16
        %v2603 = vor.u32 %v2600, %v2601
        %v2604 = vsel %vm566, %v2596, %v2603
        %s2605 = scalar_lea.vmem [#allocation8], 12
        %v2606 = vld [vmem:[%s2605] sm:$0xf]
        %v2607 = vunpack.c.l.b16 %v2265
        %v2608 = vunpack.c.l.b16 %v2274
        %v2609 = vunpack.c.l.b16 %v2287
        %v2610 = vunpack.c.l.b16 %v2296
        %v2611 = vunpack.c.l.b16 %v2309
        %v2612 = vunpack.c.l.b16 %v2318
        %v2613 = vunpack.c.l.b16 %v2331
        %v2614 = vunpack.c.l.b16 %v2340
        %v2615 = vunpack.c.l.b16 %v2353
        %v2616 = vunpack.c.l.b16 %v2362
        %v2617 = vunpack.c.l.b16 %v2375
        %v2618 = vunpack.c.l.b16 %v2384
        %v2619 = vunpack.c.l.b16 %v2397
        %v2620 = vunpack.c.l.b16 %v2406
        %v2621 = vunpack.c.l.b16 %v2419
        %v2622 = vunpack.c.l.b16 %v2428
        %v2623 = vunpack.c.l.b16 %v2441
        %v2624 = vunpack.c.l.b16 %v2450
        %v2625 = vunpack.c.l.b16 %v2463
        %v2626 = vunpack.c.l.b16 %v2472
        %v2627 = vunpack.c.l.b16 %v2485
        %v2628 = vunpack.c.l.b16 %v2494
        %v2629 = vunpack.c.l.b16 %v2507
        %v2630 = vunpack.c.l.b16 %v2516
        %v2631 = vunpack.c.l.b16 %v2529
        %v2632 = vunpack.c.l.b16 %v2538
        %v2633 = vunpack.c.l.b16 %v2551
        %v2634 = vunpack.c.l.b16 %v2560
        %v2635 = vunpack.c.l.b16 %v2573
        %v2636 = vunpack.c.l.b16 %v2582
        %v2637 = vunpack.c.l.b16 %v2595
        %v2638 = vunpack.c.l.b16 %v2604
        %v2639 = vpack.c.b16 %v2608, %v2607
        %v2640 = vpack.c.b16 %v2610, %v2609
        %v2641 = vpack.c.b16 %v2612, %v2611
        %v2642 = vpack.c.b16 %v2614, %v2613
        %v2643 = vpack.c.b16 %v2616, %v2615
        %v2644 = vpack.c.b16 %v2618, %v2617
        %v2645 = vpack.c.b16 %v2620, %v2619
        %v2646 = vpack.c.b16 %v2622, %v2621
        %v2647 = vpack.c.b16 %v2624, %v2623
        %v2648 = vpack.c.b16 %v2626, %v2625
        %v2649 = vpack.c.b16 %v2628, %v2627
        %v2650 = vpack.c.b16 %v2630, %v2629
        %v2651 = vpack.c.b16 %v2632, %v2631
        %v2652 = vpack.c.b16 %v2634, %v2633
        %v2653 = vpack.c.b16 %v2636, %v2635
        %v2654 = vpack.c.b16 %v2638, %v2637
        %v2656 = vsel %vm1002, %v2639, 0
        %v2659 = vsel %vm1002, %v2640, 0
        %v2662 = vsel %vm1002, %v2641, 0
        %v2665 = vsel %vm1002, %v2642, 0
        %v2668 = vsel %vm1002, %v2643, 0
        %v2671 = vsel %vm1002, %v2644, 0
        %v2674 = vsel %vm1002, %v2645, 0
        %v2677 = vsel %vm1002, %v2646, 0
        %v2680 = vsel %vm1002, %v2647, 0
        %v2683 = vsel %vm1002, %v2648, 0
        %v2686 = vsel %vm1002, %v2649, 0
        %v2689 = vsel %vm1002, %v2650, 0
        %v2692 = vsel %vm1002, %v2651, 0
        %v2695 = vsel %vm1002, %v2652, 0
        %v2698 = vsel %vm1002, %v2653, 0
        %v2701 = vsel %vm1002, %v2654, 0
        %v2704 = vsel %vm1051, %v2606, 0
        %2706 = vmatprep.subr.bf16.mxu0 0
        %2707 = vmatpush1.bf16.msra.mxu0 %v2704
        %2708 = vmatprep.subr.bf16.mxu0 0
        %2709 = vmatpush1.bf16.msra.mxu0 0
        %2710 = vmatprep.subr.bf16.mxu0 0
        %2711 = vmatpush1.bf16.msra.mxu0 0
        %2712 = vmatprep.subr.bf16.mxu0 0
        %2713 = vmatpush1.bf16.msra.mxu0 0
        %2714 = vmatprep.subr.bf16.mxu0 0
        %2715 = vmatpush1.bf16.msra.mxu0 0
        %2716 = vmatprep.subr.bf16.mxu0 0
        %2717 = vmatpush1.bf16.msra.mxu0 0
        %2718 = vmatprep.subr.bf16.mxu0 0
        %2719 = vmatpush1.bf16.msra.mxu0 0
        %2720 = vmatprep.subr.bf16.mxu0 0
        %2721 = vmatpush1.bf16.msra.mxu0 0
        %2722 = vmatprep.subr.bf16.mxu0 0
        %2723 = vmatpush1.bf16.msra.mxu0 0
        %2724 = vmatprep.subr.bf16.mxu0 0
        %2725 = vmatpush1.bf16.msra.mxu0 0
        %2726 = vmatprep.subr.bf16.mxu0 0
        %2727 = vmatpush1.bf16.msra.mxu0 0
        %2728 = vmatprep.subr.bf16.mxu0 0
        %2729 = vmatpush1.bf16.msra.mxu0 0
        %2730 = vmatprep.subr.bf16.mxu0 0
        %2731 = vmatpush1.bf16.msra.mxu0 0
        %2732 = vmatprep.subr.bf16.mxu0 0
        %2733 = vmatpush1.bf16.msra.mxu0 0
        %2734 = vmatprep.subr.bf16.mxu0 0
        %2735 = vmatpush1.bf16.msra.mxu0 0
        %2736 = vmatprep.subr.bf16.mxu0 0
        %2737 = vmatpush1.bf16.msra.mxu0 0
        %2738 = vmatprep.mubr.bf16.mxu0 0
        %2739 = vmatmul.mubr.bf16.gmra.mrb[0].mxu0 %v2656
        %v2740 = vpop.f32.mrb[0].mxu0
        %v2741 = vadd.f32 0.0, %v2740
        %v2742 = vpop.f32.mrb[0].mxu0
        %v2743 = vpop.f32.mrb[0].mxu0
        %v2744 = vadd.f32 0.0, %v2743
        %v2745 = vpop.f32.mrb[0].mxu0
        %2746 = vmatprep.mubr.bf16.mxu0 0
        %2747 = vmatmul.mubr.bf16.gmra.mrb[0].mxu0 %v2659
        %v2748 = vpop.f32.mrb[0].mxu0
        %v2749 = vadd.f32 0.0, %v2748
        %v2750 = vpop.f32.mrb[0].mxu0
        %v2751 = vpop.f32.mrb[0].mxu0
        %v2752 = vadd.f32 0.0, %v2751
        %v2753 = vpop.f32.mrb[0].mxu0
        %2754 = vmatprep.mubr.bf16.mxu0 0
        %2755 = vmatmul.mubr.bf16.gmra.mrb[0].mxu0 %v2662
        %v2756 = vpop.f32.mrb[0].mxu0
        %v2757 = vadd.f32 0.0, %v2756
        %v2758 = vpop.f32.mrb[0].mxu0
        %v2759 = vpop.f32.mrb[0].mxu0
        %v2760 = vadd.f32 0.0, %v2759
        %v2761 = vpop.f32.mrb[0].mxu0
        %2762 = vmatprep.mubr.bf16.mxu0 0
        %2763 = vmatmul.mubr.bf16.gmra.mrb[0].mxu0 %v2665
        %v2764 = vpop.f32.mrb[0].mxu0
        %v2765 = vadd.f32 0.0, %v2764
        %v2766 = vpop.f32.mrb[0].mxu0
        %v2767 = vpop.f32.mrb[0].mxu0
        %v2768 = vadd.f32 0.0, %v2767
        %v2769 = vpop.f32.mrb[0].mxu0
        %2770 = vmatprep.mubr.bf16.mxu0 0
        %2771 = vmatmul.mubr.bf16.gmra.mrb[0].mxu0 %v2668
        %v2772 = vpop.f32.mrb[0].mxu0
        %v2773 = vadd.f32 0.0, %v2772
        %v2774 = vpop.f32.mrb[0].mxu0
        %v2775 = vpop.f32.mrb[0].mxu0
        %v2776 = vadd.f32 0.0, %v2775
        %v2777 = vpop.f32.mrb[0].mxu0
        %2778 = vmatprep.mubr.bf16.mxu0 0
        %2779 = vmatmul.mubr.bf16.gmra.mrb[0].mxu0 %v2671
        %v2780 = vpop.f32.mrb[0].mxu0
        %v2781 = vadd.f32 0.0, %v2780
        %v2782 = vpop.f32.mrb[0].mxu0
        %v2783 = vpop.f32.mrb[0].mxu0
        %v2784 = vadd.f32 0.0, %v2783
        %v2785 = vpop.f32.mrb[0].mxu0
        %2786 = vmatprep.mubr.bf16.mxu0 0
        %2787 = vmatmul.mubr.bf16.gmra.mrb[0].mxu0 %v2674
        %v2788 = vpop.f32.mrb[0].mxu0
        %v2789 = vadd.f32 0.0, %v2788
        %v2790 = vpop.f32.mrb[0].mxu0
        %v2791 = vpop.f32.mrb[0].mxu0
        %v2792 = vadd.f32 0.0, %v2791
        %v2793 = vpop.f32.mrb[0].mxu0
        %2794 = vmatprep.mubr.bf16.mxu0 0
        %2795 = vmatmul.mubr.bf16.gmra.mrb[0].mxu0 %v2677
        %v2796 = vpop.f32.mrb[0].mxu0
        %v2797 = vadd.f32 0.0, %v2796
        %v2798 = vpop.f32.mrb[0].mxu0
        %v2799 = vpop.f32.mrb[0].mxu0
        %v2800 = vadd.f32 0.0, %v2799
        %v2801 = vpop.f32.mrb[0].mxu0
        %2802 = vmatprep.mubr.bf16.mxu0 0
        %2803 = vmatmul.mubr.bf16.gmra.mrb[0].mxu0 %v2680
        %v2804 = vpop.f32.mrb[0].mxu0
        %v2805 = vadd.f32 0.0, %v2804
        %v2806 = vpop.f32.mrb[0].mxu0
        %v2807 = vpop.f32.mrb[0].mxu0
        %v2808 = vadd.f32 0.0, %v2807
        %v2809 = vpop.f32.mrb[0].mxu0
        %2810 = vmatprep.mubr.bf16.mxu0 0
        %2811 = vmatmul.mubr.bf16.gmra.mrb[0].mxu0 %v2683
        %v2812 = vpop.f32.mrb[0].mxu0
        %v2813 = vadd.f32 0.0, %v2812
        %v2814 = vpop.f32.mrb[0].mxu0
        %v2815 = vpop.f32.mrb[0].mxu0
        %v2816 = vadd.f32 0.0, %v2815
        %v2817 = vpop.f32.mrb[0].mxu0
        %2818 = vmatprep.mubr.bf16.mxu0 0
        %2819 = vmatmul.mubr.bf16.gmra.mrb[0].mxu0 %v2686
        %v2820 = vpop.f32.mrb[0].mxu0
        %v2821 = vadd.f32 0.0, %v2820
        %v2822 = vpop.f32.mrb[0].mxu0
        %v2823 = vpop.f32.mrb[0].mxu0
        %v2824 = vadd.f32 0.0, %v2823
        %v2825 = vpop.f32.mrb[0].mxu0
        %2826 = vmatprep.mubr.bf16.mxu0 0
        %2827 = vmatmul.mubr.bf16.gmra.mrb[0].mxu0 %v2689
        %v2828 = vpop.f32.mrb[0].mxu0
        %v2829 = vadd.f32 0.0, %v2828
        %v2830 = vpop.f32.mrb[0].mxu0
        %v2831 = vpop.f32.mrb[0].mxu0
        %v2832 = vadd.f32 0.0, %v2831
        %v2833 = vpop.f32.mrb[0].mxu0
        %2834 = vmatprep.mubr.bf16.mxu0 0
        %2835 = vmatmul.mubr.bf16.gmra.mrb[0].mxu0 %v2692
        %v2836 = vpop.f32.mrb[0].mxu0
        %v2837 = vadd.f32 0.0, %v2836
        %v2838 = vpop.f32.mrb[0].mxu0
        %v2839 = vpop.f32.mrb[0].mxu0
        %v2840 = vadd.f32 0.0, %v2839
        %v2841 = vpop.f32.mrb[0].mxu0
        %2842 = vmatprep.mubr.bf16.mxu0 0
        %2843 = vmatmul.mubr.bf16.gmra.mrb[0].mxu0 %v2695
        %v2844 = vpop.f32.mrb[0].mxu0
        %v2845 = vadd.f32 0.0, %v2844
        %v2846 = vpop.f32.mrb[0].mxu0
        %v2847 = vpop.f32.mrb[0].mxu0
        %v2848 = vadd.f32 0.0, %v2847
        %v2849 = vpop.f32.mrb[0].mxu0
        %2850 = vmatprep.mubr.bf16.mxu0 0
        %2851 = vmatmul.mubr.bf16.gmra.mrb[0].mxu0 %v2698
        %v2852 = vpop.f32.mrb[0].mxu0
        %v2853 = vadd.f32 0.0, %v2852
        %v2854 = vpop.f32.mrb[0].mxu0
        %v2855 = vpop.f32.mrb[0].mxu0
        %v2856 = vadd.f32 0.0, %v2855
        %v2857 = vpop.f32.mrb[0].mxu0
        %2858 = vmatprep.mubr.bf16.mxu0 0
        %2859 = vmatmul.mubr.bf16.gmra.mrb[0].mxu0 %v2701
        %v2860 = vpop.f32.mrb[0].mxu0
        %v2861 = vadd.f32 0.0, %v2860
        %v2862 = vpop.f32.mrb[0].mxu0
        %v2863 = vpop.f32.mrb[0].mxu0
        %v2864 = vadd.f32 0.0, %v2863
        %v2865 = vpop.f32.mrb[0].mxu0
        %2866 = vdwg.mxu0
        %v2867 = vadd.f32 %v2173, %v2741
        %v2868 = vadd.f32 %v2174, %v2744
        %v2869 = vadd.f32 %v2175, %v2749
        %v2870 = vadd.f32 %v2176, %v2752
        %v2871 = vadd.f32 %v2177, %v2757
        %v2872 = vadd.f32 %v2178, %v2760
        %v2873 = vadd.f32 %v2179, %v2765
        %v2874 = vadd.f32 %v2180, %v2768
        %v2875 = vadd.f32 %v2181, %v2773
        %v2876 = vadd.f32 %v2182, %v2776
        %v2877 = vadd.f32 %v2183, %v2781
        %v2878 = vadd.f32 %v2184, %v2784
        %v2879 = vadd.f32 %v2185, %v2789
        %v2880 = vadd.f32 %v2186, %v2792
        %v2881 = vadd.f32 %v2187, %v2797
        %v2882 = vadd.f32 %v2188, %v2800
        %v2883 = vadd.f32 %v2189, %v2805
        %v2884 = vadd.f32 %v2190, %v2808
        %v2885 = vadd.f32 %v2191, %v2813
        %v2886 = vadd.f32 %v2192, %v2816
        %v2887 = vadd.f32 %v2193, %v2821
        %v2888 = vadd.f32 %v2194, %v2824
        %v2889 = vadd.f32 %v2195, %v2829
        %v2890 = vadd.f32 %v2196, %v2832
        %v2891 = vadd.f32 %v2197, %v2837
        %v2892 = vadd.f32 %v2198, %v2840
        %v2893 = vadd.f32 %v2199, %v2845
        %v2894 = vadd.f32 %v2200, %v2848
        %v2895 = vadd.f32 %v2201, %v2853
        %v2896 = vadd.f32 %v2202, %v2856
        %v2897 = vadd.f32 %v2203, %v2861
        %v2898 = vadd.f32 %v2204, %v2864
        %s2899 = scalar_lea.vmem [#allocation8], 16
        %v2900 = vld [vmem:[%s2899] sm:$0xf]
        %v2933 = vunpack.c.l.b16 %v2206
        %v2934 = vunpack.c.l.b16 %v2207
        %v2935 = vunpack.c.l.b16 %v2209
        %v2936 = vunpack.c.l.b16 %v2210
        %v2937 = vunpack.c.l.b16 %v2212
        %v2938 = vunpack.c.l.b16 %v2213
        %v2939 = vunpack.c.l.b16 %v2215
        %v2940 = vunpack.c.l.b16 %v2216
        %v2941 = vunpack.c.l.b16 %v2218
        %v2942 = vunpack.c.l.b16 %v2219
        %v2943 = vunpack.c.l.b16 %v2221
        %v2944 = vunpack.c.l.b16 %v2222
        %v2945 = vunpack.c.l.b16 %v2224
        %v2946 = vunpack.c.l.b16 %v2225
        %v2947 = vunpack.c.l.b16 %v2227
        %v2948 = vunpack.c.l.b16 %v2228
        %v2949 = vunpack.c.l.b16 %v2230
        %v2950 = vunpack.c.l.b16 %v2231
        %v2951 = vunpack.c.l.b16 %v2233
        %v2952 = vunpack.c.l.b16 %v2234
        %v2953 = vunpack.c.l.b16 %v2236
        %v2954 = vunpack.c.l.b16 %v2237
        %v2955 = vunpack.c.l.b16 %v2239
        %v2956 = vunpack.c.l.b16 %v2240
        %v2957 = vunpack.c.l.b16 %v2242
        %v2958 = vunpack.c.l.b16 %v2243
        %v2959 = vunpack.c.l.b16 %v2245
        %v2960 = vunpack.c.l.b16 %v2246
        %v2961 = vunpack.c.l.b16 %v2248
        %v2962 = vunpack.c.l.b16 %v2249
        %v2963 = vunpack.c.l.b16 %v2251
        %v2964 = vunpack.c.l.b16 %v2252
        %v2965 = vpack.c.b16 %v2934, %v2933
        %v2966 = vpack.c.b16 %v2936, %v2935
        %v2967 = vpack.c.b16 %v2938, %v2937
        %v2968 = vpack.c.b16 %v2940, %v2939
        %v2969 = vpack.c.b16 %v2942, %v2941
        %v2970 = vpack.c.b16 %v2944, %v2943
        %v2971 = vpack.c.b16 %v2946, %v2945
        %v2972 = vpack.c.b16 %v2948, %v2947
        %v2973 = vpack.c.b16 %v2950, %v2949
        %v2974 = vpack.c.b16 %v2952, %v2951
        %v2975 = vpack.c.b16 %v2954, %v2953
        %v2976 = vpack.c.b16 %v2956, %v2955
        %v2977 = vpack.c.b16 %v2958, %v2957
        %v2978 = vpack.c.b16 %v2960, %v2959
        %v2979 = vpack.c.b16 %v2962, %v2961
        %v2980 = vpack.c.b16 %v2964, %v2963
        %v2982 = vsel %vm1002, %v2965, 0
        %v2985 = vsel %vm1002, %v2966, 0
        %v2988 = vsel %vm1002, %v2967, 0
        %v2991 = vsel %vm1002, %v2968, 0
        %v2994 = vsel %vm1002, %v2969, 0
        %v2997 = vsel %vm1002, %v2970, 0
        %v3000 = vsel %vm1002, %v2971, 0
        %v3003 = vsel %vm1002, %v2972, 0
        %v3006 = vsel %vm1002, %v2973, 0
        %v3009 = vsel %vm1002, %v2974, 0
        %v3012 = vsel %vm1002, %v2975, 0
        %v3015 = vsel %vm1002, %v2976, 0
        %v3018 = vsel %vm1002, %v2977, 0
        %v3021 = vsel %vm1002, %v2978, 0
        %v3024 = vsel %vm1002, %v2979, 0
        %v3027 = vsel %vm1002, %v2980, 0
        %v3030 = vsel %vm1051, %v2900, 0
        %3032 = vmatprep.subr.bf16.mxu0 0
        %3033 = vmatpush1.bf16.msra.mxu0 %v3030
        %3034 = vmatprep.subr.bf16.mxu0 0
        %3035 = vmatpush1.bf16.msra.mxu0 0
        %3036 = vmatprep.subr.bf16.mxu0 0
        %3037 = vmatpush1.bf16.msra.mxu0 0
        %3038 = vmatprep.subr.bf16.mxu0 0
        %3039 = vmatpush1.bf16.msra.mxu0 0
        %3040 = vmatprep.subr.bf16.mxu0 0
        %3041 = vmatpush1.bf16.msra.mxu0 0
        %3042 = vmatprep.subr.bf16.mxu0 0
        %3043 = vmatpush1.bf16.msra.mxu0 0
        %3044 = vmatprep.subr.bf16.mxu0 0
        %3045 = vmatpush1.bf16.msra.mxu0 0
        %3046 = vmatprep.subr.bf16.mxu0 0
        %3047 = vmatpush1.bf16.msra.mxu0 0
        %3048 = vmatprep.subr.bf16.mxu0 0
        %3049 = vmatpush1.bf16.msra.mxu0 0
        %3050 = vmatprep.subr.bf16.mxu0 0
        %3051 = vmatpush1.bf16.msra.mxu0 0
        %3052 = vmatprep.subr.bf16.mxu0 0
        %3053 = vmatpush1.bf16.msra.mxu0 0
        %3054 = vmatprep.subr.bf16.mxu0 0
        %3055 = vmatpush1.bf16.msra.mxu0 0
        %3056 = vmatprep.subr.bf16.mxu0 0
        %3057 = vmatpush1.bf16.msra.mxu0 0
        %3058 = vmatprep.subr.bf16.mxu0 0
        %3059 = vmatpush1.bf16.msra.mxu0 0
        %3060 = vmatprep.subr.bf16.mxu0 0
        %3061 = vmatpush1.bf16.msra.mxu0 0
        %3062 = vmatprep.subr.bf16.mxu0 0
        %3063 = vmatpush1.bf16.msra.mxu0 0
        %3064 = vmatprep.mubr.bf16.mxu0 0
        %3065 = vmatmul.mubr.bf16.gmra.mrb[0].mxu0 %v2982
        %v3066 = vpop.f32.mrb[0].mxu0
        %v3067 = vadd.f32 0.0, %v3066
        %v3068 = vpop.f32.mrb[0].mxu0
        %v3069 = vpop.f32.mrb[0].mxu0
        %v3070 = vadd.f32 0.0, %v3069
        %v3071 = vpop.f32.mrb[0].mxu0
        %3072 = vmatprep.mubr.bf16.mxu0 0
        %3073 = vmatmul.mubr.bf16.gmra.mrb[0].mxu0 %v2985
        %v3074 = vpop.f32.mrb[0].mxu0
        %v3075 = vadd.f32 0.0, %v3074
        %v3076 = vpop.f32.mrb[0].mxu0
        %v3077 = vpop.f32.mrb[0].mxu0
        %v3078 = vadd.f32 0.0, %v3077
        %v3079 = vpop.f32.mrb[0].mxu0
        %3080 = vmatprep.mubr.bf16.mxu0 0
        %3081 = vmatmul.mubr.bf16.gmra.mrb[0].mxu0 %v2988
        %v3082 = vpop.f32.mrb[0].mxu0
        %v3083 = vadd.f32 0.0, %v3082
        %v3084 = vpop.f32.mrb[0].mxu0
        %v3085 = vpop.f32.mrb[0].mxu0
        %v3086 = vadd.f32 0.0, %v3085
        %v3087 = vpop.f32.mrb[0].mxu0
        %3088 = vmatprep.mubr.bf16.mxu0 0
        %3089 = vmatmul.mubr.bf16.gmra.mrb[0].mxu0 %v2991
        %v3090 = vpop.f32.mrb[0].mxu0
        %v3091 = vadd.f32 0.0, %v3090
        %v3092 = vpop.f32.mrb[0].mxu0
        %v3093 = vpop.f32.mrb[0].mxu0
        %v3094 = vadd.f32 0.0, %v3093
        %v3095 = vpop.f32.mrb[0].mxu0
        %3096 = vmatprep.mubr.bf16.mxu0 0
        %3097 = vmatmul.mubr.bf16.gmra.mrb[0].mxu0 %v2994
        %v3098 = vpop.f32.mrb[0].mxu0
        %v3099 = vadd.f32 0.0, %v3098
        %v3100 = vpop.f32.mrb[0].mxu0
        %v3101 = vpop.f32.mrb[0].mxu0
        %v3102 = vadd.f32 0.0, %v3101
        %v3103 = vpop.f32.mrb[0].mxu0
        %3104 = vmatprep.mubr.bf16.mxu0 0
        %3105 = vmatmul.mubr.bf16.gmra.mrb[0].mxu0 %v2997
        %v3106 = vpop.f32.mrb[0].mxu0
        %v3107 = vadd.f32 0.0, %v3106
        %v3108 = vpop.f32.mrb[0].mxu0
        %v3109 = vpop.f32.mrb[0].mxu0
        %v3110 = vadd.f32 0.0, %v3109
        %v3111 = vpop.f32.mrb[0].mxu0
        %3112 = vmatprep.mubr.bf16.mxu0 0
        %3113 = vmatmul.mubr.bf16.gmra.mrb[0].mxu0 %v3000
        %v3114 = vpop.f32.mrb[0].mxu0
        %v3115 = vadd.f32 0.0, %v3114
        %v3116 = vpop.f32.mrb[0].mxu0
        %v3117 = vpop.f32.mrb[0].mxu0
        %v3118 = vadd.f32 0.0, %v3117
        %v3119 = vpop.f32.mrb[0].mxu0
        %3120 = vmatprep.mubr.bf16.mxu0 0
        %3121 = vmatmul.mubr.bf16.gmra.mrb[0].mxu0 %v3003
        %v3122 = vpop.f32.mrb[0].mxu0
        %v3123 = vadd.f32 0.0, %v3122
        %v3124 = vpop.f32.mrb[0].mxu0
        %v3125 = vpop.f32.mrb[0].mxu0
        %v3126 = vadd.f32 0.0, %v3125
        %v3127 = vpop.f32.mrb[0].mxu0
        %3128 = vmatprep.mubr.bf16.mxu0 0
        %3129 = vmatmul.mubr.bf16.gmra.mrb[0].mxu0 %v3006
        %v3130 = vpop.f32.mrb[0].mxu0
        %v3131 = vadd.f32 0.0, %v3130
        %v3132 = vpop.f32.mrb[0].mxu0
        %v3133 = vpop.f32.mrb[0].mxu0
        %v3134 = vadd.f32 0.0, %v3133
        %v3135 = vpop.f32.mrb[0].mxu0
        %3136 = vmatprep.mubr.bf16.mxu0 0
        %3137 = vmatmul.mubr.bf16.gmra.mrb[0].mxu0 %v3009
        %v3138 = vpop.f32.mrb[0].mxu0
        %v3139 = vadd.f32 0.0, %v3138
        %v3140 = vpop.f32.mrb[0].mxu0
        %v3141 = vpop.f32.mrb[0].mxu0
        %v3142 = vadd.f32 0.0, %v3141
        %v3143 = vpop.f32.mrb[0].mxu0
        %3144 = vmatprep.mubr.bf16.mxu0 0
        %3145 = vmatmul.mubr.bf16.gmra.mrb[0].mxu0 %v3012
        %v3146 = vpop.f32.mrb[0].mxu0
        %v3147 = vadd.f32 0.0, %v3146
        %v3148 = vpop.f32.mrb[0].mxu0
        %v3149 = vpop.f32.mrb[0].mxu0
        %v3150 = vadd.f32 0.0, %v3149
        %v3151 = vpop.f32.mrb[0].mxu0
        %3152 = vmatprep.mubr.bf16.mxu0 0
        %3153 = vmatmul.mubr.bf16.gmra.mrb[0].mxu0 %v3015
        %v3154 = vpop.f32.mrb[0].mxu0
        %v3155 = vadd.f32 0.0, %v3154
        %v3156 = vpop.f32.mrb[0].mxu0
        %v3157 = vpop.f32.mrb[0].mxu0
        %v3158 = vadd.f32 0.0, %v3157
        %v3159 = vpop.f32.mrb[0].mxu0
        %3160 = vmatprep.mubr.bf16.mxu0 0
        %3161 = vmatmul.mubr.bf16.gmra.mrb[0].mxu0 %v3018
        %v3162 = vpop.f32.mrb[0].mxu0
        %v3163 = vadd.f32 0.0, %v3162
        %v3164 = vpop.f32.mrb[0].mxu0
        %v3165 = vpop.f32.mrb[0].mxu0
        %v3166 = vadd.f32 0.0, %v3165
        %v3167 = vpop.f32.mrb[0].mxu0
        %3168 = vmatprep.mubr.bf16.mxu0 0
        %3169 = vmatmul.mubr.bf16.gmra.mrb[0].mxu0 %v3021
        %v3170 = vpop.f32.mrb[0].mxu0
        %v3171 = vadd.f32 0.0, %v3170
        %v3172 = vpop.f32.mrb[0].mxu0
        %v3173 = vpop.f32.mrb[0].mxu0
        %v3174 = vadd.f32 0.0, %v3173
        %v3175 = vpop.f32.mrb[0].mxu0
        %3176 = vmatprep.mubr.bf16.mxu0 0
        %3177 = vmatmul.mubr.bf16.gmra.mrb[0].mxu0 %v3024
        %v3178 = vpop.f32.mrb[0].mxu0
        %v3179 = vadd.f32 0.0, %v3178
        %v3180 = vpop.f32.mrb[0].mxu0
        %v3181 = vpop.f32.mrb[0].mxu0
        %v3182 = vadd.f32 0.0, %v3181
        %v3183 = vpop.f32.mrb[0].mxu0
        %3184 = vmatprep.mubr.bf16.mxu0 0
        %3185 = vmatmul.mubr.bf16.gmra.mrb[0].mxu0 %v3027
        %v3186 = vpop.f32.mrb[0].mxu0
        %v3187 = vadd.f32 0.0, %v3186
        %v3188 = vpop.f32.mrb[0].mxu0
        %v3189 = vpop.f32.mrb[0].mxu0
        %v3190 = vadd.f32 0.0, %v3189
        %v3191 = vpop.f32.mrb[0].mxu0
        %3192 = vdwg.mxu0
        %v3193 = vadd.f32 %v2867, %v3067
        %v3194 = vadd.f32 %v2868, %v3070
        %v3195 = vadd.f32 %v2869, %v3075
        %v3196 = vadd.f32 %v2870, %v3078
        %v3197 = vadd.f32 %v2871, %v3083
        %v3198 = vadd.f32 %v2872, %v3086
        %v3199 = vadd.f32 %v2873, %v3091
        %v3200 = vadd.f32 %v2874, %v3094
        %v3201 = vadd.f32 %v2875, %v3099
        %v3202 = vadd.f32 %v2876, %v3102
        %v3203 = vadd.f32 %v2877, %v3107
        %v3204 = vadd.f32 %v2878, %v3110
        %v3205 = vadd.f32 %v2879, %v3115
        %v3206 = vadd.f32 %v2880, %v3118
        %v3207 = vadd.f32 %v2881, %v3123
        %v3208 = vadd.f32 %v2882, %v3126
        %v3209 = vadd.f32 %v2883, %v3131
        %v3210 = vadd.f32 %v2884, %v3134
        %v3211 = vadd.f32 %v2885, %v3139
        %v3212 = vadd.f32 %v2886, %v3142
        %v3213 = vadd.f32 %v2887, %v3147
        %v3214 = vadd.f32 %v2888, %v3150
        %v3215 = vadd.f32 %v2889, %v3155
        %v3216 = vadd.f32 %v2890, %v3158
        %v3217 = vadd.f32 %v2891, %v3163
        %v3218 = vadd.f32 %v2892, %v3166
        %v3219 = vadd.f32 %v2893, %v3171
        %v3220 = vadd.f32 %v2894, %v3174
        %v3221 = vadd.f32 %v2895, %v3179
        %v3222 = vadd.f32 %v2896, %v3182
        %v3223 = vadd.f32 %v2897, %v3187
        %v3224 = vadd.f32 %v2898, %v3190
        %v3225 = vld [vmem:[%s353 + $0x4] sm:$0xf]
        %v3226 = vld [vmem:[%s353 + $0x8] sm:$0xf]
        %v3227 = vld [vmem:[%s353 + $0xc] sm:$0x1]
        %v3228 = vld [vmem:[%s353 + $0x14] sm:$0xf]
        %v3229 = vld [vmem:[%s353 + $0x18] sm:$0xf]
        %v3230 = vld [vmem:[%s353 + $0x1c] sm:$0x1]
        %v3231 = vld [vmem:[%s353 + $0x24] sm:$0xf]
        %v3232 = vld [vmem:[%s353 + $0x28] sm:$0xf]
        %v3233 = vld [vmem:[%s353 + $0x2c] sm:$0x1]
        %v3234 = vld [vmem:[%s353 + $0x34] sm:$0xf]
        %v3235 = vld [vmem:[%s353 + $0x38] sm:$0xf]
        %v3236 = vld [vmem:[%s353 + $0x3c] sm:$0x1]
        %v3237 = vld [vmem:[%s353 + $0x44] sm:$0xf]
        %v3238 = vld [vmem:[%s353 + $0x48] sm:$0xf]
        %v3239 = vld [vmem:[%s353 + $0x4c] sm:$0x1]
        %v3240 = vld [vmem:[%s353 + $0x54] sm:$0xf]
        %v3241 = vld [vmem:[%s353 + $0x58] sm:$0xf]
        %v3242 = vld [vmem:[%s353 + $0x5c] sm:$0x1]
        %v3243 = vld [vmem:[%s353 + $0x64] sm:$0xf]
        %v3244 = vld [vmem:[%s353 + $0x68] sm:$0xf]
        %v3245 = vld [vmem:[%s353 + $0x6c] sm:$0x1]
        %v3246 = vld [vmem:[%s353 + $0x74] sm:$0xf]
        %v3247 = vld [vmem:[%s353 + $0x78] sm:$0xf]
        %v3248 = vld [vmem:[%s353 + $0x7c] sm:$0x1]
        %v3249 = vld [vmem:[%s353 + $0x84] sm:$0xf]
        %v3250 = vld [vmem:[%s353 + $0x88] sm:$0xf]
        %v3251 = vld [vmem:[%s353 + $0x8c] sm:$0x1]
        %v3252 = vld [vmem:[%s353 + $0x94] sm:$0xf]
        %v3253 = vld [vmem:[%s353 + $0x98] sm:$0xf]
        %v3254 = vld [vmem:[%s353 + $0x9c] sm:$0x1]
        %v3255 = vld [vmem:[%s353 + $0xa4] sm:$0xf]
        %v3256 = vld [vmem:[%s353 + $0xa8] sm:$0xf]
        %v3257 = vld [vmem:[%s353 + $0xac] sm:$0x1]
        %v3258 = vld [vmem:[%s353 + $0xb4] sm:$0xf]
        %v3259 = vld [vmem:[%s353 + $0xb8] sm:$0xf]
        %v3260 = vld [vmem:[%s353 + $0xbc] sm:$0x1]
        %v3261 = vld [vmem:[%s353 + $0xc4] sm:$0xf]
        %v3262 = vld [vmem:[%s353 + $0xc8] sm:$0xf]
        %v3263 = vld [vmem:[%s353 + $0xcc] sm:$0x1]
        %v3264 = vld [vmem:[%s353 + $0xd4] sm:$0xf]
        %v3265 = vld [vmem:[%s353 + $0xd8] sm:$0xf]
        %v3266 = vld [vmem:[%s353 + $0xdc] sm:$0x1]
        %v3267 = vld [vmem:[%s353 + $0xe4] sm:$0xf]
        %v3268 = vld [vmem:[%s353 + $0xe8] sm:$0xf]
        %v3269 = vld [vmem:[%s353 + $0xec] sm:$0x1]
        %v3270 = vld [vmem:[%s353 + $0xf4] sm:$0xf]
        %v3271 = vld [vmem:[%s353 + $0xf8] sm:$0xf]
        %v3272 = vld [vmem:[%s353 + $0xfc] sm:$0x1]
        %v3274 = vshrl.u32 %v3225, 16
        %v3276 = vrot.slane %v3274, 4
        %v3277 = vshll.u32 %v3225, 16
        %v3279 = vrot.slane %v3277, 5
        %v3280 = vor.u32 %v3276, %v3279
        %v3281 = vrot.slane %v3280, 4
        %v3283 = vshll.u32 %v3226, 16
        %v3285 = vrot.slane %v3283, 5
        %v3286 = vsel %vm1526, %v3281, %v3285
        %v3287 = vshrl.u32 %v3226, 16
        %v3289 = vrot.slane %v3287, 4
        %v3290 = vor.u32 %v3289, %v3285
        %v3291 = vrot.slane %v3290, 4
        %v3293 = vshll.u32 %v3227, 16
        %v3295 = vrot.slane %v3293, 5
        %v3296 = vsel %vm1526, %v3291, %v3295
        %v3298 = vshrl.u32 %v3228, 16
        %v3300 = vrot.slane %v3298, 4
        %v3301 = vshll.u32 %v3228, 16
        %v3303 = vrot.slane %v3301, 5
        %v3304 = vor.u32 %v3300, %v3303
        %v3305 = vrot.slane %v3304, 4
        %v3307 = vshll.u32 %v3229, 16
        %v3309 = vrot.slane %v3307, 5
        %v3310 = vsel %vm1526, %v3305, %v3309
        %v3311 = vshrl.u32 %v3229, 16
        %v3313 = vrot.slane %v3311, 4
        %v3314 = vor.u32 %v3313, %v3309
        %v3315 = vrot.slane %v3314, 4
        %v3317 = vshll.u32 %v3230, 16
        %v3319 = vrot.slane %v3317, 5
        %v3320 = vsel %vm1526, %v3315, %v3319
        %v3322 = vshrl.u32 %v3231, 16
        %v3324 = vrot.slane %v3322, 4
        %v3325 = vshll.u32 %v3231, 16
        %v3327 = vrot.slane %v3325, 5
        %v3328 = vor.u32 %v3324, %v3327
        %v3329 = vrot.slane %v3328, 4
        %v3331 = vshll.u32 %v3232, 16
        %v3333 = vrot.slane %v3331, 5
        %v3334 = vsel %vm1526, %v3329, %v3333
        %v3335 = vshrl.u32 %v3232, 16
        %v3337 = vrot.slane %v3335, 4
        %v3338 = vor.u32 %v3337, %v3333
        %v3339 = vrot.slane %v3338, 4
        %v3341 = vshll.u32 %v3233, 16
        %v3343 = vrot.slane %v3341, 5
        %v3344 = vsel %vm1526, %v3339, %v3343
        %v3346 = vshrl.u32 %v3234, 16
        %v3348 = vrot.slane %v3346, 4
        %v3349 = vshll.u32 %v3234, 16
        %v3351 = vrot.slane %v3349, 5
        %v3352 = vor.u32 %v3348, %v3351
        %v3353 = vrot.slane %v3352, 4
        %v3355 = vshll.u32 %v3235, 16
        %v3357 = vrot.slane %v3355, 5
        %v3358 = vsel %vm1526, %v3353, %v3357
        %v3359 = vshrl.u32 %v3235, 16
        %v3361 = vrot.slane %v3359, 4
        %v3362 = vor.u32 %v3361, %v3357
        %v3363 = vrot.slane %v3362, 4
        %v3365 = vshll.u32 %v3236, 16
        %v3367 = vrot.slane %v3365, 5
        %v3368 = vsel %vm1526, %v3363, %v3367
        %v3370 = vshrl.u32 %v3237, 16
        %v3372 = vrot.slane %v3370, 4
        %v3373 = vshll.u32 %v3237, 16
        %v3375 = vrot.slane %v3373, 5
        %v3376 = vor.u32 %v3372, %v3375
        %v3377 = vrot.slane %v3376, 4
        %v3379 = vshll.u32 %v3238, 16
        %v3381 = vrot.slane %v3379, 5
        %v3382 = vsel %vm1526, %v3377, %v3381
        %v3383 = vshrl.u32 %v3238, 16
        %v3385 = vrot.slane %v3383, 4
        %v3386 = vor.u32 %v3385, %v3381
        %v3387 = vrot.slane %v3386, 4
        %v3389 = vshll.u32 %v3239, 16
        %v3391 = vrot.slane %v3389, 5
        %v3392 = vsel %vm1526, %v3387, %v3391
        %v3394 = vshrl.u32 %v3240, 16
        %v3396 = vrot.slane %v3394, 4
        %v3397 = vshll.u32 %v3240, 16
        %v3399 = vrot.slane %v3397, 5
        %v3400 = vor.u32 %v3396, %v3399
        %v3401 = vrot.slane %v3400, 4
        %v3403 = vshll.u32 %v3241, 16
        %v3405 = vrot.slane %v3403, 5
        %v3406 = vsel %vm1526, %v3401, %v3405
        %v3407 = vshrl.u32 %v3241, 16
        %v3409 = vrot.slane %v3407, 4
        %v3410 = vor.u32 %v3409, %v3405
        %v3411 = vrot.slane %v3410, 4
        %v3413 = vshll.u32 %v3242, 16
        %v3415 = vrot.slane %v3413, 5
        %v3416 = vsel %vm1526, %v3411, %v3415
        %v3418 = vshrl.u32 %v3243, 16
        %v3420 = vrot.slane %v3418, 4
        %v3421 = vshll.u32 %v3243, 16
        %v3423 = vrot.slane %v3421, 5
        %v3424 = vor.u32 %v3420, %v3423
        %v3425 = vrot.slane %v3424, 4
        %v3427 = vshll.u32 %v3244, 16
        %v3429 = vrot.slane %v3427, 5
        %v3430 = vsel %vm1526, %v3425, %v3429
        %v3431 = vshrl.u32 %v3244, 16
        %v3433 = vrot.slane %v3431, 4
        %v3434 = vor.u32 %v3433, %v3429
        %v3435 = vrot.slane %v3434, 4
        %v3437 = vshll.u32 %v3245, 16
        %v3439 = vrot.slane %v3437, 5
        %v3440 = vsel %vm1526, %v3435, %v3439
        %v3442 = vshrl.u32 %v3246, 16
        %v3444 = vrot.slane %v3442, 4
        %v3445 = vshll.u32 %v3246, 16
        %v3447 = vrot.slane %v3445, 5
        %v3448 = vor.u32 %v3444, %v3447
        %v3449 = vrot.slane %v3448, 4
        %v3451 = vshll.u32 %v3247, 16
        %v3453 = vrot.slane %v3451, 5
        %v3454 = vsel %vm1526, %v3449, %v3453
        %v3455 = vshrl.u32 %v3247, 16
        %v3457 = vrot.slane %v3455, 4
        %v3458 = vor.u32 %v3457, %v3453
        %v3459 = vrot.slane %v3458, 4
        %v3461 = vshll.u32 %v3248, 16
        %v3463 = vrot.slane %v3461, 5
        %v3464 = vsel %vm1526, %v3459, %v3463
        %v3466 = vshrl.u32 %v3249, 16
        %v3468 = vrot.slane %v3466, 4
        %v3469 = vshll.u32 %v3249, 16
        %v3471 = vrot.slane %v3469, 5
        %v3472 = vor.u32 %v3468, %v3471
        %v3473 = vrot.slane %v3472, 4
        %v3475 = vshll.u32 %v3250, 16
        %v3477 = vrot.slane %v3475, 5
        %v3478 = vsel %vm1526, %v3473, %v3477
        %v3479 = vshrl.u32 %v3250, 16
        %v3481 = vrot.slane %v3479, 4
        %v3482 = vor.u32 %v3481, %v3477
        %v3483 = vrot.slane %v3482, 4
        %v3485 = vshll.u32 %v3251, 16
        %v3487 = vrot.slane %v3485, 5
        %v3488 = vsel %vm1526, %v3483, %v3487
        %v3490 = vshrl.u32 %v3252, 16
        %v3492 = vrot.slane %v3490, 4
        %v3493 = vshll.u32 %v3252, 16
        %v3495 = vrot.slane %v3493, 5
        %v3496 = vor.u32 %v3492, %v3495
        %v3497 = vrot.slane %v3496, 4
        %v3499 = vshll.u32 %v3253, 16
        %v3501 = vrot.slane %v3499, 5
        %v3502 = vsel %vm1526, %v3497, %v3501
        %v3503 = vshrl.u32 %v3253, 16
        %v3505 = vrot.slane %v3503, 4
        %v3506 = vor.u32 %v3505, %v3501
        %v3507 = vrot.slane %v3506, 4
        %v3509 = vshll.u32 %v3254, 16
        %v3511 = vrot.slane %v3509, 5
        %v3512 = vsel %vm1526, %v3507, %v3511
        %v3514 = vshrl.u32 %v3255, 16
        %v3516 = vrot.slane %v3514, 4
        %v3517 = vshll.u32 %v3255, 16
        %v3519 = vrot.slane %v3517, 5
        %v3520 = vor.u32 %v3516, %v3519
        %v3521 = vrot.slane %v3520, 4
        %v3523 = vshll.u32 %v3256, 16
        %v3525 = vrot.slane %v3523, 5
        %v3526 = vsel %vm1526, %v3521, %v3525
        %v3527 = vshrl.u32 %v3256, 16
        %v3529 = vrot.slane %v3527, 4
        %v3530 = vor.u32 %v3529, %v3525
        %v3531 = vrot.slane %v3530, 4
        %v3533 = vshll.u32 %v3257, 16
        %v3535 = vrot.slane %v3533, 5
        %v3536 = vsel %vm1526, %v3531, %v3535
        %v3538 = vshrl.u32 %v3258, 16
        %v3540 = vrot.slane %v3538, 4
        %v3541 = vshll.u32 %v3258, 16
        %v3543 = vrot.slane %v3541, 5
        %v3544 = vor.u32 %v3540, %v3543
        %v3545 = vrot.slane %v3544, 4
        %v3547 = vshll.u32 %v3259, 16
        %v3549 = vrot.slane %v3547, 5
        %v3550 = vsel %vm1526, %v3545, %v3549
        %v3551 = vshrl.u32 %v3259, 16
        %v3553 = vrot.slane %v3551, 4
        %v3554 = vor.u32 %v3553, %v3549
        %v3555 = vrot.slane %v3554, 4
        %v3557 = vshll.u32 %v3260, 16
        %v3559 = vrot.slane %v3557, 5
        %v3560 = vsel %vm1526, %v3555, %v3559
        %v3562 = vshrl.u32 %v3261, 16
        %v3564 = vrot.slane %v3562, 4
        %v3565 = vshll.u32 %v3261, 16
        %v3567 = vrot.slane %v3565, 5
        %v3568 = vor.u32 %v3564, %v3567
        %v3569 = vrot.slane %v3568, 4
        %v3571 = vshll.u32 %v3262, 16
        %v3573 = vrot.slane %v3571, 5
        %v3574 = vsel %vm1526, %v3569, %v3573
        %v3575 = vshrl.u32 %v3262, 16
        %v3577 = vrot.slane %v3575, 4
        %v3578 = vor.u32 %v3577, %v3573
        %v3579 = vrot.slane %v3578, 4
        %v3581 = vshll.u32 %v3263, 16
        %v3583 = vrot.slane %v3581, 5
        %v3584 = vsel %vm1526, %v3579, %v3583
        %v3586 = vshrl.u32 %v3264, 16
        %v3588 = vrot.slane %v3586, 4
        %v3589 = vshll.u32 %v3264, 16
        %v3591 = vrot.slane %v3589, 5
        %v3592 = vor.u32 %v3588, %v3591
        %v3593 = vrot.slane %v3592, 4
        %v3595 = vshll.u32 %v3265, 16
        %v3597 = vrot.slane %v3595, 5
        %v3598 = vsel %vm1526, %v3593, %v3597
        %v3599 = vshrl.u32 %v3265, 16
        %v3601 = vrot.slane %v3599, 4
        %v3602 = vor.u32 %v3601, %v3597
        %v3603 = vrot.slane %v3602, 4
        %v3605 = vshll.u32 %v3266, 16
        %v3607 = vrot.slane %v3605, 5
        %v3608 = vsel %vm1526, %v3603, %v3607
        %v3610 = vshrl.u32 %v3267, 16
        %v3612 = vrot.slane %v3610, 4
        %v3613 = vshll.u32 %v3267, 16
        %v3615 = vrot.slane %v3613, 5
        %v3616 = vor.u32 %v3612, %v3615
        %v3617 = vrot.slane %v3616, 4
        %v3619 = vshll.u32 %v3268, 16
        %v3621 = vrot.slane %v3619, 5
        %v3622 = vsel %vm1526, %v3617, %v3621
        %v3623 = vshrl.u32 %v3268, 16
        %v3625 = vrot.slane %v3623, 4
        %v3626 = vor.u32 %v3625, %v3621
        %v3627 = vrot.slane %v3626, 4
        %v3629 = vshll.u32 %v3269, 16
        %v3631 = vrot.slane %v3629, 5
        %v3632 = vsel %vm1526, %v3627, %v3631
        %v3634 = vshrl.u32 %v3270, 16
        %v3636 = vrot.slane %v3634, 4
        %v3637 = vshll.u32 %v3270, 16
        %v3639 = vrot.slane %v3637, 5
        %v3640 = vor.u32 %v3636, %v3639
        %v3641 = vrot.slane %v3640, 4
        %v3643 = vshll.u32 %v3271, 16
        %v3645 = vrot.slane %v3643, 5
        %v3646 = vsel %vm1526, %v3641, %v3645
        %v3647 = vshrl.u32 %v3271, 16
        %v3649 = vrot.slane %v3647, 4
        %v3650 = vor.u32 %v3649, %v3645
        %v3651 = vrot.slane %v3650, 4
        %v3653 = vshll.u32 %v3272, 16
        %v3655 = vrot.slane %v3653, 5
        %v3656 = vsel %vm1526, %v3651, %v3655
        %s3657 = scalar_lea.vmem [#allocation8], 20
        %v3658 = vld [vmem:[%s3657] sm:$0xf]
        %v3659 = vunpack.c.l.b16 %v3286
        %v3660 = vunpack.c.l.b16 %v3296
        %v3661 = vunpack.c.l.b16 %v3310
        %v3662 = vunpack.c.l.b16 %v3320
        %v3663 = vunpack.c.l.b16 %v3334
        %v3664 = vunpack.c.l.b16 %v3344
        %v3665 = vunpack.c.l.b16 %v3358
        %v3666 = vunpack.c.l.b16 %v3368
        %v3667 = vunpack.c.l.b16 %v3382
        %v3668 = vunpack.c.l.b16 %v3392
        %v3669 = vunpack.c.l.b16 %v3406
        %v3670 = vunpack.c.l.b16 %v3416
        %v3671 = vunpack.c.l.b16 %v3430
        %v3672 = vunpack.c.l.b16 %v3440
        %v3673 = vunpack.c.l.b16 %v3454
        %v3674 = vunpack.c.l.b16 %v3464
        %v3675 = vunpack.c.l.b16 %v3478
        %v3676 = vunpack.c.l.b16 %v3488
        %v3677 = vunpack.c.l.b16 %v3502
        %v3678 = vunpack.c.l.b16 %v3512
        %v3679 = vunpack.c.l.b16 %v3526
        %v3680 = vunpack.c.l.b16 %v3536
        %v3681 = vunpack.c.l.b16 %v3550
        %v3682 = vunpack.c.l.b16 %v3560
        %v3683 = vunpack.c.l.b16 %v3574
        %v3684 = vunpack.c.l.b16 %v3584
        %v3685 = vunpack.c.l.b16 %v3598
        %v3686 = vunpack.c.l.b16 %v3608
        %v3687 = vunpack.c.l.b16 %v3622
        %v3688 = vunpack.c.l.b16 %v3632
        %v3689 = vunpack.c.l.b16 %v3646
        %v3690 = vunpack.c.l.b16 %v3656
        %v3691 = vpack.c.b16 %v3660, %v3659
        %v3692 = vpack.c.b16 %v3662, %v3661
        %v3693 = vpack.c.b16 %v3664, %v3663
        %v3694 = vpack.c.b16 %v3666, %v3665
        %v3695 = vpack.c.b16 %v3668, %v3667
        %v3696 = vpack.c.b16 %v3670, %v3669
        %v3697 = vpack.c.b16 %v3672, %v3671
        %v3698 = vpack.c.b16 %v3674, %v3673
        %v3699 = vpack.c.b16 %v3676, %v3675
        %v3700 = vpack.c.b16 %v3678, %v3677
        %v3701 = vpack.c.b16 %v3680, %v3679
        %v3702 = vpack.c.b16 %v3682, %v3681
        %v3703 = vpack.c.b16 %v3684, %v3683
        %v3704 = vpack.c.b16 %v3686, %v3685
        %v3705 = vpack.c.b16 %v3688, %v3687
        %v3706 = vpack.c.b16 %v3690, %v3689
        %v3708 = vsel %vm1002, %v3691, 0
        %v3711 = vsel %vm1002, %v3692, 0
        %v3714 = vsel %vm1002, %v3693, 0
        %v3717 = vsel %vm1002, %v3694, 0
        %v3720 = vsel %vm1002, %v3695, 0
        %v3723 = vsel %vm1002, %v3696, 0
        %v3726 = vsel %vm1002, %v3697, 0
        %v3729 = vsel %vm1002, %v3698, 0
        %v3732 = vsel %vm1002, %v3699, 0
        %v3735 = vsel %vm1002, %v3700, 0
        %v3738 = vsel %vm1002, %v3701, 0
        %v3741 = vsel %vm1002, %v3702, 0
        %v3744 = vsel %vm1002, %v3703, 0
        %v3747 = vsel %vm1002, %v3704, 0
        %v3750 = vsel %vm1002, %v3705, 0
        %v3753 = vsel %vm1002, %v3706, 0
        %v3756 = vsel %vm1051, %v3658, 0
        %3758 = vmatprep.subr.bf16.mxu0 0
        %3759 = vmatpush1.bf16.msra.mxu0 %v3756
        %3760 = vmatprep.subr.bf16.mxu0 0
        %3761 = vmatpush1.bf16.msra.mxu0 0
        %3762 = vmatprep.subr.bf16.mxu0 0
        %3763 = vmatpush1.bf16.msra.mxu0 0
        %3764 = vmatprep.subr.bf16.mxu0 0
        %3765 = vmatpush1.bf16.msra.mxu0 0
        %3766 = vmatprep.subr.bf16.mxu0 0
        %3767 = vmatpush1.bf16.msra.mxu0 0
        %3768 = vmatprep.subr.bf16.mxu0 0
        %3769 = vmatpush1.bf16.msra.mxu0 0
        %3770 = vmatprep.subr.bf16.mxu0 0
        %3771 = vmatpush1.bf16.msra.mxu0 0
        %3772 = vmatprep.subr.bf16.mxu0 0
        %3773 = vmatpush1.bf16.msra.mxu0 0
        %3774 = vmatprep.subr.bf16.mxu0 0
        %3775 = vmatpush1.bf16.msra.mxu0 0
        %3776 = vmatprep.subr.bf16.mxu0 0
        %3777 = vmatpush1.bf16.msra.mxu0 0
        %3778 = vmatprep.subr.bf16.mxu0 0
        %3779 = vmatpush1.bf16.msra.mxu0 0
        %3780 = vmatprep.subr.bf16.mxu0 0
        %3781 = vmatpush1.bf16.msra.mxu0 0
        %3782 = vmatprep.subr.bf16.mxu0 0
        %3783 = vmatpush1.bf16.msra.mxu0 0
        %3784 = vmatprep.subr.bf16.mxu0 0
        %3785 = vmatpush1.bf16.msra.mxu0 0
        %3786 = vmatprep.subr.bf16.mxu0 0
        %3787 = vmatpush1.bf16.msra.mxu0 0
        %3788 = vmatprep.subr.bf16.mxu0 0
        %3789 = vmatpush1.bf16.msra.mxu0 0
        %3790 = vmatprep.mubr.bf16.mxu0 0
        %3791 = vmatmul.mubr.bf16.gmra.mrb[0].mxu0 %v3708
        %v3792 = vpop.f32.mrb[0].mxu0
        %v3793 = vadd.f32 0.0, %v3792
        %v3794 = vpop.f32.mrb[0].mxu0
        %v3795 = vpop.f32.mrb[0].mxu0
        %v3796 = vadd.f32 0.0, %v3795
        %v3797 = vpop.f32.mrb[0].mxu0
        %3798 = vmatprep.mubr.bf16.mxu0 0
        %3799 = vmatmul.mubr.bf16.gmra.mrb[0].mxu0 %v3711
        %v3800 = vpop.f32.mrb[0].mxu0
        %v3801 = vadd.f32 0.0, %v3800
        %v3802 = vpop.f32.mrb[0].mxu0
        %v3803 = vpop.f32.mrb[0].mxu0
        %v3804 = vadd.f32 0.0, %v3803
        %v3805 = vpop.f32.mrb[0].mxu0
        %3806 = vmatprep.mubr.bf16.mxu0 0
        %3807 = vmatmul.mubr.bf16.gmra.mrb[0].mxu0 %v3714
        %v3808 = vpop.f32.mrb[0].mxu0
        %v3809 = vadd.f32 0.0, %v3808
        %v3810 = vpop.f32.mrb[0].mxu0
        %v3811 = vpop.f32.mrb[0].mxu0
        %v3812 = vadd.f32 0.0, %v3811
        %v3813 = vpop.f32.mrb[0].mxu0
        %3814 = vmatprep.mubr.bf16.mxu0 0
        %3815 = vmatmul.mubr.bf16.gmra.mrb[0].mxu0 %v3717
        %v3816 = vpop.f32.mrb[0].mxu0
        %v3817 = vadd.f32 0.0, %v3816
        %v3818 = vpop.f32.mrb[0].mxu0
        %v3819 = vpop.f32.mrb[0].mxu0
        %v3820 = vadd.f32 0.0, %v3819
        %v3821 = vpop.f32.mrb[0].mxu0
        %3822 = vmatprep.mubr.bf16.mxu0 0
        %3823 = vmatmul.mubr.bf16.gmra.mrb[0].mxu0 %v3720
        %v3824 = vpop.f32.mrb[0].mxu0
        %v3825 = vadd.f32 0.0, %v3824
        %v3826 = vpop.f32.mrb[0].mxu0
        %v3827 = vpop.f32.mrb[0].mxu0
        %v3828 = vadd.f32 0.0, %v3827
        %v3829 = vpop.f32.mrb[0].mxu0
        %3830 = vmatprep.mubr.bf16.mxu0 0
        %3831 = vmatmul.mubr.bf16.gmra.mrb[0].mxu0 %v3723
        %v3832 = vpop.f32.mrb[0].mxu0
        %v3833 = vadd.f32 0.0, %v3832
        %v3834 = vpop.f32.mrb[0].mxu0
        %v3835 = vpop.f32.mrb[0].mxu0
        %v3836 = vadd.f32 0.0, %v3835
        %v3837 = vpop.f32.mrb[0].mxu0
        %3838 = vmatprep.mubr.bf16.mxu0 0
        %3839 = vmatmul.mubr.bf16.gmra.mrb[0].mxu0 %v3726
        %v3840 = vpop.f32.mrb[0].mxu0
        %v3841 = vadd.f32 0.0, %v3840
        %v3842 = vpop.f32.mrb[0].mxu0
        %v3843 = vpop.f32.mrb[0].mxu0
        %v3844 = vadd.f32 0.0, %v3843
        %v3845 = vpop.f32.mrb[0].mxu0
        %3846 = vmatprep.mubr.bf16.mxu0 0
        %3847 = vmatmul.mubr.bf16.gmra.mrb[0].mxu0 %v3729
        %v3848 = vpop.f32.mrb[0].mxu0
        %v3849 = vadd.f32 0.0, %v3848
        %v3850 = vpop.f32.mrb[0].mxu0
        %v3851 = vpop.f32.mrb[0].mxu0
        %v3852 = vadd.f32 0.0, %v3851
        %v3853 = vpop.f32.mrb[0].mxu0
        %3854 = vmatprep.mubr.bf16.mxu0 0
        %3855 = vmatmul.mubr.bf16.gmra.mrb[0].mxu0 %v3732
        %v3856 = vpop.f32.mrb[0].mxu0
        %v3857 = vadd.f32 0.0, %v3856
        %v3858 = vpop.f32.mrb[0].mxu0
        %v3859 = vpop.f32.mrb[0].mxu0
        %v3860 = vadd.f32 0.0, %v3859
        %v3861 = vpop.f32.mrb[0].mxu0
        %3862 = vmatprep.mubr.bf16.mxu0 0
        %3863 = vmatmul.mubr.bf16.gmra.mrb[0].mxu0 %v3735
        %v3864 = vpop.f32.mrb[0].mxu0
        %v3865 = vadd.f32 0.0, %v3864
        %v3866 = vpop.f32.mrb[0].mxu0
        %v3867 = vpop.f32.mrb[0].mxu0
        %v3868 = vadd.f32 0.0, %v3867
        %v3869 = vpop.f32.mrb[0].mxu0
        %3870 = vmatprep.mubr.bf16.mxu0 0
        %3871 = vmatmul.mubr.bf16.gmra.mrb[0].mxu0 %v3738
        %v3872 = vpop.f32.mrb[0].mxu0
        %v3873 = vadd.f32 0.0, %v3872
        %v3874 = vpop.f32.mrb[0].mxu0
        %v3875 = vpop.f32.mrb[0].mxu0
        %v3876 = vadd.f32 0.0, %v3875
        %v3877 = vpop.f32.mrb[0].mxu0
        %3878 = vmatprep.mubr.bf16.mxu0 0
        %3879 = vmatmul.mubr.bf16.gmra.mrb[0].mxu0 %v3741
        %v3880 = vpop.f32.mrb[0].mxu0
        %v3881 = vadd.f32 0.0, %v3880
        %v3882 = vpop.f32.mrb[0].mxu0
        %v3883 = vpop.f32.mrb[0].mxu0
        %v3884 = vadd.f32 0.0, %v3883
        %v3885 = vpop.f32.mrb[0].mxu0
        %3886 = vmatprep.mubr.bf16.mxu0 0
        %3887 = vmatmul.mubr.bf16.gmra.mrb[0].mxu0 %v3744
        %v3888 = vpop.f32.mrb[0].mxu0
        %v3889 = vadd.f32 0.0, %v3888
        %v3890 = vpop.f32.mrb[0].mxu0
        %v3891 = vpop.f32.mrb[0].mxu0
        %v3892 = vadd.f32 0.0, %v3891
        %v3893 = vpop.f32.mrb[0].mxu0
        %3894 = vmatprep.mubr.bf16.mxu0 0
        %3895 = vmatmul.mubr.bf16.gmra.mrb[0].mxu0 %v3747
        %v3896 = vpop.f32.mrb[0].mxu0
        %v3897 = vadd.f32 0.0, %v3896
        %v3898 = vpop.f32.mrb[0].mxu0
        %v3899 = vpop.f32.mrb[0].mxu0
        %v3900 = vadd.f32 0.0, %v3899
        %v3901 = vpop.f32.mrb[0].mxu0
        %3902 = vmatprep.mubr.bf16.mxu0 0
        %3903 = vmatmul.mubr.bf16.gmra.mrb[0].mxu0 %v3750
        %v3904 = vpop.f32.mrb[0].mxu0
        %v3905 = vadd.f32 0.0, %v3904
        %v3906 = vpop.f32.mrb[0].mxu0
        %v3907 = vpop.f32.mrb[0].mxu0
        %v3908 = vadd.f32 0.0, %v3907
        %v3909 = vpop.f32.mrb[0].mxu0
        %3910 = vmatprep.mubr.bf16.mxu0 0
        %3911 = vmatmul.mubr.bf16.gmra.mrb[0].mxu0 %v3753
        %v3912 = vpop.f32.mrb[0].mxu0
        %v3913 = vadd.f32 0.0, %v3912
        %v3914 = vpop.f32.mrb[0].mxu0
        %v3915 = vpop.f32.mrb[0].mxu0
        %v3916 = vadd.f32 0.0, %v3915
        %v3917 = vpop.f32.mrb[0].mxu0
        %3918 = vdwg.mxu0
        %v3919 = vadd.f32 %v3193, %v3793
        %v3920 = vadd.f32 %v3194, %v3796
        %v3921 = vadd.f32 %v3195, %v3801
        %v3922 = vadd.f32 %v3196, %v3804
        %v3923 = vadd.f32 %v3197, %v3809
        %v3924 = vadd.f32 %v3198, %v3812
        %v3925 = vadd.f32 %v3199, %v3817
        %v3926 = vadd.f32 %v3200, %v3820
        %v3927 = vadd.f32 %v3201, %v3825
        %v3928 = vadd.f32 %v3202, %v3828
        %v3929 = vadd.f32 %v3203, %v3833
        %v3930 = vadd.f32 %v3204, %v3836
        %v3931 = vadd.f32 %v3205, %v3841
        %v3932 = vadd.f32 %v3206, %v3844
        %v3933 = vadd.f32 %v3207, %v3849
        %v3934 = vadd.f32 %v3208, %v3852
        %v3935 = vadd.f32 %v3209, %v3857
        %v3936 = vadd.f32 %v3210, %v3860
        %v3937 = vadd.f32 %v3211, %v3865
        %v3938 = vadd.f32 %v3212, %v3868
        %v3939 = vadd.f32 %v3213, %v3873
        %v3940 = vadd.f32 %v3214, %v3876
        %v3941 = vadd.f32 %v3215, %v3881
        %v3942 = vadd.f32 %v3216, %v3884
        %v3943 = vadd.f32 %v3217, %v3889
        %v3944 = vadd.f32 %v3218, %v3892
        %v3945 = vadd.f32 %v3219, %v3897
        %v3946 = vadd.f32 %v3220, %v3900
        %v3947 = vadd.f32 %v3221, %v3905
        %v3948 = vadd.f32 %v3222, %v3908
        %v3949 = vadd.f32 %v3223, %v3913
        %v3950 = vadd.f32 %v3224, %v3916
        %s3951 = scalar_lea.vmem [#allocation2], 32
        %v3952 = vld [vmem:[%s3951] sm:$0x8]
        %v3953 = vld [vmem:[%s3951 + $0x4] sm:$0xf]
        %v3954 = vld [vmem:[%s3951 + $0x8] sm:$0xf]
        %v3955 = vld [vmem:[%s3951 + $0x10] sm:$0x8]
        %v3956 = vld [vmem:[%s3951 + $0x14] sm:$0xf]
        %v3957 = vld [vmem:[%s3951 + $0x18] sm:$0xf]
        %v3958 = vld [vmem:[%s3951 + $0x20] sm:$0x8]
        %v3959 = vld [vmem:[%s3951 + $0x24] sm:$0xf]
        %v3960 = vld [vmem:[%s3951 + $0x28] sm:$0xf]
        %v3961 = vld [vmem:[%s3951 + $0x30] sm:$0x8]
        %v3962 = vld [vmem:[%s3951 + $0x34] sm:$0xf]
        %v3963 = vld [vmem:[%s3951 + $0x38] sm:$0xf]
        %v3964 = vld [vmem:[%s3951 + $0x40] sm:$0x8]
        %v3965 = vld [vmem:[%s3951 + $0x44] sm:$0xf]
        %v3966 = vld [vmem:[%s3951 + $0x48] sm:$0xf]
        %v3967 = vld [vmem:[%s3951 + $0x50] sm:$0x8]
        %v3968 = vld [vmem:[%s3951 + $0x54] sm:$0xf]
        %v3969 = vld [vmem:[%s3951 + $0x58] sm:$0xf]
        %v3970 = vld [vmem:[%s3951 + $0x60] sm:$0x8]
        %v3971 = vld [vmem:[%s3951 + $0x64] sm:$0xf]
        %v3972 = vld [vmem:[%s3951 + $0x68] sm:$0xf]
        %v3973 = vld [vmem:[%s3951 + $0x70] sm:$0x8]
        %v3974 = vld [vmem:[%s3951 + $0x74] sm:$0xf]
        %v3975 = vld [vmem:[%s3951 + $0x78] sm:$0xf]
        %v3976 = vld [vmem:[%s3951 + $0x80] sm:$0x8]
        %v3977 = vld [vmem:[%s3951 + $0x84] sm:$0xf]
        %v3978 = vld [vmem:[%s3951 + $0x88] sm:$0xf]
        %v3979 = vld [vmem:[%s3951 + $0x90] sm:$0x8]
        %v3980 = vld [vmem:[%s3951 + $0x94] sm:$0xf]
        %v3981 = vld [vmem:[%s3951 + $0x98] sm:$0xf]
        %v3982 = vld [vmem:[%s3951 + $0xa0] sm:$0x8]
        %v3983 = vld [vmem:[%s3951 + $0xa4] sm:$0xf]
        %v3984 = vld [vmem:[%s3951 + $0xa8] sm:$0xf]
        %v3985 = vld [vmem:[%s3951 + $0xb0] sm:$0x8]
        %v3986 = vld [vmem:[%s3951 + $0xb4] sm:$0xf]
        %v3987 = vld [vmem:[%s3951 + $0xb8] sm:$0xf]
        %v3988 = vld [vmem:[%s3951 + $0xc0] sm:$0x8]
        %v3989 = vld [vmem:[%s3951 + $0xc4] sm:$0xf]
        %v3990 = vld [vmem:[%s3951 + $0xc8] sm:$0xf]
        %v3991 = vld [vmem:[%s3951 + $0xd0] sm:$0x8]
        %v3992 = vld [vmem:[%s3951 + $0xd4] sm:$0xf]
        %v3993 = vld [vmem:[%s3951 + $0xd8] sm:$0xf]
        %v3994 = vld [vmem:[%s3951 + $0xe0] sm:$0x8]
        %v3995 = vld [vmem:[%s3951 + $0xe4] sm:$0xf]
        %v3996 = vld [vmem:[%s3951 + $0xe8] sm:$0xf]
        %v3997 = vld [vmem:[%s3951 + $0xf0] sm:$0x8]
        %v3998 = vld [vmem:[%s3951 + $0xf4] sm:$0xf]
        %v3999 = vld [vmem:[%s3951 + $0xf8] sm:$0xf]
        %v4001 = vshrl.u32 %v3952, 16
        %v4003 = vrot.slane %v4001, 7
        %v4004 = vrot.slane %v4003, 4
        %v4006 = vshrl.u32 %v3953, 16
        %v4008 = vrot.slane %v4006, 7
        %v4009 = vshll.u32 %v3953, 16
        %v4011 = vor.u32 %v4008, %v4009
        %v4012 = vsel %vm566, %v4004, %v4011
        %v4013 = vrot.slane %v4008, 4
        %v4015 = vshrl.u32 %v3954, 16
        %v4017 = vrot.slane %v4015, 7
        %v4018 = vshll.u32 %v3954, 16
        %v4020 = vor.u32 %v4017, %v4018
        %v4021 = vsel %vm566, %v4013, %v4020
        %v4023 = vshrl.u32 %v3955, 16
        %v4025 = vrot.slane %v4023, 7
        %v4026 = vrot.slane %v4025, 4
        %v4028 = vshrl.u32 %v3956, 16
        %v4030 = vrot.slane %v4028, 7
        %v4031 = vshll.u32 %v3956, 16
        %v4033 = vor.u32 %v4030, %v4031
        %v4034 = vsel %vm566, %v4026, %v4033
        %v4035 = vrot.slane %v4030, 4
        %v4037 = vshrl.u32 %v3957, 16
        %v4039 = vrot.slane %v4037, 7
        %v4040 = vshll.u32 %v3957, 16
        %v4042 = vor.u32 %v4039, %v4040
        %v4043 = vsel %vm566, %v4035, %v4042
        %v4045 = vshrl.u32 %v3958, 16
        %v4047 = vrot.slane %v4045, 7
        %v4048 = vrot.slane %v4047, 4
        %v4050 = vshrl.u32 %v3959, 16
        %v4052 = vrot.slane %v4050, 7
        %v4053 = vshll.u32 %v3959, 16
        %v4055 = vor.u32 %v4052, %v4053
        %v4056 = vsel %vm566, %v4048, %v4055
        %v4057 = vrot.slane %v4052, 4
        %v4059 = vshrl.u32 %v3960, 16
        %v4061 = vrot.slane %v4059, 7
        %v4062 = vshll.u32 %v3960, 16
        %v4064 = vor.u32 %v4061, %v4062
        %v4065 = vsel %vm566, %v4057, %v4064
        %v4067 = vshrl.u32 %v3961, 16
        %v4069 = vrot.slane %v4067, 7
        %v4070 = vrot.slane %v4069, 4
        %v4072 = vshrl.u32 %v3962, 16
        %v4074 = vrot.slane %v4072, 7
        %v4075 = vshll.u32 %v3962, 16
        %v4077 = vor.u32 %v4074, %v4075
        %v4078 = vsel %vm566, %v4070, %v4077
        %v4079 = vrot.slane %v4074, 4
        %v4081 = vshrl.u32 %v3963, 16
        %v4083 = vrot.slane %v4081, 7
        %v4084 = vshll.u32 %v3963, 16
        %v4086 = vor.u32 %v4083, %v4084
        %v4087 = vsel %vm566, %v4079, %v4086
        %v4089 = vshrl.u32 %v3964, 16
        %v4091 = vrot.slane %v4089, 7
        %v4092 = vrot.slane %v4091, 4
        %v4094 = vshrl.u32 %v3965, 16
        %v4096 = vrot.slane %v4094, 7
        %v4097 = vshll.u32 %v3965, 16
        %v4099 = vor.u32 %v4096, %v4097
        %v4100 = vsel %vm566, %v4092, %v4099
        %v4101 = vrot.slane %v4096, 4
        %v4103 = vshrl.u32 %v3966, 16
        %v4105 = vrot.slane %v4103, 7
        %v4106 = vshll.u32 %v3966, 16
        %v4108 = vor.u32 %v4105, %v4106
        %v4109 = vsel %vm566, %v4101, %v4108
        %v4111 = vshrl.u32 %v3967, 16
        %v4113 = vrot.slane %v4111, 7
        %v4114 = vrot.slane %v4113, 4
        %v4116 = vshrl.u32 %v3968, 16
        %v4118 = vrot.slane %v4116, 7
        %v4119 = vshll.u32 %v3968, 16
        %v4121 = vor.u32 %v4118, %v4119
        %v4122 = vsel %vm566, %v4114, %v4121
        %v4123 = vrot.slane %v4118, 4
        %v4125 = vshrl.u32 %v3969, 16
        %v4127 = vrot.slane %v4125, 7
        %v4128 = vshll.u32 %v3969, 16
        %v4130 = vor.u32 %v4127, %v4128
        %v4131 = vsel %vm566, %v4123, %v4130
        %v4133 = vshrl.u32 %v3970, 16
        %v4135 = vrot.slane %v4133, 7
        %v4136 = vrot.slane %v4135, 4
        %v4138 = vshrl.u32 %v3971, 16
        %v4140 = vrot.slane %v4138, 7
        %v4141 = vshll.u32 %v3971, 16
        %v4143 = vor.u32 %v4140, %v4141
        %v4144 = vsel %vm566, %v4136, %v4143
        %v4145 = vrot.slane %v4140, 4
        %v4147 = vshrl.u32 %v3972, 16
        %v4149 = vrot.slane %v4147, 7
        %v4150 = vshll.u32 %v3972, 16
        %v4152 = vor.u32 %v4149, %v4150
        %v4153 = vsel %vm566, %v4145, %v4152
        %v4155 = vshrl.u32 %v3973, 16
        %v4157 = vrot.slane %v4155, 7
        %v4158 = vrot.slane %v4157, 4
        %v4160 = vshrl.u32 %v3974, 16
        %v4162 = vrot.slane %v4160, 7
        %v4163 = vshll.u32 %v3974, 16
        %v4165 = vor.u32 %v4162, %v4163
        %v4166 = vsel %vm566, %v4158, %v4165
        %v4167 = vrot.slane %v4162, 4
        %v4169 = vshrl.u32 %v3975, 16
        %v4171 = vrot.slane %v4169, 7
        %v4172 = vshll.u32 %v3975, 16
        %v4174 = vor.u32 %v4171, %v4172
        %v4175 = vsel %vm566, %v4167, %v4174
        %v4177 = vshrl.u32 %v3976, 16
        %v4179 = vrot.slane %v4177, 7
        %v4180 = vrot.slane %v4179, 4
        %v4182 = vshrl.u32 %v3977, 16
        %v4184 = vrot.slane %v4182, 7
        %v4185 = vshll.u32 %v3977, 16
        %v4187 = vor.u32 %v4184, %v4185
        %v4188 = vsel %vm566, %v4180, %v4187
        %v4189 = vrot.slane %v4184, 4
        %v4191 = vshrl.u32 %v3978, 16
        %v4193 = vrot.slane %v4191, 7
        %v4194 = vshll.u32 %v3978, 16
        %v4196 = vor.u32 %v4193, %v4194
        %v4197 = vsel %vm566, %v4189, %v4196
        %v4199 = vshrl.u32 %v3979, 16
        %v4201 = vrot.slane %v4199, 7
        %v4202 = vrot.slane %v4201, 4
        %v4204 = vshrl.u32 %v3980, 16
        %v4206 = vrot.slane %v4204, 7
        %v4207 = vshll.u32 %v3980, 16
        %v4209 = vor.u32 %v4206, %v4207
        %v4210 = vsel %vm566, %v4202, %v4209
        %v4211 = vrot.slane %v4206, 4
        %v4213 = vshrl.u32 %v3981, 16
        %v4215 = vrot.slane %v4213, 7
        %v4216 = vshll.u32 %v3981, 16
        %v4218 = vor.u32 %v4215, %v4216
        %v4219 = vsel %vm566, %v4211, %v4218
        %v4221 = vshrl.u32 %v3982, 16
        %v4223 = vrot.slane %v4221, 7
        %v4224 = vrot.slane %v4223, 4
        %v4226 = vshrl.u32 %v3983, 16
        %v4228 = vrot.slane %v4226, 7
        %v4229 = vshll.u32 %v3983, 16
        %v4231 = vor.u32 %v4228, %v4229
        %v4232 = vsel %vm566, %v4224, %v4231
        %v4233 = vrot.slane %v4228, 4
        %v4235 = vshrl.u32 %v3984, 16
        %v4237 = vrot.slane %v4235, 7
        %v4238 = vshll.u32 %v3984, 16
        %v4240 = vor.u32 %v4237, %v4238
        %v4241 = vsel %vm566, %v4233, %v4240
        %v4243 = vshrl.u32 %v3985, 16
        %v4245 = vrot.slane %v4243, 7
        %v4246 = vrot.slane %v4245, 4
        %v4248 = vshrl.u32 %v3986, 16
        %v4250 = vrot.slane %v4248, 7
        %v4251 = vshll.u32 %v3986, 16
        %v4253 = vor.u32 %v4250, %v4251
        %v4254 = vsel %vm566, %v4246, %v4253
        %v4255 = vrot.slane %v4250, 4
        %v4257 = vshrl.u32 %v3987, 16
        %v4259 = vrot.slane %v4257, 7
        %v4260 = vshll.u32 %v3987, 16
        %v4262 = vor.u32 %v4259, %v4260
        %v4263 = vsel %vm566, %v4255, %v4262
        %v4265 = vshrl.u32 %v3988, 16
        %v4267 = vrot.slane %v4265, 7
        %v4268 = vrot.slane %v4267, 4
        %v4270 = vshrl.u32 %v3989, 16
        %v4272 = vrot.slane %v4270, 7
        %v4273 = vshll.u32 %v3989, 16
        %v4275 = vor.u32 %v4272, %v4273
        %v4276 = vsel %vm566, %v4268, %v4275
        %v4277 = vrot.slane %v4272, 4
        %v4279 = vshrl.u32 %v3990, 16
        %v4281 = vrot.slane %v4279, 7
        %v4282 = vshll.u32 %v3990, 16
        %v4284 = vor.u32 %v4281, %v4282
        %v4285 = vsel %vm566, %v4277, %v4284
        %v4287 = vshrl.u32 %v3991, 16
        %v4289 = vrot.slane %v4287, 7
        %v4290 = vrot.slane %v4289, 4
        %v4292 = vshrl.u32 %v3992, 16
        %v4294 = vrot.slane %v4292, 7
        %v4295 = vshll.u32 %v3992, 16
        %v4297 = vor.u32 %v4294, %v4295
        %v4298 = vsel %vm566, %v4290, %v4297
        %v4299 = vrot.slane %v4294, 4
        %v4301 = vshrl.u32 %v3993, 16
        %v4303 = vrot.slane %v4301, 7
        %v4304 = vshll.u32 %v3993, 16
        %v4306 = vor.u32 %v4303, %v4304
        %v4307 = vsel %vm566, %v4299, %v4306
        %v4309 = vshrl.u32 %v3994, 16
        %v4311 = vrot.slane %v4309, 7
        %v4312 = vrot.slane %v4311, 4
        %v4314 = vshrl.u32 %v3995, 16
        %v4316 = vrot.slane %v4314, 7
        %v4317 = vshll.u32 %v3995, 16
        %v4319 = vor.u32 %v4316, %v4317
        %v4320 = vsel %vm566, %v4312, %v4319
        %v4321 = vrot.slane %v4316, 4
        %v4323 = vshrl.u32 %v3996, 16
        %v4325 = vrot.slane %v4323, 7
        %v4326 = vshll.u32 %v3996, 16
        %v4328 = vor.u32 %v4325, %v4326
        %v4329 = vsel %vm566, %v4321, %v4328
        %v4331 = vshrl.u32 %v3997, 16
        %v4333 = vrot.slane %v4331, 7
        %v4334 = vrot.slane %v4333, 4
        %v4336 = vshrl.u32 %v3998, 16
        %v4338 = vrot.slane %v4336, 7
        %v4339 = vshll.u32 %v3998, 16
        %v4341 = vor.u32 %v4338, %v4339
        %v4342 = vsel %vm566, %v4334, %v4341
        %v4343 = vrot.slane %v4338, 4
        %v4345 = vshrl.u32 %v3999, 16
        %v4347 = vrot.slane %v4345, 7
        %v4348 = vshll.u32 %v3999, 16
        %v4350 = vor.u32 %v4347, %v4348
        %v4351 = vsel %vm566, %v4343, %v4350
        %s4352 = scalar_lea.vmem [#allocation8], 24
        %v4353 = vld [vmem:[%s4352] sm:$0xf]
        %v4354 = vunpack.c.l.b16 %v4012
        %v4355 = vunpack.c.l.b16 %v4021
        %v4356 = vunpack.c.l.b16 %v4034
        %v4357 = vunpack.c.l.b16 %v4043
        %v4358 = vunpack.c.l.b16 %v4056
        %v4359 = vunpack.c.l.b16 %v4065
        %v4360 = vunpack.c.l.b16 %v4078
        %v4361 = vunpack.c.l.b16 %v4087
        %v4362 = vunpack.c.l.b16 %v4100
        %v4363 = vunpack.c.l.b16 %v4109
        %v4364 = vunpack.c.l.b16 %v4122
        %v4365 = vunpack.c.l.b16 %v4131
        %v4366 = vunpack.c.l.b16 %v4144
        %v4367 = vunpack.c.l.b16 %v4153
        %v4368 = vunpack.c.l.b16 %v4166
        %v4369 = vunpack.c.l.b16 %v4175
        %v4370 = vunpack.c.l.b16 %v4188
        %v4371 = vunpack.c.l.b16 %v4197
        %v4372 = vunpack.c.l.b16 %v4210
        %v4373 = vunpack.c.l.b16 %v4219
        %v4374 = vunpack.c.l.b16 %v4232
        %v4375 = vunpack.c.l.b16 %v4241
        %v4376 = vunpack.c.l.b16 %v4254
        %v4377 = vunpack.c.l.b16 %v4263
        %v4378 = vunpack.c.l.b16 %v4276
        %v4379 = vunpack.c.l.b16 %v4285
        %v4380 = vunpack.c.l.b16 %v4298
        %v4381 = vunpack.c.l.b16 %v4307
        %v4382 = vunpack.c.l.b16 %v4320
        %v4383 = vunpack.c.l.b16 %v4329
        %v4384 = vunpack.c.l.b16 %v4342
        %v4385 = vunpack.c.l.b16 %v4351
        %v4386 = vpack.c.b16 %v4355, %v4354
        %v4387 = vpack.c.b16 %v4357, %v4356
        %v4388 = vpack.c.b16 %v4359, %v4358
        %v4389 = vpack.c.b16 %v4361, %v4360
        %v4390 = vpack.c.b16 %v4363, %v4362
        %v4391 = vpack.c.b16 %v4365, %v4364
        %v4392 = vpack.c.b16 %v4367, %v4366
        %v4393 = vpack.c.b16 %v4369, %v4368
        %v4394 = vpack.c.b16 %v4371, %v4370
        %v4395 = vpack.c.b16 %v4373, %v4372
        %v4396 = vpack.c.b16 %v4375, %v4374
        %v4397 = vpack.c.b16 %v4377, %v4376
        %v4398 = vpack.c.b16 %v4379, %v4378
        %v4399 = vpack.c.b16 %v4381, %v4380
        %v4400 = vpack.c.b16 %v4383, %v4382
        %v4401 = vpack.c.b16 %v4385, %v4384
        %v4403 = vsel %vm1002, %v4386, 0
        %v4406 = vsel %vm1002, %v4387, 0
        %v4409 = vsel %vm1002, %v4388, 0
        %v4412 = vsel %vm1002, %v4389, 0
        %v4415 = vsel %vm1002, %v4390, 0
        %v4418 = vsel %vm1002, %v4391, 0
        %v4421 = vsel %vm1002, %v4392, 0
        %v4424 = vsel %vm1002, %v4393, 0
        %v4427 = vsel %vm1002, %v4394, 0
        %v4430 = vsel %vm1002, %v4395, 0
        %v4433 = vsel %vm1002, %v4396, 0
        %v4436 = vsel %vm1002, %v4397, 0
        %v4439 = vsel %vm1002, %v4398, 0
        %v4442 = vsel %vm1002, %v4399, 0
        %v4445 = vsel %vm1002, %v4400, 0
        %v4448 = vsel %vm1002, %v4401, 0
        %v4451 = vsel %vm1051, %v4353, 0
        %4453 = vmatprep.subr.bf16.mxu0 0
        %4454 = vmatpush1.bf16.msra.mxu0 %v4451
        %4455 = vmatprep.subr.bf16.mxu0 0
        %4456 = vmatpush1.bf16.msra.mxu0 0
        %4457 = vmatprep.subr.bf16.mxu0 0
        %4458 = vmatpush1.bf16.msra.mxu0 0
        %4459 = vmatprep.subr.bf16.mxu0 0
        %4460 = vmatpush1.bf16.msra.mxu0 0
        %4461 = vmatprep.subr.bf16.mxu0 0
        %4462 = vmatpush1.bf16.msra.mxu0 0
        %4463 = vmatprep.subr.bf16.mxu0 0
        %4464 = vmatpush1.bf16.msra.mxu0 0
        %4465 = vmatprep.subr.bf16.mxu0 0
        %4466 = vmatpush1.bf16.msra.mxu0 0
        %4467 = vmatprep.subr.bf16.mxu0 0
        %4468 = vmatpush1.bf16.msra.mxu0 0
        %4469 = vmatprep.subr.bf16.mxu0 0
        %4470 = vmatpush1.bf16.msra.mxu0 0
        %4471 = vmatprep.subr.bf16.mxu0 0
        %4472 = vmatpush1.bf16.msra.mxu0 0
        %4473 = vmatprep.subr.bf16.mxu0 0
        %4474 = vmatpush1.bf16.msra.mxu0 0
        %4475 = vmatprep.subr.bf16.mxu0 0
        %4476 = vmatpush1.bf16.msra.mxu0 0
        %4477 = vmatprep.subr.bf16.mxu0 0
        %4478 = vmatpush1.bf16.msra.mxu0 0
        %4479 = vmatprep.subr.bf16.mxu0 0
        %4480 = vmatpush1.bf16.msra.mxu0 0
        %4481 = vmatprep.subr.bf16.mxu0 0
        %4482 = vmatpush1.bf16.msra.mxu0 0
        %4483 = vmatprep.subr.bf16.mxu0 0
        %4484 = vmatpush1.bf16.msra.mxu0 0
        %4485 = vmatprep.mubr.bf16.mxu0 0
        %4486 = vmatmul.mubr.bf16.gmra.mrb[0].mxu0 %v4403
        %v4487 = vpop.f32.mrb[0].mxu0
        %v4488 = vadd.f32 0.0, %v4487
        %v4489 = vpop.f32.mrb[0].mxu0
        %v4490 = vpop.f32.mrb[0].mxu0
        %v4491 = vadd.f32 0.0, %v4490
        %v4492 = vpop.f32.mrb[0].mxu0
        %4493 = vmatprep.mubr.bf16.mxu0 0
        %4494 = vmatmul.mubr.bf16.gmra.mrb[0].mxu0 %v4406
        %v4495 = vpop.f32.mrb[0].mxu0
        %v4496 = vadd.f32 0.0, %v4495
        %v4497 = vpop.f32.mrb[0].mxu0
        %v4498 = vpop.f32.mrb[0].mxu0
        %v4499 = vadd.f32 0.0, %v4498
        %v4500 = vpop.f32.mrb[0].mxu0
        %4501 = vmatprep.mubr.bf16.mxu0 0
        %4502 = vmatmul.mubr.bf16.gmra.mrb[0].mxu0 %v4409
        %v4503 = vpop.f32.mrb[0].mxu0
        %v4504 = vadd.f32 0.0, %v4503
        %v4505 = vpop.f32.mrb[0].mxu0
        %v4506 = vpop.f32.mrb[0].mxu0
        %v4507 = vadd.f32 0.0, %v4506
        %v4508 = vpop.f32.mrb[0].mxu0
        %4509 = vmatprep.mubr.bf16.mxu0 0
        %4510 = vmatmul.mubr.bf16.gmra.mrb[0].mxu0 %v4412
        %v4511 = vpop.f32.mrb[0].mxu0
        %v4512 = vadd.f32 0.0, %v4511
        %v4513 = vpop.f32.mrb[0].mxu0
        %v4514 = vpop.f32.mrb[0].mxu0
        %v4515 = vadd.f32 0.0, %v4514
        %v4516 = vpop.f32.mrb[0].mxu0
        %4517 = vmatprep.mubr.bf16.mxu0 0
        %4518 = vmatmul.mubr.bf16.gmra.mrb[0].mxu0 %v4415
        %v4519 = vpop.f32.mrb[0].mxu0
        %v4520 = vadd.f32 0.0, %v4519
        %v4521 = vpop.f32.mrb[0].mxu0
        %v4522 = vpop.f32.mrb[0].mxu0
        %v4523 = vadd.f32 0.0, %v4522
        %v4524 = vpop.f32.mrb[0].mxu0
        %4525 = vmatprep.mubr.bf16.mxu0 0
        %4526 = vmatmul.mubr.bf16.gmra.mrb[0].mxu0 %v4418
        %v4527 = vpop.f32.mrb[0].mxu0
        %v4528 = vadd.f32 0.0, %v4527
        %v4529 = vpop.f32.mrb[0].mxu0
        %v4530 = vpop.f32.mrb[0].mxu0
        %v4531 = vadd.f32 0.0, %v4530
        %v4532 = vpop.f32.mrb[0].mxu0
        %4533 = vmatprep.mubr.bf16.mxu0 0
        %4534 = vmatmul.mubr.bf16.gmra.mrb[0].mxu0 %v4421
        %v4535 = vpop.f32.mrb[0].mxu0
        %v4536 = vadd.f32 0.0, %v4535
        %v4537 = vpop.f32.mrb[0].mxu0
        %v4538 = vpop.f32.mrb[0].mxu0
        %v4539 = vadd.f32 0.0, %v4538
        %v4540 = vpop.f32.mrb[0].mxu0
        %4541 = vmatprep.mubr.bf16.mxu0 0
        %4542 = vmatmul.mubr.bf16.gmra.mrb[0].mxu0 %v4424
        %v4543 = vpop.f32.mrb[0].mxu0
        %v4544 = vadd.f32 0.0, %v4543
        %v4545 = vpop.f32.mrb[0].mxu0
        %v4546 = vpop.f32.mrb[0].mxu0
        %v4547 = vadd.f32 0.0, %v4546
        %v4548 = vpop.f32.mrb[0].mxu0
        %4549 = vmatprep.mubr.bf16.mxu0 0
        %4550 = vmatmul.mubr.bf16.gmra.mrb[0].mxu0 %v4427
        %v4551 = vpop.f32.mrb[0].mxu0
        %v4552 = vadd.f32 0.0, %v4551
        %v4553 = vpop.f32.mrb[0].mxu0
        %v4554 = vpop.f32.mrb[0].mxu0
        %v4555 = vadd.f32 0.0, %v4554
        %v4556 = vpop.f32.mrb[0].mxu0
        %4557 = vmatprep.mubr.bf16.mxu0 0
        %4558 = vmatmul.mubr.bf16.gmra.mrb[0].mxu0 %v4430
        %v4559 = vpop.f32.mrb[0].mxu0
        %v4560 = vadd.f32 0.0, %v4559
        %v4561 = vpop.f32.mrb[0].mxu0
        %v4562 = vpop.f32.mrb[0].mxu0
        %v4563 = vadd.f32 0.0, %v4562
        %v4564 = vpop.f32.mrb[0].mxu0
        %4565 = vmatprep.mubr.bf16.mxu0 0
        %4566 = vmatmul.mubr.bf16.gmra.mrb[0].mxu0 %v4433
        %v4567 = vpop.f32.mrb[0].mxu0
        %v4568 = vadd.f32 0.0, %v4567
        %v4569 = vpop.f32.mrb[0].mxu0
        %v4570 = vpop.f32.mrb[0].mxu0
        %v4571 = vadd.f32 0.0, %v4570
        %v4572 = vpop.f32.mrb[0].mxu0
        %4573 = vmatprep.mubr.bf16.mxu0 0
        %4574 = vmatmul.mubr.bf16.gmra.mrb[0].mxu0 %v4436
        %v4575 = vpop.f32.mrb[0].mxu0
        %v4576 = vadd.f32 0.0, %v4575
        %v4577 = vpop.f32.mrb[0].mxu0
        %v4578 = vpop.f32.mrb[0].mxu0
        %v4579 = vadd.f32 0.0, %v4578
        %v4580 = vpop.f32.mrb[0].mxu0
        %4581 = vmatprep.mubr.bf16.mxu0 0
        %4582 = vmatmul.mubr.bf16.gmra.mrb[0].mxu0 %v4439
        %v4583 = vpop.f32.mrb[0].mxu0
        %v4584 = vadd.f32 0.0, %v4583
        %v4585 = vpop.f32.mrb[0].mxu0
        %v4586 = vpop.f32.mrb[0].mxu0
        %v4587 = vadd.f32 0.0, %v4586
        %v4588 = vpop.f32.mrb[0].mxu0
        %4589 = vmatprep.mubr.bf16.mxu0 0
        %4590 = vmatmul.mubr.bf16.gmra.mrb[0].mxu0 %v4442
        %v4591 = vpop.f32.mrb[0].mxu0
        %v4592 = vadd.f32 0.0, %v4591
        %v4593 = vpop.f32.mrb[0].mxu0
        %v4594 = vpop.f32.mrb[0].mxu0
        %v4595 = vadd.f32 0.0, %v4594
        %v4596 = vpop.f32.mrb[0].mxu0
        %4597 = vmatprep.mubr.bf16.mxu0 0
        %4598 = vmatmul.mubr.bf16.gmra.mrb[0].mxu0 %v4445
        %v4599 = vpop.f32.mrb[0].mxu0
        %v4600 = vadd.f32 0.0, %v4599
        %v4601 = vpop.f32.mrb[0].mxu0
        %v4602 = vpop.f32.mrb[0].mxu0
        %v4603 = vadd.f32 0.0, %v4602
        %v4604 = vpop.f32.mrb[0].mxu0
        %4605 = vmatprep.mubr.bf16.mxu0 0
        %4606 = vmatmul.mubr.bf16.gmra.mrb[0].mxu0 %v4448
        %v4607 = vpop.f32.mrb[0].mxu0
        %v4608 = vadd.f32 0.0, %v4607
        %v4609 = vpop.f32.mrb[0].mxu0
        %v4610 = vpop.f32.mrb[0].mxu0
        %v4611 = vadd.f32 0.0, %v4610
        %v4612 = vpop.f32.mrb[0].mxu0
        %4613 = vdwg.mxu0
        %v4614 = vadd.f32 %v3919, %v4488
        %v4615 = vadd.f32 %v3920, %v4491
        %v4616 = vadd.f32 %v3921, %v4496
        %v4617 = vadd.f32 %v3922, %v4499
        %v4618 = vadd.f32 %v3923, %v4504
        %v4619 = vadd.f32 %v3924, %v4507
        %v4620 = vadd.f32 %v3925, %v4512
        %v4621 = vadd.f32 %v3926, %v4515
        %v4622 = vadd.f32 %v3927, %v4520
        %v4623 = vadd.f32 %v3928, %v4523
        %v4624 = vadd.f32 %v3929, %v4528
        %v4625 = vadd.f32 %v3930, %v4531
        %v4626 = vadd.f32 %v3931, %v4536
        %v4627 = vadd.f32 %v3932, %v4539
        %v4628 = vadd.f32 %v3933, %v4544
        %v4629 = vadd.f32 %v3934, %v4547
        %v4630 = vadd.f32 %v3935, %v4552
        %v4631 = vadd.f32 %v3936, %v4555
        %v4632 = vadd.f32 %v3937, %v4560
        %v4633 = vadd.f32 %v3938, %v4563
        %v4634 = vadd.f32 %v3939, %v4568
        %v4635 = vadd.f32 %v3940, %v4571
        %v4636 = vadd.f32 %v3941, %v4576
        %v4637 = vadd.f32 %v3942, %v4579
        %v4638 = vadd.f32 %v3943, %v4584
        %v4639 = vadd.f32 %v3944, %v4587
        %v4640 = vadd.f32 %v3945, %v4592
        %v4641 = vadd.f32 %v3946, %v4595
        %v4642 = vadd.f32 %v3947, %v4600
        %v4643 = vadd.f32 %v3948, %v4603
        %v4644 = vadd.f32 %v3949, %v4608
        %v4645 = vadd.f32 %v3950, %v4611
        %s4646 = scalar_lea.vmem [#allocation8], 28
        %v4647 = vld [vmem:[%s4646] sm:$0xf]
        %v4680 = vunpack.c.l.b16 %v3953
        %v4681 = vunpack.c.l.b16 %v3954
        %v4682 = vunpack.c.l.b16 %v3956
        %v4683 = vunpack.c.l.b16 %v3957
        %v4684 = vunpack.c.l.b16 %v3959
        %v4685 = vunpack.c.l.b16 %v3960
        %v4686 = vunpack.c.l.b16 %v3962
        %v4687 = vunpack.c.l.b16 %v3963
        %v4688 = vunpack.c.l.b16 %v3965
        %v4689 = vunpack.c.l.b16 %v3966
        %v4690 = vunpack.c.l.b16 %v3968
        %v4691 = vunpack.c.l.b16 %v3969
        %v4692 = vunpack.c.l.b16 %v3971
        %v4693 = vunpack.c.l.b16 %v3972
        %v4694 = vunpack.c.l.b16 %v3974
        %v4695 = vunpack.c.l.b16 %v3975
        %v4696 = vunpack.c.l.b16 %v3977
        %v4697 = vunpack.c.l.b16 %v3978
        %v4698 = vunpack.c.l.b16 %v3980
        %v4699 = vunpack.c.l.b16 %v3981
        %v4700 = vunpack.c.l.b16 %v3983
        %v4701 = vunpack.c.l.b16 %v3984
        %v4702 = vunpack.c.l.b16 %v3986
        %v4703 = vunpack.c.l.b16 %v3987
        %v4704 = vunpack.c.l.b16 %v3989
        %v4705 = vunpack.c.l.b16 %v3990
        %v4706 = vunpack.c.l.b16 %v3992
        %v4707 = vunpack.c.l.b16 %v3993
        %v4708 = vunpack.c.l.b16 %v3995
        %v4709 = vunpack.c.l.b16 %v3996
        %v4710 = vunpack.c.l.b16 %v3998
        %v4711 = vunpack.c.l.b16 %v3999
        %v4712 = vpack.c.b16 %v4681, %v4680
        %v4713 = vpack.c.b16 %v4683, %v4682
        %v4714 = vpack.c.b16 %v4685, %v4684
        %v4715 = vpack.c.b16 %v4687, %v4686
        %v4716 = vpack.c.b16 %v4689, %v4688
        %v4717 = vpack.c.b16 %v4691, %v4690
        %v4718 = vpack.c.b16 %v4693, %v4692
        %v4719 = vpack.c.b16 %v4695, %v4694
        %v4720 = vpack.c.b16 %v4697, %v4696
        %v4721 = vpack.c.b16 %v4699, %v4698
        %v4722 = vpack.c.b16 %v4701, %v4700
        %v4723 = vpack.c.b16 %v4703, %v4702
        %v4724 = vpack.c.b16 %v4705, %v4704
        %v4725 = vpack.c.b16 %v4707, %v4706
        %v4726 = vpack.c.b16 %v4709, %v4708
        %v4727 = vpack.c.b16 %v4711, %v4710
        %v4729 = vsel %vm1002, %v4712, 0
        %v4732 = vsel %vm1002, %v4713, 0
        %v4735 = vsel %vm1002, %v4714, 0
        %v4738 = vsel %vm1002, %v4715, 0
        %v4741 = vsel %vm1002, %v4716, 0
        %v4744 = vsel %vm1002, %v4717, 0
        %v4747 = vsel %vm1002, %v4718, 0
        %v4750 = vsel %vm1002, %v4719, 0
        %v4753 = vsel %vm1002, %v4720, 0
        %v4756 = vsel %vm1002, %v4721, 0
        %v4759 = vsel %vm1002, %v4722, 0
        %v4762 = vsel %vm1002, %v4723, 0
        %v4765 = vsel %vm1002, %v4724, 0
        %v4768 = vsel %vm1002, %v4725, 0
        %v4771 = vsel %vm1002, %v4726, 0
        %v4774 = vsel %vm1002, %v4727, 0
        %v4777 = vsel %vm1051, %v4647, 0
        %4779 = vmatprep.subr.bf16.mxu0 0
        %4780 = vmatpush1.bf16.msra.mxu0 %v4777
        %4781 = vmatprep.subr.bf16.mxu0 0
        %4782 = vmatpush1.bf16.msra.mxu0 0
        %4783 = vmatprep.subr.bf16.mxu0 0
        %4784 = vmatpush1.bf16.msra.mxu0 0
        %4785 = vmatprep.subr.bf16.mxu0 0
        %4786 = vmatpush1.bf16.msra.mxu0 0
        %4787 = vmatprep.subr.bf16.mxu0 0
        %4788 = vmatpush1.bf16.msra.mxu0 0
        %4789 = vmatprep.subr.bf16.mxu0 0
        %4790 = vmatpush1.bf16.msra.mxu0 0
        %4791 = vmatprep.subr.bf16.mxu0 0
        %4792 = vmatpush1.bf16.msra.mxu0 0
        %4793 = vmatprep.subr.bf16.mxu0 0
        %4794 = vmatpush1.bf16.msra.mxu0 0
        %4795 = vmatprep.subr.bf16.mxu0 0
        %4796 = vmatpush1.bf16.msra.mxu0 0
        %4797 = vmatprep.subr.bf16.mxu0 0
        %4798 = vmatpush1.bf16.msra.mxu0 0
        %4799 = vmatprep.subr.bf16.mxu0 0
        %4800 = vmatpush1.bf16.msra.mxu0 0
        %4801 = vmatprep.subr.bf16.mxu0 0
        %4802 = vmatpush1.bf16.msra.mxu0 0
        %4803 = vmatprep.subr.bf16.mxu0 0
        %4804 = vmatpush1.bf16.msra.mxu0 0
        %4805 = vmatprep.subr.bf16.mxu0 0
        %4806 = vmatpush1.bf16.msra.mxu0 0
        %4807 = vmatprep.subr.bf16.mxu0 0
        %4808 = vmatpush1.bf16.msra.mxu0 0
        %4809 = vmatprep.subr.bf16.mxu0 0
        %4810 = vmatpush1.bf16.msra.mxu0 0
        %4811 = vmatprep.mubr.bf16.mxu0 0
        %4812 = vmatmul.mubr.bf16.gmra.mrb[0].mxu0 %v4729
        %v4813 = vpop.f32.mrb[0].mxu0
        %v4814 = vadd.f32 0.0, %v4813
        %v4815 = vpop.f32.mrb[0].mxu0
        %v4816 = vpop.f32.mrb[0].mxu0
        %v4817 = vadd.f32 0.0, %v4816
        %v4818 = vpop.f32.mrb[0].mxu0
        %4819 = vmatprep.mubr.bf16.mxu0 0
        %4820 = vmatmul.mubr.bf16.gmra.mrb[0].mxu0 %v4732
        %v4821 = vpop.f32.mrb[0].mxu0
        %v4822 = vadd.f32 0.0, %v4821
        %v4823 = vpop.f32.mrb[0].mxu0
        %v4824 = vpop.f32.mrb[0].mxu0
        %v4825 = vadd.f32 0.0, %v4824
        %v4826 = vpop.f32.mrb[0].mxu0
        %4827 = vmatprep.mubr.bf16.mxu0 0
        %4828 = vmatmul.mubr.bf16.gmra.mrb[0].mxu0 %v4735
        %v4829 = vpop.f32.mrb[0].mxu0
        %v4830 = vadd.f32 0.0, %v4829
        %v4831 = vpop.f32.mrb[0].mxu0
        %v4832 = vpop.f32.mrb[0].mxu0
        %v4833 = vadd.f32 0.0, %v4832
        %v4834 = vpop.f32.mrb[0].mxu0
        %4835 = vmatprep.mubr.bf16.mxu0 0
        %4836 = vmatmul.mubr.bf16.gmra.mrb[0].mxu0 %v4738
        %v4837 = vpop.f32.mrb[0].mxu0
        %v4838 = vadd.f32 0.0, %v4837
        %v4839 = vpop.f32.mrb[0].mxu0
        %v4840 = vpop.f32.mrb[0].mxu0
        %v4841 = vadd.f32 0.0, %v4840
        %v4842 = vpop.f32.mrb[0].mxu0
        %4843 = vmatprep.mubr.bf16.mxu0 0
        %4844 = vmatmul.mubr.bf16.gmra.mrb[0].mxu0 %v4741
        %v4845 = vpop.f32.mrb[0].mxu0
        %v4846 = vadd.f32 0.0, %v4845
        %v4847 = vpop.f32.mrb[0].mxu0
        %v4848 = vpop.f32.mrb[0].mxu0
        %v4849 = vadd.f32 0.0, %v4848
        %v4850 = vpop.f32.mrb[0].mxu0
        %4851 = vmatprep.mubr.bf16.mxu0 0
        %4852 = vmatmul.mubr.bf16.gmra.mrb[0].mxu0 %v4744
        %v4853 = vpop.f32.mrb[0].mxu0
        %v4854 = vadd.f32 0.0, %v4853
        %v4855 = vpop.f32.mrb[0].mxu0
        %v4856 = vpop.f32.mrb[0].mxu0
        %v4857 = vadd.f32 0.0, %v4856
        %v4858 = vpop.f32.mrb[0].mxu0
        %4859 = vmatprep.mubr.bf16.mxu0 0
        %4860 = vmatmul.mubr.bf16.gmra.mrb[0].mxu0 %v4747
        %v4861 = vpop.f32.mrb[0].mxu0
        %v4862 = vadd.f32 0.0, %v4861
        %v4863 = vpop.f32.mrb[0].mxu0
        %v4864 = vpop.f32.mrb[0].mxu0
        %v4865 = vadd.f32 0.0, %v4864
        %v4866 = vpop.f32.mrb[0].mxu0
        %4867 = vmatprep.mubr.bf16.mxu0 0
        %4868 = vmatmul.mubr.bf16.gmra.mrb[0].mxu0 %v4750
        %v4869 = vpop.f32.mrb[0].mxu0
        %v4870 = vadd.f32 0.0, %v4869
        %v4871 = vpop.f32.mrb[0].mxu0
        %v4872 = vpop.f32.mrb[0].mxu0
        %v4873 = vadd.f32 0.0, %v4872
        %v4874 = vpop.f32.mrb[0].mxu0
        %4875 = vmatprep.mubr.bf16.mxu0 0
        %4876 = vmatmul.mubr.bf16.gmra.mrb[0].mxu0 %v4753
        %v4877 = vpop.f32.mrb[0].mxu0
        %v4878 = vadd.f32 0.0, %v4877
        %v4879 = vpop.f32.mrb[0].mxu0
        %v4880 = vpop.f32.mrb[0].mxu0
        %v4881 = vadd.f32 0.0, %v4880
        %v4882 = vpop.f32.mrb[0].mxu0
        %4883 = vmatprep.mubr.bf16.mxu0 0
        %4884 = vmatmul.mubr.bf16.gmra.mrb[0].mxu0 %v4756
        %v4885 = vpop.f32.mrb[0].mxu0
        %v4886 = vadd.f32 0.0, %v4885
        %v4887 = vpop.f32.mrb[0].mxu0
        %v4888 = vpop.f32.mrb[0].mxu0
        %v4889 = vadd.f32 0.0, %v4888
        %v4890 = vpop.f32.mrb[0].mxu0
        %4891 = vmatprep.mubr.bf16.mxu0 0
        %4892 = vmatmul.mubr.bf16.gmra.mrb[0].mxu0 %v4759
        %v4893 = vpop.f32.mrb[0].mxu0
        %v4894 = vadd.f32 0.0, %v4893
        %v4895 = vpop.f32.mrb[0].mxu0
        %v4896 = vpop.f32.mrb[0].mxu0
        %v4897 = vadd.f32 0.0, %v4896
        %v4898 = vpop.f32.mrb[0].mxu0
        %4899 = vmatprep.mubr.bf16.mxu0 0
        %4900 = vmatmul.mubr.bf16.gmra.mrb[0].mxu0 %v4762
        %v4901 = vpop.f32.mrb[0].mxu0
        %v4902 = vadd.f32 0.0, %v4901
        %v4903 = vpop.f32.mrb[0].mxu0
        %v4904 = vpop.f32.mrb[0].mxu0
        %v4905 = vadd.f32 0.0, %v4904
        %v4906 = vpop.f32.mrb[0].mxu0
        %4907 = vmatprep.mubr.bf16.mxu0 0
        %4908 = vmatmul.mubr.bf16.gmra.mrb[0].mxu0 %v4765
        %v4909 = vpop.f32.mrb[0].mxu0
        %v4910 = vadd.f32 0.0, %v4909
        %v4911 = vpop.f32.mrb[0].mxu0
        %v4912 = vpop.f32.mrb[0].mxu0
        %v4913 = vadd.f32 0.0, %v4912
        %v4914 = vpop.f32.mrb[0].mxu0
        %4915 = vmatprep.mubr.bf16.mxu0 0
        %4916 = vmatmul.mubr.bf16.gmra.mrb[0].mxu0 %v4768
        %v4917 = vpop.f32.mrb[0].mxu0
        %v4918 = vadd.f32 0.0, %v4917
        %v4919 = vpop.f32.mrb[0].mxu0
        %v4920 = vpop.f32.mrb[0].mxu0
        %v4921 = vadd.f32 0.0, %v4920
        %v4922 = vpop.f32.mrb[0].mxu0
        %4923 = vmatprep.mubr.bf16.mxu0 0
        %4924 = vmatmul.mubr.bf16.gmra.mrb[0].mxu0 %v4771
        %v4925 = vpop.f32.mrb[0].mxu0
        %v4926 = vadd.f32 0.0, %v4925
        %v4927 = vpop.f32.mrb[0].mxu0
        %v4928 = vpop.f32.mrb[0].mxu0
        %v4929 = vadd.f32 0.0, %v4928
        %v4930 = vpop.f32.mrb[0].mxu0
        %4931 = vmatprep.mubr.bf16.mxu0 0
        %4932 = vmatmul.mubr.bf16.gmra.mrb[0].mxu0 %v4774
        %v4933 = vpop.f32.mrb[0].mxu0
        %v4934 = vadd.f32 0.0, %v4933
        %v4935 = vpop.f32.mrb[0].mxu0
        %v4936 = vpop.f32.mrb[0].mxu0
        %v4937 = vadd.f32 0.0, %v4936
        %v4938 = vpop.f32.mrb[0].mxu0
        %4939 = vdwg.mxu0
        %v4940 = vadd.f32 %v4614, %v4814
        %v4941 = vadd.f32 %v4615, %v4817
        %v4942 = vadd.f32 %v4616, %v4822
        %v4943 = vadd.f32 %v4617, %v4825
        %v4944 = vadd.f32 %v4618, %v4830
        %v4945 = vadd.f32 %v4619, %v4833
        %v4946 = vadd.f32 %v4620, %v4838
        %v4947 = vadd.f32 %v4621, %v4841
        %v4948 = vadd.f32 %v4622, %v4846
        %v4949 = vadd.f32 %v4623, %v4849
        %v4950 = vadd.f32 %v4624, %v4854
        %v4951 = vadd.f32 %v4625, %v4857
        %v4952 = vadd.f32 %v4626, %v4862
        %v4953 = vadd.f32 %v4627, %v4865
        %v4954 = vadd.f32 %v4628, %v4870
        %v4955 = vadd.f32 %v4629, %v4873
        %v4956 = vadd.f32 %v4630, %v4878
        %v4957 = vadd.f32 %v4631, %v4881
        %v4958 = vadd.f32 %v4632, %v4886
        %v4959 = vadd.f32 %v4633, %v4889
        %v4960 = vadd.f32 %v4634, %v4894
        %v4961 = vadd.f32 %v4635, %v4897
        %v4962 = vadd.f32 %v4636, %v4902
        %v4963 = vadd.f32 %v4637, %v4905
        %v4964 = vadd.f32 %v4638, %v4910
        %v4965 = vadd.f32 %v4639, %v4913
        %v4966 = vadd.f32 %v4640, %v4918
        %v4967 = vadd.f32 %v4641, %v4921
        %v4968 = vadd.f32 %v4642, %v4926
        %v4969 = vadd.f32 %v4643, %v4929
        %v4970 = vadd.f32 %v4644, %v4934
        %v4971 = vadd.f32 %v4645, %v4937
        %v4972 = vld [vmem:[%s3951 + $0x4] sm:$0xf]
        %v4973 = vld [vmem:[%s3951 + $0x8] sm:$0xf]
        %v4974 = vld [vmem:[%s3951 + $0xc] sm:$0x1]
        %v4975 = vld [vmem:[%s3951 + $0x14] sm:$0xf]
        %v4976 = vld [vmem:[%s3951 + $0x18] sm:$0xf]
        %v4977 = vld [vmem:[%s3951 + $0x1c] sm:$0x1]
        %v4978 = vld [vmem:[%s3951 + $0x24] sm:$0xf]
        %v4979 = vld [vmem:[%s3951 + $0x28] sm:$0xf]
        %v4980 = vld [vmem:[%s3951 + $0x2c] sm:$0x1]
        %v4981 = vld [vmem:[%s3951 + $0x34] sm:$0xf]
        %v4982 = vld [vmem:[%s3951 + $0x38] sm:$0xf]
        %v4983 = vld [vmem:[%s3951 + $0x3c] sm:$0x1]
        %v4984 = vld [vmem:[%s3951 + $0x44] sm:$0xf]
        %v4985 = vld [vmem:[%s3951 + $0x48] sm:$0xf]
        %v4986 = vld [vmem:[%s3951 + $0x4c] sm:$0x1]
        %v4987 = vld [vmem:[%s3951 + $0x54] sm:$0xf]
        %v4988 = vld [vmem:[%s3951 + $0x58] sm:$0xf]
        %v4989 = vld [vmem:[%s3951 + $0x5c] sm:$0x1]
        %v4990 = vld [vmem:[%s3951 + $0x64] sm:$0xf]
        %v4991 = vld [vmem:[%s3951 + $0x68] sm:$0xf]
        %v4992 = vld [vmem:[%s3951 + $0x6c] sm:$0x1]
        %v4993 = vld [vmem:[%s3951 + $0x74] sm:$0xf]
        %v4994 = vld [vmem:[%s3951 + $0x78] sm:$0xf]
        %v4995 = vld [vmem:[%s3951 + $0x7c] sm:$0x1]
        %v4996 = vld [vmem:[%s3951 + $0x84] sm:$0xf]
        %v4997 = vld [vmem:[%s3951 + $0x88] sm:$0xf]
        %v4998 = vld [vmem:[%s3951 + $0x8c] sm:$0x1]
        %v4999 = vld [vmem:[%s3951 + $0x94] sm:$0xf]
        %v5000 = vld [vmem:[%s3951 + $0x98] sm:$0xf]
        %v5001 = vld [vmem:[%s3951 + $0x9c] sm:$0x1]
        %v5002 = vld [vmem:[%s3951 + $0xa4] sm:$0xf]
        %v5003 = vld [vmem:[%s3951 + $0xa8] sm:$0xf]
        %v5004 = vld [vmem:[%s3951 + $0xac] sm:$0x1]
        %v5005 = vld [vmem:[%s3951 + $0xb4] sm:$0xf]
        %v5006 = vld [vmem:[%s3951 + $0xb8] sm:$0xf]
        %v5007 = vld [vmem:[%s3951 + $0xbc] sm:$0x1]
        %v5008 = vld [vmem:[%s3951 + $0xc4] sm:$0xf]
        %v5009 = vld [vmem:[%s3951 + $0xc8] sm:$0xf]
        %v5010 = vld [vmem:[%s3951 + $0xcc] sm:$0x1]
        %v5011 = vld [vmem:[%s3951 + $0xd4] sm:$0xf]
        %v5012 = vld [vmem:[%s3951 + $0xd8] sm:$0xf]
        %v5013 = vld [vmem:[%s3951 + $0xdc] sm:$0x1]
        %v5014 = vld [vmem:[%s3951 + $0xe4] sm:$0xf]
        %v5015 = vld [vmem:[%s3951 + $0xe8] sm:$0xf]
        %v5016 = vld [vmem:[%s3951 + $0xec] sm:$0x1]
        %v5017 = vld [vmem:[%s3951 + $0xf4] sm:$0xf]
        %v5018 = vld [vmem:[%s3951 + $0xf8] sm:$0xf]
        %v5019 = vld [vmem:[%s3951 + $0xfc] sm:$0x1]
        %v5021 = vshrl.u32 %v4972, 16
        %v5023 = vrot.slane %v5021, 4
        %v5024 = vshll.u32 %v4972, 16
        %v5026 = vrot.slane %v5024, 5
        %v5027 = vor.u32 %v5023, %v5026
        %v5028 = vrot.slane %v5027, 4
        %v5030 = vshll.u32 %v4973, 16
        %v5032 = vrot.slane %v5030, 5
        %v5033 = vsel %vm1526, %v5028, %v5032
        %v5034 = vshrl.u32 %v4973, 16
        %v5036 = vrot.slane %v5034, 4
        %v5037 = vor.u32 %v5036, %v5032
        %v5038 = vrot.slane %v5037, 4
        %v5040 = vshll.u32 %v4974, 16
        %v5042 = vrot.slane %v5040, 5
        %v5043 = vsel %vm1526, %v5038, %v5042
        %v5045 = vshrl.u32 %v4975, 16
        %v5047 = vrot.slane %v5045, 4
        %v5048 = vshll.u32 %v4975, 16
        %v5050 = vrot.slane %v5048, 5
        %v5051 = vor.u32 %v5047, %v5050
        %v5052 = vrot.slane %v5051, 4
        %v5054 = vshll.u32 %v4976, 16
        %v5056 = vrot.slane %v5054, 5
        %v5057 = vsel %vm1526, %v5052, %v5056
        %v5058 = vshrl.u32 %v4976, 16
        %v5060 = vrot.slane %v5058, 4
        %v5061 = vor.u32 %v5060, %v5056
        %v5062 = vrot.slane %v5061, 4
        %v5064 = vshll.u32 %v4977, 16
        %v5066 = vrot.slane %v5064, 5
        %v5067 = vsel %vm1526, %v5062, %v5066
        %v5069 = vshrl.u32 %v4978, 16
        %v5071 = vrot.slane %v5069, 4
        %v5072 = vshll.u32 %v4978, 16
        %v5074 = vrot.slane %v5072, 5
        %v5075 = vor.u32 %v5071, %v5074
        %v5076 = vrot.slane %v5075, 4
        %v5078 = vshll.u32 %v4979, 16
        %v5080 = vrot.slane %v5078, 5
        %v5081 = vsel %vm1526, %v5076, %v5080
        %v5082 = vshrl.u32 %v4979, 16
        %v5084 = vrot.slane %v5082, 4
        %v5085 = vor.u32 %v5084, %v5080
        %v5086 = vrot.slane %v5085, 4
        %v5088 = vshll.u32 %v4980, 16
        %v5090 = vrot.slane %v5088, 5
        %v5091 = vsel %vm1526, %v5086, %v5090
        %v5093 = vshrl.u32 %v4981, 16
        %v5095 = vrot.slane %v5093, 4
        %v5096 = vshll.u32 %v4981, 16
        %v5098 = vrot.slane %v5096, 5
        %v5099 = vor.u32 %v5095, %v5098
        %v5100 = vrot.slane %v5099, 4
        %v5102 = vshll.u32 %v4982, 16
        %v5104 = vrot.slane %v5102, 5
        %v5105 = vsel %vm1526, %v5100, %v5104
        %v5106 = vshrl.u32 %v4982, 16
        %v5108 = vrot.slane %v5106, 4
        %v5109 = vor.u32 %v5108, %v5104
        %v5110 = vrot.slane %v5109, 4
        %v5112 = vshll.u32 %v4983, 16
        %v5114 = vrot.slane %v5112, 5
        %v5115 = vsel %vm1526, %v5110, %v5114
        %v5117 = vshrl.u32 %v4984, 16
        %v5119 = vrot.slane %v5117, 4
        %v5120 = vshll.u32 %v4984, 16
        %v5122 = vrot.slane %v5120, 5
        %v5123 = vor.u32 %v5119, %v5122
        %v5124 = vrot.slane %v5123, 4
        %v5126 = vshll.u32 %v4985, 16
        %v5128 = vrot.slane %v5126, 5
        %v5129 = vsel %vm1526, %v5124, %v5128
        %v5130 = vshrl.u32 %v4985, 16
        %v5132 = vrot.slane %v5130, 4
        %v5133 = vor.u32 %v5132, %v5128
        %v5134 = vrot.slane %v5133, 4
        %v5136 = vshll.u32 %v4986, 16
        %v5138 = vrot.slane %v5136, 5
        %v5139 = vsel %vm1526, %v5134, %v5138
        %v5141 = vshrl.u32 %v4987, 16
        %v5143 = vrot.slane %v5141, 4
        %v5144 = vshll.u32 %v4987, 16
        %v5146 = vrot.slane %v5144, 5
        %v5147 = vor.u32 %v5143, %v5146
        %v5148 = vrot.slane %v5147, 4
        %v5150 = vshll.u32 %v4988, 16
        %v5152 = vrot.slane %v5150, 5
        %v5153 = vsel %vm1526, %v5148, %v5152
        %v5154 = vshrl.u32 %v4988, 16
        %v5156 = vrot.slane %v5154, 4
        %v5157 = vor.u32 %v5156, %v5152
        %v5158 = vrot.slane %v5157, 4
        %v5160 = vshll.u32 %v4989, 16
        %v5162 = vrot.slane %v5160, 5
        %v5163 = vsel %vm1526, %v5158, %v5162
        %v5165 = vshrl.u32 %v4990, 16
        %v5167 = vrot.slane %v5165, 4
        %v5168 = vshll.u32 %v4990, 16
        %v5170 = vrot.slane %v5168, 5
        %v5171 = vor.u32 %v5167, %v5170
        %v5172 = vrot.slane %v5171, 4
        %v5174 = vshll.u32 %v4991, 16
        %v5176 = vrot.slane %v5174, 5
        %v5177 = vsel %vm1526, %v5172, %v5176
        %v5178 = vshrl.u32 %v4991, 16
        %v5180 = vrot.slane %v5178, 4
        %v5181 = vor.u32 %v5180, %v5176
        %v5182 = vrot.slane %v5181, 4
        %v5184 = vshll.u32 %v4992, 16
        %v5186 = vrot.slane %v5184, 5
        %v5187 = vsel %vm1526, %v5182, %v5186
        %v5189 = vshrl.u32 %v4993, 16
        %v5191 = vrot.slane %v5189, 4
        %v5192 = vshll.u32 %v4993, 16
        %v5194 = vrot.slane %v5192, 5
        %v5195 = vor.u32 %v5191, %v5194
        %v5196 = vrot.slane %v5195, 4
        %v5198 = vshll.u32 %v4994, 16
        %v5200 = vrot.slane %v5198, 5
        %v5201 = vsel %vm1526, %v5196, %v5200
        %v5202 = vshrl.u32 %v4994, 16
        %v5204 = vrot.slane %v5202, 4
        %v5205 = vor.u32 %v5204, %v5200
        %v5206 = vrot.slane %v5205, 4
        %v5208 = vshll.u32 %v4995, 16
        %v5210 = vrot.slane %v5208, 5
        %v5211 = vsel %vm1526, %v5206, %v5210
        %v5213 = vshrl.u32 %v4996, 16
        %v5215 = vrot.slane %v5213, 4
        %v5216 = vshll.u32 %v4996, 16
        %v5218 = vrot.slane %v5216, 5
        %v5219 = vor.u32 %v5215, %v5218
        %v5220 = vrot.slane %v5219, 4
        %v5222 = vshll.u32 %v4997, 16
        %v5224 = vrot.slane %v5222, 5
        %v5225 = vsel %vm1526, %v5220, %v5224
        %v5226 = vshrl.u32 %v4997, 16
        %v5228 = vrot.slane %v5226, 4
        %v5229 = vor.u32 %v5228, %v5224
        %v5230 = vrot.slane %v5229, 4
        %v5232 = vshll.u32 %v4998, 16
        %v5234 = vrot.slane %v5232, 5
        %v5235 = vsel %vm1526, %v5230, %v5234
        %v5237 = vshrl.u32 %v4999, 16
        %v5239 = vrot.slane %v5237, 4
        %v5240 = vshll.u32 %v4999, 16
        %v5242 = vrot.slane %v5240, 5
        %v5243 = vor.u32 %v5239, %v5242
        %v5244 = vrot.slane %v5243, 4
        %v5246 = vshll.u32 %v5000, 16
        %v5248 = vrot.slane %v5246, 5
        %v5249 = vsel %vm1526, %v5244, %v5248
        %v5250 = vshrl.u32 %v5000, 16
        %v5252 = vrot.slane %v5250, 4
        %v5253 = vor.u32 %v5252, %v5248
        %v5254 = vrot.slane %v5253, 4
        %v5256 = vshll.u32 %v5001, 16
        %v5258 = vrot.slane %v5256, 5
        %v5259 = vsel %vm1526, %v5254, %v5258
        %v5261 = vshrl.u32 %v5002, 16
        %v5263 = vrot.slane %v5261, 4
        %v5264 = vshll.u32 %v5002, 16
        %v5266 = vrot.slane %v5264, 5
        %v5267 = vor.u32 %v5263, %v5266
        %v5268 = vrot.slane %v5267, 4
        %v5270 = vshll.u32 %v5003, 16
        %v5272 = vrot.slane %v5270, 5
        %v5273 = vsel %vm1526, %v5268, %v5272
        %v5274 = vshrl.u32 %v5003, 16
        %v5276 = vrot.slane %v5274, 4
        %v5277 = vor.u32 %v5276, %v5272
        %v5278 = vrot.slane %v5277, 4
        %v5280 = vshll.u32 %v5004, 16
        %v5282 = vrot.slane %v5280, 5
        %v5283 = vsel %vm1526, %v5278, %v5282
        %v5285 = vshrl.u32 %v5005, 16
        %v5287 = vrot.slane %v5285, 4
        %v5288 = vshll.u32 %v5005, 16
        %v5290 = vrot.slane %v5288, 5
        %v5291 = vor.u32 %v5287, %v5290
        %v5292 = vrot.slane %v5291, 4
        %v5294 = vshll.u32 %v5006, 16
        %v5296 = vrot.slane %v5294, 5
        %v5297 = vsel %vm1526, %v5292, %v5296
        %v5298 = vshrl.u32 %v5006, 16
        %v5300 = vrot.slane %v5298, 4
        %v5301 = vor.u32 %v5300, %v5296
        %v5302 = vrot.slane %v5301, 4
        %v5304 = vshll.u32 %v5007, 16
        %v5306 = vrot.slane %v5304, 5
        %v5307 = vsel %vm1526, %v5302, %v5306
        %v5309 = vshrl.u32 %v5008, 16
        %v5311 = vrot.slane %v5309, 4
        %v5312 = vshll.u32 %v5008, 16
        %v5314 = vrot.slane %v5312, 5
        %v5315 = vor.u32 %v5311, %v5314
        %v5316 = vrot.slane %v5315, 4
        %v5318 = vshll.u32 %v5009, 16
        %v5320 = vrot.slane %v5318, 5
        %v5321 = vsel %vm1526, %v5316, %v5320
        %v5322 = vshrl.u32 %v5009, 16
        %v5324 = vrot.slane %v5322, 4
        %v5325 = vor.u32 %v5324, %v5320
        %v5326 = vrot.slane %v5325, 4
        %v5328 = vshll.u32 %v5010, 16
        %v5330 = vrot.slane %v5328, 5
        %v5331 = vsel %vm1526, %v5326, %v5330
        %v5333 = vshrl.u32 %v5011, 16
        %v5335 = vrot.slane %v5333, 4
        %v5336 = vshll.u32 %v5011, 16
        %v5338 = vrot.slane %v5336, 5
        %v5339 = vor.u32 %v5335, %v5338
        %v5340 = vrot.slane %v5339, 4
        %v5342 = vshll.u32 %v5012, 16
        %v5344 = vrot.slane %v5342, 5
        %v5345 = vsel %vm1526, %v5340, %v5344
        %v5346 = vshrl.u32 %v5012, 16
        %v5348 = vrot.slane %v5346, 4
        %v5349 = vor.u32 %v5348, %v5344
        %v5350 = vrot.slane %v5349, 4
        %v5352 = vshll.u32 %v5013, 16
        %v5354 = vrot.slane %v5352, 5
        %v5355 = vsel %vm1526, %v5350, %v5354
        %v5357 = vshrl.u32 %v5014, 16
        %v5359 = vrot.slane %v5357, 4
        %v5360 = vshll.u32 %v5014, 16
        %v5362 = vrot.slane %v5360, 5
        %v5363 = vor.u32 %v5359, %v5362
        %v5364 = vrot.slane %v5363, 4
        %v5366 = vshll.u32 %v5015, 16
        %v5368 = vrot.slane %v5366, 5
        %v5369 = vsel %vm1526, %v5364, %v5368
        %v5370 = vshrl.u32 %v5015, 16
        %v5372 = vrot.slane %v5370, 4
        %v5373 = vor.u32 %v5372, %v5368
        %v5374 = vrot.slane %v5373, 4
        %v5376 = vshll.u32 %v5016, 16
        %v5378 = vrot.slane %v5376, 5
        %v5379 = vsel %vm1526, %v5374, %v5378
        %v5381 = vshrl.u32 %v5017, 16
        %v5383 = vrot.slane %v5381, 4
        %v5384 = vshll.u32 %v5017, 16
        %v5386 = vrot.slane %v5384, 5
        %v5387 = vor.u32 %v5383, %v5386
        %v5388 = vrot.slane %v5387, 4
        %v5390 = vshll.u32 %v5018, 16
        %v5392 = vrot.slane %v5390, 5
        %v5393 = vsel %vm1526, %v5388, %v5392
        %v5394 = vshrl.u32 %v5018, 16
        %v5396 = vrot.slane %v5394, 4
        %v5397 = vor.u32 %v5396, %v5392
        %v5398 = vrot.slane %v5397, 4
        %v5400 = vshll.u32 %v5019, 16
        %v5402 = vrot.slane %v5400, 5
        %v5403 = vsel %vm1526, %v5398, %v5402
        %s5404 = scalar_lea.vmem [#allocation8], 32
        %v5405 = vld [vmem:[%s5404] sm:$0xf]
        %v5406 = vunpack.c.l.b16 %v5033
        %v5407 = vunpack.c.l.b16 %v5043
        %v5408 = vunpack.c.l.b16 %v5057
        %v5409 = vunpack.c.l.b16 %v5067
        %v5410 = vunpack.c.l.b16 %v5081
        %v5411 = vunpack.c.l.b16 %v5091
        %v5412 = vunpack.c.l.b16 %v5105
        %v5413 = vunpack.c.l.b16 %v5115
        %v5414 = vunpack.c.l.b16 %v5129
        %v5415 = vunpack.c.l.b16 %v5139
        %v5416 = vunpack.c.l.b16 %v5153
        %v5417 = vunpack.c.l.b16 %v5163
        %v5418 = vunpack.c.l.b16 %v5177
        %v5419 = vunpack.c.l.b16 %v5187
        %v5420 = vunpack.c.l.b16 %v5201
        %v5421 = vunpack.c.l.b16 %v5211
        %v5422 = vunpack.c.l.b16 %v5225
        %v5423 = vunpack.c.l.b16 %v5235
        %v5424 = vunpack.c.l.b16 %v5249
        %v5425 = vunpack.c.l.b16 %v5259
        %v5426 = vunpack.c.l.b16 %v5273
        %v5427 = vunpack.c.l.b16 %v5283
        %v5428 = vunpack.c.l.b16 %v5297
        %v5429 = vunpack.c.l.b16 %v5307
        %v5430 = vunpack.c.l.b16 %v5321
        %v5431 = vunpack.c.l.b16 %v5331
        %v5432 = vunpack.c.l.b16 %v5345
        %v5433 = vunpack.c.l.b16 %v5355
        %v5434 = vunpack.c.l.b16 %v5369
        %v5435 = vunpack.c.l.b16 %v5379
        %v5436 = vunpack.c.l.b16 %v5393
        %v5437 = vunpack.c.l.b16 %v5403
        %v5438 = vpack.c.b16 %v5407, %v5406
        %v5439 = vpack.c.b16 %v5409, %v5408
        %v5440 = vpack.c.b16 %v5411, %v5410
        %v5441 = vpack.c.b16 %v5413, %v5412
        %v5442 = vpack.c.b16 %v5415, %v5414
        %v5443 = vpack.c.b16 %v5417, %v5416
        %v5444 = vpack.c.b16 %v5419, %v5418
        %v5445 = vpack.c.b16 %v5421, %v5420
        %v5446 = vpack.c.b16 %v5423, %v5422
        %v5447 = vpack.c.b16 %v5425, %v5424
        %v5448 = vpack.c.b16 %v5427, %v5426
        %v5449 = vpack.c.b16 %v5429, %v5428
        %v5450 = vpack.c.b16 %v5431, %v5430
        %v5451 = vpack.c.b16 %v5433, %v5432
        %v5452 = vpack.c.b16 %v5435, %v5434
        %v5453 = vpack.c.b16 %v5437, %v5436
        %v5455 = vsel %vm1002, %v5438, 0
        %v5458 = vsel %vm1002, %v5439, 0
        %v5461 = vsel %vm1002, %v5440, 0
        %v5464 = vsel %vm1002, %v5441, 0
        %v5467 = vsel %vm1002, %v5442, 0
        %v5470 = vsel %vm1002, %v5443, 0
        %v5473 = vsel %vm1002, %v5444, 0
        %v5476 = vsel %vm1002, %v5445, 0
        %v5479 = vsel %vm1002, %v5446, 0
        %v5482 = vsel %vm1002, %v5447, 0
        %v5485 = vsel %vm1002, %v5448, 0
        %v5488 = vsel %vm1002, %v5449, 0
        %v5491 = vsel %vm1002, %v5450, 0
        %v5494 = vsel %vm1002, %v5451, 0
        %v5497 = vsel %vm1002, %v5452, 0
        %v5500 = vsel %vm1002, %v5453, 0
        %v5503 = vsel %vm1051, %v5405, 0
        %5505 = vmatprep.subr.bf16.mxu0 0
        %5506 = vmatpush1.bf16.msra.mxu0 %v5503
        %5507 = vmatprep.subr.bf16.mxu0 0
        %5508 = vmatpush1.bf16.msra.mxu0 0
        %5509 = vmatprep.subr.bf16.mxu0 0
        %5510 = vmatpush1.bf16.msra.mxu0 0
        %5511 = vmatprep.subr.bf16.mxu0 0
        %5512 = vmatpush1.bf16.msra.mxu0 0
        %5513 = vmatprep.subr.bf16.mxu0 0
        %5514 = vmatpush1.bf16.msra.mxu0 0
        %5515 = vmatprep.subr.bf16.mxu0 0
        %5516 = vmatpush1.bf16.msra.mxu0 0
        %5517 = vmatprep.subr.bf16.mxu0 0
        %5518 = vmatpush1.bf16.msra.mxu0 0
        %5519 = vmatprep.subr.bf16.mxu0 0
        %5520 = vmatpush1.bf16.msra.mxu0 0
        %5521 = vmatprep.subr.bf16.mxu0 0
        %5522 = vmatpush1.bf16.msra.mxu0 0
        %5523 = vmatprep.subr.bf16.mxu0 0
        %5524 = vmatpush1.bf16.msra.mxu0 0
        %5525 = vmatprep.subr.bf16.mxu0 0
        %5526 = vmatpush1.bf16.msra.mxu0 0
        %5527 = vmatprep.subr.bf16.mxu0 0
        %5528 = vmatpush1.bf16.msra.mxu0 0
        %5529 = vmatprep.subr.bf16.mxu0 0
        %5530 = vmatpush1.bf16.msra.mxu0 0
        %5531 = vmatprep.subr.bf16.mxu0 0
        %5532 = vmatpush1.bf16.msra.mxu0 0
        %5533 = vmatprep.subr.bf16.mxu0 0
        %5534 = vmatpush1.bf16.msra.mxu0 0
        %5535 = vmatprep.subr.bf16.mxu0 0
        %5536 = vmatpush1.bf16.msra.mxu0 0
        %5537 = vmatprep.mubr.bf16.mxu0 0
        %5538 = vmatmul.mubr.bf16.gmra.mrb[0].mxu0 %v5455
        %v5539 = vpop.f32.mrb[0].mxu0
        %v5540 = vadd.f32 0.0, %v5539
        %v5541 = vpop.f32.mrb[0].mxu0
        %v5542 = vpop.f32.mrb[0].mxu0
        %v5543 = vadd.f32 0.0, %v5542
        %v5544 = vpop.f32.mrb[0].mxu0
        %5545 = vmatprep.mubr.bf16.mxu0 0
        %5546 = vmatmul.mubr.bf16.gmra.mrb[0].mxu0 %v5458
        %v5547 = vpop.f32.mrb[0].mxu0
        %v5548 = vadd.f32 0.0, %v5547
        %v5549 = vpop.f32.mrb[0].mxu0
        %v5550 = vpop.f32.mrb[0].mxu0
        %v5551 = vadd.f32 0.0, %v5550
        %v5552 = vpop.f32.mrb[0].mxu0
        %5553 = vmatprep.mubr.bf16.mxu0 0
        %5554 = vmatmul.mubr.bf16.gmra.mrb[0].mxu0 %v5461
        %v5555 = vpop.f32.mrb[0].mxu0
        %v5556 = vadd.f32 0.0, %v5555
        %v5557 = vpop.f32.mrb[0].mxu0
        %v5558 = vpop.f32.mrb[0].mxu0
        %v5559 = vadd.f32 0.0, %v5558
        %v5560 = vpop.f32.mrb[0].mxu0
        %5561 = vmatprep.mubr.bf16.mxu0 0
        %5562 = vmatmul.mubr.bf16.gmra.mrb[0].mxu0 %v5464
        %v5563 = vpop.f32.mrb[0].mxu0
        %v5564 = vadd.f32 0.0, %v5563
        %v5565 = vpop.f32.mrb[0].mxu0
        %v5566 = vpop.f32.mrb[0].mxu0
        %v5567 = vadd.f32 0.0, %v5566
        %v5568 = vpop.f32.mrb[0].mxu0
        %5569 = vmatprep.mubr.bf16.mxu0 0
        %5570 = vmatmul.mubr.bf16.gmra.mrb[0].mxu0 %v5467
        %v5571 = vpop.f32.mrb[0].mxu0
        %v5572 = vadd.f32 0.0, %v5571
        %v5573 = vpop.f32.mrb[0].mxu0
        %v5574 = vpop.f32.mrb[0].mxu0
        %v5575 = vadd.f32 0.0, %v5574
        %v5576 = vpop.f32.mrb[0].mxu0
        %5577 = vmatprep.mubr.bf16.mxu0 0
        %5578 = vmatmul.mubr.bf16.gmra.mrb[0].mxu0 %v5470
        %v5579 = vpop.f32.mrb[0].mxu0
        %v5580 = vadd.f32 0.0, %v5579
        %v5581 = vpop.f32.mrb[0].mxu0
        %v5582 = vpop.f32.mrb[0].mxu0
        %v5583 = vadd.f32 0.0, %v5582
        %v5584 = vpop.f32.mrb[0].mxu0
        %5585 = vmatprep.mubr.bf16.mxu0 0
        %5586 = vmatmul.mubr.bf16.gmra.mrb[0].mxu0 %v5473
        %v5587 = vpop.f32.mrb[0].mxu0
        %v5588 = vadd.f32 0.0, %v5587
        %v5589 = vpop.f32.mrb[0].mxu0
        %v5590 = vpop.f32.mrb[0].mxu0
        %v5591 = vadd.f32 0.0, %v5590
        %v5592 = vpop.f32.mrb[0].mxu0
        %5593 = vmatprep.mubr.bf16.mxu0 0
        %5594 = vmatmul.mubr.bf16.gmra.mrb[0].mxu0 %v5476
        %v5595 = vpop.f32.mrb[0].mxu0
        %v5596 = vadd.f32 0.0, %v5595
        %v5597 = vpop.f32.mrb[0].mxu0
        %v5598 = vpop.f32.mrb[0].mxu0
        %v5599 = vadd.f32 0.0, %v5598
        %v5600 = vpop.f32.mrb[0].mxu0
        %5601 = vmatprep.mubr.bf16.mxu0 0
        %5602 = vmatmul.mubr.bf16.gmra.mrb[0].mxu0 %v5479
        %v5603 = vpop.f32.mrb[0].mxu0
        %v5604 = vadd.f32 0.0, %v5603
        %v5605 = vpop.f32.mrb[0].mxu0
        %v5606 = vpop.f32.mrb[0].mxu0
        %v5607 = vadd.f32 0.0, %v5606
        %v5608 = vpop.f32.mrb[0].mxu0
        %5609 = vmatprep.mubr.bf16.mxu0 0
        %5610 = vmatmul.mubr.bf16.gmra.mrb[0].mxu0 %v5482
        %v5611 = vpop.f32.mrb[0].mxu0
        %v5612 = vadd.f32 0.0, %v5611
        %v5613 = vpop.f32.mrb[0].mxu0
        %v5614 = vpop.f32.mrb[0].mxu0
        %v5615 = vadd.f32 0.0, %v5614
        %v5616 = vpop.f32.mrb[0].mxu0
        %5617 = vmatprep.mubr.bf16.mxu0 0
        %5618 = vmatmul.mubr.bf16.gmra.mrb[0].mxu0 %v5485
        %v5619 = vpop.f32.mrb[0].mxu0
        %v5620 = vadd.f32 0.0, %v5619
        %v5621 = vpop.f32.mrb[0].mxu0
        %v5622 = vpop.f32.mrb[0].mxu0
        %v5623 = vadd.f32 0.0, %v5622
        %v5624 = vpop.f32.mrb[0].mxu0
        %5625 = vmatprep.mubr.bf16.mxu0 0
        %5626 = vmatmul.mubr.bf16.gmra.mrb[0].mxu0 %v5488
        %v5627 = vpop.f32.mrb[0].mxu0
        %v5628 = vadd.f32 0.0, %v5627
        %v5629 = vpop.f32.mrb[0].mxu0
        %v5630 = vpop.f32.mrb[0].mxu0
        %v5631 = vadd.f32 0.0, %v5630
        %v5632 = vpop.f32.mrb[0].mxu0
        %5633 = vmatprep.mubr.bf16.mxu0 0
        %5634 = vmatmul.mubr.bf16.gmra.mrb[0].mxu0 %v5491
        %v5635 = vpop.f32.mrb[0].mxu0
        %v5636 = vadd.f32 0.0, %v5635
        %v5637 = vpop.f32.mrb[0].mxu0
        %v5638 = vpop.f32.mrb[0].mxu0
        %v5639 = vadd.f32 0.0, %v5638
        %v5640 = vpop.f32.mrb[0].mxu0
        %5641 = vmatprep.mubr.bf16.mxu0 0
        %5642 = vmatmul.mubr.bf16.gmra.mrb[0].mxu0 %v5494
        %v5643 = vpop.f32.mrb[0].mxu0
        %v5644 = vadd.f32 0.0, %v5643
        %v5645 = vpop.f32.mrb[0].mxu0
        %v5646 = vpop.f32.mrb[0].mxu0
        %v5647 = vadd.f32 0.0, %v5646
        %v5648 = vpop.f32.mrb[0].mxu0
        %5649 = vmatprep.mubr.bf16.mxu0 0
        %5650 = vmatmul.mubr.bf16.gmra.mrb[0].mxu0 %v5497
        %v5651 = vpop.f32.mrb[0].mxu0
        %v5652 = vadd.f32 0.0, %v5651
        %v5653 = vpop.f32.mrb[0].mxu0
        %v5654 = vpop.f32.mrb[0].mxu0
        %v5655 = vadd.f32 0.0, %v5654
        %v5656 = vpop.f32.mrb[0].mxu0
        %5657 = vmatprep.mubr.bf16.mxu0 0
        %5658 = vmatmul.mubr.bf16.gmra.mrb[0].mxu0 %v5500
        %v5659 = vpop.f32.mrb[0].mxu0
        %v5660 = vadd.f32 0.0, %v5659
        %v5661 = vpop.f32.mrb[0].mxu0
        %v5662 = vpop.f32.mrb[0].mxu0
        %v5663 = vadd.f32 0.0, %v5662
        %v5664 = vpop.f32.mrb[0].mxu0
        %5665 = vdwg.mxu0
        %v5666 = vadd.f32 %v4940, %v5540
        %v5667 = vadd.f32 %v4941, %v5543
        %v5668 = vadd.f32 %v4942, %v5548
        %v5669 = vadd.f32 %v4943, %v5551
        %v5670 = vadd.f32 %v4944, %v5556
        %v5671 = vadd.f32 %v4945, %v5559
        %v5672 = vadd.f32 %v4946, %v5564
        %v5673 = vadd.f32 %v4947, %v5567
        %v5674 = vadd.f32 %v4948, %v5572
        %v5675 = vadd.f32 %v4949, %v5575
        %v5676 = vadd.f32 %v4950, %v5580
        %v5677 = vadd.f32 %v4951, %v5583
        %v5678 = vadd.f32 %v4952, %v5588
        %v5679 = vadd.f32 %v4953, %v5591
        %v5680 = vadd.f32 %v4954, %v5596
        %v5681 = vadd.f32 %v4955, %v5599
        %v5682 = vadd.f32 %v4956, %v5604
        %v5683 = vadd.f32 %v4957, %v5607
        %v5684 = vadd.f32 %v4958, %v5612
        %v5685 = vadd.f32 %v4959, %v5615
        %v5686 = vadd.f32 %v4960, %v5620
        %v5687 = vadd.f32 %v4961, %v5623
        %v5688 = vadd.f32 %v4962, %v5628
        %v5689 = vadd.f32 %v4963, %v5631
        %v5690 = vadd.f32 %v4964, %v5636
        %v5691 = vadd.f32 %v4965, %v5639
        %v5692 = vadd.f32 %v4966, %v5644
        %v5693 = vadd.f32 %v4967, %v5647
        %v5694 = vadd.f32 %v4968, %v5652
        %v5695 = vadd.f32 %v4969, %v5655
        %v5696 = vadd.f32 %v4970, %v5660
        %v5697 = vadd.f32 %v4971, %v5663
        %v5698 = vld [vmem:[#allocation10] sm:$0x1]
        %v5700 = vlaneseq
        %v5701 = vshrl.u32 %v5700, 7
        %v5702 = vsub.s32 0, %v5701
        %v5703 = vrot.slane %v5698, %v5702
        %v5705 = vadd.f32 %v5666, %v5703
        %v5706 = vadd.f32 %v5667, %v5703
        %v5707 = vadd.f32 %v5668, %v5703
        %v5708 = vadd.f32 %v5669, %v5703
        %v5709 = vadd.f32 %v5670, %v5703
        %v5710 = vadd.f32 %v5671, %v5703
        %v5711 = vadd.f32 %v5672, %v5703
        %v5712 = vadd.f32 %v5673, %v5703
        %v5713 = vadd.f32 %v5674, %v5703
        %v5714 = vadd.f32 %v5675, %v5703
        %v5715 = vadd.f32 %v5676, %v5703
        %v5716 = vadd.f32 %v5677, %v5703
        %v5717 = vadd.f32 %v5678, %v5703
        %v5718 = vadd.f32 %v5679, %v5703
        %v5719 = vadd.f32 %v5680, %v5703
        %v5720 = vadd.f32 %v5681, %v5703
        %v5721 = vadd.f32 %v5682, %v5703
        %v5722 = vadd.f32 %v5683, %v5703
        %v5723 = vadd.f32 %v5684, %v5703
        %v5724 = vadd.f32 %v5685, %v5703
        %v5725 = vadd.f32 %v5686, %v5703
        %v5726 = vadd.f32 %v5687, %v5703
        %v5727 = vadd.f32 %v5688, %v5703
        %v5728 = vadd.f32 %v5689, %v5703
        %v5729 = vadd.f32 %v5690, %v5703
        %v5730 = vadd.f32 %v5691, %v5703
        %v5731 = vadd.f32 %v5692, %v5703
        %v5732 = vadd.f32 %v5693, %v5703
        %v5733 = vadd.f32 %v5694, %v5703
        %v5734 = vadd.f32 %v5695, %v5703
        %v5735 = vadd.f32 %v5696, %v5703
        %v5736 = vadd.f32 %v5697, %v5703
        %v5737 = vmax.f32 %v5705, 0.0
        %v5738 = vmax.f32 %v5706, 0.0
        %v5739 = vmax.f32 %v5707, 0.0
        %v5740 = vmax.f32 %v5708, 0.0
        %v5741 = vmax.f32 %v5709, 0.0
        %v5742 = vmax.f32 %v5710, 0.0
        %v5743 = vmax.f32 %v5711, 0.0
        %v5744 = vmax.f32 %v5712, 0.0
        %v5745 = vmax.f32 %v5713, 0.0
        %v5746 = vmax.f32 %v5714, 0.0
        %v5747 = vmax.f32 %v5715, 0.0
        %v5748 = vmax.f32 %v5716, 0.0
        %v5749 = vmax.f32 %v5717, 0.0
        %v5750 = vmax.f32 %v5718, 0.0
        %v5751 = vmax.f32 %v5719, 0.0
        %v5752 = vmax.f32 %v5720, 0.0
        %v5753 = vmax.f32 %v5721, 0.0
        %v5754 = vmax.f32 %v5722, 0.0
        %v5755 = vmax.f32 %v5723, 0.0
        %v5756 = vmax.f32 %v5724, 0.0
        %v5757 = vmax.f32 %v5725, 0.0
        %v5758 = vmax.f32 %v5726, 0.0
        %v5759 = vmax.f32 %v5727, 0.0
        %v5760 = vmax.f32 %v5728, 0.0
        %v5761 = vmax.f32 %v5729, 0.0
        %v5762 = vmax.f32 %v5730, 0.0
        %v5763 = vmax.f32 %v5731, 0.0
        %v5764 = vmax.f32 %v5732, 0.0
        %v5765 = vmax.f32 %v5733, 0.0
        %v5766 = vmax.f32 %v5734, 0.0
        %v5767 = vmax.f32 %v5735, 0.0
        %v5768 = vmax.f32 %v5736, 0.0
        %5769 = vst.msk [vmem:[#allocation3] sm:$0xf] %vm336, 0
        %5770 = vst.msk [vmem:[#allocation3 + $0x4] sm:$0xf] %vm336, 0
        %5771 = vst.msk [vmem:[#allocation3 + $0x8] sm:$0xf] %vm336, 0
        %v5772 = vld [vmem:[#allocation3 + $0xc] sm:$0x1]
        %v5773 = vsel %vm342, 0, %v5772
        %5774 = vst [vmem:[#allocation3 + $0xc] sm:$0x1] %v5773
        %s5775 = scalar_lea.vmem [#allocation3], 272
        %5776 = vst.msk [vmem:[%s5775] sm:$0xf] %vm336, 0
        %5777 = vst.msk [vmem:[%s5775 + $0x4] sm:$0xf] %vm336, 0
        %5778 = vst.msk [vmem:[%s5775 + $0x8] sm:$0xf] %vm336, 0
        %v5779 = vld [vmem:[%s5775 + $0xc] sm:$0x1]
        %v5780 = vsel %vm342, 0, %v5779
        %5781 = vst [vmem:[%s5775 + $0xc] sm:$0x1] %v5780
        %s5782 = scalar_lea.vmem [#allocation3], 16
        %v5783 = vld [vmem:[%s5782] sm:$0x8]
        %v5784 = vsel %vm356, 0, %v5783
        %5785 = vst [vmem:[%s5782] sm:$0x8] %v5784
        %v5786 = vld [vmem:[%s5782 + $0x10] sm:$0x8]
        %v5787 = vsel %vm356, 0, %v5786
        %5788 = vst [vmem:[%s5782 + $0x10] sm:$0x8] %v5787
        %v5789 = vld [vmem:[%s5782 + $0x20] sm:$0x8]
        %v5790 = vsel %vm356, 0, %v5789
        %5791 = vst [vmem:[%s5782 + $0x20] sm:$0x8] %v5790
        %v5792 = vld [vmem:[%s5782 + $0x30] sm:$0x8]
        %v5793 = vsel %vm356, 0, %v5792
        %5794 = vst [vmem:[%s5782 + $0x30] sm:$0x8] %v5793
        %v5795 = vld [vmem:[%s5782 + $0x40] sm:$0x8]
        %v5796 = vsel %vm356, 0, %v5795
        %5797 = vst [vmem:[%s5782 + $0x40] sm:$0x8] %v5796
        %v5798 = vld [vmem:[%s5782 + $0x50] sm:$0x8]
        %v5799 = vsel %vm356, 0, %v5798
        %5800 = vst [vmem:[%s5782 + $0x50] sm:$0x8] %v5799
        %v5801 = vld [vmem:[%s5782 + $0x60] sm:$0x8]
        %v5802 = vsel %vm356, 0, %v5801
        %5803 = vst [vmem:[%s5782 + $0x60] sm:$0x8] %v5802
        %v5804 = vld [vmem:[%s5782 + $0x70] sm:$0x8]
        %v5805 = vsel %vm356, 0, %v5804
        %5806 = vst [vmem:[%s5782 + $0x70] sm:$0x8] %v5805
        %v5807 = vld [vmem:[%s5782 + $0x80] sm:$0x8]
        %v5808 = vsel %vm356, 0, %v5807
        %5809 = vst [vmem:[%s5782 + $0x80] sm:$0x8] %v5808
        %v5810 = vld [vmem:[%s5782 + $0x90] sm:$0x8]
        %v5811 = vsel %vm356, 0, %v5810
        %5812 = vst [vmem:[%s5782 + $0x90] sm:$0x8] %v5811
        %v5813 = vld [vmem:[%s5782 + $0xa0] sm:$0x8]
        %v5814 = vsel %vm356, 0, %v5813
        %5815 = vst [vmem:[%s5782 + $0xa0] sm:$0x8] %v5814
        %v5816 = vld [vmem:[%s5782 + $0xb0] sm:$0x8]
        %v5817 = vsel %vm356, 0, %v5816
        %5818 = vst [vmem:[%s5782 + $0xb0] sm:$0x8] %v5817
        %v5819 = vld [vmem:[%s5782 + $0xc0] sm:$0x8]
        %v5820 = vsel %vm356, 0, %v5819
        %5821 = vst [vmem:[%s5782 + $0xc0] sm:$0x8] %v5820
        %v5822 = vld [vmem:[%s5782 + $0xd0] sm:$0x8]
        %v5823 = vsel %vm356, 0, %v5822
        %5824 = vst [vmem:[%s5782 + $0xd0] sm:$0x8] %v5823
        %v5825 = vld [vmem:[%s5782 + $0xe0] sm:$0x8]
        %v5826 = vsel %vm356, 0, %v5825
        %5827 = vst [vmem:[%s5782 + $0xe0] sm:$0x8] %v5826
        %v5828 = vld [vmem:[%s5782 + $0xf0] sm:$0x8]
        %v5829 = vsel %vm356, 0, %v5828
        %5830 = vst [vmem:[%s5782 + $0xf0] sm:$0x8] %v5829
        %v5831 = vld [vmem:[%s5782 + $0xc] sm:$0x1]
        %v5832 = vsel %vm342, 0, %v5831
        %5833 = vst [vmem:[%s5782 + $0xc] sm:$0x1] %v5832
        %v5834 = vld [vmem:[%s5782 + $0x1c] sm:$0x1]
        %v5835 = vsel %vm342, 0, %v5834
        %5836 = vst [vmem:[%s5782 + $0x1c] sm:$0x1] %v5835
        %v5837 = vld [vmem:[%s5782 + $0x2c] sm:$0x1]
        %v5838 = vsel %vm342, 0, %v5837
        %5839 = vst [vmem:[%s5782 + $0x2c] sm:$0x1] %v5838
        %v5840 = vld [vmem:[%s5782 + $0x3c] sm:$0x1]
        %v5841 = vsel %vm342, 0, %v5840
        %5842 = vst [vmem:[%s5782 + $0x3c] sm:$0x1] %v5841
        %v5843 = vld [vmem:[%s5782 + $0x4c] sm:$0x1]
        %v5844 = vsel %vm342, 0, %v5843
        %5845 = vst [vmem:[%s5782 + $0x4c] sm:$0x1] %v5844
        %v5846 = vld [vmem:[%s5782 + $0x5c] sm:$0x1]
        %v5847 = vsel %vm342, 0, %v5846
        %5848 = vst [vmem:[%s5782 + $0x5c] sm:$0x1] %v5847
        %v5849 = vld [vmem:[%s5782 + $0x6c] sm:$0x1]
        %v5850 = vsel %vm342, 0, %v5849
        %5851 = vst [vmem:[%s5782 + $0x6c] sm:$0x1] %v5850
        %v5852 = vld [vmem:[%s5782 + $0x7c] sm:$0x1]
        %v5853 = vsel %vm342, 0, %v5852
        %5854 = vst [vmem:[%s5782 + $0x7c] sm:$0x1] %v5853
        %v5855 = vld [vmem:[%s5782 + $0x8c] sm:$0x1]
        %v5856 = vsel %vm342, 0, %v5855
        %5857 = vst [vmem:[%s5782 + $0x8c] sm:$0x1] %v5856
        %v5858 = vld [vmem:[%s5782 + $0x9c] sm:$0x1]
        %v5859 = vsel %vm342, 0, %v5858
        %5860 = vst [vmem:[%s5782 + $0x9c] sm:$0x1] %v5859
        %v5861 = vld [vmem:[%s5782 + $0xac] sm:$0x1]
        %v5862 = vsel %vm342, 0, %v5861
        %5863 = vst [vmem:[%s5782 + $0xac] sm:$0x1] %v5862
        %v5864 = vld [vmem:[%s5782 + $0xbc] sm:$0x1]
        %v5865 = vsel %vm342, 0, %v5864
        %5866 = vst [vmem:[%s5782 + $0xbc] sm:$0x1] %v5865
        %v5867 = vld [vmem:[%s5782 + $0xcc] sm:$0x1]
        %v5868 = vsel %vm342, 0, %v5867
        %5869 = vst [vmem:[%s5782 + $0xcc] sm:$0x1] %v5868
        %v5870 = vld [vmem:[%s5782 + $0xdc] sm:$0x1]
        %v5871 = vsel %vm342, 0, %v5870
        %5872 = vst [vmem:[%s5782 + $0xdc] sm:$0x1] %v5871
        %v5873 = vld [vmem:[%s5782 + $0xec] sm:$0x1]
        %v5874 = vsel %vm342, 0, %v5873
        %5875 = vst [vmem:[%s5782 + $0xec] sm:$0x1] %v5874
        %v5876 = vld [vmem:[%s5782 + $0xfc] sm:$0x1]
        %v5877 = vsel %vm342, 0, %v5876
        %5878 = vst [vmem:[%s5782 + $0xfc] sm:$0x1] %v5877
        %v5879 = vpack.c.bf16 %v5738, %v5737
        %v5880 = vpack.c.bf16 %v5740, %v5739
        %v5881 = vpack.c.bf16 %v5742, %v5741
        %v5882 = vpack.c.bf16 %v5744, %v5743
        %v5883 = vpack.c.bf16 %v5746, %v5745
        %v5884 = vpack.c.bf16 %v5748, %v5747
        %v5885 = vpack.c.bf16 %v5750, %v5749
        %v5886 = vpack.c.bf16 %v5752, %v5751
        %v5887 = vpack.c.bf16 %v5754, %v5753
        %v5888 = vpack.c.bf16 %v5756, %v5755
        %v5889 = vpack.c.bf16 %v5758, %v5757
        %v5890 = vpack.c.bf16 %v5760, %v5759
        %v5891 = vpack.c.bf16 %v5762, %v5761
        %v5892 = vpack.c.bf16 %v5764, %v5763
        %v5893 = vpack.c.bf16 %v5766, %v5765
        %v5894 = vpack.c.bf16 %v5768, %v5767
        %v5911 = vunpack.c.l.b16 %v5879
        %v5912 = vunpack.c.h.b16 %v5879
        %v5913 = vunpack.c.l.b16 %v5880
        %v5914 = vunpack.c.h.b16 %v5880
        %v5915 = vunpack.c.l.b16 %v5881
        %v5916 = vunpack.c.h.b16 %v5881
        %v5917 = vunpack.c.l.b16 %v5882
        %v5918 = vunpack.c.h.b16 %v5882
        %v5919 = vunpack.c.l.b16 %v5883
        %v5920 = vunpack.c.h.b16 %v5883
        %v5921 = vunpack.c.l.b16 %v5884
        %v5922 = vunpack.c.h.b16 %v5884
        %v5923 = vunpack.c.l.b16 %v5885
        %v5924 = vunpack.c.h.b16 %v5885
        %v5925 = vunpack.c.l.b16 %v5886
        %v5926 = vunpack.c.h.b16 %v5886
        %v5927 = vunpack.c.l.b16 %v5887
        %v5928 = vunpack.c.h.b16 %v5887
        %v5929 = vunpack.c.l.b16 %v5888
        %v5930 = vunpack.c.h.b16 %v5888
        %v5931 = vunpack.c.l.b16 %v5889
        %v5932 = vunpack.c.h.b16 %v5889
        %v5933 = vunpack.c.l.b16 %v5890
        %v5934 = vunpack.c.h.b16 %v5890
        %v5935 = vunpack.c.l.b16 %v5891
        %v5936 = vunpack.c.h.b16 %v5891
        %v5937 = vunpack.c.l.b16 %v5892
        %v5938 = vunpack.c.h.b16 %v5892
        %v5939 = vunpack.c.l.b16 %v5893
        %v5940 = vunpack.c.h.b16 %v5893
        %v5941 = vunpack.c.l.b16 %v5894
        %v5942 = vunpack.c.h.b16 %v5894
        %v5943 = vpack.c.b16 %v5911, %v5911
        %v5944 = vpack.c.b16 %v5912, %v5912
        %v5945 = vpack.c.b16 %v5913, %v5913
        %v5946 = vpack.c.b16 %v5914, %v5914
        %v5947 = vpack.c.b16 %v5915, %v5915
        %v5948 = vpack.c.b16 %v5916, %v5916
        %v5949 = vpack.c.b16 %v5917, %v5917
        %v5950 = vpack.c.b16 %v5918, %v5918
        %v5951 = vpack.c.b16 %v5919, %v5919
        %v5952 = vpack.c.b16 %v5920, %v5920
        %v5953 = vpack.c.b16 %v5921, %v5921
        %v5954 = vpack.c.b16 %v5922, %v5922
        %v5955 = vpack.c.b16 %v5923, %v5923
        %v5956 = vpack.c.b16 %v5924, %v5924
        %v5957 = vpack.c.b16 %v5925, %v5925
        %v5958 = vpack.c.b16 %v5926, %v5926
        %v5959 = vpack.c.b16 %v5927, %v5927
        %v5960 = vpack.c.b16 %v5928, %v5928
        %v5961 = vpack.c.b16 %v5929, %v5929
        %v5962 = vpack.c.b16 %v5930, %v5930
        %v5963 = vpack.c.b16 %v5931, %v5931
        %v5964 = vpack.c.b16 %v5932, %v5932
        %v5965 = vpack.c.b16 %v5933, %v5933
        %v5966 = vpack.c.b16 %v5934, %v5934
        %v5967 = vpack.c.b16 %v5935, %v5935
        %v5968 = vpack.c.b16 %v5936, %v5936
        %v5969 = vpack.c.b16 %v5937, %v5937
        %v5970 = vpack.c.b16 %v5938, %v5938
        %v5971 = vpack.c.b16 %v5939, %v5939
        %v5972 = vpack.c.b16 %v5940, %v5940
        %v5973 = vpack.c.b16 %v5941, %v5941
        %v5974 = vpack.c.b16 %v5942, %v5942
        %6007 = vst.msk [vmem:[%s5782 + $0x4] sm:$0xf] %vm336, %v5943
        %6008 = vst.msk [vmem:[%s5782 + $0x8] sm:$0xf] %vm336, %v5944
        %6009 = vst.msk [vmem:[%s5782 + $0x14] sm:$0xf] %vm336, %v5945
        %6010 = vst.msk [vmem:[%s5782 + $0x18] sm:$0xf] %vm336, %v5946
        %6011 = vst.msk [vmem:[%s5782 + $0x24] sm:$0xf] %vm336, %v5947
        %6012 = vst.msk [vmem:[%s5782 + $0x28] sm:$0xf] %vm336, %v5948
        %6013 = vst.msk [vmem:[%s5782 + $0x34] sm:$0xf] %vm336, %v5949
        %6014 = vst.msk [vmem:[%s5782 + $0x38] sm:$0xf] %vm336, %v5950
        %6015 = vst.msk [vmem:[%s5782 + $0x44] sm:$0xf] %vm336, %v5951
        %6016 = vst.msk [vmem:[%s5782 + $0x48] sm:$0xf] %vm336, %v5952
        %6017 = vst.msk [vmem:[%s5782 + $0x54] sm:$0xf] %vm336, %v5953
        %6018 = vst.msk [vmem:[%s5782 + $0x58] sm:$0xf] %vm336, %v5954
        %6019 = vst.msk [vmem:[%s5782 + $0x64] sm:$0xf] %vm336, %v5955
        %6020 = vst.msk [vmem:[%s5782 + $0x68] sm:$0xf] %vm336, %v5956
        %6021 = vst.msk [vmem:[%s5782 + $0x74] sm:$0xf] %vm336, %v5957
        %6022 = vst.msk [vmem:[%s5782 + $0x78] sm:$0xf] %vm336, %v5958
        %6023 = vst.msk [vmem:[%s5782 + $0x84] sm:$0xf] %vm336, %v5959
        %6024 = vst.msk [vmem:[%s5782 + $0x88] sm:$0xf] %vm336, %v5960
        %6025 = vst.msk [vmem:[%s5782 + $0x94] sm:$0xf] %vm336, %v5961
        %6026 = vst.msk [vmem:[%s5782 + $0x98] sm:$0xf] %vm336, %v5962
        %6027 = vst.msk [vmem:[%s5782 + $0xa4] sm:$0xf] %vm336, %v5963
        %6028 = vst.msk [vmem:[%s5782 + $0xa8] sm:$0xf] %vm336, %v5964
        %6029 = vst.msk [vmem:[%s5782 + $0xb4] sm:$0xf] %vm336, %v5965
        %6030 = vst.msk [vmem:[%s5782 + $0xb8] sm:$0xf] %vm336, %v5966
        %6031 = vst.msk [vmem:[%s5782 + $0xc4] sm:$0xf] %vm336, %v5967
        %6032 = vst.msk [vmem:[%s5782 + $0xc8] sm:$0xf] %vm336, %v5968
        %6033 = vst.msk [vmem:[%s5782 + $0xd4] sm:$0xf] %vm336, %v5969
        %6034 = vst.msk [vmem:[%s5782 + $0xd8] sm:$0xf] %vm336, %v5970
        %6035 = vst.msk [vmem:[%s5782 + $0xe4] sm:$0xf] %vm336, %v5971
        %6036 = vst.msk [vmem:[%s5782 + $0xe8] sm:$0xf] %vm336, %v5972
        %6037 = vst.msk [vmem:[%s5782 + $0xf4] sm:$0xf] %vm336, %v5973
        %6038 = vst.msk [vmem:[%s5782 + $0xf8] sm:$0xf] %vm336, %v5974
        %v6039 = vld [vmem:[#allocation3] sm:$0x8]
        %v6040 = vld [vmem:[#allocation3 + $0x4] sm:$0xf]
        %v6041 = vld [vmem:[#allocation3 + $0x8] sm:$0xf]
        %v6042 = vld [vmem:[#allocation3 + $0x10] sm:$0x8]
        %v6043 = vld [vmem:[#allocation3 + $0x14] sm:$0xf]
        %v6044 = vld [vmem:[#allocation3 + $0x18] sm:$0xf]
        %v6045 = vld [vmem:[#allocation3 + $0x20] sm:$0x8]
        %v6046 = vld [vmem:[#allocation3 + $0x24] sm:$0xf]
        %v6047 = vld [vmem:[#allocation3 + $0x28] sm:$0xf]
        %v6048 = vld [vmem:[#allocation3 + $0x30] sm:$0x8]
        %v6049 = vld [vmem:[#allocation3 + $0x34] sm:$0xf]
        %v6050 = vld [vmem:[#allocation3 + $0x38] sm:$0xf]
        %v6051 = vld [vmem:[#allocation3 + $0x40] sm:$0x8]
        %v6052 = vld [vmem:[#allocation3 + $0x44] sm:$0xf]
        %v6053 = vld [vmem:[#allocation3 + $0x48] sm:$0xf]
        %v6054 = vld [vmem:[#allocation3 + $0x50] sm:$0x8]
        %v6055 = vld [vmem:[#allocation3 + $0x54] sm:$0xf]
        %v6056 = vld [vmem:[#allocation3 + $0x58] sm:$0xf]
        %v6057 = vld [vmem:[#allocation3 + $0x60] sm:$0x8]
        %v6058 = vld [vmem:[#allocation3 + $0x64] sm:$0xf]
        %v6059 = vld [vmem:[#allocation3 + $0x68] sm:$0xf]
        %v6060 = vld [vmem:[#allocation3 + $0x70] sm:$0x8]
        %v6061 = vld [vmem:[#allocation3 + $0x74] sm:$0xf]
        %v6062 = vld [vmem:[#allocation3 + $0x78] sm:$0xf]
        %v6063 = vld [vmem:[#allocation3 + $0x80] sm:$0x8]
        %v6064 = vld [vmem:[#allocation3 + $0x84] sm:$0xf]
        %v6065 = vld [vmem:[#allocation3 + $0x88] sm:$0xf]
        %v6066 = vld [vmem:[#allocation3 + $0x90] sm:$0x8]
        %v6067 = vld [vmem:[#allocation3 + $0x94] sm:$0xf]
        %v6068 = vld [vmem:[#allocation3 + $0x98] sm:$0xf]
        %v6069 = vld [vmem:[#allocation3 + $0xa0] sm:$0x8]
        %v6070 = vld [vmem:[#allocation3 + $0xa4] sm:$0xf]
        %v6071 = vld [vmem:[#allocation3 + $0xa8] sm:$0xf]
        %v6072 = vld [vmem:[#allocation3 + $0xb0] sm:$0x8]
        %v6073 = vld [vmem:[#allocation3 + $0xb4] sm:$0xf]
        %v6074 = vld [vmem:[#allocation3 + $0xb8] sm:$0xf]
        %v6075 = vld [vmem:[#allocation3 + $0xc0] sm:$0x8]
        %v6076 = vld [vmem:[#allocation3 + $0xc4] sm:$0xf]
        %v6077 = vld [vmem:[#allocation3 + $0xc8] sm:$0xf]
        %v6078 = vld [vmem:[#allocation3 + $0xd0] sm:$0x8]
        %v6079 = vld [vmem:[#allocation3 + $0xd4] sm:$0xf]
        %v6080 = vld [vmem:[#allocation3 + $0xd8] sm:$0xf]
        %v6081 = vld [vmem:[#allocation3 + $0xe0] sm:$0x8]
        %v6082 = vld [vmem:[#allocation3 + $0xe4] sm:$0xf]
        %v6083 = vld [vmem:[#allocation3 + $0xe8] sm:$0xf]
        %v6084 = vld [vmem:[#allocation3 + $0xf0] sm:$0x8]
        %v6085 = vld [vmem:[#allocation3 + $0xf4] sm:$0xf]
        %v6086 = vld [vmem:[#allocation3 + $0xf8] sm:$0xf]
        %v6088 = vshrl.u32 %v6039, 16
        %v6090 = vrot.slane %v6088, 7
        %v6091 = vrot.slane %v6090, 4
        %v6093 = vshrl.u32 %v6040, 16
        %v6095 = vrot.slane %v6093, 7
        %v6096 = vshll.u32 %v6040, 16
        %v6098 = vor.u32 %v6095, %v6096
        %v6099 = vsel %vm566, %v6091, %v6098
        %v6100 = vrot.slane %v6095, 4
        %v6102 = vshrl.u32 %v6041, 16
        %v6104 = vrot.slane %v6102, 7
        %v6105 = vshll.u32 %v6041, 16
        %v6107 = vor.u32 %v6104, %v6105
        %v6108 = vsel %vm566, %v6100, %v6107
        %v6110 = vshrl.u32 %v6042, 16
        %v6112 = vrot.slane %v6110, 7
        %v6113 = vrot.slane %v6112, 4
        %v6115 = vshrl.u32 %v6043, 16
        %v6117 = vrot.slane %v6115, 7
        %v6118 = vshll.u32 %v6043, 16
        %v6120 = vor.u32 %v6117, %v6118
        %v6121 = vsel %vm566, %v6113, %v6120
        %v6122 = vrot.slane %v6117, 4
        %v6124 = vshrl.u32 %v6044, 16
        %v6126 = vrot.slane %v6124, 7
        %v6127 = vshll.u32 %v6044, 16
        %v6129 = vor.u32 %v6126, %v6127
        %v6130 = vsel %vm566, %v6122, %v6129
        %v6132 = vshrl.u32 %v6045, 16
        %v6134 = vrot.slane %v6132, 7
        %v6135 = vrot.slane %v6134, 4
        %v6137 = vshrl.u32 %v6046, 16
        %v6139 = vrot.slane %v6137, 7
        %v6140 = vshll.u32 %v6046, 16
        %v6142 = vor.u32 %v6139, %v6140
        %v6143 = vsel %vm566, %v6135, %v6142
        %v6144 = vrot.slane %v6139, 4
        %v6146 = vshrl.u32 %v6047, 16
        %v6148 = vrot.slane %v6146, 7
        %v6149 = vshll.u32 %v6047, 16
        %v6151 = vor.u32 %v6148, %v6149
        %v6152 = vsel %vm566, %v6144, %v6151
        %v6154 = vshrl.u32 %v6048, 16
        %v6156 = vrot.slane %v6154, 7
        %v6157 = vrot.slane %v6156, 4
        %v6159 = vshrl.u32 %v6049, 16
        %v6161 = vrot.slane %v6159, 7
        %v6162 = vshll.u32 %v6049, 16
        %v6164 = vor.u32 %v6161, %v6162
        %v6165 = vsel %vm566, %v6157, %v6164
        %v6166 = vrot.slane %v6161, 4
        %v6168 = vshrl.u32 %v6050, 16
        %v6170 = vrot.slane %v6168, 7
        %v6171 = vshll.u32 %v6050, 16
        %v6173 = vor.u32 %v6170, %v6171
        %v6174 = vsel %vm566, %v6166, %v6173
        %v6176 = vshrl.u32 %v6051, 16
        %v6178 = vrot.slane %v6176, 7
        %v6179 = vrot.slane %v6178, 4
        %v6181 = vshrl.u32 %v6052, 16
        %v6183 = vrot.slane %v6181, 7
        %v6184 = vshll.u32 %v6052, 16
        %v6186 = vor.u32 %v6183, %v6184
        %v6187 = vsel %vm566, %v6179, %v6186
        %v6188 = vrot.slane %v6183, 4
        %v6190 = vshrl.u32 %v6053, 16
        %v6192 = vrot.slane %v6190, 7
        %v6193 = vshll.u32 %v6053, 16
        %v6195 = vor.u32 %v6192, %v6193
        %v6196 = vsel %vm566, %v6188, %v6195
        %v6198 = vshrl.u32 %v6054, 16
        %v6200 = vrot.slane %v6198, 7
        %v6201 = vrot.slane %v6200, 4
        %v6203 = vshrl.u32 %v6055, 16
        %v6205 = vrot.slane %v6203, 7
        %v6206 = vshll.u32 %v6055, 16
        %v6208 = vor.u32 %v6205, %v6206
        %v6209 = vsel %vm566, %v6201, %v6208
        %v6210 = vrot.slane %v6205, 4
        %v6212 = vshrl.u32 %v6056, 16
        %v6214 = vrot.slane %v6212, 7
        %v6215 = vshll.u32 %v6056, 16
        %v6217 = vor.u32 %v6214, %v6215
        %v6218 = vsel %vm566, %v6210, %v6217
        %v6220 = vshrl.u32 %v6057, 16
        %v6222 = vrot.slane %v6220, 7
        %v6223 = vrot.slane %v6222, 4
        %v6225 = vshrl.u32 %v6058, 16
        %v6227 = vrot.slane %v6225, 7
        %v6228 = vshll.u32 %v6058, 16
        %v6230 = vor.u32 %v6227, %v6228
        %v6231 = vsel %vm566, %v6223, %v6230
        %v6232 = vrot.slane %v6227, 4
        %v6234 = vshrl.u32 %v6059, 16
        %v6236 = vrot.slane %v6234, 7
        %v6237 = vshll.u32 %v6059, 16
        %v6239 = vor.u32 %v6236, %v6237
        %v6240 = vsel %vm566, %v6232, %v6239
        %v6242 = vshrl.u32 %v6060, 16
        %v6244 = vrot.slane %v6242, 7
        %v6245 = vrot.slane %v6244, 4
        %v6247 = vshrl.u32 %v6061, 16
        %v6249 = vrot.slane %v6247, 7
        %v6250 = vshll.u32 %v6061, 16
        %v6252 = vor.u32 %v6249, %v6250
        %v6253 = vsel %vm566, %v6245, %v6252
        %v6254 = vrot.slane %v6249, 4
        %v6256 = vshrl.u32 %v6062, 16
        %v6258 = vrot.slane %v6256, 7
        %v6259 = vshll.u32 %v6062, 16
        %v6261 = vor.u32 %v6258, %v6259
        %v6262 = vsel %vm566, %v6254, %v6261
        %v6264 = vshrl.u32 %v6063, 16
        %v6266 = vrot.slane %v6264, 7
        %v6267 = vrot.slane %v6266, 4
        %v6269 = vshrl.u32 %v6064, 16
        %v6271 = vrot.slane %v6269, 7
        %v6272 = vshll.u32 %v6064, 16
        %v6274 = vor.u32 %v6271, %v6272
        %v6275 = vsel %vm566, %v6267, %v6274
        %v6276 = vrot.slane %v6271, 4
        %v6278 = vshrl.u32 %v6065, 16
        %v6280 = vrot.slane %v6278, 7
        %v6281 = vshll.u32 %v6065, 16
        %v6283 = vor.u32 %v6280, %v6281
        %v6284 = vsel %vm566, %v6276, %v6283
        %v6286 = vshrl.u32 %v6066, 16
        %v6288 = vrot.slane %v6286, 7
        %v6289 = vrot.slane %v6288, 4
        %v6291 = vshrl.u32 %v6067, 16
        %v6293 = vrot.slane %v6291, 7
        %v6294 = vshll.u32 %v6067, 16
        %v6296 = vor.u32 %v6293, %v6294
        %v6297 = vsel %vm566, %v6289, %v6296
        %v6298 = vrot.slane %v6293, 4
        %v6300 = vshrl.u32 %v6068, 16
        %v6302 = vrot.slane %v6300, 7
        %v6303 = vshll.u32 %v6068, 16
        %v6305 = vor.u32 %v6302, %v6303
        %v6306 = vsel %vm566, %v6298, %v6305
        %v6308 = vshrl.u32 %v6069, 16
        %v6310 = vrot.slane %v6308, 7
        %v6311 = vrot.slane %v6310, 4
        %v6313 = vshrl.u32 %v6070, 16
        %v6315 = vrot.slane %v6313, 7
        %v6316 = vshll.u32 %v6070, 16
        %v6318 = vor.u32 %v6315, %v6316
        %v6319 = vsel %vm566, %v6311, %v6318
        %v6320 = vrot.slane %v6315, 4
        %v6322 = vshrl.u32 %v6071, 16
        %v6324 = vrot.slane %v6322, 7
        %v6325 = vshll.u32 %v6071, 16
        %v6327 = vor.u32 %v6324, %v6325
        %v6328 = vsel %vm566, %v6320, %v6327
        %v6330 = vshrl.u32 %v6072, 16
        %v6332 = vrot.slane %v6330, 7
        %v6333 = vrot.slane %v6332, 4
        %v6335 = vshrl.u32 %v6073, 16
        %v6337 = vrot.slane %v6335, 7
        %v6338 = vshll.u32 %v6073, 16
        %v6340 = vor.u32 %v6337, %v6338
        %v6341 = vsel %vm566, %v6333, %v6340
        %v6342 = vrot.slane %v6337, 4
        %v6344 = vshrl.u32 %v6074, 16
        %v6346 = vrot.slane %v6344, 7
        %v6347 = vshll.u32 %v6074, 16
        %v6349 = vor.u32 %v6346, %v6347
        %v6350 = vsel %vm566, %v6342, %v6349
        %v6352 = vshrl.u32 %v6075, 16
        %v6354 = vrot.slane %v6352, 7
        %v6355 = vrot.slane %v6354, 4
        %v6357 = vshrl.u32 %v6076, 16
        %v6359 = vrot.slane %v6357, 7
        %v6360 = vshll.u32 %v6076, 16
        %v6362 = vor.u32 %v6359, %v6360
        %v6363 = vsel %vm566, %v6355, %v6362
        %v6364 = vrot.slane %v6359, 4
        %v6366 = vshrl.u32 %v6077, 16
        %v6368 = vrot.slane %v6366, 7
        %v6369 = vshll.u32 %v6077, 16
        %v6371 = vor.u32 %v6368, %v6369
        %v6372 = vsel %vm566, %v6364, %v6371
        %v6374 = vshrl.u32 %v6078, 16
        %v6376 = vrot.slane %v6374, 7
        %v6377 = vrot.slane %v6376, 4
        %v6379 = vshrl.u32 %v6079, 16
        %v6381 = vrot.slane %v6379, 7
        %v6382 = vshll.u32 %v6079, 16
        %v6384 = vor.u32 %v6381, %v6382
        %v6385 = vsel %vm566, %v6377, %v6384
        %v6386 = vrot.slane %v6381, 4
        %v6388 = vshrl.u32 %v6080, 16
        %v6390 = vrot.slane %v6388, 7
        %v6391 = vshll.u32 %v6080, 16
        %v6393 = vor.u32 %v6390, %v6391
        %v6394 = vsel %vm566, %v6386, %v6393
        %v6396 = vshrl.u32 %v6081, 16
        %v6398 = vrot.slane %v6396, 7
        %v6399 = vrot.slane %v6398, 4
        %v6401 = vshrl.u32 %v6082, 16
        %v6403 = vrot.slane %v6401, 7
        %v6404 = vshll.u32 %v6082, 16
        %v6406 = vor.u32 %v6403, %v6404
        %v6407 = vsel %vm566, %v6399, %v6406
        %v6408 = vrot.slane %v6403, 4
        %v6410 = vshrl.u32 %v6083, 16
        %v6412 = vrot.slane %v6410, 7
        %v6413 = vshll.u32 %v6083, 16
        %v6415 = vor.u32 %v6412, %v6413
        %v6416 = vsel %vm566, %v6408, %v6415
        %v6418 = vshrl.u32 %v6084, 16
        %v6420 = vrot.slane %v6418, 7
        %v6421 = vrot.slane %v6420, 4
        %v6423 = vshrl.u32 %v6085, 16
        %v6425 = vrot.slane %v6423, 7
        %v6426 = vshll.u32 %v6085, 16
        %v6428 = vor.u32 %v6425, %v6426
        %v6429 = vsel %vm566, %v6421, %v6428
        %v6430 = vrot.slane %v6425, 4
        %v6432 = vshrl.u32 %v6086, 16
        %v6434 = vrot.slane %v6432, 7
        %v6435 = vshll.u32 %v6086, 16
        %v6437 = vor.u32 %v6434, %v6435
        %v6438 = vsel %vm566, %v6430, %v6437
        %v6439 = vld [vmem:[#allocation11] sm:$0xf]
        %s6440 = scalar_lea.vmem [#allocation11], 4
        %v6441 = vld [vmem:[%s6440] sm:$0xf]
        %v6474 = vunpack.c.l.b16 %v6040
        %v6475 = vunpack.c.l.b16 %v6041
        %v6476 = vunpack.c.l.b16 %v6043
        %v6477 = vunpack.c.l.b16 %v6044
        %v6478 = vunpack.c.l.b16 %v6046
        %v6479 = vunpack.c.l.b16 %v6047
        %v6480 = vunpack.c.l.b16 %v6049
        %v6481 = vunpack.c.l.b16 %v6050
        %v6482 = vunpack.c.l.b16 %v6052
        %v6483 = vunpack.c.l.b16 %v6053
        %v6484 = vunpack.c.l.b16 %v6055
        %v6485 = vunpack.c.l.b16 %v6056
        %v6486 = vunpack.c.l.b16 %v6058
        %v6487 = vunpack.c.l.b16 %v6059
        %v6488 = vunpack.c.l.b16 %v6061
        %v6489 = vunpack.c.l.b16 %v6062
        %v6490 = vunpack.c.l.b16 %v6064
        %v6491 = vunpack.c.l.b16 %v6065
        %v6492 = vunpack.c.l.b16 %v6067
        %v6493 = vunpack.c.l.b16 %v6068
        %v6494 = vunpack.c.l.b16 %v6070
        %v6495 = vunpack.c.l.b16 %v6071
        %v6496 = vunpack.c.l.b16 %v6073
        %v6497 = vunpack.c.l.b16 %v6074
        %v6498 = vunpack.c.l.b16 %v6076
        %v6499 = vunpack.c.l.b16 %v6077
        %v6500 = vunpack.c.l.b16 %v6079
        %v6501 = vunpack.c.l.b16 %v6080
        %v6502 = vunpack.c.l.b16 %v6082
        %v6503 = vunpack.c.l.b16 %v6083
        %v6504 = vunpack.c.l.b16 %v6085
        %v6505 = vunpack.c.l.b16 %v6086
        %v6506 = vpack.c.b16 %v6475, %v6474
        %v6507 = vpack.c.b16 %v6477, %v6476
        %v6508 = vpack.c.b16 %v6479, %v6478
        %v6509 = vpack.c.b16 %v6481, %v6480
        %v6510 = vpack.c.b16 %v6483, %v6482
        %v6511 = vpack.c.b16 %v6485, %v6484
        %v6512 = vpack.c.b16 %v6487, %v6486
        %v6513 = vpack.c.b16 %v6489, %v6488
        %v6514 = vpack.c.b16 %v6491, %v6490
        %v6515 = vpack.c.b16 %v6493, %v6492
        %v6516 = vpack.c.b16 %v6495, %v6494
        %v6517 = vpack.c.b16 %v6497, %v6496
        %v6518 = vpack.c.b16 %v6499, %v6498
        %v6519 = vpack.c.b16 %v6501, %v6500
        %v6520 = vpack.c.b16 %v6503, %v6502
        %v6521 = vpack.c.b16 %v6505, %v6504
        %v6523 = vsel %vm1002, %v6506, 0
        %v6526 = vsel %vm1002, %v6507, 0
        %v6529 = vsel %vm1002, %v6508, 0
        %v6532 = vsel %vm1002, %v6509, 0
        %v6535 = vsel %vm1002, %v6510, 0
        %v6538 = vsel %vm1002, %v6511, 0
        %v6541 = vsel %vm1002, %v6512, 0
        %v6544 = vsel %vm1002, %v6513, 0
        %v6547 = vsel %vm1002, %v6514, 0
        %v6550 = vsel %vm1002, %v6515, 0
        %v6553 = vsel %vm1002, %v6516, 0
        %v6556 = vsel %vm1002, %v6517, 0
        %v6559 = vsel %vm1002, %v6518, 0
        %v6562 = vsel %vm1002, %v6519, 0
        %v6565 = vsel %vm1002, %v6520, 0
        %v6568 = vsel %vm1002, %v6521, 0
        %v6571 = vsel %vm1051, %v6441, 0
        %6573 = vmatprep.subr.bf16.mxu0 0
        %6574 = vmatpush1.bf16.msra.mxu0 %v6571
        %6575 = vmatprep.subr.bf16.mxu0 0
        %6576 = vmatpush1.bf16.msra.mxu0 0
        %6577 = vmatprep.subr.bf16.mxu0 0
        %6578 = vmatpush1.bf16.msra.mxu0 0
        %6579 = vmatprep.subr.bf16.mxu0 0
        %6580 = vmatpush1.bf16.msra.mxu0 0
        %6581 = vmatprep.subr.bf16.mxu0 0
        %6582 = vmatpush1.bf16.msra.mxu0 0
        %6583 = vmatprep.subr.bf16.mxu0 0
        %6584 = vmatpush1.bf16.msra.mxu0 0
        %6585 = vmatprep.subr.bf16.mxu0 0
        %6586 = vmatpush1.bf16.msra.mxu0 0
        %6587 = vmatprep.subr.bf16.mxu0 0
        %6588 = vmatpush1.bf16.msra.mxu0 0
        %6589 = vmatprep.subr.bf16.mxu0 0
        %6590 = vmatpush1.bf16.msra.mxu0 0
        %6591 = vmatprep.subr.bf16.mxu0 0
        %6592 = vmatpush1.bf16.msra.mxu0 0
        %6593 = vmatprep.subr.bf16.mxu0 0
        %6594 = vmatpush1.bf16.msra.mxu0 0
        %6595 = vmatprep.subr.bf16.mxu0 0
        %6596 = vmatpush1.bf16.msra.mxu0 0
        %6597 = vmatprep.subr.bf16.mxu0 0
        %6598 = vmatpush1.bf16.msra.mxu0 0
        %6599 = vmatprep.subr.bf16.mxu0 0
        %6600 = vmatpush1.bf16.msra.mxu0 0
        %6601 = vmatprep.subr.bf16.mxu0 0
        %6602 = vmatpush1.bf16.msra.mxu0 0
        %6603 = vmatprep.subr.bf16.mxu0 0
        %6604 = vmatpush1.bf16.msra.mxu0 0
        %6605 = vmatprep.mubr.bf16.mxu0 0
        %6606 = vmatmul.mubr.bf16.gmra.mrb[0].mxu0 %v6523
        %v6607 = vpop.f32.mrb[0].mxu0
        %v6608 = vadd.f32 0.0, %v6607
        %v6609 = vpop.f32.mrb[0].mxu0
        %v6610 = vpop.f32.mrb[0].mxu0
        %v6611 = vadd.f32 0.0, %v6610
        %v6612 = vpop.f32.mrb[0].mxu0
        %6613 = vmatprep.mubr.bf16.mxu0 0
        %6614 = vmatmul.mubr.bf16.gmra.mrb[0].mxu0 %v6526
        %v6615 = vpop.f32.mrb[0].mxu0
        %v6616 = vadd.f32 0.0, %v6615
        %v6617 = vpop.f32.mrb[0].mxu0
        %v6618 = vpop.f32.mrb[0].mxu0
        %v6619 = vadd.f32 0.0, %v6618
        %v6620 = vpop.f32.mrb[0].mxu0
        %6621 = vmatprep.mubr.bf16.mxu0 0
        %6622 = vmatmul.mubr.bf16.gmra.mrb[0].mxu0 %v6529
        %v6623 = vpop.f32.mrb[0].mxu0
        %v6624 = vadd.f32 0.0, %v6623
        %v6625 = vpop.f32.mrb[0].mxu0
        %v6626 = vpop.f32.mrb[0].mxu0
        %v6627 = vadd.f32 0.0, %v6626
        %v6628 = vpop.f32.mrb[0].mxu0
        %6629 = vmatprep.mubr.bf16.mxu0 0
        %6630 = vmatmul.mubr.bf16.gmra.mrb[0].mxu0 %v6532
        %v6631 = vpop.f32.mrb[0].mxu0
        %v6632 = vadd.f32 0.0, %v6631
        %v6633 = vpop.f32.mrb[0].mxu0
        %v6634 = vpop.f32.mrb[0].mxu0
        %v6635 = vadd.f32 0.0, %v6634
        %v6636 = vpop.f32.mrb[0].mxu0
        %6637 = vmatprep.mubr.bf16.mxu0 0
        %6638 = vmatmul.mubr.bf16.gmra.mrb[0].mxu0 %v6535
        %v6639 = vpop.f32.mrb[0].mxu0
        %v6640 = vadd.f32 0.0, %v6639
        %v6641 = vpop.f32.mrb[0].mxu0
        %v6642 = vpop.f32.mrb[0].mxu0
        %v6643 = vadd.f32 0.0, %v6642
        %v6644 = vpop.f32.mrb[0].mxu0
        %6645 = vmatprep.mubr.bf16.mxu0 0
        %6646 = vmatmul.mubr.bf16.gmra.mrb[0].mxu0 %v6538
        %v6647 = vpop.f32.mrb[0].mxu0
        %v6648 = vadd.f32 0.0, %v6647
        %v6649 = vpop.f32.mrb[0].mxu0
        %v6650 = vpop.f32.mrb[0].mxu0
        %v6651 = vadd.f32 0.0, %v6650
        %v6652 = vpop.f32.mrb[0].mxu0
        %6653 = vmatprep.mubr.bf16.mxu0 0
        %6654 = vmatmul.mubr.bf16.gmra.mrb[0].mxu0 %v6541
        %v6655 = vpop.f32.mrb[0].mxu0
        %v6656 = vadd.f32 0.0, %v6655
        %v6657 = vpop.f32.mrb[0].mxu0
        %v6658 = vpop.f32.mrb[0].mxu0
        %v6659 = vadd.f32 0.0, %v6658
        %v6660 = vpop.f32.mrb[0].mxu0
        %6661 = vmatprep.mubr.bf16.mxu0 0
        %6662 = vmatmul.mubr.bf16.gmra.mrb[0].mxu0 %v6544
        %v6663 = vpop.f32.mrb[0].mxu0
        %v6664 = vadd.f32 0.0, %v6663
        %v6665 = vpop.f32.mrb[0].mxu0
        %v6666 = vpop.f32.mrb[0].mxu0
        %v6667 = vadd.f32 0.0, %v6666
        %v6668 = vpop.f32.mrb[0].mxu0
        %6669 = vmatprep.mubr.bf16.mxu0 0
        %6670 = vmatmul.mubr.bf16.gmra.mrb[0].mxu0 %v6547
        %v6671 = vpop.f32.mrb[0].mxu0
        %v6672 = vadd.f32 0.0, %v6671
        %v6673 = vpop.f32.mrb[0].mxu0
        %v6674 = vpop.f32.mrb[0].mxu0
        %v6675 = vadd.f32 0.0, %v6674
        %v6676 = vpop.f32.mrb[0].mxu0
        %6677 = vmatprep.mubr.bf16.mxu0 0
        %6678 = vmatmul.mubr.bf16.gmra.mrb[0].mxu0 %v6550
        %v6679 = vpop.f32.mrb[0].mxu0
        %v6680 = vadd.f32 0.0, %v6679
        %v6681 = vpop.f32.mrb[0].mxu0
        %v6682 = vpop.f32.mrb[0].mxu0
        %v6683 = vadd.f32 0.0, %v6682
        %v6684 = vpop.f32.mrb[0].mxu0
        %6685 = vmatprep.mubr.bf16.mxu0 0
        %6686 = vmatmul.mubr.bf16.gmra.mrb[0].mxu0 %v6553
        %v6687 = vpop.f32.mrb[0].mxu0
        %v6688 = vadd.f32 0.0, %v6687
        %v6689 = vpop.f32.mrb[0].mxu0
        %v6690 = vpop.f32.mrb[0].mxu0
        %v6691 = vadd.f32 0.0, %v6690
        %v6692 = vpop.f32.mrb[0].mxu0
        %6693 = vmatprep.mubr.bf16.mxu0 0
        %6694 = vmatmul.mubr.bf16.gmra.mrb[0].mxu0 %v6556
        %v6695 = vpop.f32.mrb[0].mxu0
        %v6696 = vadd.f32 0.0, %v6695
        %v6697 = vpop.f32.mrb[0].mxu0
        %v6698 = vpop.f32.mrb[0].mxu0
        %v6699 = vadd.f32 0.0, %v6698
        %v6700 = vpop.f32.mrb[0].mxu0
        %6701 = vmatprep.mubr.bf16.mxu0 0
        %6702 = vmatmul.mubr.bf16.gmra.mrb[0].mxu0 %v6559
        %v6703 = vpop.f32.mrb[0].mxu0
        %v6704 = vadd.f32 0.0, %v6703
        %v6705 = vpop.f32.mrb[0].mxu0
        %v6706 = vpop.f32.mrb[0].mxu0
        %v6707 = vadd.f32 0.0, %v6706
        %v6708 = vpop.f32.mrb[0].mxu0
        %6709 = vmatprep.mubr.bf16.mxu0 0
        %6710 = vmatmul.mubr.bf16.gmra.mrb[0].mxu0 %v6562
        %v6711 = vpop.f32.mrb[0].mxu0
        %v6712 = vadd.f32 0.0, %v6711
        %v6713 = vpop.f32.mrb[0].mxu0
        %v6714 = vpop.f32.mrb[0].mxu0
        %v6715 = vadd.f32 0.0, %v6714
        %v6716 = vpop.f32.mrb[0].mxu0
        %6717 = vmatprep.mubr.bf16.mxu0 0
        %6718 = vmatmul.mubr.bf16.gmra.mrb[0].mxu0 %v6565
        %v6719 = vpop.f32.mrb[0].mxu0
        %v6720 = vadd.f32 0.0, %v6719
        %v6721 = vpop.f32.mrb[0].mxu0
        %v6722 = vpop.f32.mrb[0].mxu0
        %v6723 = vadd.f32 0.0, %v6722
        %v6724 = vpop.f32.mrb[0].mxu0
        %6725 = vmatprep.mubr.bf16.mxu0 0
        %6726 = vmatmul.mubr.bf16.gmra.mrb[0].mxu0 %v6568
        %v6727 = vpop.f32.mrb[0].mxu0
        %v6728 = vadd.f32 0.0, %v6727
        %v6729 = vpop.f32.mrb[0].mxu0
        %v6730 = vpop.f32.mrb[0].mxu0
        %v6731 = vadd.f32 0.0, %v6730
        %v6732 = vpop.f32.mrb[0].mxu0
        %6733 = vdwg.mxu0
        %v6734 = vunpack.c.l.b16 %v6099
        %v6735 = vunpack.c.l.b16 %v6108
        %v6736 = vunpack.c.l.b16 %v6121
        %v6737 = vunpack.c.l.b16 %v6130
        %v6738 = vunpack.c.l.b16 %v6143
        %v6739 = vunpack.c.l.b16 %v6152
        %v6740 = vunpack.c.l.b16 %v6165
        %v6741 = vunpack.c.l.b16 %v6174
        %v6742 = vunpack.c.l.b16 %v6187
        %v6743 = vunpack.c.l.b16 %v6196
        %v6744 = vunpack.c.l.b16 %v6209
        %v6745 = vunpack.c.l.b16 %v6218
        %v6746 = vunpack.c.l.b16 %v6231
        %v6747 = vunpack.c.l.b16 %v6240
        %v6748 = vunpack.c.l.b16 %v6253
        %v6749 = vunpack.c.l.b16 %v6262
        %v6750 = vunpack.c.l.b16 %v6275
        %v6751 = vunpack.c.l.b16 %v6284
        %v6752 = vunpack.c.l.b16 %v6297
        %v6753 = vunpack.c.l.b16 %v6306
        %v6754 = vunpack.c.l.b16 %v6319
        %v6755 = vunpack.c.l.b16 %v6328
        %v6756 = vunpack.c.l.b16 %v6341
        %v6757 = vunpack.c.l.b16 %v6350
        %v6758 = vunpack.c.l.b16 %v6363
        %v6759 = vunpack.c.l.b16 %v6372
        %v6760 = vunpack.c.l.b16 %v6385
        %v6761 = vunpack.c.l.b16 %v6394
        %v6762 = vunpack.c.l.b16 %v6407
        %v6763 = vunpack.c.l.b16 %v6416
        %v6764 = vunpack.c.l.b16 %v6429
        %v6765 = vunpack.c.l.b16 %v6438
        %v6766 = vpack.c.b16 %v6735, %v6734
        %v6767 = vpack.c.b16 %v6737, %v6736
        %v6768 = vpack.c.b16 %v6739, %v6738
        %v6769 = vpack.c.b16 %v6741, %v6740
        %v6770 = vpack.c.b16 %v6743, %v6742
        %v6771 = vpack.c.b16 %v6745, %v6744
        %v6772 = vpack.c.b16 %v6747, %v6746
        %v6773 = vpack.c.b16 %v6749, %v6748
        %v6774 = vpack.c.b16 %v6751, %v6750
        %v6775 = vpack.c.b16 %v6753, %v6752
        %v6776 = vpack.c.b16 %v6755, %v6754
        %v6777 = vpack.c.b16 %v6757, %v6756
        %v6778 = vpack.c.b16 %v6759, %v6758
        %v6779 = vpack.c.b16 %v6761, %v6760
        %v6780 = vpack.c.b16 %v6763, %v6762
        %v6781 = vpack.c.b16 %v6765, %v6764
        %v6783 = vsel %vm1002, %v6766, 0
        %v6786 = vsel %vm1002, %v6767, 0
        %v6789 = vsel %vm1002, %v6768, 0
        %v6792 = vsel %vm1002, %v6769, 0
        %v6795 = vsel %vm1002, %v6770, 0
        %v6798 = vsel %vm1002, %v6771, 0
        %v6801 = vsel %vm1002, %v6772, 0
        %v6804 = vsel %vm1002, %v6773, 0
        %v6807 = vsel %vm1002, %v6774, 0
        %v6810 = vsel %vm1002, %v6775, 0
        %v6813 = vsel %vm1002, %v6776, 0
        %v6816 = vsel %vm1002, %v6777, 0
        %v6819 = vsel %vm1002, %v6778, 0
        %v6822 = vsel %vm1002, %v6779, 0
        %v6825 = vsel %vm1002, %v6780, 0
        %v6828 = vsel %vm1002, %v6781, 0
        %v6831 = vsel %vm1051, %v6439, 0
        %6833 = vmatprep.subr.bf16.mxu0 0
        %6834 = vmatpush1.bf16.msra.mxu0 %v6831
        %6835 = vmatprep.subr.bf16.mxu0 0
        %6836 = vmatpush1.bf16.msra.mxu0 0
        %6837 = vmatprep.subr.bf16.mxu0 0
        %6838 = vmatpush1.bf16.msra.mxu0 0
        %6839 = vmatprep.subr.bf16.mxu0 0
        %6840 = vmatpush1.bf16.msra.mxu0 0
        %6841 = vmatprep.subr.bf16.mxu0 0
        %6842 = vmatpush1.bf16.msra.mxu0 0
        %6843 = vmatprep.subr.bf16.mxu0 0
        %6844 = vmatpush1.bf16.msra.mxu0 0
        %6845 = vmatprep.subr.bf16.mxu0 0
        %6846 = vmatpush1.bf16.msra.mxu0 0
        %6847 = vmatprep.subr.bf16.mxu0 0
        %6848 = vmatpush1.bf16.msra.mxu0 0
        %6849 = vmatprep.subr.bf16.mxu0 0
        %6850 = vmatpush1.bf16.msra.mxu0 0
        %6851 = vmatprep.subr.bf16.mxu0 0
        %6852 = vmatpush1.bf16.msra.mxu0 0
        %6853 = vmatprep.subr.bf16.mxu0 0
        %6854 = vmatpush1.bf16.msra.mxu0 0
        %6855 = vmatprep.subr.bf16.mxu0 0
        %6856 = vmatpush1.bf16.msra.mxu0 0
        %6857 = vmatprep.subr.bf16.mxu0 0
        %6858 = vmatpush1.bf16.msra.mxu0 0
        %6859 = vmatprep.subr.bf16.mxu0 0
        %6860 = vmatpush1.bf16.msra.mxu0 0
        %6861 = vmatprep.subr.bf16.mxu0 0
        %6862 = vmatpush1.bf16.msra.mxu0 0
        %6863 = vmatprep.subr.bf16.mxu0 0
        %6864 = vmatpush1.bf16.msra.mxu0 0
        %6865 = vmatprep.mubr.bf16.mxu0 0
        %6866 = vmatmul.mubr.bf16.gmra.mrb[0].mxu0 %v6783
        %v6867 = vpop.f32.mrb[0].mxu0
        %v6868 = vadd.f32 %v6608, %v6867
        %v6869 = vpop.f32.mrb[0].mxu0
        %v6870 = vpop.f32.mrb[0].mxu0
        %v6871 = vadd.f32 %v6611, %v6870
        %v6872 = vpop.f32.mrb[0].mxu0
        %6873 = vmatprep.mubr.bf16.mxu0 0
        %6874 = vmatmul.mubr.bf16.gmra.mrb[0].mxu0 %v6786
        %v6875 = vpop.f32.mrb[0].mxu0
        %v6876 = vadd.f32 %v6616, %v6875
        %v6877 = vpop.f32.mrb[0].mxu0
        %v6878 = vpop.f32.mrb[0].mxu0
        %v6879 = vadd.f32 %v6619, %v6878
        %v6880 = vpop.f32.mrb[0].mxu0
        %6881 = vmatprep.mubr.bf16.mxu0 0
        %6882 = vmatmul.mubr.bf16.gmra.mrb[0].mxu0 %v6789
        %v6883 = vpop.f32.mrb[0].mxu0
        %v6884 = vadd.f32 %v6624, %v6883
        %v6885 = vpop.f32.mrb[0].mxu0
        %v6886 = vpop.f32.mrb[0].mxu0
        %v6887 = vadd.f32 %v6627, %v6886
        %v6888 = vpop.f32.mrb[0].mxu0
        %6889 = vmatprep.mubr.bf16.mxu0 0
        %6890 = vmatmul.mubr.bf16.gmra.mrb[0].mxu0 %v6792
        %v6891 = vpop.f32.mrb[0].mxu0
        %v6892 = vadd.f32 %v6632, %v6891
        %v6893 = vpop.f32.mrb[0].mxu0
        %v6894 = vpop.f32.mrb[0].mxu0
        %v6895 = vadd.f32 %v6635, %v6894
        %v6896 = vpop.f32.mrb[0].mxu0
        %6897 = vmatprep.mubr.bf16.mxu0 0
        %6898 = vmatmul.mubr.bf16.gmra.mrb[0].mxu0 %v6795
        %v6899 = vpop.f32.mrb[0].mxu0
        %v6900 = vadd.f32 %v6640, %v6899
        %v6901 = vpop.f32.mrb[0].mxu0
        %v6902 = vpop.f32.mrb[0].mxu0
        %v6903 = vadd.f32 %v6643, %v6902
        %v6904 = vpop.f32.mrb[0].mxu0
        %6905 = vmatprep.mubr.bf16.mxu0 0
        %6906 = vmatmul.mubr.bf16.gmra.mrb[0].mxu0 %v6798
        %v6907 = vpop.f32.mrb[0].mxu0
        %v6908 = vadd.f32 %v6648, %v6907
        %v6909 = vpop.f32.mrb[0].mxu0
        %v6910 = vpop.f32.mrb[0].mxu0
        %v6911 = vadd.f32 %v6651, %v6910
        %v6912 = vpop.f32.mrb[0].mxu0
        %6913 = vmatprep.mubr.bf16.mxu0 0
        %6914 = vmatmul.mubr.bf16.gmra.mrb[0].mxu0 %v6801
        %v6915 = vpop.f32.mrb[0].mxu0
        %v6916 = vadd.f32 %v6656, %v6915
        %v6917 = vpop.f32.mrb[0].mxu0
        %v6918 = vpop.f32.mrb[0].mxu0
        %v6919 = vadd.f32 %v6659, %v6918
        %v6920 = vpop.f32.mrb[0].mxu0
        %6921 = vmatprep.mubr.bf16.mxu0 0
        %6922 = vmatmul.mubr.bf16.gmra.mrb[0].mxu0 %v6804
        %v6923 = vpop.f32.mrb[0].mxu0
        %v6924 = vadd.f32 %v6664, %v6923
        %v6925 = vpop.f32.mrb[0].mxu0
        %v6926 = vpop.f32.mrb[0].mxu0
        %v6927 = vadd.f32 %v6667, %v6926
        %v6928 = vpop.f32.mrb[0].mxu0
        %6929 = vmatprep.mubr.bf16.mxu0 0
        %6930 = vmatmul.mubr.bf16.gmra.mrb[0].mxu0 %v6807
        %v6931 = vpop.f32.mrb[0].mxu0
        %v6932 = vadd.f32 %v6672, %v6931
        %v6933 = vpop.f32.mrb[0].mxu0
        %v6934 = vpop.f32.mrb[0].mxu0
        %v6935 = vadd.f32 %v6675, %v6934
        %v6936 = vpop.f32.mrb[0].mxu0
        %6937 = vmatprep.mubr.bf16.mxu0 0
        %6938 = vmatmul.mubr.bf16.gmra.mrb[0].mxu0 %v6810
        %v6939 = vpop.f32.mrb[0].mxu0
        %v6940 = vadd.f32 %v6680, %v6939
        %v6941 = vpop.f32.mrb[0].mxu0
        %v6942 = vpop.f32.mrb[0].mxu0
        %v6943 = vadd.f32 %v6683, %v6942
        %v6944 = vpop.f32.mrb[0].mxu0
        %6945 = vmatprep.mubr.bf16.mxu0 0
        %6946 = vmatmul.mubr.bf16.gmra.mrb[0].mxu0 %v6813
        %v6947 = vpop.f32.mrb[0].mxu0
        %v6948 = vadd.f32 %v6688, %v6947
        %v6949 = vpop.f32.mrb[0].mxu0
        %v6950 = vpop.f32.mrb[0].mxu0
        %v6951 = vadd.f32 %v6691, %v6950
        %v6952 = vpop.f32.mrb[0].mxu0
        %6953 = vmatprep.mubr.bf16.mxu0 0
        %6954 = vmatmul.mubr.bf16.gmra.mrb[0].mxu0 %v6816
        %v6955 = vpop.f32.mrb[0].mxu0
        %v6956 = vadd.f32 %v6696, %v6955
        %v6957 = vpop.f32.mrb[0].mxu0
        %v6958 = vpop.f32.mrb[0].mxu0
        %v6959 = vadd.f32 %v6699, %v6958
        %v6960 = vpop.f32.mrb[0].mxu0
        %6961 = vmatprep.mubr.bf16.mxu0 0
        %6962 = vmatmul.mubr.bf16.gmra.mrb[0].mxu0 %v6819
        %v6963 = vpop.f32.mrb[0].mxu0
        %v6964 = vadd.f32 %v6704, %v6963
        %v6965 = vpop.f32.mrb[0].mxu0
        %v6966 = vpop.f32.mrb[0].mxu0
        %v6967 = vadd.f32 %v6707, %v6966
        %v6968 = vpop.f32.mrb[0].mxu0
        %6969 = vmatprep.mubr.bf16.mxu0 0
        %6970 = vmatmul.mubr.bf16.gmra.mrb[0].mxu0 %v6822
        %v6971 = vpop.f32.mrb[0].mxu0
        %v6972 = vadd.f32 %v6712, %v6971
        %v6973 = vpop.f32.mrb[0].mxu0
        %v6974 = vpop.f32.mrb[0].mxu0
        %v6975 = vadd.f32 %v6715, %v6974
        %v6976 = vpop.f32.mrb[0].mxu0
        %6977 = vmatprep.mubr.bf16.mxu0 0
        %6978 = vmatmul.mubr.bf16.gmra.mrb[0].mxu0 %v6825
        %v6979 = vpop.f32.mrb[0].mxu0
        %v6980 = vadd.f32 %v6720, %v6979
        %v6981 = vpop.f32.mrb[0].mxu0
        %v6982 = vpop.f32.mrb[0].mxu0
        %v6983 = vadd.f32 %v6723, %v6982
        %v6984 = vpop.f32.mrb[0].mxu0
        %6985 = vmatprep.mubr.bf16.mxu0 0
        %6986 = vmatmul.mubr.bf16.gmra.mrb[0].mxu0 %v6828
        %v6987 = vpop.f32.mrb[0].mxu0
        %v6988 = vadd.f32 %v6728, %v6987
        %v6989 = vpop.f32.mrb[0].mxu0
        %v6990 = vpop.f32.mrb[0].mxu0
        %v6991 = vadd.f32 %v6731, %v6990
        %v6992 = vpop.f32.mrb[0].mxu0
        %6993 = vdwg.mxu0
        %v6994 = vld [vmem:[#allocation3 + $0x4] sm:$0xf]
        %v6995 = vld [vmem:[#allocation3 + $0x8] sm:$0xf]
        %v6996 = vld [vmem:[#allocation3 + $0xc] sm:$0x1]
        %v6997 = vld [vmem:[#allocation3 + $0x14] sm:$0xf]
        %v6998 = vld [vmem:[#allocation3 + $0x18] sm:$0xf]
        %v6999 = vld [vmem:[#allocation3 + $0x1c] sm:$0x1]
        %v7000 = vld [vmem:[#allocation3 + $0x24] sm:$0xf]
        %v7001 = vld [vmem:[#allocation3 + $0x28] sm:$0xf]
        %v7002 = vld [vmem:[#allocation3 + $0x2c] sm:$0x1]
        %v7003 = vld [vmem:[#allocation3 + $0x34] sm:$0xf]
        %v7004 = vld [vmem:[#allocation3 + $0x38] sm:$0xf]
        %v7005 = vld [vmem:[#allocation3 + $0x3c] sm:$0x1]
        %v7006 = vld [vmem:[#allocation3 + $0x44] sm:$0xf]
        %v7007 = vld [vmem:[#allocation3 + $0x48] sm:$0xf]
        %v7008 = vld [vmem:[#allocation3 + $0x4c] sm:$0x1]
        %v7009 = vld [vmem:[#allocation3 + $0x54] sm:$0xf]
        %v7010 = vld [vmem:[#allocation3 + $0x58] sm:$0xf]
        %v7011 = vld [vmem:[#allocation3 + $0x5c] sm:$0x1]
        %v7012 = vld [vmem:[#allocation3 + $0x64] sm:$0xf]
        %v7013 = vld [vmem:[#allocation3 + $0x68] sm:$0xf]
        %v7014 = vld [vmem:[#allocation3 + $0x6c] sm:$0x1]
        %v7015 = vld [vmem:[#allocation3 + $0x74] sm:$0xf]
        %v7016 = vld [vmem:[#allocation3 + $0x78] sm:$0xf]
        %v7017 = vld [vmem:[#allocation3 + $0x7c] sm:$0x1]
        %v7018 = vld [vmem:[#allocation3 + $0x84] sm:$0xf]
        %v7019 = vld [vmem:[#allocation3 + $0x88] sm:$0xf]
        %v7020 = vld [vmem:[#allocation3 + $0x8c] sm:$0x1]
        %v7021 = vld [vmem:[#allocation3 + $0x94] sm:$0xf]
        %v7022 = vld [vmem:[#allocation3 + $0x98] sm:$0xf]
        %v7023 = vld [vmem:[#allocation3 + $0x9c] sm:$0x1]
        %v7024 = vld [vmem:[#allocation3 + $0xa4] sm:$0xf]
        %v7025 = vld [vmem:[#allocation3 + $0xa8] sm:$0xf]
        %v7026 = vld [vmem:[#allocation3 + $0xac] sm:$0x1]
        %v7027 = vld [vmem:[#allocation3 + $0xb4] sm:$0xf]
        %v7028 = vld [vmem:[#allocation3 + $0xb8] sm:$0xf]
        %v7029 = vld [vmem:[#allocation3 + $0xbc] sm:$0x1]
        %v7030 = vld [vmem:[#allocation3 + $0xc4] sm:$0xf]
        %v7031 = vld [vmem:[#allocation3 + $0xc8] sm:$0xf]
        %v7032 = vld [vmem:[#allocation3 + $0xcc] sm:$0x1]
        %v7033 = vld [vmem:[#allocation3 + $0xd4] sm:$0xf]
        %v7034 = vld [vmem:[#allocation3 + $0xd8] sm:$0xf]
        %v7035 = vld [vmem:[#allocation3 + $0xdc] sm:$0x1]
        %v7036 = vld [vmem:[#allocation3 + $0xe4] sm:$0xf]
        %v7037 = vld [vmem:[#allocation3 + $0xe8] sm:$0xf]
        %v7038 = vld [vmem:[#allocation3 + $0xec] sm:$0x1]
        %v7039 = vld [vmem:[#allocation3 + $0xf4] sm:$0xf]
        %v7040 = vld [vmem:[#allocation3 + $0xf8] sm:$0xf]
        %v7041 = vld [vmem:[#allocation3 + $0xfc] sm:$0x1]
        %v7043 = vshrl.u32 %v6994, 16
        %v7045 = vrot.slane %v7043, 4
        %v7046 = vshll.u32 %v6994, 16
        %v7048 = vrot.slane %v7046, 5
        %v7049 = vor.u32 %v7045, %v7048
        %v7050 = vrot.slane %v7049, 4
        %v7052 = vshll.u32 %v6995, 16
        %v7054 = vrot.slane %v7052, 5
        %v7055 = vsel %vm1526, %v7050, %v7054
        %v7056 = vshrl.u32 %v6995, 16
        %v7058 = vrot.slane %v7056, 4
        %v7059 = vor.u32 %v7058, %v7054
        %v7060 = vrot.slane %v7059, 4
        %v7062 = vshll.u32 %v6996, 16
        %v7064 = vrot.slane %v7062, 5
        %v7065 = vsel %vm1526, %v7060, %v7064
        %v7067 = vshrl.u32 %v6997, 16
        %v7069 = vrot.slane %v7067, 4
        %v7070 = vshll.u32 %v6997, 16
        %v7072 = vrot.slane %v7070, 5
        %v7073 = vor.u32 %v7069, %v7072
        %v7074 = vrot.slane %v7073, 4
        %v7076 = vshll.u32 %v6998, 16
        %v7078 = vrot.slane %v7076, 5
        %v7079 = vsel %vm1526, %v7074, %v7078
        %v7080 = vshrl.u32 %v6998, 16
        %v7082 = vrot.slane %v7080, 4
        %v7083 = vor.u32 %v7082, %v7078
        %v7084 = vrot.slane %v7083, 4
        %v7086 = vshll.u32 %v6999, 16
        %v7088 = vrot.slane %v7086, 5
        %v7089 = vsel %vm1526, %v7084, %v7088
        %v7091 = vshrl.u32 %v7000, 16
        %v7093 = vrot.slane %v7091, 4
        %v7094 = vshll.u32 %v7000, 16
        %v7096 = vrot.slane %v7094, 5
        %v7097 = vor.u32 %v7093, %v7096
        %v7098 = vrot.slane %v7097, 4
        %v7100 = vshll.u32 %v7001, 16
        %v7102 = vrot.slane %v7100, 5
        %v7103 = vsel %vm1526, %v7098, %v7102
        %v7104 = vshrl.u32 %v7001, 16
        %v7106 = vrot.slane %v7104, 4
        %v7107 = vor.u32 %v7106, %v7102
        %v7108 = vrot.slane %v7107, 4
        %v7110 = vshll.u32 %v7002, 16
        %v7112 = vrot.slane %v7110, 5
        %v7113 = vsel %vm1526, %v7108, %v7112
        %v7115 = vshrl.u32 %v7003, 16
        %v7117 = vrot.slane %v7115, 4
        %v7118 = vshll.u32 %v7003, 16
        %v7120 = vrot.slane %v7118, 5
        %v7121 = vor.u32 %v7117, %v7120
        %v7122 = vrot.slane %v7121, 4
        %v7124 = vshll.u32 %v7004, 16
        %v7126 = vrot.slane %v7124, 5
        %v7127 = vsel %vm1526, %v7122, %v7126
        %v7128 = vshrl.u32 %v7004, 16
        %v7130 = vrot.slane %v7128, 4
        %v7131 = vor.u32 %v7130, %v7126
        %v7132 = vrot.slane %v7131, 4
        %v7134 = vshll.u32 %v7005, 16
        %v7136 = vrot.slane %v7134, 5
        %v7137 = vsel %vm1526, %v7132, %v7136
        %v7139 = vshrl.u32 %v7006, 16
        %v7141 = vrot.slane %v7139, 4
        %v7142 = vshll.u32 %v7006, 16
        %v7144 = vrot.slane %v7142, 5
        %v7145 = vor.u32 %v7141, %v7144
        %v7146 = vrot.slane %v7145, 4
        %v7148 = vshll.u32 %v7007, 16
        %v7150 = vrot.slane %v7148, 5
        %v7151 = vsel %vm1526, %v7146, %v7150
        %v7152 = vshrl.u32 %v7007, 16
        %v7154 = vrot.slane %v7152, 4
        %v7155 = vor.u32 %v7154, %v7150
        %v7156 = vrot.slane %v7155, 4
        %v7158 = vshll.u32 %v7008, 16
        %v7160 = vrot.slane %v7158, 5
        %v7161 = vsel %vm1526, %v7156, %v7160
        %v7163 = vshrl.u32 %v7009, 16
        %v7165 = vrot.slane %v7163, 4
        %v7166 = vshll.u32 %v7009, 16
        %v7168 = vrot.slane %v7166, 5
        %v7169 = vor.u32 %v7165, %v7168
        %v7170 = vrot.slane %v7169, 4
        %v7172 = vshll.u32 %v7010, 16
        %v7174 = vrot.slane %v7172, 5
        %v7175 = vsel %vm1526, %v7170, %v7174
        %v7176 = vshrl.u32 %v7010, 16
        %v7178 = vrot.slane %v7176, 4
        %v7179 = vor.u32 %v7178, %v7174
        %v7180 = vrot.slane %v7179, 4
        %v7182 = vshll.u32 %v7011, 16
        %v7184 = vrot.slane %v7182, 5
        %v7185 = vsel %vm1526, %v7180, %v7184
        %v7187 = vshrl.u32 %v7012, 16
        %v7189 = vrot.slane %v7187, 4
        %v7190 = vshll.u32 %v7012, 16
        %v7192 = vrot.slane %v7190, 5
        %v7193 = vor.u32 %v7189, %v7192
        %v7194 = vrot.slane %v7193, 4
        %v7196 = vshll.u32 %v7013, 16
        %v7198 = vrot.slane %v7196, 5
        %v7199 = vsel %vm1526, %v7194, %v7198
        %v7200 = vshrl.u32 %v7013, 16
        %v7202 = vrot.slane %v7200, 4
        %v7203 = vor.u32 %v7202, %v7198
        %v7204 = vrot.slane %v7203, 4
        %v7206 = vshll.u32 %v7014, 16
        %v7208 = vrot.slane %v7206, 5
        %v7209 = vsel %vm1526, %v7204, %v7208
        %v7211 = vshrl.u32 %v7015, 16
        %v7213 = vrot.slane %v7211, 4
        %v7214 = vshll.u32 %v7015, 16
        %v7216 = vrot.slane %v7214, 5
        %v7217 = vor.u32 %v7213, %v7216
        %v7218 = vrot.slane %v7217, 4
        %v7220 = vshll.u32 %v7016, 16
        %v7222 = vrot.slane %v7220, 5
        %v7223 = vsel %vm1526, %v7218, %v7222
        %v7224 = vshrl.u32 %v7016, 16
        %v7226 = vrot.slane %v7224, 4
        %v7227 = vor.u32 %v7226, %v7222
        %v7228 = vrot.slane %v7227, 4
        %v7230 = vshll.u32 %v7017, 16
        %v7232 = vrot.slane %v7230, 5
        %v7233 = vsel %vm1526, %v7228, %v7232
        %v7235 = vshrl.u32 %v7018, 16
        %v7237 = vrot.slane %v7235, 4
        %v7238 = vshll.u32 %v7018, 16
        %v7240 = vrot.slane %v7238, 5
        %v7241 = vor.u32 %v7237, %v7240
        %v7242 = vrot.slane %v7241, 4
        %v7244 = vshll.u32 %v7019, 16
        %v7246 = vrot.slane %v7244, 5
        %v7247 = vsel %vm1526, %v7242, %v7246
        %v7248 = vshrl.u32 %v7019, 16
        %v7250 = vrot.slane %v7248, 4
        %v7251 = vor.u32 %v7250, %v7246
        %v7252 = vrot.slane %v7251, 4
        %v7254 = vshll.u32 %v7020, 16
        %v7256 = vrot.slane %v7254, 5
        %v7257 = vsel %vm1526, %v7252, %v7256
        %v7259 = vshrl.u32 %v7021, 16
        %v7261 = vrot.slane %v7259, 4
        %v7262 = vshll.u32 %v7021, 16
        %v7264 = vrot.slane %v7262, 5
        %v7265 = vor.u32 %v7261, %v7264
        %v7266 = vrot.slane %v7265, 4
        %v7268 = vshll.u32 %v7022, 16
        %v7270 = vrot.slane %v7268, 5
        %v7271 = vsel %vm1526, %v7266, %v7270
        %v7272 = vshrl.u32 %v7022, 16
        %v7274 = vrot.slane %v7272, 4
        %v7275 = vor.u32 %v7274, %v7270
        %v7276 = vrot.slane %v7275, 4
        %v7278 = vshll.u32 %v7023, 16
        %v7280 = vrot.slane %v7278, 5
        %v7281 = vsel %vm1526, %v7276, %v7280
        %v7283 = vshrl.u32 %v7024, 16
        %v7285 = vrot.slane %v7283, 4
        %v7286 = vshll.u32 %v7024, 16
        %v7288 = vrot.slane %v7286, 5
        %v7289 = vor.u32 %v7285, %v7288
        %v7290 = vrot.slane %v7289, 4
        %v7292 = vshll.u32 %v7025, 16
        %v7294 = vrot.slane %v7292, 5
        %v7295 = vsel %vm1526, %v7290, %v7294
        %v7296 = vshrl.u32 %v7025, 16
        %v7298 = vrot.slane %v7296, 4
        %v7299 = vor.u32 %v7298, %v7294
        %v7300 = vrot.slane %v7299, 4
        %v7302 = vshll.u32 %v7026, 16
        %v7304 = vrot.slane %v7302, 5
        %v7305 = vsel %vm1526, %v7300, %v7304
        %v7307 = vshrl.u32 %v7027, 16
        %v7309 = vrot.slane %v7307, 4
        %v7310 = vshll.u32 %v7027, 16
        %v7312 = vrot.slane %v7310, 5
        %v7313 = vor.u32 %v7309, %v7312
        %v7314 = vrot.slane %v7313, 4
        %v7316 = vshll.u32 %v7028, 16
        %v7318 = vrot.slane %v7316, 5
        %v7319 = vsel %vm1526, %v7314, %v7318
        %v7320 = vshrl.u32 %v7028, 16
        %v7322 = vrot.slane %v7320, 4
        %v7323 = vor.u32 %v7322, %v7318
        %v7324 = vrot.slane %v7323, 4
        %v7326 = vshll.u32 %v7029, 16
        %v7328 = vrot.slane %v7326, 5
        %v7329 = vsel %vm1526, %v7324, %v7328
        %v7331 = vshrl.u32 %v7030, 16
        %v7333 = vrot.slane %v7331, 4
        %v7334 = vshll.u32 %v7030, 16
        %v7336 = vrot.slane %v7334, 5
        %v7337 = vor.u32 %v7333, %v7336
        %v7338 = vrot.slane %v7337, 4
        %v7340 = vshll.u32 %v7031, 16
        %v7342 = vrot.slane %v7340, 5
        %v7343 = vsel %vm1526, %v7338, %v7342
        %v7344 = vshrl.u32 %v7031, 16
        %v7346 = vrot.slane %v7344, 4
        %v7347 = vor.u32 %v7346, %v7342
        %v7348 = vrot.slane %v7347, 4
        %v7350 = vshll.u32 %v7032, 16
        %v7352 = vrot.slane %v7350, 5
        %v7353 = vsel %vm1526, %v7348, %v7352
        %v7355 = vshrl.u32 %v7033, 16
        %v7357 = vrot.slane %v7355, 4
        %v7358 = vshll.u32 %v7033, 16
        %v7360 = vrot.slane %v7358, 5
        %v7361 = vor.u32 %v7357, %v7360
        %v7362 = vrot.slane %v7361, 4
        %v7364 = vshll.u32 %v7034, 16
        %v7366 = vrot.slane %v7364, 5
        %v7367 = vsel %vm1526, %v7362, %v7366
        %v7368 = vshrl.u32 %v7034, 16
        %v7370 = vrot.slane %v7368, 4
        %v7371 = vor.u32 %v7370, %v7366
        %v7372 = vrot.slane %v7371, 4
        %v7374 = vshll.u32 %v7035, 16
        %v7376 = vrot.slane %v7374, 5
        %v7377 = vsel %vm1526, %v7372, %v7376
        %v7379 = vshrl.u32 %v7036, 16
        %v7381 = vrot.slane %v7379, 4
        %v7382 = vshll.u32 %v7036, 16
        %v7384 = vrot.slane %v7382, 5
        %v7385 = vor.u32 %v7381, %v7384
        %v7386 = vrot.slane %v7385, 4
        %v7388 = vshll.u32 %v7037, 16
        %v7390 = vrot.slane %v7388, 5
        %v7391 = vsel %vm1526, %v7386, %v7390
        %v7392 = vshrl.u32 %v7037, 16
        %v7394 = vrot.slane %v7392, 4
        %v7395 = vor.u32 %v7394, %v7390
        %v7396 = vrot.slane %v7395, 4
        %v7398 = vshll.u32 %v7038, 16
        %v7400 = vrot.slane %v7398, 5
        %v7401 = vsel %vm1526, %v7396, %v7400
        %v7403 = vshrl.u32 %v7039, 16
        %v7405 = vrot.slane %v7403, 4
        %v7406 = vshll.u32 %v7039, 16
        %v7408 = vrot.slane %v7406, 5
        %v7409 = vor.u32 %v7405, %v7408
        %v7410 = vrot.slane %v7409, 4
        %v7412 = vshll.u32 %v7040, 16
        %v7414 = vrot.slane %v7412, 5
        %v7415 = vsel %vm1526, %v7410, %v7414
        %v7416 = vshrl.u32 %v7040, 16
        %v7418 = vrot.slane %v7416, 4
        %v7419 = vor.u32 %v7418, %v7414
        %v7420 = vrot.slane %v7419, 4
        %v7422 = vshll.u32 %v7041, 16
        %v7424 = vrot.slane %v7422, 5
        %v7425 = vsel %vm1526, %v7420, %v7424
        %s7426 = scalar_lea.vmem [#allocation11], 8
        %v7427 = vld [vmem:[%s7426] sm:$0xf]
        %v7428 = vunpack.c.l.b16 %v7055
        %v7429 = vunpack.c.l.b16 %v7065
        %v7430 = vunpack.c.l.b16 %v7079
        %v7431 = vunpack.c.l.b16 %v7089
        %v7432 = vunpack.c.l.b16 %v7103
        %v7433 = vunpack.c.l.b16 %v7113
        %v7434 = vunpack.c.l.b16 %v7127
        %v7435 = vunpack.c.l.b16 %v7137
        %v7436 = vunpack.c.l.b16 %v7151
        %v7437 = vunpack.c.l.b16 %v7161
        %v7438 = vunpack.c.l.b16 %v7175
        %v7439 = vunpack.c.l.b16 %v7185
        %v7440 = vunpack.c.l.b16 %v7199
        %v7441 = vunpack.c.l.b16 %v7209
        %v7442 = vunpack.c.l.b16 %v7223
        %v7443 = vunpack.c.l.b16 %v7233
        %v7444 = vunpack.c.l.b16 %v7247
        %v7445 = vunpack.c.l.b16 %v7257
        %v7446 = vunpack.c.l.b16 %v7271
        %v7447 = vunpack.c.l.b16 %v7281
        %v7448 = vunpack.c.l.b16 %v7295
        %v7449 = vunpack.c.l.b16 %v7305
        %v7450 = vunpack.c.l.b16 %v7319
        %v7451 = vunpack.c.l.b16 %v7329
        %v7452 = vunpack.c.l.b16 %v7343
        %v7453 = vunpack.c.l.b16 %v7353
        %v7454 = vunpack.c.l.b16 %v7367
        %v7455 = vunpack.c.l.b16 %v7377
        %v7456 = vunpack.c.l.b16 %v7391
        %v7457 = vunpack.c.l.b16 %v7401
        %v7458 = vunpack.c.l.b16 %v7415
        %v7459 = vunpack.c.l.b16 %v7425
        %v7460 = vpack.c.b16 %v7429, %v7428
        %v7461 = vpack.c.b16 %v7431, %v7430
        %v7462 = vpack.c.b16 %v7433, %v7432
        %v7463 = vpack.c.b16 %v7435, %v7434
        %v7464 = vpack.c.b16 %v7437, %v7436
        %v7465 = vpack.c.b16 %v7439, %v7438
        %v7466 = vpack.c.b16 %v7441, %v7440
        %v7467 = vpack.c.b16 %v7443, %v7442
        %v7468 = vpack.c.b16 %v7445, %v7444
        %v7469 = vpack.c.b16 %v7447, %v7446
        %v7470 = vpack.c.b16 %v7449, %v7448
        %v7471 = vpack.c.b16 %v7451, %v7450
        %v7472 = vpack.c.b16 %v7453, %v7452
        %v7473 = vpack.c.b16 %v7455, %v7454
        %v7474 = vpack.c.b16 %v7457, %v7456
        %v7475 = vpack.c.b16 %v7459, %v7458
        %v7477 = vsel %vm1002, %v7460, 0
        %v7480 = vsel %vm1002, %v7461, 0
        %v7483 = vsel %vm1002, %v7462, 0
        %v7486 = vsel %vm1002, %v7463, 0
        %v7489 = vsel %vm1002, %v7464, 0
        %v7492 = vsel %vm1002, %v7465, 0
        %v7495 = vsel %vm1002, %v7466, 0
        %v7498 = vsel %vm1002, %v7467, 0
        %v7501 = vsel %vm1002, %v7468, 0
        %v7504 = vsel %vm1002, %v7469, 0
        %v7507 = vsel %vm1002, %v7470, 0
        %v7510 = vsel %vm1002, %v7471, 0
        %v7513 = vsel %vm1002, %v7472, 0
        %v7516 = vsel %vm1002, %v7473, 0
        %v7519 = vsel %vm1002, %v7474, 0
        %v7522 = vsel %vm1002, %v7475, 0
        %v7525 = vsel %vm1051, %v7427, 0
        %7527 = vmatprep.subr.bf16.mxu0 0
        %7528 = vmatpush1.bf16.msra.mxu0 %v7525
        %7529 = vmatprep.subr.bf16.mxu0 0
        %7530 = vmatpush1.bf16.msra.mxu0 0
        %7531 = vmatprep.subr.bf16.mxu0 0
        %7532 = vmatpush1.bf16.msra.mxu0 0
        %7533 = vmatprep.subr.bf16.mxu0 0
        %7534 = vmatpush1.bf16.msra.mxu0 0
        %7535 = vmatprep.subr.bf16.mxu0 0
        %7536 = vmatpush1.bf16.msra.mxu0 0
        %7537 = vmatprep.subr.bf16.mxu0 0
        %7538 = vmatpush1.bf16.msra.mxu0 0
        %7539 = vmatprep.subr.bf16.mxu0 0
        %7540 = vmatpush1.bf16.msra.mxu0 0
        %7541 = vmatprep.subr.bf16.mxu0 0
        %7542 = vmatpush1.bf16.msra.mxu0 0
        %7543 = vmatprep.subr.bf16.mxu0 0
        %7544 = vmatpush1.bf16.msra.mxu0 0
        %7545 = vmatprep.subr.bf16.mxu0 0
        %7546 = vmatpush1.bf16.msra.mxu0 0
        %7547 = vmatprep.subr.bf16.mxu0 0
        %7548 = vmatpush1.bf16.msra.mxu0 0
        %7549 = vmatprep.subr.bf16.mxu0 0
        %7550 = vmatpush1.bf16.msra.mxu0 0
        %7551 = vmatprep.subr.bf16.mxu0 0
        %7552 = vmatpush1.bf16.msra.mxu0 0
        %7553 = vmatprep.subr.bf16.mxu0 0
        %7554 = vmatpush1.bf16.msra.mxu0 0
        %7555 = vmatprep.subr.bf16.mxu0 0
        %7556 = vmatpush1.bf16.msra.mxu0 0
        %7557 = vmatprep.subr.bf16.mxu0 0
        %7558 = vmatpush1.bf16.msra.mxu0 0
        %7559 = vmatprep.mubr.bf16.mxu0 0
        %7560 = vmatmul.mubr.bf16.gmra.mrb[0].mxu0 %v7477
        %v7561 = vpop.f32.mrb[0].mxu0
        %v7562 = vadd.f32 0.0, %v7561
        %v7563 = vpop.f32.mrb[0].mxu0
        %v7564 = vpop.f32.mrb[0].mxu0
        %v7565 = vadd.f32 0.0, %v7564
        %v7566 = vpop.f32.mrb[0].mxu0
        %7567 = vmatprep.mubr.bf16.mxu0 0
        %7568 = vmatmul.mubr.bf16.gmra.mrb[0].mxu0 %v7480
        %v7569 = vpop.f32.mrb[0].mxu0
        %v7570 = vadd.f32 0.0, %v7569
        %v7571 = vpop.f32.mrb[0].mxu0
        %v7572 = vpop.f32.mrb[0].mxu0
        %v7573 = vadd.f32 0.0, %v7572
        %v7574 = vpop.f32.mrb[0].mxu0
        %7575 = vmatprep.mubr.bf16.mxu0 0
        %7576 = vmatmul.mubr.bf16.gmra.mrb[0].mxu0 %v7483
        %v7577 = vpop.f32.mrb[0].mxu0
        %v7578 = vadd.f32 0.0, %v7577
        %v7579 = vpop.f32.mrb[0].mxu0
        %v7580 = vpop.f32.mrb[0].mxu0
        %v7581 = vadd.f32 0.0, %v7580
        %v7582 = vpop.f32.mrb[0].mxu0
        %7583 = vmatprep.mubr.bf16.mxu0 0
        %7584 = vmatmul.mubr.bf16.gmra.mrb[0].mxu0 %v7486
        %v7585 = vpop.f32.mrb[0].mxu0
        %v7586 = vadd.f32 0.0, %v7585
        %v7587 = vpop.f32.mrb[0].mxu0
        %v7588 = vpop.f32.mrb[0].mxu0
        %v7589 = vadd.f32 0.0, %v7588
        %v7590 = vpop.f32.mrb[0].mxu0
        %7591 = vmatprep.mubr.bf16.mxu0 0
        %7592 = vmatmul.mubr.bf16.gmra.mrb[0].mxu0 %v7489
        %v7593 = vpop.f32.mrb[0].mxu0
        %v7594 = vadd.f32 0.0, %v7593
        %v7595 = vpop.f32.mrb[0].mxu0
        %v7596 = vpop.f32.mrb[0].mxu0
        %v7597 = vadd.f32 0.0, %v7596
        %v7598 = vpop.f32.mrb[0].mxu0
        %7599 = vmatprep.mubr.bf16.mxu0 0
        %7600 = vmatmul.mubr.bf16.gmra.mrb[0].mxu0 %v7492
        %v7601 = vpop.f32.mrb[0].mxu0
        %v7602 = vadd.f32 0.0, %v7601
        %v7603 = vpop.f32.mrb[0].mxu0
        %v7604 = vpop.f32.mrb[0].mxu0
        %v7605 = vadd.f32 0.0, %v7604
        %v7606 = vpop.f32.mrb[0].mxu0
        %7607 = vmatprep.mubr.bf16.mxu0 0
        %7608 = vmatmul.mubr.bf16.gmra.mrb[0].mxu0 %v7495
        %v7609 = vpop.f32.mrb[0].mxu0
        %v7610 = vadd.f32 0.0, %v7609
        %v7611 = vpop.f32.mrb[0].mxu0
        %v7612 = vpop.f32.mrb[0].mxu0
        %v7613 = vadd.f32 0.0, %v7612
        %v7614 = vpop.f32.mrb[0].mxu0
        %7615 = vmatprep.mubr.bf16.mxu0 0
        %7616 = vmatmul.mubr.bf16.gmra.mrb[0].mxu0 %v7498
        %v7617 = vpop.f32.mrb[0].mxu0
        %v7618 = vadd.f32 0.0, %v7617
        %v7619 = vpop.f32.mrb[0].mxu0
        %v7620 = vpop.f32.mrb[0].mxu0
        %v7621 = vadd.f32 0.0, %v7620
        %v7622 = vpop.f32.mrb[0].mxu0
        %7623 = vmatprep.mubr.bf16.mxu0 0
        %7624 = vmatmul.mubr.bf16.gmra.mrb[0].mxu0 %v7501
        %v7625 = vpop.f32.mrb[0].mxu0
        %v7626 = vadd.f32 0.0, %v7625
        %v7627 = vpop.f32.mrb[0].mxu0
        %v7628 = vpop.f32.mrb[0].mxu0
        %v7629 = vadd.f32 0.0, %v7628
        %v7630 = vpop.f32.mrb[0].mxu0
        %7631 = vmatprep.mubr.bf16.mxu0 0
        %7632 = vmatmul.mubr.bf16.gmra.mrb[0].mxu0 %v7504
        %v7633 = vpop.f32.mrb[0].mxu0
        %v7634 = vadd.f32 0.0, %v7633
        %v7635 = vpop.f32.mrb[0].mxu0
        %v7636 = vpop.f32.mrb[0].mxu0
        %v7637 = vadd.f32 0.0, %v7636
        %v7638 = vpop.f32.mrb[0].mxu0
        %7639 = vmatprep.mubr.bf16.mxu0 0
        %7640 = vmatmul.mubr.bf16.gmra.mrb[0].mxu0 %v7507
        %v7641 = vpop.f32.mrb[0].mxu0
        %v7642 = vadd.f32 0.0, %v7641
        %v7643 = vpop.f32.mrb[0].mxu0
        %v7644 = vpop.f32.mrb[0].mxu0
        %v7645 = vadd.f32 0.0, %v7644
        %v7646 = vpop.f32.mrb[0].mxu0
        %7647 = vmatprep.mubr.bf16.mxu0 0
        %7648 = vmatmul.mubr.bf16.gmra.mrb[0].mxu0 %v7510
        %v7649 = vpop.f32.mrb[0].mxu0
        %v7650 = vadd.f32 0.0, %v7649
        %v7651 = vpop.f32.mrb[0].mxu0
        %v7652 = vpop.f32.mrb[0].mxu0
        %v7653 = vadd.f32 0.0, %v7652
        %v7654 = vpop.f32.mrb[0].mxu0
        %7655 = vmatprep.mubr.bf16.mxu0 0
        %7656 = vmatmul.mubr.bf16.gmra.mrb[0].mxu0 %v7513
        %v7657 = vpop.f32.mrb[0].mxu0
        %v7658 = vadd.f32 0.0, %v7657
        %v7659 = vpop.f32.mrb[0].mxu0
        %v7660 = vpop.f32.mrb[0].mxu0
        %v7661 = vadd.f32 0.0, %v7660
        %v7662 = vpop.f32.mrb[0].mxu0
        %7663 = vmatprep.mubr.bf16.mxu0 0
        %7664 = vmatmul.mubr.bf16.gmra.mrb[0].mxu0 %v7516
        %v7665 = vpop.f32.mrb[0].mxu0
        %v7666 = vadd.f32 0.0, %v7665
        %v7667 = vpop.f32.mrb[0].mxu0
        %v7668 = vpop.f32.mrb[0].mxu0
        %v7669 = vadd.f32 0.0, %v7668
        %v7670 = vpop.f32.mrb[0].mxu0
        %7671 = vmatprep.mubr.bf16.mxu0 0
        %7672 = vmatmul.mubr.bf16.gmra.mrb[0].mxu0 %v7519
        %v7673 = vpop.f32.mrb[0].mxu0
        %v7674 = vadd.f32 0.0, %v7673
        %v7675 = vpop.f32.mrb[0].mxu0
        %v7676 = vpop.f32.mrb[0].mxu0
        %v7677 = vadd.f32 0.0, %v7676
        %v7678 = vpop.f32.mrb[0].mxu0
        %7679 = vmatprep.mubr.bf16.mxu0 0
        %7680 = vmatmul.mubr.bf16.gmra.mrb[0].mxu0 %v7522
        %v7681 = vpop.f32.mrb[0].mxu0
        %v7682 = vadd.f32 0.0, %v7681
        %v7683 = vpop.f32.mrb[0].mxu0
        %v7684 = vpop.f32.mrb[0].mxu0
        %v7685 = vadd.f32 0.0, %v7684
        %v7686 = vpop.f32.mrb[0].mxu0
        %7687 = vdwg.mxu0
        %v7688 = vadd.f32 %v6868, %v7562
        %v7689 = vadd.f32 %v6871, %v7565
        %v7690 = vadd.f32 %v6876, %v7570
        %v7691 = vadd.f32 %v6879, %v7573
        %v7692 = vadd.f32 %v6884, %v7578
        %v7693 = vadd.f32 %v6887, %v7581
        %v7694 = vadd.f32 %v6892, %v7586
        %v7695 = vadd.f32 %v6895, %v7589
        %v7696 = vadd.f32 %v6900, %v7594
        %v7697 = vadd.f32 %v6903, %v7597
        %v7698 = vadd.f32 %v6908, %v7602
        %v7699 = vadd.f32 %v6911, %v7605
        %v7700 = vadd.f32 %v6916, %v7610
        %v7701 = vadd.f32 %v6919, %v7613
        %v7702 = vadd.f32 %v6924, %v7618
        %v7703 = vadd.f32 %v6927, %v7621
        %v7704 = vadd.f32 %v6932, %v7626
        %v7705 = vadd.f32 %v6935, %v7629
        %v7706 = vadd.f32 %v6940, %v7634
        %v7707 = vadd.f32 %v6943, %v7637
        %v7708 = vadd.f32 %v6948, %v7642
        %v7709 = vadd.f32 %v6951, %v7645
        %v7710 = vadd.f32 %v6956, %v7650
        %v7711 = vadd.f32 %v6959, %v7653
        %v7712 = vadd.f32 %v6964, %v7658
        %v7713 = vadd.f32 %v6967, %v7661
        %v7714 = vadd.f32 %v6972, %v7666
        %v7715 = vadd.f32 %v6975, %v7669
        %v7716 = vadd.f32 %v6980, %v7674
        %v7717 = vadd.f32 %v6983, %v7677
        %v7718 = vadd.f32 %v6988, %v7682
        %v7719 = vadd.f32 %v6991, %v7685
        %v7720 = vld [vmem:[%s5782] sm:$0x8]
        %v7721 = vld [vmem:[%s5782 + $0x4] sm:$0xf]
        %v7722 = vld [vmem:[%s5782 + $0x8] sm:$0xf]
        %v7723 = vld [vmem:[%s5782 + $0x10] sm:$0x8]
        %v7724 = vld [vmem:[%s5782 + $0x14] sm:$0xf]
        %v7725 = vld [vmem:[%s5782 + $0x18] sm:$0xf]
        %v7726 = vld [vmem:[%s5782 + $0x20] sm:$0x8]
        %v7727 = vld [vmem:[%s5782 + $0x24] sm:$0xf]
        %v7728 = vld [vmem:[%s5782 + $0x28] sm:$0xf]
        %v7729 = vld [vmem:[%s5782 + $0x30] sm:$0x8]
        %v7730 = vld [vmem:[%s5782 + $0x34] sm:$0xf]
        %v7731 = vld [vmem:[%s5782 + $0x38] sm:$0xf]
        %v7732 = vld [vmem:[%s5782 + $0x40] sm:$0x8]
        %v7733 = vld [vmem:[%s5782 + $0x44] sm:$0xf]
        %v7734 = vld [vmem:[%s5782 + $0x48] sm:$0xf]
        %v7735 = vld [vmem:[%s5782 + $0x50] sm:$0x8]
        %v7736 = vld [vmem:[%s5782 + $0x54] sm:$0xf]
        %v7737 = vld [vmem:[%s5782 + $0x58] sm:$0xf]
        %v7738 = vld [vmem:[%s5782 + $0x60] sm:$0x8]
        %v7739 = vld [vmem:[%s5782 + $0x64] sm:$0xf]
        %v7740 = vld [vmem:[%s5782 + $0x68] sm:$0xf]
        %v7741 = vld [vmem:[%s5782 + $0x70] sm:$0x8]
        %v7742 = vld [vmem:[%s5782 + $0x74] sm:$0xf]
        %v7743 = vld [vmem:[%s5782 + $0x78] sm:$0xf]
        %v7744 = vld [vmem:[%s5782 + $0x80] sm:$0x8]
        %v7745 = vld [vmem:[%s5782 + $0x84] sm:$0xf]
        %v7746 = vld [vmem:[%s5782 + $0x88] sm:$0xf]
        %v7747 = vld [vmem:[%s5782 + $0x90] sm:$0x8]
        %v7748 = vld [vmem:[%s5782 + $0x94] sm:$0xf]
        %v7749 = vld [vmem:[%s5782 + $0x98] sm:$0xf]
        %v7750 = vld [vmem:[%s5782 + $0xa0] sm:$0x8]
        %v7751 = vld [vmem:[%s5782 + $0xa4] sm:$0xf]
        %v7752 = vld [vmem:[%s5782 + $0xa8] sm:$0xf]
        %v7753 = vld [vmem:[%s5782 + $0xb0] sm:$0x8]
        %v7754 = vld [vmem:[%s5782 + $0xb4] sm:$0xf]
        %v7755 = vld [vmem:[%s5782 + $0xb8] sm:$0xf]
        %v7756 = vld [vmem:[%s5782 + $0xc0] sm:$0x8]
        %v7757 = vld [vmem:[%s5782 + $0xc4] sm:$0xf]
        %v7758 = vld [vmem:[%s5782 + $0xc8] sm:$0xf]
        %v7759 = vld [vmem:[%s5782 + $0xd0] sm:$0x8]
        %v7760 = vld [vmem:[%s5782 + $0xd4] sm:$0xf]
        %v7761 = vld [vmem:[%s5782 + $0xd8] sm:$0xf]
        %v7762 = vld [vmem:[%s5782 + $0xe0] sm:$0x8]
        %v7763 = vld [vmem:[%s5782 + $0xe4] sm:$0xf]
        %v7764 = vld [vmem:[%s5782 + $0xe8] sm:$0xf]
        %v7765 = vld [vmem:[%s5782 + $0xf0] sm:$0x8]
        %v7766 = vld [vmem:[%s5782 + $0xf4] sm:$0xf]
        %v7767 = vld [vmem:[%s5782 + $0xf8] sm:$0xf]
        %v7769 = vshrl.u32 %v7720, 16
        %v7771 = vrot.slane %v7769, 7
        %v7772 = vrot.slane %v7771, 4
        %v7774 = vshrl.u32 %v7721, 16
        %v7776 = vrot.slane %v7774, 7
        %v7777 = vshll.u32 %v7721, 16
        %v7779 = vor.u32 %v7776, %v7777
        %v7780 = vsel %vm566, %v7772, %v7779
        %v7781 = vrot.slane %v7776, 4
        %v7783 = vshrl.u32 %v7722, 16
        %v7785 = vrot.slane %v7783, 7
        %v7786 = vshll.u32 %v7722, 16
        %v7788 = vor.u32 %v7785, %v7786
        %v7789 = vsel %vm566, %v7781, %v7788
        %v7791 = vshrl.u32 %v7723, 16
        %v7793 = vrot.slane %v7791, 7
        %v7794 = vrot.slane %v7793, 4
        %v7796 = vshrl.u32 %v7724, 16
        %v7798 = vrot.slane %v7796, 7
        %v7799 = vshll.u32 %v7724, 16
        %v7801 = vor.u32 %v7798, %v7799
        %v7802 = vsel %vm566, %v7794, %v7801
        %v7803 = vrot.slane %v7798, 4
        %v7805 = vshrl.u32 %v7725, 16
        %v7807 = vrot.slane %v7805, 7
        %v7808 = vshll.u32 %v7725, 16
        %v7810 = vor.u32 %v7807, %v7808
        %v7811 = vsel %vm566, %v7803, %v7810
        %v7813 = vshrl.u32 %v7726, 16
        %v7815 = vrot.slane %v7813, 7
        %v7816 = vrot.slane %v7815, 4
        %v7818 = vshrl.u32 %v7727, 16
        %v7820 = vrot.slane %v7818, 7
        %v7821 = vshll.u32 %v7727, 16
        %v7823 = vor.u32 %v7820, %v7821
        %v7824 = vsel %vm566, %v7816, %v7823
        %v7825 = vrot.slane %v7820, 4
        %v7827 = vshrl.u32 %v7728, 16
        %v7829 = vrot.slane %v7827, 7
        %v7830 = vshll.u32 %v7728, 16
        %v7832 = vor.u32 %v7829, %v7830
        %v7833 = vsel %vm566, %v7825, %v7832
        %v7835 = vshrl.u32 %v7729, 16
        %v7837 = vrot.slane %v7835, 7
        %v7838 = vrot.slane %v7837, 4
        %v7840 = vshrl.u32 %v7730, 16
        %v7842 = vrot.slane %v7840, 7
        %v7843 = vshll.u32 %v7730, 16
        %v7845 = vor.u32 %v7842, %v7843
        %v7846 = vsel %vm566, %v7838, %v7845
        %v7847 = vrot.slane %v7842, 4
        %v7849 = vshrl.u32 %v7731, 16
        %v7851 = vrot.slane %v7849, 7
        %v7852 = vshll.u32 %v7731, 16
        %v7854 = vor.u32 %v7851, %v7852
        %v7855 = vsel %vm566, %v7847, %v7854
        %v7857 = vshrl.u32 %v7732, 16
        %v7859 = vrot.slane %v7857, 7
        %v7860 = vrot.slane %v7859, 4
        %v7862 = vshrl.u32 %v7733, 16
        %v7864 = vrot.slane %v7862, 7
        %v7865 = vshll.u32 %v7733, 16
        %v7867 = vor.u32 %v7864, %v7865
        %v7868 = vsel %vm566, %v7860, %v7867
        %v7869 = vrot.slane %v7864, 4
        %v7871 = vshrl.u32 %v7734, 16
        %v7873 = vrot.slane %v7871, 7
        %v7874 = vshll.u32 %v7734, 16
        %v7876 = vor.u32 %v7873, %v7874
        %v7877 = vsel %vm566, %v7869, %v7876
        %v7879 = vshrl.u32 %v7735, 16
        %v7881 = vrot.slane %v7879, 7
        %v7882 = vrot.slane %v7881, 4
        %v7884 = vshrl.u32 %v7736, 16
        %v7886 = vrot.slane %v7884, 7
        %v7887 = vshll.u32 %v7736, 16
        %v7889 = vor.u32 %v7886, %v7887
        %v7890 = vsel %vm566, %v7882, %v7889
        %v7891 = vrot.slane %v7886, 4
        %v7893 = vshrl.u32 %v7737, 16
        %v7895 = vrot.slane %v7893, 7
        %v7896 = vshll.u32 %v7737, 16
        %v7898 = vor.u32 %v7895, %v7896
        %v7899 = vsel %vm566, %v7891, %v7898
        %v7901 = vshrl.u32 %v7738, 16
        %v7903 = vrot.slane %v7901, 7
        %v7904 = vrot.slane %v7903, 4
        %v7906 = vshrl.u32 %v7739, 16
        %v7908 = vrot.slane %v7906, 7
        %v7909 = vshll.u32 %v7739, 16
        %v7911 = vor.u32 %v7908, %v7909
        %v7912 = vsel %vm566, %v7904, %v7911
        %v7913 = vrot.slane %v7908, 4
        %v7915 = vshrl.u32 %v7740, 16
        %v7917 = vrot.slane %v7915, 7
        %v7918 = vshll.u32 %v7740, 16
        %v7920 = vor.u32 %v7917, %v7918
        %v7921 = vsel %vm566, %v7913, %v7920
        %v7923 = vshrl.u32 %v7741, 16
        %v7925 = vrot.slane %v7923, 7
        %v7926 = vrot.slane %v7925, 4
        %v7928 = vshrl.u32 %v7742, 16
        %v7930 = vrot.slane %v7928, 7
        %v7931 = vshll.u32 %v7742, 16
        %v7933 = vor.u32 %v7930, %v7931
        %v7934 = vsel %vm566, %v7926, %v7933
        %v7935 = vrot.slane %v7930, 4
        %v7937 = vshrl.u32 %v7743, 16
        %v7939 = vrot.slane %v7937, 7
        %v7940 = vshll.u32 %v7743, 16
        %v7942 = vor.u32 %v7939, %v7940
        %v7943 = vsel %vm566, %v7935, %v7942
        %v7945 = vshrl.u32 %v7744, 16
        %v7947 = vrot.slane %v7945, 7
        %v7948 = vrot.slane %v7947, 4
        %v7950 = vshrl.u32 %v7745, 16
        %v7952 = vrot.slane %v7950, 7
        %v7953 = vshll.u32 %v7745, 16
        %v7955 = vor.u32 %v7952, %v7953
        %v7956 = vsel %vm566, %v7948, %v7955
        %v7957 = vrot.slane %v7952, 4
        %v7959 = vshrl.u32 %v7746, 16
        %v7961 = vrot.slane %v7959, 7
        %v7962 = vshll.u32 %v7746, 16
        %v7964 = vor.u32 %v7961, %v7962
        %v7965 = vsel %vm566, %v7957, %v7964
        %v7967 = vshrl.u32 %v7747, 16
        %v7969 = vrot.slane %v7967, 7
        %v7970 = vrot.slane %v7969, 4
        %v7972 = vshrl.u32 %v7748, 16
        %v7974 = vrot.slane %v7972, 7
        %v7975 = vshll.u32 %v7748, 16
        %v7977 = vor.u32 %v7974, %v7975
        %v7978 = vsel %vm566, %v7970, %v7977
        %v7979 = vrot.slane %v7974, 4
        %v7981 = vshrl.u32 %v7749, 16
        %v7983 = vrot.slane %v7981, 7
        %v7984 = vshll.u32 %v7749, 16
        %v7986 = vor.u32 %v7983, %v7984
        %v7987 = vsel %vm566, %v7979, %v7986
        %v7989 = vshrl.u32 %v7750, 16
        %v7991 = vrot.slane %v7989, 7
        %v7992 = vrot.slane %v7991, 4
        %v7994 = vshrl.u32 %v7751, 16
        %v7996 = vrot.slane %v7994, 7
        %v7997 = vshll.u32 %v7751, 16
        %v7999 = vor.u32 %v7996, %v7997
        %v8000 = vsel %vm566, %v7992, %v7999
        %v8001 = vrot.slane %v7996, 4
        %v8003 = vshrl.u32 %v7752, 16
        %v8005 = vrot.slane %v8003, 7
        %v8006 = vshll.u32 %v7752, 16
        %v8008 = vor.u32 %v8005, %v8006
        %v8009 = vsel %vm566, %v8001, %v8008
        %v8011 = vshrl.u32 %v7753, 16
        %v8013 = vrot.slane %v8011, 7
        %v8014 = vrot.slane %v8013, 4
        %v8016 = vshrl.u32 %v7754, 16
        %v8018 = vrot.slane %v8016, 7
        %v8019 = vshll.u32 %v7754, 16
        %v8021 = vor.u32 %v8018, %v8019
        %v8022 = vsel %vm566, %v8014, %v8021
        %v8023 = vrot.slane %v8018, 4
        %v8025 = vshrl.u32 %v7755, 16
        %v8027 = vrot.slane %v8025, 7
        %v8028 = vshll.u32 %v7755, 16
        %v8030 = vor.u32 %v8027, %v8028
        %v8031 = vsel %vm566, %v8023, %v8030
        %v8033 = vshrl.u32 %v7756, 16
        %v8035 = vrot.slane %v8033, 7
        %v8036 = vrot.slane %v8035, 4
        %v8038 = vshrl.u32 %v7757, 16
        %v8040 = vrot.slane %v8038, 7
        %v8041 = vshll.u32 %v7757, 16
        %v8043 = vor.u32 %v8040, %v8041
        %v8044 = vsel %vm566, %v8036, %v8043
        %v8045 = vrot.slane %v8040, 4
        %v8047 = vshrl.u32 %v7758, 16
        %v8049 = vrot.slane %v8047, 7
        %v8050 = vshll.u32 %v7758, 16
        %v8052 = vor.u32 %v8049, %v8050
        %v8053 = vsel %vm566, %v8045, %v8052
        %v8055 = vshrl.u32 %v7759, 16
        %v8057 = vrot.slane %v8055, 7
        %v8058 = vrot.slane %v8057, 4
        %v8060 = vshrl.u32 %v7760, 16
        %v8062 = vrot.slane %v8060, 7
        %v8063 = vshll.u32 %v7760, 16
        %v8065 = vor.u32 %v8062, %v8063
        %v8066 = vsel %vm566, %v8058, %v8065
        %v8067 = vrot.slane %v8062, 4
        %v8069 = vshrl.u32 %v7761, 16
        %v8071 = vrot.slane %v8069, 7
        %v8072 = vshll.u32 %v7761, 16
        %v8074 = vor.u32 %v8071, %v8072
        %v8075 = vsel %vm566, %v8067, %v8074
        %v8077 = vshrl.u32 %v7762, 16
        %v8079 = vrot.slane %v8077, 7
        %v8080 = vrot.slane %v8079, 4
        %v8082 = vshrl.u32 %v7763, 16
        %v8084 = vrot.slane %v8082, 7
        %v8085 = vshll.u32 %v7763, 16
        %v8087 = vor.u32 %v8084, %v8085
        %v8088 = vsel %vm566, %v8080, %v8087
        %v8089 = vrot.slane %v8084, 4
        %v8091 = vshrl.u32 %v7764, 16
        %v8093 = vrot.slane %v8091, 7
        %v8094 = vshll.u32 %v7764, 16
        %v8096 = vor.u32 %v8093, %v8094
        %v8097 = vsel %vm566, %v8089, %v8096
        %v8099 = vshrl.u32 %v7765, 16
        %v8101 = vrot.slane %v8099, 7
        %v8102 = vrot.slane %v8101, 4
        %v8104 = vshrl.u32 %v7766, 16
        %v8106 = vrot.slane %v8104, 7
        %v8107 = vshll.u32 %v7766, 16
        %v8109 = vor.u32 %v8106, %v8107
        %v8110 = vsel %vm566, %v8102, %v8109
        %v8111 = vrot.slane %v8106, 4
        %v8113 = vshrl.u32 %v7767, 16
        %v8115 = vrot.slane %v8113, 7
        %v8116 = vshll.u32 %v7767, 16
        %v8118 = vor.u32 %v8115, %v8116
        %v8119 = vsel %vm566, %v8111, %v8118
        %s8120 = scalar_lea.vmem [#allocation11], 12
        %v8121 = vld [vmem:[%s8120] sm:$0xf]
        %v8122 = vunpack.c.l.b16 %v7780
        %v8123 = vunpack.c.l.b16 %v7789
        %v8124 = vunpack.c.l.b16 %v7802
        %v8125 = vunpack.c.l.b16 %v7811
        %v8126 = vunpack.c.l.b16 %v7824
        %v8127 = vunpack.c.l.b16 %v7833
        %v8128 = vunpack.c.l.b16 %v7846
        %v8129 = vunpack.c.l.b16 %v7855
        %v8130 = vunpack.c.l.b16 %v7868
        %v8131 = vunpack.c.l.b16 %v7877
        %v8132 = vunpack.c.l.b16 %v7890
        %v8133 = vunpack.c.l.b16 %v7899
        %v8134 = vunpack.c.l.b16 %v7912
        %v8135 = vunpack.c.l.b16 %v7921
        %v8136 = vunpack.c.l.b16 %v7934
        %v8137 = vunpack.c.l.b16 %v7943
        %v8138 = vunpack.c.l.b16 %v7956
        %v8139 = vunpack.c.l.b16 %v7965
        %v8140 = vunpack.c.l.b16 %v7978
        %v8141 = vunpack.c.l.b16 %v7987
        %v8142 = vunpack.c.l.b16 %v8000
        %v8143 = vunpack.c.l.b16 %v8009
        %v8144 = vunpack.c.l.b16 %v8022
        %v8145 = vunpack.c.l.b16 %v8031
        %v8146 = vunpack.c.l.b16 %v8044
        %v8147 = vunpack.c.l.b16 %v8053
        %v8148 = vunpack.c.l.b16 %v8066
        %v8149 = vunpack.c.l.b16 %v8075
        %v8150 = vunpack.c.l.b16 %v8088
        %v8151 = vunpack.c.l.b16 %v8097
        %v8152 = vunpack.c.l.b16 %v8110
        %v8153 = vunpack.c.l.b16 %v8119
        %v8154 = vpack.c.b16 %v8123, %v8122
        %v8155 = vpack.c.b16 %v8125, %v8124
        %v8156 = vpack.c.b16 %v8127, %v8126
        %v8157 = vpack.c.b16 %v8129, %v8128
        %v8158 = vpack.c.b16 %v8131, %v8130
        %v8159 = vpack.c.b16 %v8133, %v8132
        %v8160 = vpack.c.b16 %v8135, %v8134
        %v8161 = vpack.c.b16 %v8137, %v8136
        %v8162 = vpack.c.b16 %v8139, %v8138
        %v8163 = vpack.c.b16 %v8141, %v8140
        %v8164 = vpack.c.b16 %v8143, %v8142
        %v8165 = vpack.c.b16 %v8145, %v8144
        %v8166 = vpack.c.b16 %v8147, %v8146
        %v8167 = vpack.c.b16 %v8149, %v8148
        %v8168 = vpack.c.b16 %v8151, %v8150
        %v8169 = vpack.c.b16 %v8153, %v8152
        %v8171 = vsel %vm1002, %v8154, 0
        %v8174 = vsel %vm1002, %v8155, 0
        %v8177 = vsel %vm1002, %v8156, 0
        %v8180 = vsel %vm1002, %v8157, 0
        %v8183 = vsel %vm1002, %v8158, 0
        %v8186 = vsel %vm1002, %v8159, 0
        %v8189 = vsel %vm1002, %v8160, 0
        %v8192 = vsel %vm1002, %v8161, 0
        %v8195 = vsel %vm1002, %v8162, 0
        %v8198 = vsel %vm1002, %v8163, 0
        %v8201 = vsel %vm1002, %v8164, 0
        %v8204 = vsel %vm1002, %v8165, 0
        %v8207 = vsel %vm1002, %v8166, 0
        %v8210 = vsel %vm1002, %v8167, 0
        %v8213 = vsel %vm1002, %v8168, 0
        %v8216 = vsel %vm1002, %v8169, 0
        %v8219 = vsel %vm1051, %v8121, 0
        %8221 = vmatprep.subr.bf16.mxu0 0
        %8222 = vmatpush1.bf16.msra.mxu0 %v8219
        %8223 = vmatprep.subr.bf16.mxu0 0
        %8224 = vmatpush1.bf16.msra.mxu0 0
        %8225 = vmatprep.subr.bf16.mxu0 0
        %8226 = vmatpush1.bf16.msra.mxu0 0
        %8227 = vmatprep.subr.bf16.mxu0 0
        %8228 = vmatpush1.bf16.msra.mxu0 0
        %8229 = vmatprep.subr.bf16.mxu0 0
        %8230 = vmatpush1.bf16.msra.mxu0 0
        %8231 = vmatprep.subr.bf16.mxu0 0
        %8232 = vmatpush1.bf16.msra.mxu0 0
        %8233 = vmatprep.subr.bf16.mxu0 0
        %8234 = vmatpush1.bf16.msra.mxu0 0
        %8235 = vmatprep.subr.bf16.mxu0 0
        %8236 = vmatpush1.bf16.msra.mxu0 0
        %8237 = vmatprep.subr.bf16.mxu0 0
        %8238 = vmatpush1.bf16.msra.mxu0 0
        %8239 = vmatprep.subr.bf16.mxu0 0
        %8240 = vmatpush1.bf16.msra.mxu0 0
        %8241 = vmatprep.subr.bf16.mxu0 0
        %8242 = vmatpush1.bf16.msra.mxu0 0
        %8243 = vmatprep.subr.bf16.mxu0 0
        %8244 = vmatpush1.bf16.msra.mxu0 0
        %8245 = vmatprep.subr.bf16.mxu0 0
        %8246 = vmatpush1.bf16.msra.mxu0 0
        %8247 = vmatprep.subr.bf16.mxu0 0
        %8248 = vmatpush1.bf16.msra.mxu0 0
        %8249 = vmatprep.subr.bf16.mxu0 0
        %8250 = vmatpush1.bf16.msra.mxu0 0
        %8251 = vmatprep.subr.bf16.mxu0 0
        %8252 = vmatpush1.bf16.msra.mxu0 0
        %8253 = vmatprep.mubr.bf16.mxu0 0
        %8254 = vmatmul.mubr.bf16.gmra.mrb[0].mxu0 %v8171
        %v8255 = vpop.f32.mrb[0].mxu0
        %v8256 = vadd.f32 0.0, %v8255
        %v8257 = vpop.f32.mrb[0].mxu0
        %v8258 = vpop.f32.mrb[0].mxu0
        %v8259 = vadd.f32 0.0, %v8258
        %v8260 = vpop.f32.mrb[0].mxu0
        %8261 = vmatprep.mubr.bf16.mxu0 0
        %8262 = vmatmul.mubr.bf16.gmra.mrb[0].mxu0 %v8174
        %v8263 = vpop.f32.mrb[0].mxu0
        %v8264 = vadd.f32 0.0, %v8263
        %v8265 = vpop.f32.mrb[0].mxu0
        %v8266 = vpop.f32.mrb[0].mxu0
        %v8267 = vadd.f32 0.0, %v8266
        %v8268 = vpop.f32.mrb[0].mxu0
        %8269 = vmatprep.mubr.bf16.mxu0 0
        %8270 = vmatmul.mubr.bf16.gmra.mrb[0].mxu0 %v8177
        %v8271 = vpop.f32.mrb[0].mxu0
        %v8272 = vadd.f32 0.0, %v8271
        %v8273 = vpop.f32.mrb[0].mxu0
        %v8274 = vpop.f32.mrb[0].mxu0
        %v8275 = vadd.f32 0.0, %v8274
        %v8276 = vpop.f32.mrb[0].mxu0
        %8277 = vmatprep.mubr.bf16.mxu0 0
        %8278 = vmatmul.mubr.bf16.gmra.mrb[0].mxu0 %v8180
        %v8279 = vpop.f32.mrb[0].mxu0
        %v8280 = vadd.f32 0.0, %v8279
        %v8281 = vpop.f32.mrb[0].mxu0
        %v8282 = vpop.f32.mrb[0].mxu0
        %v8283 = vadd.f32 0.0, %v8282
        %v8284 = vpop.f32.mrb[0].mxu0
        %8285 = vmatprep.mubr.bf16.mxu0 0
        %8286 = vmatmul.mubr.bf16.gmra.mrb[0].mxu0 %v8183
        %v8287 = vpop.f32.mrb[0].mxu0
        %v8288 = vadd.f32 0.0, %v8287
        %v8289 = vpop.f32.mrb[0].mxu0
        %v8290 = vpop.f32.mrb[0].mxu0
        %v8291 = vadd.f32 0.0, %v8290
        %v8292 = vpop.f32.mrb[0].mxu0
        %8293 = vmatprep.mubr.bf16.mxu0 0
        %8294 = vmatmul.mubr.bf16.gmra.mrb[0].mxu0 %v8186
        %v8295 = vpop.f32.mrb[0].mxu0
        %v8296 = vadd.f32 0.0, %v8295
        %v8297 = vpop.f32.mrb[0].mxu0
        %v8298 = vpop.f32.mrb[0].mxu0
        %v8299 = vadd.f32 0.0, %v8298
        %v8300 = vpop.f32.mrb[0].mxu0
        %8301 = vmatprep.mubr.bf16.mxu0 0
        %8302 = vmatmul.mubr.bf16.gmra.mrb[0].mxu0 %v8189
        %v8303 = vpop.f32.mrb[0].mxu0
        %v8304 = vadd.f32 0.0, %v8303
        %v8305 = vpop.f32.mrb[0].mxu0
        %v8306 = vpop.f32.mrb[0].mxu0
        %v8307 = vadd.f32 0.0, %v8306
        %v8308 = vpop.f32.mrb[0].mxu0
        %8309 = vmatprep.mubr.bf16.mxu0 0
        %8310 = vmatmul.mubr.bf16.gmra.mrb[0].mxu0 %v8192
        %v8311 = vpop.f32.mrb[0].mxu0
        %v8312 = vadd.f32 0.0, %v8311
        %v8313 = vpop.f32.mrb[0].mxu0
        %v8314 = vpop.f32.mrb[0].mxu0
        %v8315 = vadd.f32 0.0, %v8314
        %v8316 = vpop.f32.mrb[0].mxu0
        %8317 = vmatprep.mubr.bf16.mxu0 0
        %8318 = vmatmul.mubr.bf16.gmra.mrb[0].mxu0 %v8195
        %v8319 = vpop.f32.mrb[0].mxu0
        %v8320 = vadd.f32 0.0, %v8319
        %v8321 = vpop.f32.mrb[0].mxu0
        %v8322 = vpop.f32.mrb[0].mxu0
        %v8323 = vadd.f32 0.0, %v8322
        %v8324 = vpop.f32.mrb[0].mxu0
        %8325 = vmatprep.mubr.bf16.mxu0 0
        %8326 = vmatmul.mubr.bf16.gmra.mrb[0].mxu0 %v8198
        %v8327 = vpop.f32.mrb[0].mxu0
        %v8328 = vadd.f32 0.0, %v8327
        %v8329 = vpop.f32.mrb[0].mxu0
        %v8330 = vpop.f32.mrb[0].mxu0
        %v8331 = vadd.f32 0.0, %v8330
        %v8332 = vpop.f32.mrb[0].mxu0
        %8333 = vmatprep.mubr.bf16.mxu0 0
        %8334 = vmatmul.mubr.bf16.gmra.mrb[0].mxu0 %v8201
        %v8335 = vpop.f32.mrb[0].mxu0
        %v8336 = vadd.f32 0.0, %v8335
        %v8337 = vpop.f32.mrb[0].mxu0
        %v8338 = vpop.f32.mrb[0].mxu0
        %v8339 = vadd.f32 0.0, %v8338
        %v8340 = vpop.f32.mrb[0].mxu0
        %8341 = vmatprep.mubr.bf16.mxu0 0
        %8342 = vmatmul.mubr.bf16.gmra.mrb[0].mxu0 %v8204
        %v8343 = vpop.f32.mrb[0].mxu0
        %v8344 = vadd.f32 0.0, %v8343
        %v8345 = vpop.f32.mrb[0].mxu0
        %v8346 = vpop.f32.mrb[0].mxu0
        %v8347 = vadd.f32 0.0, %v8346
        %v8348 = vpop.f32.mrb[0].mxu0
        %8349 = vmatprep.mubr.bf16.mxu0 0
        %8350 = vmatmul.mubr.bf16.gmra.mrb[0].mxu0 %v8207
        %v8351 = vpop.f32.mrb[0].mxu0
        %v8352 = vadd.f32 0.0, %v8351
        %v8353 = vpop.f32.mrb[0].mxu0
        %v8354 = vpop.f32.mrb[0].mxu0
        %v8355 = vadd.f32 0.0, %v8354
        %v8356 = vpop.f32.mrb[0].mxu0
        %8357 = vmatprep.mubr.bf16.mxu0 0
        %8358 = vmatmul.mubr.bf16.gmra.mrb[0].mxu0 %v8210
        %v8359 = vpop.f32.mrb[0].mxu0
        %v8360 = vadd.f32 0.0, %v8359
        %v8361 = vpop.f32.mrb[0].mxu0
        %v8362 = vpop.f32.mrb[0].mxu0
        %v8363 = vadd.f32 0.0, %v8362
        %v8364 = vpop.f32.mrb[0].mxu0
        %8365 = vmatprep.mubr.bf16.mxu0 0
        %8366 = vmatmul.mubr.bf16.gmra.mrb[0].mxu0 %v8213
        %v8367 = vpop.f32.mrb[0].mxu0
        %v8368 = vadd.f32 0.0, %v8367
        %v8369 = vpop.f32.mrb[0].mxu0
        %v8370 = vpop.f32.mrb[0].mxu0
        %v8371 = vadd.f32 0.0, %v8370
        %v8372 = vpop.f32.mrb[0].mxu0
        %8373 = vmatprep.mubr.bf16.mxu0 0
        %8374 = vmatmul.mubr.bf16.gmra.mrb[0].mxu0 %v8216
        %v8375 = vpop.f32.mrb[0].mxu0
        %v8376 = vadd.f32 0.0, %v8375
        %v8377 = vpop.f32.mrb[0].mxu0
        %v8378 = vpop.f32.mrb[0].mxu0
        %v8379 = vadd.f32 0.0, %v8378
        %v8380 = vpop.f32.mrb[0].mxu0
        %8381 = vdwg.mxu0
        %v8382 = vadd.f32 %v7688, %v8256
        %v8383 = vadd.f32 %v7689, %v8259
        %v8384 = vadd.f32 %v7690, %v8264
        %v8385 = vadd.f32 %v7691, %v8267
        %v8386 = vadd.f32 %v7692, %v8272
        %v8387 = vadd.f32 %v7693, %v8275
        %v8388 = vadd.f32 %v7694, %v8280
        %v8389 = vadd.f32 %v7695, %v8283
        %v8390 = vadd.f32 %v7696, %v8288
        %v8391 = vadd.f32 %v7697, %v8291
        %v8392 = vadd.f32 %v7698, %v8296
        %v8393 = vadd.f32 %v7699, %v8299
        %v8394 = vadd.f32 %v7700, %v8304
        %v8395 = vadd.f32 %v7701, %v8307
        %v8396 = vadd.f32 %v7702, %v8312
        %v8397 = vadd.f32 %v7703, %v8315
        %v8398 = vadd.f32 %v7704, %v8320
        %v8399 = vadd.f32 %v7705, %v8323
        %v8400 = vadd.f32 %v7706, %v8328
        %v8401 = vadd.f32 %v7707, %v8331
        %v8402 = vadd.f32 %v7708, %v8336
        %v8403 = vadd.f32 %v7709, %v8339
        %v8404 = vadd.f32 %v7710, %v8344
        %v8405 = vadd.f32 %v7711, %v8347
        %v8406 = vadd.f32 %v7712, %v8352
        %v8407 = vadd.f32 %v7713, %v8355
        %v8408 = vadd.f32 %v7714, %v8360
        %v8409 = vadd.f32 %v7715, %v8363
        %v8410 = vadd.f32 %v7716, %v8368
        %v8411 = vadd.f32 %v7717, %v8371
        %v8412 = vadd.f32 %v7718, %v8376
        %v8413 = vadd.f32 %v7719, %v8379
        %s8414 = scalar_lea.vmem [#allocation11], 16
        %v8415 = vld [vmem:[%s8414] sm:$0xf]
        %v8448 = vunpack.c.l.b16 %v7721
        %v8449 = vunpack.c.l.b16 %v7722
        %v8450 = vunpack.c.l.b16 %v7724
        %v8451 = vunpack.c.l.b16 %v7725
        %v8452 = vunpack.c.l.b16 %v7727
        %v8453 = vunpack.c.l.b16 %v7728
        %v8454 = vunpack.c.l.b16 %v7730
        %v8455 = vunpack.c.l.b16 %v7731
        %v8456 = vunpack.c.l.b16 %v7733
        %v8457 = vunpack.c.l.b16 %v7734
        %v8458 = vunpack.c.l.b16 %v7736
        %v8459 = vunpack.c.l.b16 %v7737
        %v8460 = vunpack.c.l.b16 %v7739
        %v8461 = vunpack.c.l.b16 %v7740
        %v8462 = vunpack.c.l.b16 %v7742
        %v8463 = vunpack.c.l.b16 %v7743
        %v8464 = vunpack.c.l.b16 %v7745
        %v8465 = vunpack.c.l.b16 %v7746
        %v8466 = vunpack.c.l.b16 %v7748
        %v8467 = vunpack.c.l.b16 %v7749
        %v8468 = vunpack.c.l.b16 %v7751
        %v8469 = vunpack.c.l.b16 %v7752
        %v8470 = vunpack.c.l.b16 %v7754
        %v8471 = vunpack.c.l.b16 %v7755
        %v8472 = vunpack.c.l.b16 %v7757
        %v8473 = vunpack.c.l.b16 %v7758
        %v8474 = vunpack.c.l.b16 %v7760
        %v8475 = vunpack.c.l.b16 %v7761
        %v8476 = vunpack.c.l.b16 %v7763
        %v8477 = vunpack.c.l.b16 %v7764
        %v8478 = vunpack.c.l.b16 %v7766
        %v8479 = vunpack.c.l.b16 %v7767
        %v8480 = vpack.c.b16 %v8449, %v8448
        %v8481 = vpack.c.b16 %v8451, %v8450
        %v8482 = vpack.c.b16 %v8453, %v8452
        %v8483 = vpack.c.b16 %v8455, %v8454
        %v8484 = vpack.c.b16 %v8457, %v8456
        %v8485 = vpack.c.b16 %v8459, %v8458
        %v8486 = vpack.c.b16 %v8461, %v8460
        %v8487 = vpack.c.b16 %v8463, %v8462
        %v8488 = vpack.c.b16 %v8465, %v8464
        %v8489 = vpack.c.b16 %v8467, %v8466
        %v8490 = vpack.c.b16 %v8469, %v8468
        %v8491 = vpack.c.b16 %v8471, %v8470
        %v8492 = vpack.c.b16 %v8473, %v8472
        %v8493 = vpack.c.b16 %v8475, %v8474
        %v8494 = vpack.c.b16 %v8477, %v8476
        %v8495 = vpack.c.b16 %v8479, %v8478
        %v8497 = vsel %vm1002, %v8480, 0
        %v8500 = vsel %vm1002, %v8481, 0
        %v8503 = vsel %vm1002, %v8482, 0
        %v8506 = vsel %vm1002, %v8483, 0
        %v8509 = vsel %vm1002, %v8484, 0
        %v8512 = vsel %vm1002, %v8485, 0
        %v8515 = vsel %vm1002, %v8486, 0
        %v8518 = vsel %vm1002, %v8487, 0
        %v8521 = vsel %vm1002, %v8488, 0
        %v8524 = vsel %vm1002, %v8489, 0
        %v8527 = vsel %vm1002, %v8490, 0
        %v8530 = vsel %vm1002, %v8491, 0
        %v8533 = vsel %vm1002, %v8492, 0
        %v8536 = vsel %vm1002, %v8493, 0
        %v8539 = vsel %vm1002, %v8494, 0
        %v8542 = vsel %vm1002, %v8495, 0
        %v8545 = vsel %vm1051, %v8415, 0
        %8547 = vmatprep.subr.bf16.mxu0 0
        %8548 = vmatpush1.bf16.msra.mxu0 %v8545
        %8549 = vmatprep.subr.bf16.mxu0 0
        %8550 = vmatpush1.bf16.msra.mxu0 0
        %8551 = vmatprep.subr.bf16.mxu0 0
        %8552 = vmatpush1.bf16.msra.mxu0 0
        %8553 = vmatprep.subr.bf16.mxu0 0
        %8554 = vmatpush1.bf16.msra.mxu0 0
        %8555 = vmatprep.subr.bf16.mxu0 0
        %8556 = vmatpush1.bf16.msra.mxu0 0
        %8557 = vmatprep.subr.bf16.mxu0 0
        %8558 = vmatpush1.bf16.msra.mxu0 0
        %8559 = vmatprep.subr.bf16.mxu0 0
        %8560 = vmatpush1.bf16.msra.mxu0 0
        %8561 = vmatprep.subr.bf16.mxu0 0
        %8562 = vmatpush1.bf16.msra.mxu0 0
        %8563 = vmatprep.subr.bf16.mxu0 0
        %8564 = vmatpush1.bf16.msra.mxu0 0
        %8565 = vmatprep.subr.bf16.mxu0 0
        %8566 = vmatpush1.bf16.msra.mxu0 0
        %8567 = vmatprep.subr.bf16.mxu0 0
        %8568 = vmatpush1.bf16.msra.mxu0 0
        %8569 = vmatprep.subr.bf16.mxu0 0
        %8570 = vmatpush1.bf16.msra.mxu0 0
        %8571 = vmatprep.subr.bf16.mxu0 0
        %8572 = vmatpush1.bf16.msra.mxu0 0
        %8573 = vmatprep.subr.bf16.mxu0 0
        %8574 = vmatpush1.bf16.msra.mxu0 0
        %8575 = vmatprep.subr.bf16.mxu0 0
        %8576 = vmatpush1.bf16.msra.mxu0 0
        %8577 = vmatprep.subr.bf16.mxu0 0
        %8578 = vmatpush1.bf16.msra.mxu0 0
        %8579 = vmatprep.mubr.bf16.mxu0 0
        %8580 = vmatmul.mubr.bf16.gmra.mrb[0].mxu0 %v8497
        %v8581 = vpop.f32.mrb[0].mxu0
        %v8582 = vadd.f32 0.0, %v8581
        %v8583 = vpop.f32.mrb[0].mxu0
        %v8584 = vpop.f32.mrb[0].mxu0
        %v8585 = vadd.f32 0.0, %v8584
        %v8586 = vpop.f32.mrb[0].mxu0
        %8587 = vmatprep.mubr.bf16.mxu0 0
        %8588 = vmatmul.mubr.bf16.gmra.mrb[0].mxu0 %v8500
        %v8589 = vpop.f32.mrb[0].mxu0
        %v8590 = vadd.f32 0.0, %v8589
        %v8591 = vpop.f32.mrb[0].mxu0
        %v8592 = vpop.f32.mrb[0].mxu0
        %v8593 = vadd.f32 0.0, %v8592
        %v8594 = vpop.f32.mrb[0].mxu0
        %8595 = vmatprep.mubr.bf16.mxu0 0
        %8596 = vmatmul.mubr.bf16.gmra.mrb[0].mxu0 %v8503
        %v8597 = vpop.f32.mrb[0].mxu0
        %v8598 = vadd.f32 0.0, %v8597
        %v8599 = vpop.f32.mrb[0].mxu0
        %v8600 = vpop.f32.mrb[0].mxu0
        %v8601 = vadd.f32 0.0, %v8600
        %v8602 = vpop.f32.mrb[0].mxu0
        %8603 = vmatprep.mubr.bf16.mxu0 0
        %8604 = vmatmul.mubr.bf16.gmra.mrb[0].mxu0 %v8506
        %v8605 = vpop.f32.mrb[0].mxu0
        %v8606 = vadd.f32 0.0, %v8605
        %v8607 = vpop.f32.mrb[0].mxu0
        %v8608 = vpop.f32.mrb[0].mxu0
        %v8609 = vadd.f32 0.0, %v8608
        %v8610 = vpop.f32.mrb[0].mxu0
        %8611 = vmatprep.mubr.bf16.mxu0 0
        %8612 = vmatmul.mubr.bf16.gmra.mrb[0].mxu0 %v8509
        %v8613 = vpop.f32.mrb[0].mxu0
        %v8614 = vadd.f32 0.0, %v8613
        %v8615 = vpop.f32.mrb[0].mxu0
        %v8616 = vpop.f32.mrb[0].mxu0
        %v8617 = vadd.f32 0.0, %v8616
        %v8618 = vpop.f32.mrb[0].mxu0
        %8619 = vmatprep.mubr.bf16.mxu0 0
        %8620 = vmatmul.mubr.bf16.gmra.mrb[0].mxu0 %v8512
        %v8621 = vpop.f32.mrb[0].mxu0
        %v8622 = vadd.f32 0.0, %v8621
        %v8623 = vpop.f32.mrb[0].mxu0
        %v8624 = vpop.f32.mrb[0].mxu0
        %v8625 = vadd.f32 0.0, %v8624
        %v8626 = vpop.f32.mrb[0].mxu0
        %8627 = vmatprep.mubr.bf16.mxu0 0
        %8628 = vmatmul.mubr.bf16.gmra.mrb[0].mxu0 %v8515
        %v8629 = vpop.f32.mrb[0].mxu0
        %v8630 = vadd.f32 0.0, %v8629
        %v8631 = vpop.f32.mrb[0].mxu0
        %v8632 = vpop.f32.mrb[0].mxu0
        %v8633 = vadd.f32 0.0, %v8632
        %v8634 = vpop.f32.mrb[0].mxu0
        %8635 = vmatprep.mubr.bf16.mxu0 0
        %8636 = vmatmul.mubr.bf16.gmra.mrb[0].mxu0 %v8518
        %v8637 = vpop.f32.mrb[0].mxu0
        %v8638 = vadd.f32 0.0, %v8637
        %v8639 = vpop.f32.mrb[0].mxu0
        %v8640 = vpop.f32.mrb[0].mxu0
        %v8641 = vadd.f32 0.0, %v8640
        %v8642 = vpop.f32.mrb[0].mxu0
        %8643 = vmatprep.mubr.bf16.mxu0 0
        %8644 = vmatmul.mubr.bf16.gmra.mrb[0].mxu0 %v8521
        %v8645 = vpop.f32.mrb[0].mxu0
        %v8646 = vadd.f32 0.0, %v8645
        %v8647 = vpop.f32.mrb[0].mxu0
        %v8648 = vpop.f32.mrb[0].mxu0
        %v8649 = vadd.f32 0.0, %v8648
        %v8650 = vpop.f32.mrb[0].mxu0
        %8651 = vmatprep.mubr.bf16.mxu0 0
        %8652 = vmatmul.mubr.bf16.gmra.mrb[0].mxu0 %v8524
        %v8653 = vpop.f32.mrb[0].mxu0
        %v8654 = vadd.f32 0.0, %v8653
        %v8655 = vpop.f32.mrb[0].mxu0
        %v8656 = vpop.f32.mrb[0].mxu0
        %v8657 = vadd.f32 0.0, %v8656
        %v8658 = vpop.f32.mrb[0].mxu0
        %8659 = vmatprep.mubr.bf16.mxu0 0
        %8660 = vmatmul.mubr.bf16.gmra.mrb[0].mxu0 %v8527
        %v8661 = vpop.f32.mrb[0].mxu0
        %v8662 = vadd.f32 0.0, %v8661
        %v8663 = vpop.f32.mrb[0].mxu0
        %v8664 = vpop.f32.mrb[0].mxu0
        %v8665 = vadd.f32 0.0, %v8664
        %v8666 = vpop.f32.mrb[0].mxu0
        %8667 = vmatprep.mubr.bf16.mxu0 0
        %8668 = vmatmul.mubr.bf16.gmra.mrb[0].mxu0 %v8530
        %v8669 = vpop.f32.mrb[0].mxu0
        %v8670 = vadd.f32 0.0, %v8669
        %v8671 = vpop.f32.mrb[0].mxu0
        %v8672 = vpop.f32.mrb[0].mxu0
        %v8673 = vadd.f32 0.0, %v8672
        %v8674 = vpop.f32.mrb[0].mxu0
        %8675 = vmatprep.mubr.bf16.mxu0 0
        %8676 = vmatmul.mubr.bf16.gmra.mrb[0].mxu0 %v8533
        %v8677 = vpop.f32.mrb[0].mxu0
        %v8678 = vadd.f32 0.0, %v8677
        %v8679 = vpop.f32.mrb[0].mxu0
        %v8680 = vpop.f32.mrb[0].mxu0
        %v8681 = vadd.f32 0.0, %v8680
        %v8682 = vpop.f32.mrb[0].mxu0
        %8683 = vmatprep.mubr.bf16.mxu0 0
        %8684 = vmatmul.mubr.bf16.gmra.mrb[0].mxu0 %v8536
        %v8685 = vpop.f32.mrb[0].mxu0
        %v8686 = vadd.f32 0.0, %v8685
        %v8687 = vpop.f32.mrb[0].mxu0
        %v8688 = vpop.f32.mrb[0].mxu0
        %v8689 = vadd.f32 0.0, %v8688
        %v8690 = vpop.f32.mrb[0].mxu0
        %8691 = vmatprep.mubr.bf16.mxu0 0
        %8692 = vmatmul.mubr.bf16.gmra.mrb[0].mxu0 %v8539
        %v8693 = vpop.f32.mrb[0].mxu0
        %v8694 = vadd.f32 0.0, %v8693
        %v8695 = vpop.f32.mrb[0].mxu0
        %v8696 = vpop.f32.mrb[0].mxu0
        %v8697 = vadd.f32 0.0, %v8696
        %v8698 = vpop.f32.mrb[0].mxu0
        %8699 = vmatprep.mubr.bf16.mxu0 0
        %8700 = vmatmul.mubr.bf16.gmra.mrb[0].mxu0 %v8542
        %v8701 = vpop.f32.mrb[0].mxu0
        %v8702 = vadd.f32 0.0, %v8701
        %v8703 = vpop.f32.mrb[0].mxu0
        %v8704 = vpop.f32.mrb[0].mxu0
        %v8705 = vadd.f32 0.0, %v8704
        %v8706 = vpop.f32.mrb[0].mxu0
        %8707 = vdwg.mxu0
        %v8708 = vadd.f32 %v8382, %v8582
        %v8709 = vadd.f32 %v8383, %v8585
        %v8710 = vadd.f32 %v8384, %v8590
        %v8711 = vadd.f32 %v8385, %v8593
        %v8712 = vadd.f32 %v8386, %v8598
        %v8713 = vadd.f32 %v8387, %v8601
        %v8714 = vadd.f32 %v8388, %v8606
        %v8715 = vadd.f32 %v8389, %v8609
        %v8716 = vadd.f32 %v8390, %v8614
        %v8717 = vadd.f32 %v8391, %v8617
        %v8718 = vadd.f32 %v8392, %v8622
        %v8719 = vadd.f32 %v8393, %v8625
        %v8720 = vadd.f32 %v8394, %v8630
        %v8721 = vadd.f32 %v8395, %v8633
        %v8722 = vadd.f32 %v8396, %v8638
        %v8723 = vadd.f32 %v8397, %v8641
        %v8724 = vadd.f32 %v8398, %v8646
        %v8725 = vadd.f32 %v8399, %v8649
        %v8726 = vadd.f32 %v8400, %v8654
        %v8727 = vadd.f32 %v8401, %v8657
        %v8728 = vadd.f32 %v8402, %v8662
        %v8729 = vadd.f32 %v8403, %v8665
        %v8730 = vadd.f32 %v8404, %v8670
        %v8731 = vadd.f32 %v8405, %v8673
        %v8732 = vadd.f32 %v8406, %v8678
        %v8733 = vadd.f32 %v8407, %v8681
        %v8734 = vadd.f32 %v8408, %v8686
        %v8735 = vadd.f32 %v8409, %v8689
        %v8736 = vadd.f32 %v8410, %v8694
        %v8737 = vadd.f32 %v8411, %v8697
        %v8738 = vadd.f32 %v8412, %v8702
        %v8739 = vadd.f32 %v8413, %v8705
        %v8740 = vld [vmem:[%s5782 + $0x4] sm:$0xf]
        %v8741 = vld [vmem:[%s5782 + $0x8] sm:$0xf]
        %v8742 = vld [vmem:[%s5782 + $0xc] sm:$0x1]
        %v8743 = vld [vmem:[%s5782 + $0x14] sm:$0xf]
        %v8744 = vld [vmem:[%s5782 + $0x18] sm:$0xf]
        %v8745 = vld [vmem:[%s5782 + $0x1c] sm:$0x1]
        %v8746 = vld [vmem:[%s5782 + $0x24] sm:$0xf]
        %v8747 = vld [vmem:[%s5782 + $0x28] sm:$0xf]
        %v8748 = vld [vmem:[%s5782 + $0x2c] sm:$0x1]
        %v8749 = vld [vmem:[%s5782 + $0x34] sm:$0xf]
        %v8750 = vld [vmem:[%s5782 + $0x38] sm:$0xf]
        %v8751 = vld [vmem:[%s5782 + $0x3c] sm:$0x1]
        %v8752 = vld [vmem:[%s5782 + $0x44] sm:$0xf]
        %v8753 = vld [vmem:[%s5782 + $0x48] sm:$0xf]
        %v8754 = vld [vmem:[%s5782 + $0x4c] sm:$0x1]
        %v8755 = vld [vmem:[%s5782 + $0x54] sm:$0xf]
        %v8756 = vld [vmem:[%s5782 + $0x58] sm:$0xf]
        %v8757 = vld [vmem:[%s5782 + $0x5c] sm:$0x1]
        %v8758 = vld [vmem:[%s5782 + $0x64] sm:$0xf]
        %v8759 = vld [vmem:[%s5782 + $0x68] sm:$0xf]
        %v8760 = vld [vmem:[%s5782 + $0x6c] sm:$0x1]
        %v8761 = vld [vmem:[%s5782 + $0x74] sm:$0xf]
        %v8762 = vld [vmem:[%s5782 + $0x78] sm:$0xf]
        %v8763 = vld [vmem:[%s5782 + $0x7c] sm:$0x1]
        %v8764 = vld [vmem:[%s5782 + $0x84] sm:$0xf]
        %v8765 = vld [vmem:[%s5782 + $0x88] sm:$0xf]
        %v8766 = vld [vmem:[%s5782 + $0x8c] sm:$0x1]
        %v8767 = vld [vmem:[%s5782 + $0x94] sm:$0xf]
        %v8768 = vld [vmem:[%s5782 + $0x98] sm:$0xf]
        %v8769 = vld [vmem:[%s5782 + $0x9c] sm:$0x1]
        %v8770 = vld [vmem:[%s5782 + $0xa4] sm:$0xf]
        %v8771 = vld [vmem:[%s5782 + $0xa8] sm:$0xf]
        %v8772 = vld [vmem:[%s5782 + $0xac] sm:$0x1]
        %v8773 = vld [vmem:[%s5782 + $0xb4] sm:$0xf]
        %v8774 = vld [vmem:[%s5782 + $0xb8] sm:$0xf]
        %v8775 = vld [vmem:[%s5782 + $0xbc] sm:$0x1]
        %v8776 = vld [vmem:[%s5782 + $0xc4] sm:$0xf]
        %v8777 = vld [vmem:[%s5782 + $0xc8] sm:$0xf]
        %v8778 = vld [vmem:[%s5782 + $0xcc] sm:$0x1]
        %v8779 = vld [vmem:[%s5782 + $0xd4] sm:$0xf]
        %v8780 = vld [vmem:[%s5782 + $0xd8] sm:$0xf]
        %v8781 = vld [vmem:[%s5782 + $0xdc] sm:$0x1]
        %v8782 = vld [vmem:[%s5782 + $0xe4] sm:$0xf]
        %v8783 = vld [vmem:[%s5782 + $0xe8] sm:$0xf]
        %v8784 = vld [vmem:[%s5782 + $0xec] sm:$0x1]
        %v8785 = vld [vmem:[%s5782 + $0xf4] sm:$0xf]
        %v8786 = vld [vmem:[%s5782 + $0xf8] sm:$0xf]
        %v8787 = vld [vmem:[%s5782 + $0xfc] sm:$0x1]
        %v8789 = vshrl.u32 %v8740, 16
        %v8791 = vrot.slane %v8789, 4
        %v8792 = vshll.u32 %v8740, 16
        %v8794 = vrot.slane %v8792, 5
        %v8795 = vor.u32 %v8791, %v8794
        %v8796 = vrot.slane %v8795, 4
        %v8798 = vshll.u32 %v8741, 16
        %v8800 = vrot.slane %v8798, 5
        %v8801 = vsel %vm1526, %v8796, %v8800
        %v8802 = vshrl.u32 %v8741, 16
        %v8804 = vrot.slane %v8802, 4
        %v8805 = vor.u32 %v8804, %v8800
        %v8806 = vrot.slane %v8805, 4
        %v8808 = vshll.u32 %v8742, 16
        %v8810 = vrot.slane %v8808, 5
        %v8811 = vsel %vm1526, %v8806, %v8810
        %v8813 = vshrl.u32 %v8743, 16
        %v8815 = vrot.slane %v8813, 4
        %v8816 = vshll.u32 %v8743, 16
        %v8818 = vrot.slane %v8816, 5
        %v8819 = vor.u32 %v8815, %v8818
        %v8820 = vrot.slane %v8819, 4
        %v8822 = vshll.u32 %v8744, 16
        %v8824 = vrot.slane %v8822, 5
        %v8825 = vsel %vm1526, %v8820, %v8824
        %v8826 = vshrl.u32 %v8744, 16
        %v8828 = vrot.slane %v8826, 4
        %v8829 = vor.u32 %v8828, %v8824
        %v8830 = vrot.slane %v8829, 4
        %v8832 = vshll.u32 %v8745, 16
        %v8834 = vrot.slane %v8832, 5
        %v8835 = vsel %vm1526, %v8830, %v8834
        %v8837 = vshrl.u32 %v8746, 16
        %v8839 = vrot.slane %v8837, 4
        %v8840 = vshll.u32 %v8746, 16
        %v8842 = vrot.slane %v8840, 5
        %v8843 = vor.u32 %v8839, %v8842
        %v8844 = vrot.slane %v8843, 4
        %v8846 = vshll.u32 %v8747, 16
        %v8848 = vrot.slane %v8846, 5
        %v8849 = vsel %vm1526, %v8844, %v8848
        %v8850 = vshrl.u32 %v8747, 16
        %v8852 = vrot.slane %v8850, 4
        %v8853 = vor.u32 %v8852, %v8848
        %v8854 = vrot.slane %v8853, 4
        %v8856 = vshll.u32 %v8748, 16
        %v8858 = vrot.slane %v8856, 5
        %v8859 = vsel %vm1526, %v8854, %v8858
        %v8861 = vshrl.u32 %v8749, 16
        %v8863 = vrot.slane %v8861, 4
        %v8864 = vshll.u32 %v8749, 16
        %v8866 = vrot.slane %v8864, 5
        %v8867 = vor.u32 %v8863, %v8866
        %v8868 = vrot.slane %v8867, 4
        %v8870 = vshll.u32 %v8750, 16
        %v8872 = vrot.slane %v8870, 5
        %v8873 = vsel %vm1526, %v8868, %v8872
        %v8874 = vshrl.u32 %v8750, 16
        %v8876 = vrot.slane %v8874, 4
        %v8877 = vor.u32 %v8876, %v8872
        %v8878 = vrot.slane %v8877, 4
        %v8880 = vshll.u32 %v8751, 16
        %v8882 = vrot.slane %v8880, 5
        %v8883 = vsel %vm1526, %v8878, %v8882
        %v8885 = vshrl.u32 %v8752, 16
        %v8887 = vrot.slane %v8885, 4
        %v8888 = vshll.u32 %v8752, 16
        %v8890 = vrot.slane %v8888, 5
        %v8891 = vor.u32 %v8887, %v8890
        %v8892 = vrot.slane %v8891, 4
        %v8894 = vshll.u32 %v8753, 16
        %v8896 = vrot.slane %v8894, 5
        %v8897 = vsel %vm1526, %v8892, %v8896
        %v8898 = vshrl.u32 %v8753, 16
        %v8900 = vrot.slane %v8898, 4
        %v8901 = vor.u32 %v8900, %v8896
        %v8902 = vrot.slane %v8901, 4
        %v8904 = vshll.u32 %v8754, 16
        %v8906 = vrot.slane %v8904, 5
        %v8907 = vsel %vm1526, %v8902, %v8906
        %v8909 = vshrl.u32 %v8755, 16
        %v8911 = vrot.slane %v8909, 4
        %v8912 = vshll.u32 %v8755, 16
        %v8914 = vrot.slane %v8912, 5
        %v8915 = vor.u32 %v8911, %v8914
        %v8916 = vrot.slane %v8915, 4
        %v8918 = vshll.u32 %v8756, 16
        %v8920 = vrot.slane %v8918, 5
        %v8921 = vsel %vm1526, %v8916, %v8920
        %v8922 = vshrl.u32 %v8756, 16
        %v8924 = vrot.slane %v8922, 4
        %v8925 = vor.u32 %v8924, %v8920
        %v8926 = vrot.slane %v8925, 4
        %v8928 = vshll.u32 %v8757, 16
        %v8930 = vrot.slane %v8928, 5
        %v8931 = vsel %vm1526, %v8926, %v8930
        %v8933 = vshrl.u32 %v8758, 16
        %v8935 = vrot.slane %v8933, 4
        %v8936 = vshll.u32 %v8758, 16
        %v8938 = vrot.slane %v8936, 5
        %v8939 = vor.u32 %v8935, %v8938
        %v8940 = vrot.slane %v8939, 4
        %v8942 = vshll.u32 %v8759, 16
        %v8944 = vrot.slane %v8942, 5
        %v8945 = vsel %vm1526, %v8940, %v8944
        %v8946 = vshrl.u32 %v8759, 16
        %v8948 = vrot.slane %v8946, 4
        %v8949 = vor.u32 %v8948, %v8944
        %v8950 = vrot.slane %v8949, 4
        %v8952 = vshll.u32 %v8760, 16
        %v8954 = vrot.slane %v8952, 5
        %v8955 = vsel %vm1526, %v8950, %v8954
        %v8957 = vshrl.u32 %v8761, 16
        %v8959 = vrot.slane %v8957, 4
        %v8960 = vshll.u32 %v8761, 16
        %v8962 = vrot.slane %v8960, 5
        %v8963 = vor.u32 %v8959, %v8962
        %v8964 = vrot.slane %v8963, 4
        %v8966 = vshll.u32 %v8762, 16
        %v8968 = vrot.slane %v8966, 5
        %v8969 = vsel %vm1526, %v8964, %v8968
        %v8970 = vshrl.u32 %v8762, 16
        %v8972 = vrot.slane %v8970, 4
        %v8973 = vor.u32 %v8972, %v8968
        %v8974 = vrot.slane %v8973, 4
        %v8976 = vshll.u32 %v8763, 16
        %v8978 = vrot.slane %v8976, 5
        %v8979 = vsel %vm1526, %v8974, %v8978
        %v8981 = vshrl.u32 %v8764, 16
        %v8983 = vrot.slane %v8981, 4
        %v8984 = vshll.u32 %v8764, 16
        %v8986 = vrot.slane %v8984, 5
        %v8987 = vor.u32 %v8983, %v8986
        %v8988 = vrot.slane %v8987, 4
        %v8990 = vshll.u32 %v8765, 16
        %v8992 = vrot.slane %v8990, 5
        %v8993 = vsel %vm1526, %v8988, %v8992
        %v8994 = vshrl.u32 %v8765, 16
        %v8996 = vrot.slane %v8994, 4
        %v8997 = vor.u32 %v8996, %v8992
        %v8998 = vrot.slane %v8997, 4
        %v9000 = vshll.u32 %v8766, 16
        %v9002 = vrot.slane %v9000, 5
        %v9003 = vsel %vm1526, %v8998, %v9002
        %v9005 = vshrl.u32 %v8767, 16
        %v9007 = vrot.slane %v9005, 4
        %v9008 = vshll.u32 %v8767, 16
        %v9010 = vrot.slane %v9008, 5
        %v9011 = vor.u32 %v9007, %v9010
        %v9012 = vrot.slane %v9011, 4
        %v9014 = vshll.u32 %v8768, 16
        %v9016 = vrot.slane %v9014, 5
        %v9017 = vsel %vm1526, %v9012, %v9016
        %v9018 = vshrl.u32 %v8768, 16
        %v9020 = vrot.slane %v9018, 4
        %v9021 = vor.u32 %v9020, %v9016
        %v9022 = vrot.slane %v9021, 4
        %v9024 = vshll.u32 %v8769, 16
        %v9026 = vrot.slane %v9024, 5
        %v9027 = vsel %vm1526, %v9022, %v9026
        %v9029 = vshrl.u32 %v8770, 16
        %v9031 = vrot.slane %v9029, 4
        %v9032 = vshll.u32 %v8770, 16
        %v9034 = vrot.slane %v9032, 5
        %v9035 = vor.u32 %v9031, %v9034
        %v9036 = vrot.slane %v9035, 4
        %v9038 = vshll.u32 %v8771, 16
        %v9040 = vrot.slane %v9038, 5
        %v9041 = vsel %vm1526, %v9036, %v9040
        %v9042 = vshrl.u32 %v8771, 16
        %v9044 = vrot.slane %v9042, 4
        %v9045 = vor.u32 %v9044, %v9040
        %v9046 = vrot.slane %v9045, 4
        %v9048 = vshll.u32 %v8772, 16
        %v9050 = vrot.slane %v9048, 5
        %v9051 = vsel %vm1526, %v9046, %v9050
        %v9053 = vshrl.u32 %v8773, 16
        %v9055 = vrot.slane %v9053, 4
        %v9056 = vshll.u32 %v8773, 16
        %v9058 = vrot.slane %v9056, 5
        %v9059 = vor.u32 %v9055, %v9058
        %v9060 = vrot.slane %v9059, 4
        %v9062 = vshll.u32 %v8774, 16
        %v9064 = vrot.slane %v9062, 5
        %v9065 = vsel %vm1526, %v9060, %v9064
        %v9066 = vshrl.u32 %v8774, 16
        %v9068 = vrot.slane %v9066, 4
        %v9069 = vor.u32 %v9068, %v9064
        %v9070 = vrot.slane %v9069, 4
        %v9072 = vshll.u32 %v8775, 16
        %v9074 = vrot.slane %v9072, 5
        %v9075 = vsel %vm1526, %v9070, %v9074
        %v9077 = vshrl.u32 %v8776, 16
        %v9079 = vrot.slane %v9077, 4
        %v9080 = vshll.u32 %v8776, 16
        %v9082 = vrot.slane %v9080, 5
        %v9083 = vor.u32 %v9079, %v9082
        %v9084 = vrot.slane %v9083, 4
        %v9086 = vshll.u32 %v8777, 16
        %v9088 = vrot.slane %v9086, 5
        %v9089 = vsel %vm1526, %v9084, %v9088
        %v9090 = vshrl.u32 %v8777, 16
        %v9092 = vrot.slane %v9090, 4
        %v9093 = vor.u32 %v9092, %v9088
        %v9094 = vrot.slane %v9093, 4
        %v9096 = vshll.u32 %v8778, 16
        %v9098 = vrot.slane %v9096, 5
        %v9099 = vsel %vm1526, %v9094, %v9098
        %v9101 = vshrl.u32 %v8779, 16
        %v9103 = vrot.slane %v9101, 4
        %v9104 = vshll.u32 %v8779, 16
        %v9106 = vrot.slane %v9104, 5
        %v9107 = vor.u32 %v9103, %v9106
        %v9108 = vrot.slane %v9107, 4
        %v9110 = vshll.u32 %v8780, 16
        %v9112 = vrot.slane %v9110, 5
        %v9113 = vsel %vm1526, %v9108, %v9112
        %v9114 = vshrl.u32 %v8780, 16
        %v9116 = vrot.slane %v9114, 4
        %v9117 = vor.u32 %v9116, %v9112
        %v9118 = vrot.slane %v9117, 4
        %v9120 = vshll.u32 %v8781, 16
        %v9122 = vrot.slane %v9120, 5
        %v9123 = vsel %vm1526, %v9118, %v9122
        %v9125 = vshrl.u32 %v8782, 16
        %v9127 = vrot.slane %v9125, 4
        %v9128 = vshll.u32 %v8782, 16
        %v9130 = vrot.slane %v9128, 5
        %v9131 = vor.u32 %v9127, %v9130
        %v9132 = vrot.slane %v9131, 4
        %v9134 = vshll.u32 %v8783, 16
        %v9136 = vrot.slane %v9134, 5
        %v9137 = vsel %vm1526, %v9132, %v9136
        %v9138 = vshrl.u32 %v8783, 16
        %v9140 = vrot.slane %v9138, 4
        %v9141 = vor.u32 %v9140, %v9136
        %v9142 = vrot.slane %v9141, 4
        %v9144 = vshll.u32 %v8784, 16
        %v9146 = vrot.slane %v9144, 5
        %v9147 = vsel %vm1526, %v9142, %v9146
        %v9149 = vshrl.u32 %v8785, 16
        %v9151 = vrot.slane %v9149, 4
        %v9152 = vshll.u32 %v8785, 16
        %v9154 = vrot.slane %v9152, 5
        %v9155 = vor.u32 %v9151, %v9154
        %v9156 = vrot.slane %v9155, 4
        %v9158 = vshll.u32 %v8786, 16
        %v9160 = vrot.slane %v9158, 5
        %v9161 = vsel %vm1526, %v9156, %v9160
        %v9162 = vshrl.u32 %v8786, 16
        %v9164 = vrot.slane %v9162, 4
        %v9165 = vor.u32 %v9164, %v9160
        %v9166 = vrot.slane %v9165, 4
        %v9168 = vshll.u32 %v8787, 16
        %v9170 = vrot.slane %v9168, 5
        %v9171 = vsel %vm1526, %v9166, %v9170
        %s9172 = scalar_lea.vmem [#allocation11], 20
        %v9173 = vld [vmem:[%s9172] sm:$0xf]
        %v9174 = vunpack.c.l.b16 %v8801
        %v9175 = vunpack.c.l.b16 %v8811
        %v9176 = vunpack.c.l.b16 %v8825
        %v9177 = vunpack.c.l.b16 %v8835
        %v9178 = vunpack.c.l.b16 %v8849
        %v9179 = vunpack.c.l.b16 %v8859
        %v9180 = vunpack.c.l.b16 %v8873
        %v9181 = vunpack.c.l.b16 %v8883
        %v9182 = vunpack.c.l.b16 %v8897
        %v9183 = vunpack.c.l.b16 %v8907
        %v9184 = vunpack.c.l.b16 %v8921
        %v9185 = vunpack.c.l.b16 %v8931
        %v9186 = vunpack.c.l.b16 %v8945
        %v9187 = vunpack.c.l.b16 %v8955
        %v9188 = vunpack.c.l.b16 %v8969
        %v9189 = vunpack.c.l.b16 %v8979
        %v9190 = vunpack.c.l.b16 %v8993
        %v9191 = vunpack.c.l.b16 %v9003
        %v9192 = vunpack.c.l.b16 %v9017
        %v9193 = vunpack.c.l.b16 %v9027
        %v9194 = vunpack.c.l.b16 %v9041
        %v9195 = vunpack.c.l.b16 %v9051
        %v9196 = vunpack.c.l.b16 %v9065
        %v9197 = vunpack.c.l.b16 %v9075
        %v9198 = vunpack.c.l.b16 %v9089
        %v9199 = vunpack.c.l.b16 %v9099
        %v9200 = vunpack.c.l.b16 %v9113
        %v9201 = vunpack.c.l.b16 %v9123
        %v9202 = vunpack.c.l.b16 %v9137
        %v9203 = vunpack.c.l.b16 %v9147
        %v9204 = vunpack.c.l.b16 %v9161
        %v9205 = vunpack.c.l.b16 %v9171
        %v9206 = vpack.c.b16 %v9175, %v9174
        %v9207 = vpack.c.b16 %v9177, %v9176
        %v9208 = vpack.c.b16 %v9179, %v9178
        %v9209 = vpack.c.b16 %v9181, %v9180
        %v9210 = vpack.c.b16 %v9183, %v9182
        %v9211 = vpack.c.b16 %v9185, %v9184
        %v9212 = vpack.c.b16 %v9187, %v9186
        %v9213 = vpack.c.b16 %v9189, %v9188
        %v9214 = vpack.c.b16 %v9191, %v9190
        %v9215 = vpack.c.b16 %v9193, %v9192
        %v9216 = vpack.c.b16 %v9195, %v9194
        %v9217 = vpack.c.b16 %v9197, %v9196
        %v9218 = vpack.c.b16 %v9199, %v9198
        %v9219 = vpack.c.b16 %v9201, %v9200
        %v9220 = vpack.c.b16 %v9203, %v9202
        %v9221 = vpack.c.b16 %v9205, %v9204
        %v9223 = vsel %vm1002, %v9206, 0
        %v9226 = vsel %vm1002, %v9207, 0
        %v9229 = vsel %vm1002, %v9208, 0
        %v9232 = vsel %vm1002, %v9209, 0
        %v9235 = vsel %vm1002, %v9210, 0
        %v9238 = vsel %vm1002, %v9211, 0
        %v9241 = vsel %vm1002, %v9212, 0
        %v9244 = vsel %vm1002, %v9213, 0
        %v9247 = vsel %vm1002, %v9214, 0
        %v9250 = vsel %vm1002, %v9215, 0
        %v9253 = vsel %vm1002, %v9216, 0
        %v9256 = vsel %vm1002, %v9217, 0
        %v9259 = vsel %vm1002, %v9218, 0
        %v9262 = vsel %vm1002, %v9219, 0
        %v9265 = vsel %vm1002, %v9220, 0
        %v9268 = vsel %vm1002, %v9221, 0
        %v9271 = vsel %vm1051, %v9173, 0
        %9273 = vmatprep.subr.bf16.mxu0 0
        %9274 = vmatpush1.bf16.msra.mxu0 %v9271
        %9275 = vmatprep.subr.bf16.mxu0 0
        %9276 = vmatpush1.bf16.msra.mxu0 0
        %9277 = vmatprep.subr.bf16.mxu0 0
        %9278 = vmatpush1.bf16.msra.mxu0 0
        %9279 = vmatprep.subr.bf16.mxu0 0
        %9280 = vmatpush1.bf16.msra.mxu0 0
        %9281 = vmatprep.subr.bf16.mxu0 0
        %9282 = vmatpush1.bf16.msra.mxu0 0
        %9283 = vmatprep.subr.bf16.mxu0 0
        %9284 = vmatpush1.bf16.msra.mxu0 0
        %9285 = vmatprep.subr.bf16.mxu0 0
        %9286 = vmatpush1.bf16.msra.mxu0 0
        %9287 = vmatprep.subr.bf16.mxu0 0
        %9288 = vmatpush1.bf16.msra.mxu0 0
        %9289 = vmatprep.subr.bf16.mxu0 0
        %9290 = vmatpush1.bf16.msra.mxu0 0
        %9291 = vmatprep.subr.bf16.mxu0 0
        %9292 = vmatpush1.bf16.msra.mxu0 0
        %9293 = vmatprep.subr.bf16.mxu0 0
        %9294 = vmatpush1.bf16.msra.mxu0 0
        %9295 = vmatprep.subr.bf16.mxu0 0
        %9296 = vmatpush1.bf16.msra.mxu0 0
        %9297 = vmatprep.subr.bf16.mxu0 0
        %9298 = vmatpush1.bf16.msra.mxu0 0
        %9299 = vmatprep.subr.bf16.mxu0 0
        %9300 = vmatpush1.bf16.msra.mxu0 0
        %9301 = vmatprep.subr.bf16.mxu0 0
        %9302 = vmatpush1.bf16.msra.mxu0 0
        %9303 = vmatprep.subr.bf16.mxu0 0
        %9304 = vmatpush1.bf16.msra.mxu0 0
        %9305 = vmatprep.mubr.bf16.mxu0 0
        %9306 = vmatmul.mubr.bf16.gmra.mrb[0].mxu0 %v9223
        %v9307 = vpop.f32.mrb[0].mxu0
        %v9308 = vadd.f32 0.0, %v9307
        %v9309 = vpop.f32.mrb[0].mxu0
        %v9310 = vpop.f32.mrb[0].mxu0
        %v9311 = vadd.f32 0.0, %v9310
        %v9312 = vpop.f32.mrb[0].mxu0
        %9313 = vmatprep.mubr.bf16.mxu0 0
        %9314 = vmatmul.mubr.bf16.gmra.mrb[0].mxu0 %v9226
        %v9315 = vpop.f32.mrb[0].mxu0
        %v9316 = vadd.f32 0.0, %v9315
        %v9317 = vpop.f32.mrb[0].mxu0
        %v9318 = vpop.f32.mrb[0].mxu0
        %v9319 = vadd.f32 0.0, %v9318
        %v9320 = vpop.f32.mrb[0].mxu0
        %9321 = vmatprep.mubr.bf16.mxu0 0
        %9322 = vmatmul.mubr.bf16.gmra.mrb[0].mxu0 %v9229
        %v9323 = vpop.f32.mrb[0].mxu0
        %v9324 = vadd.f32 0.0, %v9323
        %v9325 = vpop.f32.mrb[0].mxu0
        %v9326 = vpop.f32.mrb[0].mxu0
        %v9327 = vadd.f32 0.0, %v9326
        %v9328 = vpop.f32.mrb[0].mxu0
        %9329 = vmatprep.mubr.bf16.mxu0 0
        %9330 = vmatmul.mubr.bf16.gmra.mrb[0].mxu0 %v9232
        %v9331 = vpop.f32.mrb[0].mxu0
        %v9332 = vadd.f32 0.0, %v9331
        %v9333 = vpop.f32.mrb[0].mxu0
        %v9334 = vpop.f32.mrb[0].mxu0
        %v9335 = vadd.f32 0.0, %v9334
        %v9336 = vpop.f32.mrb[0].mxu0
        %9337 = vmatprep.mubr.bf16.mxu0 0
        %9338 = vmatmul.mubr.bf16.gmra.mrb[0].mxu0 %v9235
        %v9339 = vpop.f32.mrb[0].mxu0
        %v9340 = vadd.f32 0.0, %v9339
        %v9341 = vpop.f32.mrb[0].mxu0
        %v9342 = vpop.f32.mrb[0].mxu0
        %v9343 = vadd.f32 0.0, %v9342
        %v9344 = vpop.f32.mrb[0].mxu0
        %9345 = vmatprep.mubr.bf16.mxu0 0
        %9346 = vmatmul.mubr.bf16.gmra.mrb[0].mxu0 %v9238
        %v9347 = vpop.f32.mrb[0].mxu0
        %v9348 = vadd.f32 0.0, %v9347
        %v9349 = vpop.f32.mrb[0].mxu0
        %v9350 = vpop.f32.mrb[0].mxu0
        %v9351 = vadd.f32 0.0, %v9350
        %v9352 = vpop.f32.mrb[0].mxu0
        %9353 = vmatprep.mubr.bf16.mxu0 0
        %9354 = vmatmul.mubr.bf16.gmra.mrb[0].mxu0 %v9241
        %v9355 = vpop.f32.mrb[0].mxu0
        %v9356 = vadd.f32 0.0, %v9355
        %v9357 = vpop.f32.mrb[0].mxu0
        %v9358 = vpop.f32.mrb[0].mxu0
        %v9359 = vadd.f32 0.0, %v9358
        %v9360 = vpop.f32.mrb[0].mxu0
        %9361 = vmatprep.mubr.bf16.mxu0 0
        %9362 = vmatmul.mubr.bf16.gmra.mrb[0].mxu0 %v9244
        %v9363 = vpop.f32.mrb[0].mxu0
        %v9364 = vadd.f32 0.0, %v9363
        %v9365 = vpop.f32.mrb[0].mxu0
        %v9366 = vpop.f32.mrb[0].mxu0
        %v9367 = vadd.f32 0.0, %v9366
        %v9368 = vpop.f32.mrb[0].mxu0
        %9369 = vmatprep.mubr.bf16.mxu0 0
        %9370 = vmatmul.mubr.bf16.gmra.mrb[0].mxu0 %v9247
        %v9371 = vpop.f32.mrb[0].mxu0
        %v9372 = vadd.f32 0.0, %v9371
        %v9373 = vpop.f32.mrb[0].mxu0
        %v9374 = vpop.f32.mrb[0].mxu0
        %v9375 = vadd.f32 0.0, %v9374
        %v9376 = vpop.f32.mrb[0].mxu0
        %9377 = vmatprep.mubr.bf16.mxu0 0
        %9378 = vmatmul.mubr.bf16.gmra.mrb[0].mxu0 %v9250
        %v9379 = vpop.f32.mrb[0].mxu0
        %v9380 = vadd.f32 0.0, %v9379
        %v9381 = vpop.f32.mrb[0].mxu0
        %v9382 = vpop.f32.mrb[0].mxu0
        %v9383 = vadd.f32 0.0, %v9382
        %v9384 = vpop.f32.mrb[0].mxu0
        %9385 = vmatprep.mubr.bf16.mxu0 0
        %9386 = vmatmul.mubr.bf16.gmra.mrb[0].mxu0 %v9253
        %v9387 = vpop.f32.mrb[0].mxu0
        %v9388 = vadd.f32 0.0, %v9387
        %v9389 = vpop.f32.mrb[0].mxu0
        %v9390 = vpop.f32.mrb[0].mxu0
        %v9391 = vadd.f32 0.0, %v9390
        %v9392 = vpop.f32.mrb[0].mxu0
        %9393 = vmatprep.mubr.bf16.mxu0 0
        %9394 = vmatmul.mubr.bf16.gmra.mrb[0].mxu0 %v9256
        %v9395 = vpop.f32.mrb[0].mxu0
        %v9396 = vadd.f32 0.0, %v9395
        %v9397 = vpop.f32.mrb[0].mxu0
        %v9398 = vpop.f32.mrb[0].mxu0
        %v9399 = vadd.f32 0.0, %v9398
        %v9400 = vpop.f32.mrb[0].mxu0
        %9401 = vmatprep.mubr.bf16.mxu0 0
        %9402 = vmatmul.mubr.bf16.gmra.mrb[0].mxu0 %v9259
        %v9403 = vpop.f32.mrb[0].mxu0
        %v9404 = vadd.f32 0.0, %v9403
        %v9405 = vpop.f32.mrb[0].mxu0
        %v9406 = vpop.f32.mrb[0].mxu0
        %v9407 = vadd.f32 0.0, %v9406
        %v9408 = vpop.f32.mrb[0].mxu0
        %9409 = vmatprep.mubr.bf16.mxu0 0
        %9410 = vmatmul.mubr.bf16.gmra.mrb[0].mxu0 %v9262
        %v9411 = vpop.f32.mrb[0].mxu0
        %v9412 = vadd.f32 0.0, %v9411
        %v9413 = vpop.f32.mrb[0].mxu0
        %v9414 = vpop.f32.mrb[0].mxu0
        %v9415 = vadd.f32 0.0, %v9414
        %v9416 = vpop.f32.mrb[0].mxu0
        %9417 = vmatprep.mubr.bf16.mxu0 0
        %9418 = vmatmul.mubr.bf16.gmra.mrb[0].mxu0 %v9265
        %v9419 = vpop.f32.mrb[0].mxu0
        %v9420 = vadd.f32 0.0, %v9419
        %v9421 = vpop.f32.mrb[0].mxu0
        %v9422 = vpop.f32.mrb[0].mxu0
        %v9423 = vadd.f32 0.0, %v9422
        %v9424 = vpop.f32.mrb[0].mxu0
        %9425 = vmatprep.mubr.bf16.mxu0 0
        %9426 = vmatmul.mubr.bf16.gmra.mrb[0].mxu0 %v9268
        %v9427 = vpop.f32.mrb[0].mxu0
        %v9428 = vadd.f32 0.0, %v9427
        %v9429 = vpop.f32.mrb[0].mxu0
        %v9430 = vpop.f32.mrb[0].mxu0
        %v9431 = vadd.f32 0.0, %v9430
        %v9432 = vpop.f32.mrb[0].mxu0
        %9433 = vdwg.mxu0
        %v9434 = vadd.f32 %v8708, %v9308
        %v9435 = vadd.f32 %v8709, %v9311
        %v9436 = vadd.f32 %v8710, %v9316
        %v9437 = vadd.f32 %v8711, %v9319
        %v9438 = vadd.f32 %v8712, %v9324
        %v9439 = vadd.f32 %v8713, %v9327
        %v9440 = vadd.f32 %v8714, %v9332
        %v9441 = vadd.f32 %v8715, %v9335
        %v9442 = vadd.f32 %v8716, %v9340
        %v9443 = vadd.f32 %v8717, %v9343
        %v9444 = vadd.f32 %v8718, %v9348
        %v9445 = vadd.f32 %v8719, %v9351
        %v9446 = vadd.f32 %v8720, %v9356
        %v9447 = vadd.f32 %v8721, %v9359
        %v9448 = vadd.f32 %v8722, %v9364
        %v9449 = vadd.f32 %v8723, %v9367
        %v9450 = vadd.f32 %v8724, %v9372
        %v9451 = vadd.f32 %v8725, %v9375
        %v9452 = vadd.f32 %v8726, %v9380
        %v9453 = vadd.f32 %v8727, %v9383
        %v9454 = vadd.f32 %v8728, %v9388
        %v9455 = vadd.f32 %v8729, %v9391
        %v9456 = vadd.f32 %v8730, %v9396
        %v9457 = vadd.f32 %v8731, %v9399
        %v9458 = vadd.f32 %v8732, %v9404
        %v9459 = vadd.f32 %v8733, %v9407
        %v9460 = vadd.f32 %v8734, %v9412
        %v9461 = vadd.f32 %v8735, %v9415
        %v9462 = vadd.f32 %v8736, %v9420
        %v9463 = vadd.f32 %v8737, %v9423
        %v9464 = vadd.f32 %v8738, %v9428
        %v9465 = vadd.f32 %v8739, %v9431
        %s9466 = scalar_lea.vmem [#allocation3], 32
        %v9467 = vld [vmem:[%s9466] sm:$0x8]
        %v9468 = vld [vmem:[%s9466 + $0x4] sm:$0xf]
        %v9469 = vld [vmem:[%s9466 + $0x8] sm:$0xf]
        %v9470 = vld [vmem:[%s9466 + $0x10] sm:$0x8]
        %v9471 = vld [vmem:[%s9466 + $0x14] sm:$0xf]
        %v9472 = vld [vmem:[%s9466 + $0x18] sm:$0xf]
        %v9473 = vld [vmem:[%s9466 + $0x20] sm:$0x8]
        %v9474 = vld [vmem:[%s9466 + $0x24] sm:$0xf]
        %v9475 = vld [vmem:[%s9466 + $0x28] sm:$0xf]
        %v9476 = vld [vmem:[%s9466 + $0x30] sm:$0x8]
        %v9477 = vld [vmem:[%s9466 + $0x34] sm:$0xf]
        %v9478 = vld [vmem:[%s9466 + $0x38] sm:$0xf]
        %v9479 = vld [vmem:[%s9466 + $0x40] sm:$0x8]
        %v9480 = vld [vmem:[%s9466 + $0x44] sm:$0xf]
        %v9481 = vld [vmem:[%s9466 + $0x48] sm:$0xf]
        %v9482 = vld [vmem:[%s9466 + $0x50] sm:$0x8]
        %v9483 = vld [vmem:[%s9466 + $0x54] sm:$0xf]
        %v9484 = vld [vmem:[%s9466 + $0x58] sm:$0xf]
        %v9485 = vld [vmem:[%s9466 + $0x60] sm:$0x8]
        %v9486 = vld [vmem:[%s9466 + $0x64] sm:$0xf]
        %v9487 = vld [vmem:[%s9466 + $0x68] sm:$0xf]
        %v9488 = vld [vmem:[%s9466 + $0x70] sm:$0x8]
        %v9489 = vld [vmem:[%s9466 + $0x74] sm:$0xf]
        %v9490 = vld [vmem:[%s9466 + $0x78] sm:$0xf]
        %v9491 = vld [vmem:[%s9466 + $0x80] sm:$0x8]
        %v9492 = vld [vmem:[%s9466 + $0x84] sm:$0xf]
        %v9493 = vld [vmem:[%s9466 + $0x88] sm:$0xf]
        %v9494 = vld [vmem:[%s9466 + $0x90] sm:$0x8]
        %v9495 = vld [vmem:[%s9466 + $0x94] sm:$0xf]
        %v9496 = vld [vmem:[%s9466 + $0x98] sm:$0xf]
        %v9497 = vld [vmem:[%s9466 + $0xa0] sm:$0x8]
        %v9498 = vld [vmem:[%s9466 + $0xa4] sm:$0xf]
        %v9499 = vld [vmem:[%s9466 + $0xa8] sm:$0xf]
        %v9500 = vld [vmem:[%s9466 + $0xb0] sm:$0x8]
        %v9501 = vld [vmem:[%s9466 + $0xb4] sm:$0xf]
        %v9502 = vld [vmem:[%s9466 + $0xb8] sm:$0xf]
        %v9503 = vld [vmem:[%s9466 + $0xc0] sm:$0x8]
        %v9504 = vld [vmem:[%s9466 + $0xc4] sm:$0xf]
        %v9505 = vld [vmem:[%s9466 + $0xc8] sm:$0xf]
        %v9506 = vld [vmem:[%s9466 + $0xd0] sm:$0x8]
        %v9507 = vld [vmem:[%s9466 + $0xd4] sm:$0xf]
        %v9508 = vld [vmem:[%s9466 + $0xd8] sm:$0xf]
        %v9509 = vld [vmem:[%s9466 + $0xe0] sm:$0x8]
        %v9510 = vld [vmem:[%s9466 + $0xe4] sm:$0xf]
        %v9511 = vld [vmem:[%s9466 + $0xe8] sm:$0xf]
        %v9512 = vld [vmem:[%s9466 + $0xf0] sm:$0x8]
        %v9513 = vld [vmem:[%s9466 + $0xf4] sm:$0xf]
        %v9514 = vld [vmem:[%s9466 + $0xf8] sm:$0xf]
        %v9516 = vshrl.u32 %v9467, 16
        %v9518 = vrot.slane %v9516, 7
        %v9519 = vrot.slane %v9518, 4
        %v9521 = vshrl.u32 %v9468, 16
        %v9523 = vrot.slane %v9521, 7
        %v9524 = vshll.u32 %v9468, 16
        %v9526 = vor.u32 %v9523, %v9524
        %v9527 = vsel %vm566, %v9519, %v9526
        %v9528 = vrot.slane %v9523, 4
        %v9530 = vshrl.u32 %v9469, 16
        %v9532 = vrot.slane %v9530, 7
        %v9533 = vshll.u32 %v9469, 16
        %v9535 = vor.u32 %v9532, %v9533
        %v9536 = vsel %vm566, %v9528, %v9535
        %v9538 = vshrl.u32 %v9470, 16
        %v9540 = vrot.slane %v9538, 7
        %v9541 = vrot.slane %v9540, 4
        %v9543 = vshrl.u32 %v9471, 16
        %v9545 = vrot.slane %v9543, 7
        %v9546 = vshll.u32 %v9471, 16
        %v9548 = vor.u32 %v9545, %v9546
        %v9549 = vsel %vm566, %v9541, %v9548
        %v9550 = vrot.slane %v9545, 4
        %v9552 = vshrl.u32 %v9472, 16
        %v9554 = vrot.slane %v9552, 7
        %v9555 = vshll.u32 %v9472, 16
        %v9557 = vor.u32 %v9554, %v9555
        %v9558 = vsel %vm566, %v9550, %v9557
        %v9560 = vshrl.u32 %v9473, 16
        %v9562 = vrot.slane %v9560, 7
        %v9563 = vrot.slane %v9562, 4
        %v9565 = vshrl.u32 %v9474, 16
        %v9567 = vrot.slane %v9565, 7
        %v9568 = vshll.u32 %v9474, 16
        %v9570 = vor.u32 %v9567, %v9568
        %v9571 = vsel %vm566, %v9563, %v9570
        %v9572 = vrot.slane %v9567, 4
        %v9574 = vshrl.u32 %v9475, 16
        %v9576 = vrot.slane %v9574, 7
        %v9577 = vshll.u32 %v9475, 16
        %v9579 = vor.u32 %v9576, %v9577
        %v9580 = vsel %vm566, %v9572, %v9579
        %v9582 = vshrl.u32 %v9476, 16
        %v9584 = vrot.slane %v9582, 7
        %v9585 = vrot.slane %v9584, 4
        %v9587 = vshrl.u32 %v9477, 16
        %v9589 = vrot.slane %v9587, 7
        %v9590 = vshll.u32 %v9477, 16
        %v9592 = vor.u32 %v9589, %v9590
        %v9593 = vsel %vm566, %v9585, %v9592
        %v9594 = vrot.slane %v9589, 4
        %v9596 = vshrl.u32 %v9478, 16
        %v9598 = vrot.slane %v9596, 7
        %v9599 = vshll.u32 %v9478, 16
        %v9601 = vor.u32 %v9598, %v9599
        %v9602 = vsel %vm566, %v9594, %v9601
        %v9604 = vshrl.u32 %v9479, 16
        %v9606 = vrot.slane %v9604, 7
        %v9607 = vrot.slane %v9606, 4
        %v9609 = vshrl.u32 %v9480, 16
        %v9611 = vrot.slane %v9609, 7
        %v9612 = vshll.u32 %v9480, 16
        %v9614 = vor.u32 %v9611, %v9612
        %v9615 = vsel %vm566, %v9607, %v9614
        %v9616 = vrot.slane %v9611, 4
        %v9618 = vshrl.u32 %v9481, 16
        %v9620 = vrot.slane %v9618, 7
        %v9621 = vshll.u32 %v9481, 16
        %v9623 = vor.u32 %v9620, %v9621
        %v9624 = vsel %vm566, %v9616, %v9623
        %v9626 = vshrl.u32 %v9482, 16
        %v9628 = vrot.slane %v9626, 7
        %v9629 = vrot.slane %v9628, 4
        %v9631 = vshrl.u32 %v9483, 16
        %v9633 = vrot.slane %v9631, 7
        %v9634 = vshll.u32 %v9483, 16
        %v9636 = vor.u32 %v9633, %v9634
        %v9637 = vsel %vm566, %v9629, %v9636
        %v9638 = vrot.slane %v9633, 4
        %v9640 = vshrl.u32 %v9484, 16
        %v9642 = vrot.slane %v9640, 7
        %v9643 = vshll.u32 %v9484, 16
        %v9645 = vor.u32 %v9642, %v9643
        %v9646 = vsel %vm566, %v9638, %v9645
        %v9648 = vshrl.u32 %v9485, 16
        %v9650 = vrot.slane %v9648, 7
        %v9651 = vrot.slane %v9650, 4
        %v9653 = vshrl.u32 %v9486, 16
        %v9655 = vrot.slane %v9653, 7
        %v9656 = vshll.u32 %v9486, 16
        %v9658 = vor.u32 %v9655, %v9656
        %v9659 = vsel %vm566, %v9651, %v9658
        %v9660 = vrot.slane %v9655, 4
        %v9662 = vshrl.u32 %v9487, 16
        %v9664 = vrot.slane %v9662, 7
        %v9665 = vshll.u32 %v9487, 16
        %v9667 = vor.u32 %v9664, %v9665
        %v9668 = vsel %vm566, %v9660, %v9667
        %v9670 = vshrl.u32 %v9488, 16
        %v9672 = vrot.slane %v9670, 7
        %v9673 = vrot.slane %v9672, 4
        %v9675 = vshrl.u32 %v9489, 16
        %v9677 = vrot.slane %v9675, 7
        %v9678 = vshll.u32 %v9489, 16
        %v9680 = vor.u32 %v9677, %v9678
        %v9681 = vsel %vm566, %v9673, %v9680
        %v9682 = vrot.slane %v9677, 4
        %v9684 = vshrl.u32 %v9490, 16
        %v9686 = vrot.slane %v9684, 7
        %v9687 = vshll.u32 %v9490, 16
        %v9689 = vor.u32 %v9686, %v9687
        %v9690 = vsel %vm566, %v9682, %v9689
        %v9692 = vshrl.u32 %v9491, 16
        %v9694 = vrot.slane %v9692, 7
        %v9695 = vrot.slane %v9694, 4
        %v9697 = vshrl.u32 %v9492, 16
        %v9699 = vrot.slane %v9697, 7
        %v9700 = vshll.u32 %v9492, 16
        %v9702 = vor.u32 %v9699, %v9700
        %v9703 = vsel %vm566, %v9695, %v9702
        %v9704 = vrot.slane %v9699, 4
        %v9706 = vshrl.u32 %v9493, 16
        %v9708 = vrot.slane %v9706, 7
        %v9709 = vshll.u32 %v9493, 16
        %v9711 = vor.u32 %v9708, %v9709
        %v9712 = vsel %vm566, %v9704, %v9711
        %v9714 = vshrl.u32 %v9494, 16
        %v9716 = vrot.slane %v9714, 7
        %v9717 = vrot.slane %v9716, 4
        %v9719 = vshrl.u32 %v9495, 16
        %v9721 = vrot.slane %v9719, 7
        %v9722 = vshll.u32 %v9495, 16
        %v9724 = vor.u32 %v9721, %v9722
        %v9725 = vsel %vm566, %v9717, %v9724
        %v9726 = vrot.slane %v9721, 4
        %v9728 = vshrl.u32 %v9496, 16
        %v9730 = vrot.slane %v9728, 7
        %v9731 = vshll.u32 %v9496, 16
        %v9733 = vor.u32 %v9730, %v9731
        %v9734 = vsel %vm566, %v9726, %v9733
        %v9736 = vshrl.u32 %v9497, 16
        %v9738 = vrot.slane %v9736, 7
        %v9739 = vrot.slane %v9738, 4
        %v9741 = vshrl.u32 %v9498, 16
        %v9743 = vrot.slane %v9741, 7
        %v9744 = vshll.u32 %v9498, 16
        %v9746 = vor.u32 %v9743, %v9744
        %v9747 = vsel %vm566, %v9739, %v9746
        %v9748 = vrot.slane %v9743, 4
        %v9750 = vshrl.u32 %v9499, 16
        %v9752 = vrot.slane %v9750, 7
        %v9753 = vshll.u32 %v9499, 16
        %v9755 = vor.u32 %v9752, %v9753
        %v9756 = vsel %vm566, %v9748, %v9755
        %v9758 = vshrl.u32 %v9500, 16
        %v9760 = vrot.slane %v9758, 7
        %v9761 = vrot.slane %v9760, 4
        %v9763 = vshrl.u32 %v9501, 16
        %v9765 = vrot.slane %v9763, 7
        %v9766 = vshll.u32 %v9501, 16
        %v9768 = vor.u32 %v9765, %v9766
        %v9769 = vsel %vm566, %v9761, %v9768
        %v9770 = vrot.slane %v9765, 4
        %v9772 = vshrl.u32 %v9502, 16
        %v9774 = vrot.slane %v9772, 7
        %v9775 = vshll.u32 %v9502, 16
        %v9777 = vor.u32 %v9774, %v9775
        %v9778 = vsel %vm566, %v9770, %v9777
        %v9780 = vshrl.u32 %v9503, 16
        %v9782 = vrot.slane %v9780, 7
        %v9783 = vrot.slane %v9782, 4
        %v9785 = vshrl.u32 %v9504, 16
        %v9787 = vrot.slane %v9785, 7
        %v9788 = vshll.u32 %v9504, 16
        %v9790 = vor.u32 %v9787, %v9788
        %v9791 = vsel %vm566, %v9783, %v9790
        %v9792 = vrot.slane %v9787, 4
        %v9794 = vshrl.u32 %v9505, 16
        %v9796 = vrot.slane %v9794, 7
        %v9797 = vshll.u32 %v9505, 16
        %v9799 = vor.u32 %v9796, %v9797
        %v9800 = vsel %vm566, %v9792, %v9799
        %v9802 = vshrl.u32 %v9506, 16
        %v9804 = vrot.slane %v9802, 7
        %v9805 = vrot.slane %v9804, 4
        %v9807 = vshrl.u32 %v9507, 16
        %v9809 = vrot.slane %v9807, 7
        %v9810 = vshll.u32 %v9507, 16
        %v9812 = vor.u32 %v9809, %v9810
        %v9813 = vsel %vm566, %v9805, %v9812
        %v9814 = vrot.slane %v9809, 4
        %v9816 = vshrl.u32 %v9508, 16
        %v9818 = vrot.slane %v9816, 7
        %v9819 = vshll.u32 %v9508, 16
        %v9821 = vor.u32 %v9818, %v9819
        %v9822 = vsel %vm566, %v9814, %v9821
        %v9824 = vshrl.u32 %v9509, 16
        %v9826 = vrot.slane %v9824, 7
        %v9827 = vrot.slane %v9826, 4
        %v9829 = vshrl.u32 %v9510, 16
        %v9831 = vrot.slane %v9829, 7
        %v9832 = vshll.u32 %v9510, 16
        %v9834 = vor.u32 %v9831, %v9832
        %v9835 = vsel %vm566, %v9827, %v9834
        %v9836 = vrot.slane %v9831, 4
        %v9838 = vshrl.u32 %v9511, 16
        %v9840 = vrot.slane %v9838, 7
        %v9841 = vshll.u32 %v9511, 16
        %v9843 = vor.u32 %v9840, %v9841
        %v9844 = vsel %vm566, %v9836, %v9843
        %v9846 = vshrl.u32 %v9512, 16
        %v9848 = vrot.slane %v9846, 7
        %v9849 = vrot.slane %v9848, 4
        %v9851 = vshrl.u32 %v9513, 16
        %v9853 = vrot.slane %v9851, 7
        %v9854 = vshll.u32 %v9513, 16
        %v9856 = vor.u32 %v9853, %v9854
        %v9857 = vsel %vm566, %v9849, %v9856
        %v9858 = vrot.slane %v9853, 4
        %v9860 = vshrl.u32 %v9514, 16
        %v9862 = vrot.slane %v9860, 7
        %v9863 = vshll.u32 %v9514, 16
        %v9865 = vor.u32 %v9862, %v9863
        %v9866 = vsel %vm566, %v9858, %v9865
        %s9867 = scalar_lea.vmem [#allocation11], 24
        %v9868 = vld [vmem:[%s9867] sm:$0xf]
        %v9869 = vunpack.c.l.b16 %v9527
        %v9870 = vunpack.c.l.b16 %v9536
        %v9871 = vunpack.c.l.b16 %v9549
        %v9872 = vunpack.c.l.b16 %v9558
        %v9873 = vunpack.c.l.b16 %v9571
        %v9874 = vunpack.c.l.b16 %v9580
        %v9875 = vunpack.c.l.b16 %v9593
        %v9876 = vunpack.c.l.b16 %v9602
        %v9877 = vunpack.c.l.b16 %v9615
        %v9878 = vunpack.c.l.b16 %v9624
        %v9879 = vunpack.c.l.b16 %v9637
        %v9880 = vunpack.c.l.b16 %v9646
        %v9881 = vunpack.c.l.b16 %v9659
        %v9882 = vunpack.c.l.b16 %v9668
        %v9883 = vunpack.c.l.b16 %v9681
        %v9884 = vunpack.c.l.b16 %v9690
        %v9885 = vunpack.c.l.b16 %v9703
        %v9886 = vunpack.c.l.b16 %v9712
        %v9887 = vunpack.c.l.b16 %v9725
        %v9888 = vunpack.c.l.b16 %v9734
        %v9889 = vunpack.c.l.b16 %v9747
        %v9890 = vunpack.c.l.b16 %v9756
        %v9891 = vunpack.c.l.b16 %v9769
        %v9892 = vunpack.c.l.b16 %v9778
        %v9893 = vunpack.c.l.b16 %v9791
        %v9894 = vunpack.c.l.b16 %v9800
        %v9895 = vunpack.c.l.b16 %v9813
        %v9896 = vunpack.c.l.b16 %v9822
        %v9897 = vunpack.c.l.b16 %v9835
        %v9898 = vunpack.c.l.b16 %v9844
        %v9899 = vunpack.c.l.b16 %v9857
        %v9900 = vunpack.c.l.b16 %v9866
        %v9901 = vpack.c.b16 %v9870, %v9869
        %v9902 = vpack.c.b16 %v9872, %v9871
        %v9903 = vpack.c.b16 %v9874, %v9873
        %v9904 = vpack.c.b16 %v9876, %v9875
        %v9905 = vpack.c.b16 %v9878, %v9877
        %v9906 = vpack.c.b16 %v9880, %v9879
        %v9907 = vpack.c.b16 %v9882, %v9881
        %v9908 = vpack.c.b16 %v9884, %v9883
        %v9909 = vpack.c.b16 %v9886, %v9885
        %v9910 = vpack.c.b16 %v9888, %v9887
        %v9911 = vpack.c.b16 %v9890, %v9889
        %v9912 = vpack.c.b16 %v9892, %v9891
        %v9913 = vpack.c.b16 %v9894, %v9893
        %v9914 = vpack.c.b16 %v9896, %v9895
        %v9915 = vpack.c.b16 %v9898, %v9897
        %v9916 = vpack.c.b16 %v9900, %v9899
        %v9918 = vsel %vm1002, %v9901, 0
        %v9921 = vsel %vm1002, %v9902, 0
        %v9924 = vsel %vm1002, %v9903, 0
        %v9927 = vsel %vm1002, %v9904, 0
        %v9930 = vsel %vm1002, %v9905, 0
        %v9933 = vsel %vm1002, %v9906, 0
        %v9936 = vsel %vm1002, %v9907, 0
        %v9939 = vsel %vm1002, %v9908, 0
        %v9942 = vsel %vm1002, %v9909, 0
        %v9945 = vsel %vm1002, %v9910, 0
        %v9948 = vsel %vm1002, %v9911, 0
        %v9951 = vsel %vm1002, %v9912, 0
        %v9954 = vsel %vm1002, %v9913, 0
        %v9957 = vsel %vm1002, %v9914, 0
        %v9960 = vsel %vm1002, %v9915, 0
        %v9963 = vsel %vm1002, %v9916, 0
        %v9966 = vsel %vm1051, %v9868, 0
        %9968 = vmatprep.subr.bf16.mxu0 0
        %9969 = vmatpush1.bf16.msra.mxu0 %v9966
        %9970 = vmatprep.subr.bf16.mxu0 0
        %9971 = vmatpush1.bf16.msra.mxu0 0
        %9972 = vmatprep.subr.bf16.mxu0 0
        %9973 = vmatpush1.bf16.msra.mxu0 0
        %9974 = vmatprep.subr.bf16.mxu0 0
        %9975 = vmatpush1.bf16.msra.mxu0 0
        %9976 = vmatprep.subr.bf16.mxu0 0
        %9977 = vmatpush1.bf16.msra.mxu0 0
        %9978 = vmatprep.subr.bf16.mxu0 0
        %9979 = vmatpush1.bf16.msra.mxu0 0
        %9980 = vmatprep.subr.bf16.mxu0 0
        %9981 = vmatpush1.bf16.msra.mxu0 0
        %9982 = vmatprep.subr.bf16.mxu0 0
        %9983 = vmatpush1.bf16.msra.mxu0 0
        %9984 = vmatprep.subr.bf16.mxu0 0
        %9985 = vmatpush1.bf16.msra.mxu0 0
        %9986 = vmatprep.subr.bf16.mxu0 0
        %9987 = vmatpush1.bf16.msra.mxu0 0
        %9988 = vmatprep.subr.bf16.mxu0 0
        %9989 = vmatpush1.bf16.msra.mxu0 0
        %9990 = vmatprep.subr.bf16.mxu0 0
        %9991 = vmatpush1.bf16.msra.mxu0 0
        %9992 = vmatprep.subr.bf16.mxu0 0
        %9993 = vmatpush1.bf16.msra.mxu0 0
        %9994 = vmatprep.subr.bf16.mxu0 0
        %9995 = vmatpush1.bf16.msra.mxu0 0
        %9996 = vmatprep.subr.bf16.mxu0 0
        %9997 = vmatpush1.bf16.msra.mxu0 0
        %9998 = vmatprep.subr.bf16.mxu0 0
        %9999 = vmatpush1.bf16.msra.mxu0 0
        %10000 = vmatprep.mubr.bf16.mxu0 0
        %10001 = vmatmul.mubr.bf16.gmra.mrb[0].mxu0 %v9918
        %v10002 = vpop.f32.mrb[0].mxu0
        %v10003 = vadd.f32 0.0, %v10002
        %v10004 = vpop.f32.mrb[0].mxu0
        %v10005 = vpop.f32.mrb[0].mxu0
        %v10006 = vadd.f32 0.0, %v10005
        %v10007 = vpop.f32.mrb[0].mxu0
        %10008 = vmatprep.mubr.bf16.mxu0 0
        %10009 = vmatmul.mubr.bf16.gmra.mrb[0].mxu0 %v9921
        %v10010 = vpop.f32.mrb[0].mxu0
        %v10011 = vadd.f32 0.0, %v10010
        %v10012 = vpop.f32.mrb[0].mxu0
        %v10013 = vpop.f32.mrb[0].mxu0
        %v10014 = vadd.f32 0.0, %v10013
        %v10015 = vpop.f32.mrb[0].mxu0
        %10016 = vmatprep.mubr.bf16.mxu0 0
        %10017 = vmatmul.mubr.bf16.gmra.mrb[0].mxu0 %v9924
        %v10018 = vpop.f32.mrb[0].mxu0
        %v10019 = vadd.f32 0.0, %v10018
        %v10020 = vpop.f32.mrb[0].mxu0
        %v10021 = vpop.f32.mrb[0].mxu0
        %v10022 = vadd.f32 0.0, %v10021
        %v10023 = vpop.f32.mrb[0].mxu0
        %10024 = vmatprep.mubr.bf16.mxu0 0
        %10025 = vmatmul.mubr.bf16.gmra.mrb[0].mxu0 %v9927
        %v10026 = vpop.f32.mrb[0].mxu0
        %v10027 = vadd.f32 0.0, %v10026
        %v10028 = vpop.f32.mrb[0].mxu0
        %v10029 = vpop.f32.mrb[0].mxu0
        %v10030 = vadd.f32 0.0, %v10029
        %v10031 = vpop.f32.mrb[0].mxu0
        %10032 = vmatprep.mubr.bf16.mxu0 0
        %10033 = vmatmul.mubr.bf16.gmra.mrb[0].mxu0 %v9930
        %v10034 = vpop.f32.mrb[0].mxu0
        %v10035 = vadd.f32 0.0, %v10034
        %v10036 = vpop.f32.mrb[0].mxu0
        %v10037 = vpop.f32.mrb[0].mxu0
        %v10038 = vadd.f32 0.0, %v10037
        %v10039 = vpop.f32.mrb[0].mxu0
        %10040 = vmatprep.mubr.bf16.mxu0 0
        %10041 = vmatmul.mubr.bf16.gmra.mrb[0].mxu0 %v9933
        %v10042 = vpop.f32.mrb[0].mxu0
        %v10043 = vadd.f32 0.0, %v10042
        %v10044 = vpop.f32.mrb[0].mxu0
        %v10045 = vpop.f32.mrb[0].mxu0
        %v10046 = vadd.f32 0.0, %v10045
        %v10047 = vpop.f32.mrb[0].mxu0
        %10048 = vmatprep.mubr.bf16.mxu0 0
        %10049 = vmatmul.mubr.bf16.gmra.mrb[0].mxu0 %v9936
        %v10050 = vpop.f32.mrb[0].mxu0
        %v10051 = vadd.f32 0.0, %v10050
        %v10052 = vpop.f32.mrb[0].mxu0
        %v10053 = vpop.f32.mrb[0].mxu0
        %v10054 = vadd.f32 0.0, %v10053
        %v10055 = vpop.f32.mrb[0].mxu0
        %10056 = vmatprep.mubr.bf16.mxu0 0
        %10057 = vmatmul.mubr.bf16.gmra.mrb[0].mxu0 %v9939
        %v10058 = vpop.f32.mrb[0].mxu0
        %v10059 = vadd.f32 0.0, %v10058
        %v10060 = vpop.f32.mrb[0].mxu0
        %v10061 = vpop.f32.mrb[0].mxu0
        %v10062 = vadd.f32 0.0, %v10061
        %v10063 = vpop.f32.mrb[0].mxu0
        %10064 = vmatprep.mubr.bf16.mxu0 0
        %10065 = vmatmul.mubr.bf16.gmra.mrb[0].mxu0 %v9942
        %v10066 = vpop.f32.mrb[0].mxu0
        %v10067 = vadd.f32 0.0, %v10066
        %v10068 = vpop.f32.mrb[0].mxu0
        %v10069 = vpop.f32.mrb[0].mxu0
        %v10070 = vadd.f32 0.0, %v10069
        %v10071 = vpop.f32.mrb[0].mxu0
        %10072 = vmatprep.mubr.bf16.mxu0 0
        %10073 = vmatmul.mubr.bf16.gmra.mrb[0].mxu0 %v9945
        %v10074 = vpop.f32.mrb[0].mxu0
        %v10075 = vadd.f32 0.0, %v10074
        %v10076 = vpop.f32.mrb[0].mxu0
        %v10077 = vpop.f32.mrb[0].mxu0
        %v10078 = vadd.f32 0.0, %v10077
        %v10079 = vpop.f32.mrb[0].mxu0
        %10080 = vmatprep.mubr.bf16.mxu0 0
        %10081 = vmatmul.mubr.bf16.gmra.mrb[0].mxu0 %v9948
        %v10082 = vpop.f32.mrb[0].mxu0
        %v10083 = vadd.f32 0.0, %v10082
        %v10084 = vpop.f32.mrb[0].mxu0
        %v10085 = vpop.f32.mrb[0].mxu0
        %v10086 = vadd.f32 0.0, %v10085
        %v10087 = vpop.f32.mrb[0].mxu0
        %10088 = vmatprep.mubr.bf16.mxu0 0
        %10089 = vmatmul.mubr.bf16.gmra.mrb[0].mxu0 %v9951
        %v10090 = vpop.f32.mrb[0].mxu0
        %v10091 = vadd.f32 0.0, %v10090
        %v10092 = vpop.f32.mrb[0].mxu0
        %v10093 = vpop.f32.mrb[0].mxu0
        %v10094 = vadd.f32 0.0, %v10093
        %v10095 = vpop.f32.mrb[0].mxu0
        %10096 = vmatprep.mubr.bf16.mxu0 0
        %10097 = vmatmul.mubr.bf16.gmra.mrb[0].mxu0 %v9954
        %v10098 = vpop.f32.mrb[0].mxu0
        %v10099 = vadd.f32 0.0, %v10098
        %v10100 = vpop.f32.mrb[0].mxu0
        %v10101 = vpop.f32.mrb[0].mxu0
        %v10102 = vadd.f32 0.0, %v10101
        %v10103 = vpop.f32.mrb[0].mxu0
        %10104 = vmatprep.mubr.bf16.mxu0 0
        %10105 = vmatmul.mubr.bf16.gmra.mrb[0].mxu0 %v9957
        %v10106 = vpop.f32.mrb[0].mxu0
        %v10107 = vadd.f32 0.0, %v10106
        %v10108 = vpop.f32.mrb[0].mxu0
        %v10109 = vpop.f32.mrb[0].mxu0
        %v10110 = vadd.f32 0.0, %v10109
        %v10111 = vpop.f32.mrb[0].mxu0
        %10112 = vmatprep.mubr.bf16.mxu0 0
        %10113 = vmatmul.mubr.bf16.gmra.mrb[0].mxu0 %v9960
        %v10114 = vpop.f32.mrb[0].mxu0
        %v10115 = vadd.f32 0.0, %v10114
        %v10116 = vpop.f32.mrb[0].mxu0
        %v10117 = vpop.f32.mrb[0].mxu0
        %v10118 = vadd.f32 0.0, %v10117
        %v10119 = vpop.f32.mrb[0].mxu0
        %10120 = vmatprep.mubr.bf16.mxu0 0
        %10121 = vmatmul.mubr.bf16.gmra.mrb[0].mxu0 %v9963
        %v10122 = vpop.f32.mrb[0].mxu0
        %v10123 = vadd.f32 0.0, %v10122
        %v10124 = vpop.f32.mrb[0].mxu0
        %v10125 = vpop.f32.mrb[0].mxu0
        %v10126 = vadd.f32 0.0, %v10125
        %v10127 = vpop.f32.mrb[0].mxu0
        %10128 = vdwg.mxu0
        %v10129 = vadd.f32 %v9434, %v10003
        %v10130 = vadd.f32 %v9435, %v10006
        %v10131 = vadd.f32 %v9436, %v10011
        %v10132 = vadd.f32 %v9437, %v10014
        %v10133 = vadd.f32 %v9438, %v10019
        %v10134 = vadd.f32 %v9439, %v10022
        %v10135 = vadd.f32 %v9440, %v10027
        %v10136 = vadd.f32 %v9441, %v10030
        %v10137 = vadd.f32 %v9442, %v10035
        %v10138 = vadd.f32 %v9443, %v10038
        %v10139 = vadd.f32 %v9444, %v10043
        %v10140 = vadd.f32 %v9445, %v10046
        %v10141 = vadd.f32 %v9446, %v10051
        %v10142 = vadd.f32 %v9447, %v10054
        %v10143 = vadd.f32 %v9448, %v10059
        %v10144 = vadd.f32 %v9449, %v10062
        %v10145 = vadd.f32 %v9450, %v10067
        %v10146 = vadd.f32 %v9451, %v10070
        %v10147 = vadd.f32 %v9452, %v10075
        %v10148 = vadd.f32 %v9453, %v10078
        %v10149 = vadd.f32 %v9454, %v10083
        %v10150 = vadd.f32 %v9455, %v10086
        %v10151 = vadd.f32 %v9456, %v10091
        %v10152 = vadd.f32 %v9457, %v10094
        %v10153 = vadd.f32 %v9458, %v10099
        %v10154 = vadd.f32 %v9459, %v10102
        %v10155 = vadd.f32 %v9460, %v10107
        %v10156 = vadd.f32 %v9461, %v10110
        %v10157 = vadd.f32 %v9462, %v10115
        %v10158 = vadd.f32 %v9463, %v10118
        %v10159 = vadd.f32 %v9464, %v10123
        %v10160 = vadd.f32 %v9465, %v10126
        %s10161 = scalar_lea.vmem [#allocation11], 28
        %v10162 = vld [vmem:[%s10161] sm:$0xf]
        %v10195 = vunpack.c.l.b16 %v9468
        %v10196 = vunpack.c.l.b16 %v9469
        %v10197 = vunpack.c.l.b16 %v9471
        %v10198 = vunpack.c.l.b16 %v9472
        %v10199 = vunpack.c.l.b16 %v9474
        %v10200 = vunpack.c.l.b16 %v9475
        %v10201 = vunpack.c.l.b16 %v9477
        %v10202 = vunpack.c.l.b16 %v9478
        %v10203 = vunpack.c.l.b16 %v9480
        %v10204 = vunpack.c.l.b16 %v9481
        %v10205 = vunpack.c.l.b16 %v9483
        %v10206 = vunpack.c.l.b16 %v9484
        %v10207 = vunpack.c.l.b16 %v9486
        %v10208 = vunpack.c.l.b16 %v9487
        %v10209 = vunpack.c.l.b16 %v9489
        %v10210 = vunpack.c.l.b16 %v9490
        %v10211 = vunpack.c.l.b16 %v9492
        %v10212 = vunpack.c.l.b16 %v9493
        %v10213 = vunpack.c.l.b16 %v9495
        %v10214 = vunpack.c.l.b16 %v9496
        %v10215 = vunpack.c.l.b16 %v9498
        %v10216 = vunpack.c.l.b16 %v9499
        %v10217 = vunpack.c.l.b16 %v9501
        %v10218 = vunpack.c.l.b16 %v9502
        %v10219 = vunpack.c.l.b16 %v9504
        %v10220 = vunpack.c.l.b16 %v9505
        %v10221 = vunpack.c.l.b16 %v9507
        %v10222 = vunpack.c.l.b16 %v9508
        %v10223 = vunpack.c.l.b16 %v9510
        %v10224 = vunpack.c.l.b16 %v9511
        %v10225 = vunpack.c.l.b16 %v9513
        %v10226 = vunpack.c.l.b16 %v9514
        %v10227 = vpack.c.b16 %v10196, %v10195
        %v10228 = vpack.c.b16 %v10198, %v10197
        %v10229 = vpack.c.b16 %v10200, %v10199
        %v10230 = vpack.c.b16 %v10202, %v10201
        %v10231 = vpack.c.b16 %v10204, %v10203
        %v10232 = vpack.c.b16 %v10206, %v10205
        %v10233 = vpack.c.b16 %v10208, %v10207
        %v10234 = vpack.c.b16 %v10210, %v10209
        %v10235 = vpack.c.b16 %v10212, %v10211
        %v10236 = vpack.c.b16 %v10214, %v10213
        %v10237 = vpack.c.b16 %v10216, %v10215
        %v10238 = vpack.c.b16 %v10218, %v10217
        %v10239 = vpack.c.b16 %v10220, %v10219
        %v10240 = vpack.c.b16 %v10222, %v10221
        %v10241 = vpack.c.b16 %v10224, %v10223
        %v10242 = vpack.c.b16 %v10226, %v10225
        %v10244 = vsel %vm1002, %v10227, 0
        %v10247 = vsel %vm1002, %v10228, 0
        %v10250 = vsel %vm1002, %v10229, 0
        %v10253 = vsel %vm1002, %v10230, 0
        %v10256 = vsel %vm1002, %v10231, 0
        %v10259 = vsel %vm1002, %v10232, 0
        %v10262 = vsel %vm1002, %v10233, 0
        %v10265 = vsel %vm1002, %v10234, 0
        %v10268 = vsel %vm1002, %v10235, 0
        %v10271 = vsel %vm1002, %v10236, 0
        %v10274 = vsel %vm1002, %v10237, 0
        %v10277 = vsel %vm1002, %v10238, 0
        %v10280 = vsel %vm1002, %v10239, 0
        %v10283 = vsel %vm1002, %v10240, 0
        %v10286 = vsel %vm1002, %v10241, 0
        %v10289 = vsel %vm1002, %v10242, 0
        %v10292 = vsel %vm1051, %v10162, 0
        %10294 = vmatprep.subr.bf16.mxu0 0
        %10295 = vmatpush1.bf16.msra.mxu0 %v10292
        %10296 = vmatprep.subr.bf16.mxu0 0
        %10297 = vmatpush1.bf16.msra.mxu0 0
        %10298 = vmatprep.subr.bf16.mxu0 0
        %10299 = vmatpush1.bf16.msra.mxu0 0
        %10300 = vmatprep.subr.bf16.mxu0 0
        %10301 = vmatpush1.bf16.msra.mxu0 0
        %10302 = vmatprep.subr.bf16.mxu0 0
        %10303 = vmatpush1.bf16.msra.mxu0 0
        %10304 = vmatprep.subr.bf16.mxu0 0
        %10305 = vmatpush1.bf16.msra.mxu0 0
        %10306 = vmatprep.subr.bf16.mxu0 0
        %10307 = vmatpush1.bf16.msra.mxu0 0
        %10308 = vmatprep.subr.bf16.mxu0 0
        %10309 = vmatpush1.bf16.msra.mxu0 0
        %10310 = vmatprep.subr.bf16.mxu0 0
        %10311 = vmatpush1.bf16.msra.mxu0 0
        %10312 = vmatprep.subr.bf16.mxu0 0
        %10313 = vmatpush1.bf16.msra.mxu0 0
        %10314 = vmatprep.subr.bf16.mxu0 0
        %10315 = vmatpush1.bf16.msra.mxu0 0
        %10316 = vmatprep.subr.bf16.mxu0 0
        %10317 = vmatpush1.bf16.msra.mxu0 0
        %10318 = vmatprep.subr.bf16.mxu0 0
        %10319 = vmatpush1.bf16.msra.mxu0 0
        %10320 = vmatprep.subr.bf16.mxu0 0
        %10321 = vmatpush1.bf16.msra.mxu0 0
        %10322 = vmatprep.subr.bf16.mxu0 0
        %10323 = vmatpush1.bf16.msra.mxu0 0
        %10324 = vmatprep.subr.bf16.mxu0 0
        %10325 = vmatpush1.bf16.msra.mxu0 0
        %10326 = vmatprep.mubr.bf16.mxu0 0
        %10327 = vmatmul.mubr.bf16.gmra.mrb[0].mxu0 %v10244
        %v10328 = vpop.f32.mrb[0].mxu0
        %v10329 = vadd.f32 0.0, %v10328
        %v10330 = vpop.f32.mrb[0].mxu0
        %v10331 = vpop.f32.mrb[0].mxu0
        %v10332 = vadd.f32 0.0, %v10331
        %v10333 = vpop.f32.mrb[0].mxu0
        %10334 = vmatprep.mubr.bf16.mxu0 0
        %10335 = vmatmul.mubr.bf16.gmra.mrb[0].mxu0 %v10247
        %v10336 = vpop.f32.mrb[0].mxu0
        %v10337 = vadd.f32 0.0, %v10336
        %v10338 = vpop.f32.mrb[0].mxu0
        %v10339 = vpop.f32.mrb[0].mxu0
        %v10340 = vadd.f32 0.0, %v10339
        %v10341 = vpop.f32.mrb[0].mxu0
        %10342 = vmatprep.mubr.bf16.mxu0 0
        %10343 = vmatmul.mubr.bf16.gmra.mrb[0].mxu0 %v10250
        %v10344 = vpop.f32.mrb[0].mxu0
        %v10345 = vadd.f32 0.0, %v10344
        %v10346 = vpop.f32.mrb[0].mxu0
        %v10347 = vpop.f32.mrb[0].mxu0
        %v10348 = vadd.f32 0.0, %v10347
        %v10349 = vpop.f32.mrb[0].mxu0
        %10350 = vmatprep.mubr.bf16.mxu0 0
        %10351 = vmatmul.mubr.bf16.gmra.mrb[0].mxu0 %v10253
        %v10352 = vpop.f32.mrb[0].mxu0
        %v10353 = vadd.f32 0.0, %v10352
        %v10354 = vpop.f32.mrb[0].mxu0
        %v10355 = vpop.f32.mrb[0].mxu0
        %v10356 = vadd.f32 0.0, %v10355
        %v10357 = vpop.f32.mrb[0].mxu0
        %10358 = vmatprep.mubr.bf16.mxu0 0
        %10359 = vmatmul.mubr.bf16.gmra.mrb[0].mxu0 %v10256
        %v10360 = vpop.f32.mrb[0].mxu0
        %v10361 = vadd.f32 0.0, %v10360
        %v10362 = vpop.f32.mrb[0].mxu0
        %v10363 = vpop.f32.mrb[0].mxu0
        %v10364 = vadd.f32 0.0, %v10363
        %v10365 = vpop.f32.mrb[0].mxu0
        %10366 = vmatprep.mubr.bf16.mxu0 0
        %10367 = vmatmul.mubr.bf16.gmra.mrb[0].mxu0 %v10259
        %v10368 = vpop.f32.mrb[0].mxu0
        %v10369 = vadd.f32 0.0, %v10368
        %v10370 = vpop.f32.mrb[0].mxu0
        %v10371 = vpop.f32.mrb[0].mxu0
        %v10372 = vadd.f32 0.0, %v10371
        %v10373 = vpop.f32.mrb[0].mxu0
        %10374 = vmatprep.mubr.bf16.mxu0 0
        %10375 = vmatmul.mubr.bf16.gmra.mrb[0].mxu0 %v10262
        %v10376 = vpop.f32.mrb[0].mxu0
        %v10377 = vadd.f32 0.0, %v10376
        %v10378 = vpop.f32.mrb[0].mxu0
        %v10379 = vpop.f32.mrb[0].mxu0
        %v10380 = vadd.f32 0.0, %v10379
        %v10381 = vpop.f32.mrb[0].mxu0
        %10382 = vmatprep.mubr.bf16.mxu0 0
        %10383 = vmatmul.mubr.bf16.gmra.mrb[0].mxu0 %v10265
        %v10384 = vpop.f32.mrb[0].mxu0
        %v10385 = vadd.f32 0.0, %v10384
        %v10386 = vpop.f32.mrb[0].mxu0
        %v10387 = vpop.f32.mrb[0].mxu0
        %v10388 = vadd.f32 0.0, %v10387
        %v10389 = vpop.f32.mrb[0].mxu0
        %10390 = vmatprep.mubr.bf16.mxu0 0
        %10391 = vmatmul.mubr.bf16.gmra.mrb[0].mxu0 %v10268
        %v10392 = vpop.f32.mrb[0].mxu0
        %v10393 = vadd.f32 0.0, %v10392
        %v10394 = vpop.f32.mrb[0].mxu0
        %v10395 = vpop.f32.mrb[0].mxu0
        %v10396 = vadd.f32 0.0, %v10395
        %v10397 = vpop.f32.mrb[0].mxu0
        %10398 = vmatprep.mubr.bf16.mxu0 0
        %10399 = vmatmul.mubr.bf16.gmra.mrb[0].mxu0 %v10271
        %v10400 = vpop.f32.mrb[0].mxu0
        %v10401 = vadd.f32 0.0, %v10400
        %v10402 = vpop.f32.mrb[0].mxu0
        %v10403 = vpop.f32.mrb[0].mxu0
        %v10404 = vadd.f32 0.0, %v10403
        %v10405 = vpop.f32.mrb[0].mxu0
        %10406 = vmatprep.mubr.bf16.mxu0 0
        %10407 = vmatmul.mubr.bf16.gmra.mrb[0].mxu0 %v10274
        %v10408 = vpop.f32.mrb[0].mxu0
        %v10409 = vadd.f32 0.0, %v10408
        %v10410 = vpop.f32.mrb[0].mxu0
        %v10411 = vpop.f32.mrb[0].mxu0
        %v10412 = vadd.f32 0.0, %v10411
        %v10413 = vpop.f32.mrb[0].mxu0
        %10414 = vmatprep.mubr.bf16.mxu0 0
        %10415 = vmatmul.mubr.bf16.gmra.mrb[0].mxu0 %v10277
        %v10416 = vpop.f32.mrb[0].mxu0
        %v10417 = vadd.f32 0.0, %v10416
        %v10418 = vpop.f32.mrb[0].mxu0
        %v10419 = vpop.f32.mrb[0].mxu0
        %v10420 = vadd.f32 0.0, %v10419
        %v10421 = vpop.f32.mrb[0].mxu0
        %10422 = vmatprep.mubr.bf16.mxu0 0
        %10423 = vmatmul.mubr.bf16.gmra.mrb[0].mxu0 %v10280
        %v10424 = vpop.f32.mrb[0].mxu0
        %v10425 = vadd.f32 0.0, %v10424
        %v10426 = vpop.f32.mrb[0].mxu0
        %v10427 = vpop.f32.mrb[0].mxu0
        %v10428 = vadd.f32 0.0, %v10427
        %v10429 = vpop.f32.mrb[0].mxu0
        %10430 = vmatprep.mubr.bf16.mxu0 0
        %10431 = vmatmul.mubr.bf16.gmra.mrb[0].mxu0 %v10283
        %v10432 = vpop.f32.mrb[0].mxu0
        %v10433 = vadd.f32 0.0, %v10432
        %v10434 = vpop.f32.mrb[0].mxu0
        %v10435 = vpop.f32.mrb[0].mxu0
        %v10436 = vadd.f32 0.0, %v10435
        %v10437 = vpop.f32.mrb[0].mxu0
        %10438 = vmatprep.mubr.bf16.mxu0 0
        %10439 = vmatmul.mubr.bf16.gmra.mrb[0].mxu0 %v10286
        %v10440 = vpop.f32.mrb[0].mxu0
        %v10441 = vadd.f32 0.0, %v10440
        %v10442 = vpop.f32.mrb[0].mxu0
        %v10443 = vpop.f32.mrb[0].mxu0
        %v10444 = vadd.f32 0.0, %v10443
        %v10445 = vpop.f32.mrb[0].mxu0
        %10446 = vmatprep.mubr.bf16.mxu0 0
        %10447 = vmatmul.mubr.bf16.gmra.mrb[0].mxu0 %v10289
        %v10448 = vpop.f32.mrb[0].mxu0
        %v10449 = vadd.f32 0.0, %v10448
        %v10450 = vpop.f32.mrb[0].mxu0
        %v10451 = vpop.f32.mrb[0].mxu0
        %v10452 = vadd.f32 0.0, %v10451
        %v10453 = vpop.f32.mrb[0].mxu0
        %10454 = vdwg.mxu0
        %v10455 = vadd.f32 %v10129, %v10329
        %v10456 = vadd.f32 %v10130, %v10332
        %v10457 = vadd.f32 %v10131, %v10337
        %v10458 = vadd.f32 %v10132, %v10340
        %v10459 = vadd.f32 %v10133, %v10345
        %v10460 = vadd.f32 %v10134, %v10348
        %v10461 = vadd.f32 %v10135, %v10353
        %v10462 = vadd.f32 %v10136, %v10356
        %v10463 = vadd.f32 %v10137, %v10361
        %v10464 = vadd.f32 %v10138, %v10364
        %v10465 = vadd.f32 %v10139, %v10369
        %v10466 = vadd.f32 %v10140, %v10372
        %v10467 = vadd.f32 %v10141, %v10377
        %v10468 = vadd.f32 %v10142, %v10380
        %v10469 = vadd.f32 %v10143, %v10385
        %v10470 = vadd.f32 %v10144, %v10388
        %v10471 = vadd.f32 %v10145, %v10393
        %v10472 = vadd.f32 %v10146, %v10396
        %v10473 = vadd.f32 %v10147, %v10401
        %v10474 = vadd.f32 %v10148, %v10404
        %v10475 = vadd.f32 %v10149, %v10409
        %v10476 = vadd.f32 %v10150, %v10412
        %v10477 = vadd.f32 %v10151, %v10417
        %v10478 = vadd.f32 %v10152, %v10420
        %v10479 = vadd.f32 %v10153, %v10425
        %v10480 = vadd.f32 %v10154, %v10428
        %v10481 = vadd.f32 %v10155, %v10433
        %v10482 = vadd.f32 %v10156, %v10436
        %v10483 = vadd.f32 %v10157, %v10441
        %v10484 = vadd.f32 %v10158, %v10444
        %v10485 = vadd.f32 %v10159, %v10449
        %v10486 = vadd.f32 %v10160, %v10452
        %v10487 = vld [vmem:[%s9466 + $0x4] sm:$0xf]
        %v10488 = vld [vmem:[%s9466 + $0x8] sm:$0xf]
        %v10489 = vld [vmem:[%s9466 + $0xc] sm:$0x1]
        %v10490 = vld [vmem:[%s9466 + $0x14] sm:$0xf]
        %v10491 = vld [vmem:[%s9466 + $0x18] sm:$0xf]
        %v10492 = vld [vmem:[%s9466 + $0x1c] sm:$0x1]
        %v10493 = vld [vmem:[%s9466 + $0x24] sm:$0xf]
        %v10494 = vld [vmem:[%s9466 + $0x28] sm:$0xf]
        %v10495 = vld [vmem:[%s9466 + $0x2c] sm:$0x1]
        %v10496 = vld [vmem:[%s9466 + $0x34] sm:$0xf]
        %v10497 = vld [vmem:[%s9466 + $0x38] sm:$0xf]
        %v10498 = vld [vmem:[%s9466 + $0x3c] sm:$0x1]
        %v10499 = vld [vmem:[%s9466 + $0x44] sm:$0xf]
        %v10500 = vld [vmem:[%s9466 + $0x48] sm:$0xf]
        %v10501 = vld [vmem:[%s9466 + $0x4c] sm:$0x1]
        %v10502 = vld [vmem:[%s9466 + $0x54] sm:$0xf]
        %v10503 = vld [vmem:[%s9466 + $0x58] sm:$0xf]
        %v10504 = vld [vmem:[%s9466 + $0x5c] sm:$0x1]
        %v10505 = vld [vmem:[%s9466 + $0x64] sm:$0xf]
        %v10506 = vld [vmem:[%s9466 + $0x68] sm:$0xf]
        %v10507 = vld [vmem:[%s9466 + $0x6c] sm:$0x1]
        %v10508 = vld [vmem:[%s9466 + $0x74] sm:$0xf]
        %v10509 = vld [vmem:[%s9466 + $0x78] sm:$0xf]
        %v10510 = vld [vmem:[%s9466 + $0x7c] sm:$0x1]
        %v10511 = vld [vmem:[%s9466 + $0x84] sm:$0xf]
        %v10512 = vld [vmem:[%s9466 + $0x88] sm:$0xf]
        %v10513 = vld [vmem:[%s9466 + $0x8c] sm:$0x1]
        %v10514 = vld [vmem:[%s9466 + $0x94] sm:$0xf]
        %v10515 = vld [vmem:[%s9466 + $0x98] sm:$0xf]
        %v10516 = vld [vmem:[%s9466 + $0x9c] sm:$0x1]
        %v10517 = vld [vmem:[%s9466 + $0xa4] sm:$0xf]
        %v10518 = vld [vmem:[%s9466 + $0xa8] sm:$0xf]
        %v10519 = vld [vmem:[%s9466 + $0xac] sm:$0x1]
        %v10520 = vld [vmem:[%s9466 + $0xb4] sm:$0xf]
        %v10521 = vld [vmem:[%s9466 + $0xb8] sm:$0xf]
        %v10522 = vld [vmem:[%s9466 + $0xbc] sm:$0x1]
        %v10523 = vld [vmem:[%s9466 + $0xc4] sm:$0xf]
        %v10524 = vld [vmem:[%s9466 + $0xc8] sm:$0xf]
        %v10525 = vld [vmem:[%s9466 + $0xcc] sm:$0x1]
        %v10526 = vld [vmem:[%s9466 + $0xd4] sm:$0xf]
        %v10527 = vld [vmem:[%s9466 + $0xd8] sm:$0xf]
        %v10528 = vld [vmem:[%s9466 + $0xdc] sm:$0x1]
        %v10529 = vld [vmem:[%s9466 + $0xe4] sm:$0xf]
        %v10530 = vld [vmem:[%s9466 + $0xe8] sm:$0xf]
        %v10531 = vld [vmem:[%s9466 + $0xec] sm:$0x1]
        %v10532 = vld [vmem:[%s9466 + $0xf4] sm:$0xf]
        %v10533 = vld [vmem:[%s9466 + $0xf8] sm:$0xf]
        %v10534 = vld [vmem:[%s9466 + $0xfc] sm:$0x1]
        %v10536 = vshrl.u32 %v10487, 16
        %v10538 = vrot.slane %v10536, 4
        %v10539 = vshll.u32 %v10487, 16
        %v10541 = vrot.slane %v10539, 5
        %v10542 = vor.u32 %v10538, %v10541
        %v10543 = vrot.slane %v10542, 4
        %v10545 = vshll.u32 %v10488, 16
        %v10547 = vrot.slane %v10545, 5
        %v10548 = vsel %vm1526, %v10543, %v10547
        %v10549 = vshrl.u32 %v10488, 16
        %v10551 = vrot.slane %v10549, 4
        %v10552 = vor.u32 %v10551, %v10547
        %v10553 = vrot.slane %v10552, 4
        %v10555 = vshll.u32 %v10489, 16
        %v10557 = vrot.slane %v10555, 5
        %v10558 = vsel %vm1526, %v10553, %v10557
        %v10560 = vshrl.u32 %v10490, 16
        %v10562 = vrot.slane %v10560, 4
        %v10563 = vshll.u32 %v10490, 16
        %v10565 = vrot.slane %v10563, 5
        %v10566 = vor.u32 %v10562, %v10565
        %v10567 = vrot.slane %v10566, 4
        %v10569 = vshll.u32 %v10491, 16
        %v10571 = vrot.slane %v10569, 5
        %v10572 = vsel %vm1526, %v10567, %v10571
        %v10573 = vshrl.u32 %v10491, 16
        %v10575 = vrot.slane %v10573, 4
        %v10576 = vor.u32 %v10575, %v10571
        %v10577 = vrot.slane %v10576, 4
        %v10579 = vshll.u32 %v10492, 16
        %v10581 = vrot.slane %v10579, 5
        %v10582 = vsel %vm1526, %v10577, %v10581
        %v10584 = vshrl.u32 %v10493, 16
        %v10586 = vrot.slane %v10584, 4
        %v10587 = vshll.u32 %v10493, 16
        %v10589 = vrot.slane %v10587, 5
        %v10590 = vor.u32 %v10586, %v10589
        %v10591 = vrot.slane %v10590, 4
        %v10593 = vshll.u32 %v10494, 16
        %v10595 = vrot.slane %v10593, 5
        %v10596 = vsel %vm1526, %v10591, %v10595
        %v10597 = vshrl.u32 %v10494, 16
        %v10599 = vrot.slane %v10597, 4
        %v10600 = vor.u32 %v10599, %v10595
        %v10601 = vrot.slane %v10600, 4
        %v10603 = vshll.u32 %v10495, 16
        %v10605 = vrot.slane %v10603, 5
        %v10606 = vsel %vm1526, %v10601, %v10605
        %v10608 = vshrl.u32 %v10496, 16
        %v10610 = vrot.slane %v10608, 4
        %v10611 = vshll.u32 %v10496, 16
        %v10613 = vrot.slane %v10611, 5
        %v10614 = vor.u32 %v10610, %v10613
        %v10615 = vrot.slane %v10614, 4
        %v10617 = vshll.u32 %v10497, 16
        %v10619 = vrot.slane %v10617, 5
        %v10620 = vsel %vm1526, %v10615, %v10619
        %v10621 = vshrl.u32 %v10497, 16
        %v10623 = vrot.slane %v10621, 4
        %v10624 = vor.u32 %v10623, %v10619
        %v10625 = vrot.slane %v10624, 4
        %v10627 = vshll.u32 %v10498, 16
        %v10629 = vrot.slane %v10627, 5
        %v10630 = vsel %vm1526, %v10625, %v10629
        %v10632 = vshrl.u32 %v10499, 16
        %v10634 = vrot.slane %v10632, 4
        %v10635 = vshll.u32 %v10499, 16
        %v10637 = vrot.slane %v10635, 5
        %v10638 = vor.u32 %v10634, %v10637
        %v10639 = vrot.slane %v10638, 4
        %v10641 = vshll.u32 %v10500, 16
        %v10643 = vrot.slane %v10641, 5
        %v10644 = vsel %vm1526, %v10639, %v10643
        %v10645 = vshrl.u32 %v10500, 16
        %v10647 = vrot.slane %v10645, 4
        %v10648 = vor.u32 %v10647, %v10643
        %v10649 = vrot.slane %v10648, 4
        %v10651 = vshll.u32 %v10501, 16
        %v10653 = vrot.slane %v10651, 5
        %v10654 = vsel %vm1526, %v10649, %v10653
        %v10656 = vshrl.u32 %v10502, 16
        %v10658 = vrot.slane %v10656, 4
        %v10659 = vshll.u32 %v10502, 16
        %v10661 = vrot.slane %v10659, 5
        %v10662 = vor.u32 %v10658, %v10661
        %v10663 = vrot.slane %v10662, 4
        %v10665 = vshll.u32 %v10503, 16
        %v10667 = vrot.slane %v10665, 5
        %v10668 = vsel %vm1526, %v10663, %v10667
        %v10669 = vshrl.u32 %v10503, 16
        %v10671 = vrot.slane %v10669, 4
        %v10672 = vor.u32 %v10671, %v10667
        %v10673 = vrot.slane %v10672, 4
        %v10675 = vshll.u32 %v10504, 16
        %v10677 = vrot.slane %v10675, 5
        %v10678 = vsel %vm1526, %v10673, %v10677
        %v10680 = vshrl.u32 %v10505, 16
        %v10682 = vrot.slane %v10680, 4
        %v10683 = vshll.u32 %v10505, 16
        %v10685 = vrot.slane %v10683, 5
        %v10686 = vor.u32 %v10682, %v10685
        %v10687 = vrot.slane %v10686, 4
        %v10689 = vshll.u32 %v10506, 16
        %v10691 = vrot.slane %v10689, 5
        %v10692 = vsel %vm1526, %v10687, %v10691
        %v10693 = vshrl.u32 %v10506, 16
        %v10695 = vrot.slane %v10693, 4
        %v10696 = vor.u32 %v10695, %v10691
        %v10697 = vrot.slane %v10696, 4
        %v10699 = vshll.u32 %v10507, 16
        %v10701 = vrot.slane %v10699, 5
        %v10702 = vsel %vm1526, %v10697, %v10701
        %v10704 = vshrl.u32 %v10508, 16
        %v10706 = vrot.slane %v10704, 4
        %v10707 = vshll.u32 %v10508, 16
        %v10709 = vrot.slane %v10707, 5
        %v10710 = vor.u32 %v10706, %v10709
        %v10711 = vrot.slane %v10710, 4
        %v10713 = vshll.u32 %v10509, 16
        %v10715 = vrot.slane %v10713, 5
        %v10716 = vsel %vm1526, %v10711, %v10715
        %v10717 = vshrl.u32 %v10509, 16
        %v10719 = vrot.slane %v10717, 4
        %v10720 = vor.u32 %v10719, %v10715
        %v10721 = vrot.slane %v10720, 4
        %v10723 = vshll.u32 %v10510, 16
        %v10725 = vrot.slane %v10723, 5
        %v10726 = vsel %vm1526, %v10721, %v10725
        %v10728 = vshrl.u32 %v10511, 16
        %v10730 = vrot.slane %v10728, 4
        %v10731 = vshll.u32 %v10511, 16
        %v10733 = vrot.slane %v10731, 5
        %v10734 = vor.u32 %v10730, %v10733
        %v10735 = vrot.slane %v10734, 4
        %v10737 = vshll.u32 %v10512, 16
        %v10739 = vrot.slane %v10737, 5
        %v10740 = vsel %vm1526, %v10735, %v10739
        %v10741 = vshrl.u32 %v10512, 16
        %v10743 = vrot.slane %v10741, 4
        %v10744 = vor.u32 %v10743, %v10739
        %v10745 = vrot.slane %v10744, 4
        %v10747 = vshll.u32 %v10513, 16
        %v10749 = vrot.slane %v10747, 5
        %v10750 = vsel %vm1526, %v10745, %v10749
        %v10752 = vshrl.u32 %v10514, 16
        %v10754 = vrot.slane %v10752, 4
        %v10755 = vshll.u32 %v10514, 16
        %v10757 = vrot.slane %v10755, 5
        %v10758 = vor.u32 %v10754, %v10757
        %v10759 = vrot.slane %v10758, 4
        %v10761 = vshll.u32 %v10515, 16
        %v10763 = vrot.slane %v10761, 5
        %v10764 = vsel %vm1526, %v10759, %v10763
        %v10765 = vshrl.u32 %v10515, 16
        %v10767 = vrot.slane %v10765, 4
        %v10768 = vor.u32 %v10767, %v10763
        %v10769 = vrot.slane %v10768, 4
        %v10771 = vshll.u32 %v10516, 16
        %v10773 = vrot.slane %v10771, 5
        %v10774 = vsel %vm1526, %v10769, %v10773
        %v10776 = vshrl.u32 %v10517, 16
        %v10778 = vrot.slane %v10776, 4
        %v10779 = vshll.u32 %v10517, 16
        %v10781 = vrot.slane %v10779, 5
        %v10782 = vor.u32 %v10778, %v10781
        %v10783 = vrot.slane %v10782, 4
        %v10785 = vshll.u32 %v10518, 16
        %v10787 = vrot.slane %v10785, 5
        %v10788 = vsel %vm1526, %v10783, %v10787
        %v10789 = vshrl.u32 %v10518, 16
        %v10791 = vrot.slane %v10789, 4
        %v10792 = vor.u32 %v10791, %v10787
        %v10793 = vrot.slane %v10792, 4
        %v10795 = vshll.u32 %v10519, 16
        %v10797 = vrot.slane %v10795, 5
        %v10798 = vsel %vm1526, %v10793, %v10797
        %v10800 = vshrl.u32 %v10520, 16
        %v10802 = vrot.slane %v10800, 4
        %v10803 = vshll.u32 %v10520, 16
        %v10805 = vrot.slane %v10803, 5
        %v10806 = vor.u32 %v10802, %v10805
        %v10807 = vrot.slane %v10806, 4
        %v10809 = vshll.u32 %v10521, 16
        %v10811 = vrot.slane %v10809, 5
        %v10812 = vsel %vm1526, %v10807, %v10811
        %v10813 = vshrl.u32 %v10521, 16
        %v10815 = vrot.slane %v10813, 4
        %v10816 = vor.u32 %v10815, %v10811
        %v10817 = vrot.slane %v10816, 4
        %v10819 = vshll.u32 %v10522, 16
        %v10821 = vrot.slane %v10819, 5
        %v10822 = vsel %vm1526, %v10817, %v10821
        %v10824 = vshrl.u32 %v10523, 16
        %v10826 = vrot.slane %v10824, 4
        %v10827 = vshll.u32 %v10523, 16
        %v10829 = vrot.slane %v10827, 5
        %v10830 = vor.u32 %v10826, %v10829
        %v10831 = vrot.slane %v10830, 4
        %v10833 = vshll.u32 %v10524, 16
        %v10835 = vrot.slane %v10833, 5
        %v10836 = vsel %vm1526, %v10831, %v10835
        %v10837 = vshrl.u32 %v10524, 16
        %v10839 = vrot.slane %v10837, 4
        %v10840 = vor.u32 %v10839, %v10835
        %v10841 = vrot.slane %v10840, 4
        %v10843 = vshll.u32 %v10525, 16
        %v10845 = vrot.slane %v10843, 5
        %v10846 = vsel %vm1526, %v10841, %v10845
        %v10848 = vshrl.u32 %v10526, 16
        %v10850 = vrot.slane %v10848, 4
        %v10851 = vshll.u32 %v10526, 16
        %v10853 = vrot.slane %v10851, 5
        %v10854 = vor.u32 %v10850, %v10853
        %v10855 = vrot.slane %v10854, 4
        %v10857 = vshll.u32 %v10527, 16
        %v10859 = vrot.slane %v10857, 5
        %v10860 = vsel %vm1526, %v10855, %v10859
        %v10861 = vshrl.u32 %v10527, 16
        %v10863 = vrot.slane %v10861, 4
        %v10864 = vor.u32 %v10863, %v10859
        %v10865 = vrot.slane %v10864, 4
        %v10867 = vshll.u32 %v10528, 16
        %v10869 = vrot.slane %v10867, 5
        %v10870 = vsel %vm1526, %v10865, %v10869
        %v10872 = vshrl.u32 %v10529, 16
        %v10874 = vrot.slane %v10872, 4
        %v10875 = vshll.u32 %v10529, 16
        %v10877 = vrot.slane %v10875, 5
        %v10878 = vor.u32 %v10874, %v10877
        %v10879 = vrot.slane %v10878, 4
        %v10881 = vshll.u32 %v10530, 16
        %v10883 = vrot.slane %v10881, 5
        %v10884 = vsel %vm1526, %v10879, %v10883
        %v10885 = vshrl.u32 %v10530, 16
        %v10887 = vrot.slane %v10885, 4
        %v10888 = vor.u32 %v10887, %v10883
        %v10889 = vrot.slane %v10888, 4
        %v10891 = vshll.u32 %v10531, 16
        %v10893 = vrot.slane %v10891, 5
        %v10894 = vsel %vm1526, %v10889, %v10893
        %v10896 = vshrl.u32 %v10532, 16
        %v10898 = vrot.slane %v10896, 4
        %v10899 = vshll.u32 %v10532, 16
        %v10901 = vrot.slane %v10899, 5
        %v10902 = vor.u32 %v10898, %v10901
        %v10903 = vrot.slane %v10902, 4
        %v10905 = vshll.u32 %v10533, 16
        %v10907 = vrot.slane %v10905, 5
        %v10908 = vsel %vm1526, %v10903, %v10907
        %v10909 = vshrl.u32 %v10533, 16
        %v10911 = vrot.slane %v10909, 4
        %v10912 = vor.u32 %v10911, %v10907
        %v10913 = vrot.slane %v10912, 4
        %v10915 = vshll.u32 %v10534, 16
        %v10917 = vrot.slane %v10915, 5
        %v10918 = vsel %vm1526, %v10913, %v10917
        %s10919 = scalar_lea.vmem [#allocation11], 32
        %v10920 = vld [vmem:[%s10919] sm:$0xf]
        %v10921 = vunpack.c.l.b16 %v10548
        %v10922 = vunpack.c.l.b16 %v10558
        %v10923 = vunpack.c.l.b16 %v10572
        %v10924 = vunpack.c.l.b16 %v10582
        %v10925 = vunpack.c.l.b16 %v10596
        %v10926 = vunpack.c.l.b16 %v10606
        %v10927 = vunpack.c.l.b16 %v10620
        %v10928 = vunpack.c.l.b16 %v10630
        %v10929 = vunpack.c.l.b16 %v10644
        %v10930 = vunpack.c.l.b16 %v10654
        %v10931 = vunpack.c.l.b16 %v10668
        %v10932 = vunpack.c.l.b16 %v10678
        %v10933 = vunpack.c.l.b16 %v10692
        %v10934 = vunpack.c.l.b16 %v10702
        %v10935 = vunpack.c.l.b16 %v10716
        %v10936 = vunpack.c.l.b16 %v10726
        %v10937 = vunpack.c.l.b16 %v10740
        %v10938 = vunpack.c.l.b16 %v10750
        %v10939 = vunpack.c.l.b16 %v10764
        %v10940 = vunpack.c.l.b16 %v10774
        %v10941 = vunpack.c.l.b16 %v10788
        %v10942 = vunpack.c.l.b16 %v10798
        %v10943 = vunpack.c.l.b16 %v10812
        %v10944 = vunpack.c.l.b16 %v10822
        %v10945 = vunpack.c.l.b16 %v10836
        %v10946 = vunpack.c.l.b16 %v10846
        %v10947 = vunpack.c.l.b16 %v10860
        %v10948 = vunpack.c.l.b16 %v10870
        %v10949 = vunpack.c.l.b16 %v10884
        %v10950 = vunpack.c.l.b16 %v10894
        %v10951 = vunpack.c.l.b16 %v10908
        %v10952 = vunpack.c.l.b16 %v10918
        %v10953 = vpack.c.b16 %v10922, %v10921
        %v10954 = vpack.c.b16 %v10924, %v10923
        %v10955 = vpack.c.b16 %v10926, %v10925
        %v10956 = vpack.c.b16 %v10928, %v10927
        %v10957 = vpack.c.b16 %v10930, %v10929
        %v10958 = vpack.c.b16 %v10932, %v10931
        %v10959 = vpack.c.b16 %v10934, %v10933
        %v10960 = vpack.c.b16 %v10936, %v10935
        %v10961 = vpack.c.b16 %v10938, %v10937
        %v10962 = vpack.c.b16 %v10940, %v10939
        %v10963 = vpack.c.b16 %v10942, %v10941
        %v10964 = vpack.c.b16 %v10944, %v10943
        %v10965 = vpack.c.b16 %v10946, %v10945
        %v10966 = vpack.c.b16 %v10948, %v10947
        %v10967 = vpack.c.b16 %v10950, %v10949
        %v10968 = vpack.c.b16 %v10952, %v10951
        %v10970 = vsel %vm1002, %v10953, 0
        %v10973 = vsel %vm1002, %v10954, 0
        %v10976 = vsel %vm1002, %v10955, 0
        %v10979 = vsel %vm1002, %v10956, 0
        %v10982 = vsel %vm1002, %v10957, 0
        %v10985 = vsel %vm1002, %v10958, 0
        %v10988 = vsel %vm1002, %v10959, 0
        %v10991 = vsel %vm1002, %v10960, 0
        %v10994 = vsel %vm1002, %v10961, 0
        %v10997 = vsel %vm1002, %v10962, 0
        %v11000 = vsel %vm1002, %v10963, 0
        %v11003 = vsel %vm1002, %v10964, 0
        %v11006 = vsel %vm1002, %v10965, 0
        %v11009 = vsel %vm1002, %v10966, 0
        %v11012 = vsel %vm1002, %v10967, 0
        %v11015 = vsel %vm1002, %v10968, 0
        %v11018 = vsel %vm1051, %v10920, 0
        %11020 = vmatprep.subr.bf16.mxu0 0
        %11021 = vmatpush1.bf16.msra.mxu0 %v11018
        %11022 = vmatprep.subr.bf16.mxu0 0
        %11023 = vmatpush1.bf16.msra.mxu0 0
        %11024 = vmatprep.subr.bf16.mxu0 0
        %11025 = vmatpush1.bf16.msra.mxu0 0
        %11026 = vmatprep.subr.bf16.mxu0 0
        %11027 = vmatpush1.bf16.msra.mxu0 0
        %11028 = vmatprep.subr.bf16.mxu0 0
        %11029 = vmatpush1.bf16.msra.mxu0 0
        %11030 = vmatprep.subr.bf16.mxu0 0
        %11031 = vmatpush1.bf16.msra.mxu0 0
        %11032 = vmatprep.subr.bf16.mxu0 0
        %11033 = vmatpush1.bf16.msra.mxu0 0
        %11034 = vmatprep.subr.bf16.mxu0 0
        %11035 = vmatpush1.bf16.msra.mxu0 0
        %11036 = vmatprep.subr.bf16.mxu0 0
        %11037 = vmatpush1.bf16.msra.mxu0 0
        %11038 = vmatprep.subr.bf16.mxu0 0
        %11039 = vmatpush1.bf16.msra.mxu0 0
        %11040 = vmatprep.subr.bf16.mxu0 0
        %11041 = vmatpush1.bf16.msra.mxu0 0
        %11042 = vmatprep.subr.bf16.mxu0 0
        %11043 = vmatpush1.bf16.msra.mxu0 0
        %11044 = vmatprep.subr.bf16.mxu0 0
        %11045 = vmatpush1.bf16.msra.mxu0 0
        %11046 = vmatprep.subr.bf16.mxu0 0
        %11047 = vmatpush1.bf16.msra.mxu0 0
        %11048 = vmatprep.subr.bf16.mxu0 0
        %11049 = vmatpush1.bf16.msra.mxu0 0
        %11050 = vmatprep.subr.bf16.mxu0 0
        %11051 = vmatpush1.bf16.msra.mxu0 0
        %11052 = vmatprep.mubr.bf16.mxu0 0
        %11053 = vmatmul.mubr.bf16.gmra.mrb[0].mxu0 %v10970
        %v11054 = vpop.f32.mrb[0].mxu0
        %v11055 = vadd.f32 0.0, %v11054
        %v11056 = vpop.f32.mrb[0].mxu0
        %v11057 = vpop.f32.mrb[0].mxu0
        %v11058 = vadd.f32 0.0, %v11057
        %v11059 = vpop.f32.mrb[0].mxu0
        %11060 = vmatprep.mubr.bf16.mxu0 0
        %11061 = vmatmul.mubr.bf16.gmra.mrb[0].mxu0 %v10973
        %v11062 = vpop.f32.mrb[0].mxu0
        %v11063 = vadd.f32 0.0, %v11062
        %v11064 = vpop.f32.mrb[0].mxu0
        %v11065 = vpop.f32.mrb[0].mxu0
        %v11066 = vadd.f32 0.0, %v11065
        %v11067 = vpop.f32.mrb[0].mxu0
        %11068 = vmatprep.mubr.bf16.mxu0 0
        %11069 = vmatmul.mubr.bf16.gmra.mrb[0].mxu0 %v10976
        %v11070 = vpop.f32.mrb[0].mxu0
        %v11071 = vadd.f32 0.0, %v11070
        %v11072 = vpop.f32.mrb[0].mxu0
        %v11073 = vpop.f32.mrb[0].mxu0
        %v11074 = vadd.f32 0.0, %v11073
        %v11075 = vpop.f32.mrb[0].mxu0
        %11076 = vmatprep.mubr.bf16.mxu0 0
        %11077 = vmatmul.mubr.bf16.gmra.mrb[0].mxu0 %v10979
        %v11078 = vpop.f32.mrb[0].mxu0
        %v11079 = vadd.f32 0.0, %v11078
        %v11080 = vpop.f32.mrb[0].mxu0
        %v11081 = vpop.f32.mrb[0].mxu0
        %v11082 = vadd.f32 0.0, %v11081
        %v11083 = vpop.f32.mrb[0].mxu0
        %11084 = vmatprep.mubr.bf16.mxu0 0
        %11085 = vmatmul.mubr.bf16.gmra.mrb[0].mxu0 %v10982
        %v11086 = vpop.f32.mrb[0].mxu0
        %v11087 = vadd.f32 0.0, %v11086
        %v11088 = vpop.f32.mrb[0].mxu0
        %v11089 = vpop.f32.mrb[0].mxu0
        %v11090 = vadd.f32 0.0, %v11089
        %v11091 = vpop.f32.mrb[0].mxu0
        %11092 = vmatprep.mubr.bf16.mxu0 0
        %11093 = vmatmul.mubr.bf16.gmra.mrb[0].mxu0 %v10985
        %v11094 = vpop.f32.mrb[0].mxu0
        %v11095 = vadd.f32 0.0, %v11094
        %v11096 = vpop.f32.mrb[0].mxu0
        %v11097 = vpop.f32.mrb[0].mxu0
        %v11098 = vadd.f32 0.0, %v11097
        %v11099 = vpop.f32.mrb[0].mxu0
        %11100 = vmatprep.mubr.bf16.mxu0 0
        %11101 = vmatmul.mubr.bf16.gmra.mrb[0].mxu0 %v10988
        %v11102 = vpop.f32.mrb[0].mxu0
        %v11103 = vadd.f32 0.0, %v11102
        %v11104 = vpop.f32.mrb[0].mxu0
        %v11105 = vpop.f32.mrb[0].mxu0
        %v11106 = vadd.f32 0.0, %v11105
        %v11107 = vpop.f32.mrb[0].mxu0
        %11108 = vmatprep.mubr.bf16.mxu0 0
        %11109 = vmatmul.mubr.bf16.gmra.mrb[0].mxu0 %v10991
        %v11110 = vpop.f32.mrb[0].mxu0
        %v11111 = vadd.f32 0.0, %v11110
        %v11112 = vpop.f32.mrb[0].mxu0
        %v11113 = vpop.f32.mrb[0].mxu0
        %v11114 = vadd.f32 0.0, %v11113
        %v11115 = vpop.f32.mrb[0].mxu0
        %11116 = vmatprep.mubr.bf16.mxu0 0
        %11117 = vmatmul.mubr.bf16.gmra.mrb[0].mxu0 %v10994
        %v11118 = vpop.f32.mrb[0].mxu0
        %v11119 = vadd.f32 0.0, %v11118
        %v11120 = vpop.f32.mrb[0].mxu0
        %v11121 = vpop.f32.mrb[0].mxu0
        %v11122 = vadd.f32 0.0, %v11121
        %v11123 = vpop.f32.mrb[0].mxu0
        %11124 = vmatprep.mubr.bf16.mxu0 0
        %11125 = vmatmul.mubr.bf16.gmra.mrb[0].mxu0 %v10997
        %v11126 = vpop.f32.mrb[0].mxu0
        %v11127 = vadd.f32 0.0, %v11126
        %v11128 = vpop.f32.mrb[0].mxu0
        %v11129 = vpop.f32.mrb[0].mxu0
        %v11130 = vadd.f32 0.0, %v11129
        %v11131 = vpop.f32.mrb[0].mxu0
        %11132 = vmatprep.mubr.bf16.mxu0 0
        %11133 = vmatmul.mubr.bf16.gmra.mrb[0].mxu0 %v11000
        %v11134 = vpop.f32.mrb[0].mxu0
        %v11135 = vadd.f32 0.0, %v11134
        %v11136 = vpop.f32.mrb[0].mxu0
        %v11137 = vpop.f32.mrb[0].mxu0
        %v11138 = vadd.f32 0.0, %v11137
        %v11139 = vpop.f32.mrb[0].mxu0
        %11140 = vmatprep.mubr.bf16.mxu0 0
        %11141 = vmatmul.mubr.bf16.gmra.mrb[0].mxu0 %v11003
        %v11142 = vpop.f32.mrb[0].mxu0
        %v11143 = vadd.f32 0.0, %v11142
        %v11144 = vpop.f32.mrb[0].mxu0
        %v11145 = vpop.f32.mrb[0].mxu0
        %v11146 = vadd.f32 0.0, %v11145
        %v11147 = vpop.f32.mrb[0].mxu0
        %11148 = vmatprep.mubr.bf16.mxu0 0
        %11149 = vmatmul.mubr.bf16.gmra.mrb[0].mxu0 %v11006
        %v11150 = vpop.f32.mrb[0].mxu0
        %v11151 = vadd.f32 0.0, %v11150
        %v11152 = vpop.f32.mrb[0].mxu0
        %v11153 = vpop.f32.mrb[0].mxu0
        %v11154 = vadd.f32 0.0, %v11153
        %v11155 = vpop.f32.mrb[0].mxu0
        %11156 = vmatprep.mubr.bf16.mxu0 0
        %11157 = vmatmul.mubr.bf16.gmra.mrb[0].mxu0 %v11009
        %v11158 = vpop.f32.mrb[0].mxu0
        %v11159 = vadd.f32 0.0, %v11158
        %v11160 = vpop.f32.mrb[0].mxu0
        %v11161 = vpop.f32.mrb[0].mxu0
        %v11162 = vadd.f32 0.0, %v11161
        %v11163 = vpop.f32.mrb[0].mxu0
        %11164 = vmatprep.mubr.bf16.mxu0 0
        %11165 = vmatmul.mubr.bf16.gmra.mrb[0].mxu0 %v11012
        %v11166 = vpop.f32.mrb[0].mxu0
        %v11167 = vadd.f32 0.0, %v11166
        %v11168 = vpop.f32.mrb[0].mxu0
        %v11169 = vpop.f32.mrb[0].mxu0
        %v11170 = vadd.f32 0.0, %v11169
        %v11171 = vpop.f32.mrb[0].mxu0
        %11172 = vmatprep.mubr.bf16.mxu0 0
        %11173 = vmatmul.mubr.bf16.gmra.mrb[0].mxu0 %v11015
        %v11174 = vpop.f32.mrb[0].mxu0
        %v11175 = vadd.f32 0.0, %v11174
        %v11176 = vpop.f32.mrb[0].mxu0
        %v11177 = vpop.f32.mrb[0].mxu0
        %v11178 = vadd.f32 0.0, %v11177
        %v11179 = vpop.f32.mrb[0].mxu0
        %11180 = vdwg.mxu0
        %v11181 = vadd.f32 %v10455, %v11055
        %v11182 = vadd.f32 %v10456, %v11058
        %v11183 = vadd.f32 %v10457, %v11063
        %v11184 = vadd.f32 %v10458, %v11066
        %v11185 = vadd.f32 %v10459, %v11071
        %v11186 = vadd.f32 %v10460, %v11074
        %v11187 = vadd.f32 %v10461, %v11079
        %v11188 = vadd.f32 %v10462, %v11082
        %v11189 = vadd.f32 %v10463, %v11087
        %v11190 = vadd.f32 %v10464, %v11090
        %v11191 = vadd.f32 %v10465, %v11095
        %v11192 = vadd.f32 %v10466, %v11098
        %v11193 = vadd.f32 %v10467, %v11103
        %v11194 = vadd.f32 %v10468, %v11106
        %v11195 = vadd.f32 %v10469, %v11111
        %v11196 = vadd.f32 %v10470, %v11114
        %v11197 = vadd.f32 %v10471, %v11119
        %v11198 = vadd.f32 %v10472, %v11122
        %v11199 = vadd.f32 %v10473, %v11127
        %v11200 = vadd.f32 %v10474, %v11130
        %v11201 = vadd.f32 %v10475, %v11135
        %v11202 = vadd.f32 %v10476, %v11138
        %v11203 = vadd.f32 %v10477, %v11143
        %v11204 = vadd.f32 %v10478, %v11146
        %v11205 = vadd.f32 %v10479, %v11151
        %v11206 = vadd.f32 %v10480, %v11154
        %v11207 = vadd.f32 %v10481, %v11159
        %v11208 = vadd.f32 %v10482, %v11162
        %v11209 = vadd.f32 %v10483, %v11167
        %v11210 = vadd.f32 %v10484, %v11170
        %v11211 = vadd.f32 %v10485, %v11175
        %v11212 = vadd.f32 %v10486, %v11178
        %v11213 = vld [vmem:[#allocation13] sm:$0x1]
        %v11215 = vlaneseq
        %v11216 = vshrl.u32 %v11215, 7
        %v11217 = vsub.s32 0, %v11216
        %v11218 = vrot.slane %v11213, %v11217
        %v11220 = vadd.f32 %v11181, %v11218
        %v11221 = vadd.f32 %v11182, %v11218
        %v11222 = vadd.f32 %v11183, %v11218
        %v11223 = vadd.f32 %v11184, %v11218
        %v11224 = vadd.f32 %v11185, %v11218
        %v11225 = vadd.f32 %v11186, %v11218
        %v11226 = vadd.f32 %v11187, %v11218
        %v11227 = vadd.f32 %v11188, %v11218
        %v11228 = vadd.f32 %v11189, %v11218
        %v11229 = vadd.f32 %v11190, %v11218
        %v11230 = vadd.f32 %v11191, %v11218
        %v11231 = vadd.f32 %v11192, %v11218
        %v11232 = vadd.f32 %v11193, %v11218
        %v11233 = vadd.f32 %v11194, %v11218
        %v11234 = vadd.f32 %v11195, %v11218
        %v11235 = vadd.f32 %v11196, %v11218
        %v11236 = vadd.f32 %v11197, %v11218
        %v11237 = vadd.f32 %v11198, %v11218
        %v11238 = vadd.f32 %v11199, %v11218
        %v11239 = vadd.f32 %v11200, %v11218
        %v11240 = vadd.f32 %v11201, %v11218
        %v11241 = vadd.f32 %v11202, %v11218
        %v11242 = vadd.f32 %v11203, %v11218
        %v11243 = vadd.f32 %v11204, %v11218
        %v11244 = vadd.f32 %v11205, %v11218
        %v11245 = vadd.f32 %v11206, %v11218
        %v11246 = vadd.f32 %v11207, %v11218
        %v11247 = vadd.f32 %v11208, %v11218
        %v11248 = vadd.f32 %v11209, %v11218
        %v11249 = vadd.f32 %v11210, %v11218
        %v11250 = vadd.f32 %v11211, %v11218
        %v11251 = vadd.f32 %v11212, %v11218
        %v11252 = vadd.f32 %v11220, %v5737
        %v11253 = vadd.f32 %v11221, %v5738
        %v11254 = vadd.f32 %v11222, %v5739
        %v11255 = vadd.f32 %v11223, %v5740
        %v11256 = vadd.f32 %v11224, %v5741
        %v11257 = vadd.f32 %v11225, %v5742
        %v11258 = vadd.f32 %v11226, %v5743
        %v11259 = vadd.f32 %v11227, %v5744
        %v11260 = vadd.f32 %v11228, %v5745
        %v11261 = vadd.f32 %v11229, %v5746
        %v11262 = vadd.f32 %v11230, %v5747
        %v11263 = vadd.f32 %v11231, %v5748
        %v11264 = vadd.f32 %v11232, %v5749
        %v11265 = vadd.f32 %v11233, %v5750
        %v11266 = vadd.f32 %v11234, %v5751
        %v11267 = vadd.f32 %v11235, %v5752
        %v11268 = vadd.f32 %v11236, %v5753
        %v11269 = vadd.f32 %v11237, %v5754
        %v11270 = vadd.f32 %v11238, %v5755
        %v11271 = vadd.f32 %v11239, %v5756
        %v11272 = vadd.f32 %v11240, %v5757
        %v11273 = vadd.f32 %v11241, %v5758
        %v11274 = vadd.f32 %v11242, %v5759
        %v11275 = vadd.f32 %v11243, %v5760
        %v11276 = vadd.f32 %v11244, %v5761
        %v11277 = vadd.f32 %v11245, %v5762
        %v11278 = vadd.f32 %v11246, %v5763
        %v11279 = vadd.f32 %v11247, %v5764
        %v11280 = vadd.f32 %v11248, %v5765
        %v11281 = vadd.f32 %v11249, %v5766
        %v11282 = vadd.f32 %v11250, %v5767
        %v11283 = vadd.f32 %v11251, %v5768
        %v11284 = vmax.f32 %v11252, 0.0
        %v11285 = vmax.f32 %v11253, 0.0
        %v11286 = vmax.f32 %v11254, 0.0
        %v11287 = vmax.f32 %v11255, 0.0
        %v11288 = vmax.f32 %v11256, 0.0
        %v11289 = vmax.f32 %v11257, 0.0
        %v11290 = vmax.f32 %v11258, 0.0
        %v11291 = vmax.f32 %v11259, 0.0
        %v11292 = vmax.f32 %v11260, 0.0
        %v11293 = vmax.f32 %v11261, 0.0
        %v11294 = vmax.f32 %v11262, 0.0
        %v11295 = vmax.f32 %v11263, 0.0
        %v11296 = vmax.f32 %v11264, 0.0
        %v11297 = vmax.f32 %v11265, 0.0
        %v11298 = vmax.f32 %v11266, 0.0
        %v11299 = vmax.f32 %v11267, 0.0
        %v11300 = vmax.f32 %v11268, 0.0
        %v11301 = vmax.f32 %v11269, 0.0
        %v11302 = vmax.f32 %v11270, 0.0
        %v11303 = vmax.f32 %v11271, 0.0
        %v11304 = vmax.f32 %v11272, 0.0
        %v11305 = vmax.f32 %v11273, 0.0
        %v11306 = vmax.f32 %v11274, 0.0
        %v11307 = vmax.f32 %v11275, 0.0
        %v11308 = vmax.f32 %v11276, 0.0
        %v11309 = vmax.f32 %v11277, 0.0
        %v11310 = vmax.f32 %v11278, 0.0
        %v11311 = vmax.f32 %v11279, 0.0
        %v11312 = vmax.f32 %v11280, 0.0
        %v11313 = vmax.f32 %v11281, 0.0
        %v11314 = vmax.f32 %v11282, 0.0
        %v11315 = vmax.f32 %v11283, 0.0
        %v11316 = vpack.c.bf16 %v11285, %v11284
        %v11317 = vpack.c.bf16 %v11287, %v11286
        %v11318 = vpack.c.bf16 %v11289, %v11288
        %v11319 = vpack.c.bf16 %v11291, %v11290
        %v11320 = vpack.c.bf16 %v11293, %v11292
        %v11321 = vpack.c.bf16 %v11295, %v11294
        %v11322 = vpack.c.bf16 %v11297, %v11296
        %v11323 = vpack.c.bf16 %v11299, %v11298
        %v11324 = vpack.c.bf16 %v11301, %v11300
        %v11325 = vpack.c.bf16 %v11303, %v11302
        %v11326 = vpack.c.bf16 %v11305, %v11304
        %v11327 = vpack.c.bf16 %v11307, %v11306
        %v11328 = vpack.c.bf16 %v11309, %v11308
        %v11329 = vpack.c.bf16 %v11311, %v11310
        %v11330 = vpack.c.bf16 %v11313, %v11312
        %v11331 = vpack.c.bf16 %v11315, %v11314
        %v11348 = vunpack.c.l.b16 %v11316
        %v11349 = vunpack.c.h.b16 %v11316
        %v11350 = vunpack.c.l.b16 %v11317
        %v11351 = vunpack.c.h.b16 %v11317
        %v11352 = vunpack.c.l.b16 %v11318
        %v11353 = vunpack.c.h.b16 %v11318
        %v11354 = vunpack.c.l.b16 %v11319
        %v11355 = vunpack.c.h.b16 %v11319
        %v11356 = vunpack.c.l.b16 %v11320
        %v11357 = vunpack.c.h.b16 %v11320
        %v11358 = vunpack.c.l.b16 %v11321
        %v11359 = vunpack.c.h.b16 %v11321
        %v11360 = vunpack.c.l.b16 %v11322
        %v11361 = vunpack.c.h.b16 %v11322
        %v11362 = vunpack.c.l.b16 %v11323
        %v11363 = vunpack.c.h.b16 %v11323
        %v11364 = vunpack.c.l.b16 %v11324
        %v11365 = vunpack.c.h.b16 %v11324
        %v11366 = vunpack.c.l.b16 %v11325
        %v11367 = vunpack.c.h.b16 %v11325
        %v11368 = vunpack.c.l.b16 %v11326
        %v11369 = vunpack.c.h.b16 %v11326
        %v11370 = vunpack.c.l.b16 %v11327
        %v11371 = vunpack.c.h.b16 %v11327
        %v11372 = vunpack.c.l.b16 %v11328
        %v11373 = vunpack.c.h.b16 %v11328
        %v11374 = vunpack.c.l.b16 %v11329
        %v11375 = vunpack.c.h.b16 %v11329
        %v11376 = vunpack.c.l.b16 %v11330
        %v11377 = vunpack.c.h.b16 %v11330
        %v11378 = vunpack.c.l.b16 %v11331
        %v11379 = vunpack.c.h.b16 %v11331
        %v11380 = vpack.c.b16 %v11348, %v11348
        %v11381 = vpack.c.b16 %v11349, %v11349
        %v11382 = vpack.c.b16 %v11350, %v11350
        %v11383 = vpack.c.b16 %v11351, %v11351
        %v11384 = vpack.c.b16 %v11352, %v11352
        %v11385 = vpack.c.b16 %v11353, %v11353
        %v11386 = vpack.c.b16 %v11354, %v11354
        %v11387 = vpack.c.b16 %v11355, %v11355
        %v11388 = vpack.c.b16 %v11356, %v11356
        %v11389 = vpack.c.b16 %v11357, %v11357
        %v11390 = vpack.c.b16 %v11358, %v11358
        %v11391 = vpack.c.b16 %v11359, %v11359
        %v11392 = vpack.c.b16 %v11360, %v11360
        %v11393 = vpack.c.b16 %v11361, %v11361
        %v11394 = vpack.c.b16 %v11362, %v11362
        %v11395 = vpack.c.b16 %v11363, %v11363
        %v11396 = vpack.c.b16 %v11364, %v11364
        %v11397 = vpack.c.b16 %v11365, %v11365
        %v11398 = vpack.c.b16 %v11366, %v11366
        %v11399 = vpack.c.b16 %v11367, %v11367
        %v11400 = vpack.c.b16 %v11368, %v11368
        %v11401 = vpack.c.b16 %v11369, %v11369
        %v11402 = vpack.c.b16 %v11370, %v11370
        %v11403 = vpack.c.b16 %v11371, %v11371
        %v11404 = vpack.c.b16 %v11372, %v11372
        %v11405 = vpack.c.b16 %v11373, %v11373
        %v11406 = vpack.c.b16 %v11374, %v11374
        %v11407 = vpack.c.b16 %v11375, %v11375
        %v11408 = vpack.c.b16 %v11376, %v11376
        %v11409 = vpack.c.b16 %v11377, %v11377
        %v11410 = vpack.c.b16 %v11378, %v11378
        %v11411 = vpack.c.b16 %v11379, %v11379
        %11444 = vst.msk [vmem:[%s327] sm:$0xf] %vm336, %v11380
        %11445 = vst.msk [vmem:[%s327 + $0x4] sm:$0xf] %vm336, %v11381
        %11446 = vst.msk [vmem:[%s327 + $0x8] sm:$0xf] %vm336, %v11382
        %11447 = vst.msk [vmem:[%s327 + $0xc] sm:$0xf] %vm336, %v11383
        %11448 = vst.msk [vmem:[%s327 + $0x10] sm:$0xf] %vm336, %v11384
        %11449 = vst.msk [vmem:[%s327 + $0x14] sm:$0xf] %vm336, %v11385
        %11450 = vst.msk [vmem:[%s327 + $0x18] sm:$0xf] %vm336, %v11386
        %11451 = vst.msk [vmem:[%s327 + $0x1c] sm:$0xf] %vm336, %v11387
        %11452 = vst.msk [vmem:[%s327 + $0x20] sm:$0xf] %vm336, %v11388
        %11453 = vst.msk [vmem:[%s327 + $0x24] sm:$0xf] %vm336, %v11389
        %11454 = vst.msk [vmem:[%s327 + $0x28] sm:$0xf] %vm336, %v11390
        %11455 = vst.msk [vmem:[%s327 + $0x2c] sm:$0xf] %vm336, %v11391
        %11456 = vst.msk [vmem:[%s327 + $0x30] sm:$0xf] %vm336, %v11392
        %11457 = vst.msk [vmem:[%s327 + $0x34] sm:$0xf] %vm336, %v11393
        %11458 = vst.msk [vmem:[%s327 + $0x38] sm:$0xf] %vm336, %v11394
        %11459 = vst.msk [vmem:[%s327 + $0x3c] sm:$0xf] %vm336, %v11395
        %11460 = vst.msk [vmem:[%s327 + $0x40] sm:$0xf] %vm336, %v11396
        %11461 = vst.msk [vmem:[%s327 + $0x44] sm:$0xf] %vm336, %v11397
        %11462 = vst.msk [vmem:[%s327 + $0x48] sm:$0xf] %vm336, %v11398
        %11463 = vst.msk [vmem:[%s327 + $0x4c] sm:$0xf] %vm336, %v11399
        %11464 = vst.msk [vmem:[%s327 + $0x50] sm:$0xf] %vm336, %v11400
        %11465 = vst.msk [vmem:[%s327 + $0x54] sm:$0xf] %vm336, %v11401
        %11466 = vst.msk [vmem:[%s327 + $0x58] sm:$0xf] %vm336, %v11402
        %11467 = vst.msk [vmem:[%s327 + $0x5c] sm:$0xf] %vm336, %v11403
        %11468 = vst.msk [vmem:[%s327 + $0x60] sm:$0xf] %vm336, %v11404
        %11469 = vst.msk [vmem:[%s327 + $0x64] sm:$0xf] %vm336, %v11405
        %11470 = vst.msk [vmem:[%s327 + $0x68] sm:$0xf] %vm336, %v11406
        %11471 = vst.msk [vmem:[%s327 + $0x6c] sm:$0xf] %vm336, %v11407
        %11472 = vst.msk [vmem:[%s327 + $0x70] sm:$0xf] %vm336, %v11408
        %11473 = vst.msk [vmem:[%s327 + $0x74] sm:$0xf] %vm336, %v11409
        %11474 = vst.msk [vmem:[%s327 + $0x78] sm:$0xf] %vm336, %v11410
        %11475 = vst.msk [vmem:[%s327 + $0x7c] sm:$0xf] %vm336, %v11411
        %v11476 = vmax.f32 %v11284, %v11286
        %v11477 = vmax.f32 %v11285, %v11287
        %v11478 = vmax.f32 %v11288, %v11290
        %v11479 = vmax.f32 %v11289, %v11291
        %v11480 = vmax.f32 %v11292, %v11294
        %v11481 = vmax.f32 %v11293, %v11295
        %v11482 = vmax.f32 %v11296, %v11298
        %v11483 = vmax.f32 %v11297, %v11299
        %v11484 = vmax.f32 %v11300, %v11302
        %v11485 = vmax.f32 %v11301, %v11303
        %v11486 = vmax.f32 %v11304, %v11306
        %v11487 = vmax.f32 %v11305, %v11307
        %v11488 = vmax.f32 %v11308, %v11310
        %v11489 = vmax.f32 %v11309, %v11311
        %v11490 = vmax.f32 %v11312, %v11314
        %v11491 = vmax.f32 %v11313, %v11315
        %11492 = vst.msk [vmem:[#allocation4] sm:$0xff] %vm1002, %v11476
        %11493 = vst.msk [vmem:[#allocation4 + $0x8] sm:$0xff] %vm1002, %v11477
        %11494 = vst.msk [vmem:[#allocation4 + $0x10] sm:$0xff] %vm1002, %v11478
        %11495 = vst.msk [vmem:[#allocation4 + $0x18] sm:$0xff] %vm1002, %v11479
        %11496 = vst.msk [vmem:[#allocation4 + $0x20] sm:$0xff] %vm1002, %v11480
        %11497 = vst.msk [vmem:[#allocation4 + $0x28] sm:$0xff] %vm1002, %v11481
        %11498 = vst.msk [vmem:[#allocation4 + $0x30] sm:$0xff] %vm1002, %v11482
        %11499 = vst.msk [vmem:[#allocation4 + $0x38] sm:$0xff] %vm1002, %v11483
        %11500 = vst.msk [vmem:[#allocation4 + $0x40] sm:$0xff] %vm1002, %v11484
        %11501 = vst.msk [vmem:[#allocation4 + $0x48] sm:$0xff] %vm1002, %v11485
        %11502 = vst.msk [vmem:[#allocation4 + $0x50] sm:$0xff] %vm1002, %v11486
        %11503 = vst.msk [vmem:[#allocation4 + $0x58] sm:$0xff] %vm1002, %v11487
        %11504 = vst.msk [vmem:[#allocation4 + $0x60] sm:$0xff] %vm1002, %v11488
        %11505 = vst.msk [vmem:[#allocation4 + $0x68] sm:$0xff] %vm1002, %v11489
        %11506 = vst.msk [vmem:[#allocation4 + $0x70] sm:$0xff] %vm1002, %v11490
        %11507 = vst.msk [vmem:[#allocation4 + $0x78] sm:$0xff] %vm1002, %v11491
        %v11508 = vld [vmem:[#allocation4] ss:$2 sm:$0xff]
        %s11509 = scalar_lea.vmem [#allocation4], 16
        %v11510 = vld [vmem:[%s11509] ss:$2 sm:$0xff]
        %s11511 = scalar_lea.vmem [#allocation4], 32
        %v11512 = vld [vmem:[%s11511] ss:$2 sm:$0xff]
        %s11513 = scalar_lea.vmem [#allocation4], 48
        %v11514 = vld [vmem:[%s11513] ss:$2 sm:$0xff]
        %s11515 = scalar_lea.vmem [#allocation4], 64
        %v11516 = vld [vmem:[%s11515] ss:$2 sm:$0xff]
        %s11517 = scalar_lea.vmem [#allocation4], 80
        %v11518 = vld [vmem:[%s11517] ss:$2 sm:$0xff]
        %s11519 = scalar_lea.vmem [#allocation4], 96
        %v11520 = vld [vmem:[%s11519] ss:$2 sm:$0xff]
        %s11521 = scalar_lea.vmem [#allocation4], 112
        %v11522 = vld [vmem:[%s11521] ss:$2 sm:$0xff]
        %s11523 = scalar_lea.vmem [#allocation4], 1
        %v11524 = vld [vmem:[%s11523] ss:$2 sm:$0xff]
        %s11525 = scalar_lea.vmem [#allocation4], 17
        %v11526 = vld [vmem:[%s11525] ss:$2 sm:$0xff]
        %s11527 = scalar_lea.vmem [#allocation4], 33
        %v11528 = vld [vmem:[%s11527] ss:$2 sm:$0xff]
        %s11529 = scalar_lea.vmem [#allocation4], 49
        %v11530 = vld [vmem:[%s11529] ss:$2 sm:$0xff]
        %s11531 = scalar_lea.vmem [#allocation4], 65
        %v11532 = vld [vmem:[%s11531] ss:$2 sm:$0xff]
        %s11533 = scalar_lea.vmem [#allocation4], 81
        %v11534 = vld [vmem:[%s11533] ss:$2 sm:$0xff]
        %s11535 = scalar_lea.vmem [#allocation4], 97
        %v11536 = vld [vmem:[%s11535] ss:$2 sm:$0xff]
        %s11537 = scalar_lea.vmem [#allocation4], 113
        %v11538 = vld [vmem:[%s11537] ss:$2 sm:$0xff]
        %v11539 = vmax.f32 %v11508, %v11524
        %v11540 = vmax.f32 %v11510, %v11526
        %v11541 = vmax.f32 %v11512, %v11528
        %v11542 = vmax.f32 %v11514, %v11530
        %v11543 = vmax.f32 %v11516, %v11532
        %v11544 = vmax.f32 %v11518, %v11534
        %v11545 = vmax.f32 %v11520, %v11536
        %v11546 = vmax.f32 %v11522, %v11538
        %v11547 = vpack.c.bf16 %v11539, %v11539
        %v11548 = vpack.c.bf16 %v11540, %v11540
        %v11549 = vpack.c.bf16 %v11541, %v11541
        %v11550 = vpack.c.bf16 %v11542, %v11542
        %v11551 = vpack.c.bf16 %v11543, %v11543
        %v11552 = vpack.c.bf16 %v11544, %v11544
        %v11553 = vpack.c.bf16 %v11545, %v11545
        %v11554 = vpack.c.bf16 %v11546, %v11546
        %11555 = vst.msk [vmem:[%s334] sm:$0xf] %vm336, %v11547
        %11556 = vst.msk [vmem:[%s334 + $0x4] sm:$0xf] %vm336, %v11548
        %11557 = vst.msk [vmem:[%s334 + $0x8] sm:$0xf] %vm336, %v11549
        %11558 = vst.msk [vmem:[%s334 + $0xc] sm:$0xf] %vm336, %v11550
        %11559 = vst.msk [vmem:[%s334 + $0x10] sm:$0xf] %vm336, %v11551
        %11560 = vst.msk [vmem:[%s334 + $0x14] sm:$0xf] %vm336, %v11552
        %11561 = vst.msk [vmem:[%s334 + $0x18] sm:$0xf] %vm336, %v11553
        %11562 = vst.msk [vmem:[%s334 + $0x1c] sm:$0xf] %vm336, %v11554
        %s11563 = sand.u32 %s147, 1
        %s11564 = scalar_lea.sflag [#allocation7], %s11563
        %s11565 = sand.u32 %s147, 1
        %s11566 = smul.addr %s11565, 128
        %s11567 = scalar_lea.vmem [#allocation14], %s11566
        %s11568 = sand.u32 %s173, 1
        %s11569 = scalar_lea.sflag [#allocation16], %s11568
        %s11570 = sand.u32 %s173, 1
        %s11571 = smul.addr %s11570, 32
        %s11572 = scalar_lea.vmem [#allocation15], %s11571
        // Predicated region
        $region61: #{tpu_custom_call.1} parent=39 // pred_check
          %p11573 = pneg %p157
        $region62: #{tpu_custom_call.1} parent=39 // pred_check_branch
          %11575 = sbr.rel (%p11573) target = $region64
        $region63: #{tpu_custom_call.1} parent=39 // pred_region
          %s11577 = ssub.s32 2048, 2048
          %11578 = vsyncadd %s11564, %s11577
          %s11579 = smul.addr %s29, 32
          %s11580 = smul.addr %s11579, 64
          %s11581 = scalar_lea.hbm %s5, %s11580
          %s11582 = sshll.u32 %s11567, 4
          %s11583 = int_to_ptr.vmem [resolvable:$true] %s11582
          %11588 = dma.vmem_to_hbm [thread:$0]  %s11583, 2048, %s11581, %s11564, 64, 64, 4
        $region64: #{tpu_custom_call.1} parent=39 // pred_fallthru
          _
        // Predicated region
        $region65: #{tpu_custom_call.1} parent=39 // pred_check
          %p11589 = pneg %p183
        $region66: #{tpu_custom_call.1} parent=39 // pred_check_branch
          %11591 = sbr.rel (%p11589) target = $region68
        $region67: #{tpu_custom_call.1} parent=39 // pred_region
          %s11593 = ssub.s32 512, 512
          %11594 = vsyncadd %s11569, %s11593
          %s11595 = smul.addr %s29, 8
          %s11596 = smul.addr %s11595, 64
          %s11597 = scalar_lea.hbm %s6, %s11596
          %s11598 = sshll.u32 %s11572, 4
          %s11599 = int_to_ptr.vmem [resolvable:$true] %s11598
          %11604 = dma.vmem_to_hbm [thread:$0]  %s11599, 512, %s11597, %s11569, 64, 64, 4
        $region68: #{tpu_custom_call.1} parent=39 // pred_fallthru
          _
      $region40: #{tpu_custom_call.1} parent=5 // pred_fallthru
        _
      %p11605 = scmp.le.s32.totalorder 2, %s24
      // Predicated region
      $region69: #{tpu_custom_call.1} parent=5 // pred_check
        %p11606 = pneg %p11605
      $region70: #{tpu_custom_call.1} parent=5 // pred_check_branch
        %11608 = sbr.rel (%p11606) target = $region72
      $region71: #{tpu_custom_call.1} parent=5 // pred_region
        %s11609 = ssub.s32 %s24, 2
        // Predicated region
        $region73: #{tpu_custom_call.1} parent=71 // pred_check
          %p11610 = pneg %p163
        $region74: #{tpu_custom_call.1} parent=71 // pred_check_branch
          %11612 = sbr.rel (%p11610) target = $region76
        $region75: #{tpu_custom_call.1} parent=71 // pred_region
          %s11613 = sand.u32 %s148, 1
          %s11614 = scalar_lea.sflag [#allocation7], %s11613
          %s11615 = sand.u32 %s148, 1
          %s11616 = smul.addr %s11615, 128
          %s11617 = scalar_lea.vmem [#allocation14], %s11616
          %11618 = dma.done %s11614, 2048
        $region76: #{tpu_custom_call.1} parent=71 // pred_fallthru
          _
        // Predicated region
        $region77: #{tpu_custom_call.1} parent=71 // pred_check
          %p11619 = pneg %p189
        $region78: #{tpu_custom_call.1} parent=71 // pred_check_branch
          %11621 = sbr.rel (%p11619) target = $region80
        $region79: #{tpu_custom_call.1} parent=71 // pred_region
          %s11622 = sand.u32 %s174, 1
          %s11623 = scalar_lea.sflag [#allocation16], %s11622
          %s11624 = sand.u32 %s174, 1
          %s11625 = smul.addr %s11624, 32
          %s11626 = scalar_lea.vmem [#allocation15], %s11625
          %11627 = dma.done %s11623, 512
        $region80: #{tpu_custom_call.1} parent=71 // pred_fallthru
          _
      $region72: #{tpu_custom_call.1} parent=5 // pred_fallthru
        _
    $region6: #{tpu_custom_call.1} parent=1 // loop_footer
      %s28 = sadd.s32 1, %s24
    $region7: #{tpu_custom_call.1} parent=1 // loop_footer_branch
      %23 = sbr.rel target = $region3
    $region8: #{tpu_custom_call.1} parent=1 // loop_exit
      _
    %11628 = vsyncpa [#allocation6], 1
    %s11629 = scalar_lea.sflag [#allocation6], 1
    %11630 = vsyncpa %s11629, 1
    %11631 = vsyncpa [#allocation9], 1
    %11632 = vsyncpa [#allocation12], 1
    %11633 = vsyncpa [#allocation7], 1
    %s11634 = scalar_lea.sflag [#allocation7], 1
    %11635 = vsyncpa %s11634, 1
    %11636 = vsyncpa [#allocation16], 1
    %s11637 = scalar_lea.sflag [#allocation16], 1
    %11638 = vsyncpa %s11637, 1

</llo_original>
